<compile_context>
chip_gen: v6e
topology: v6e:2x2x1
jax: 0.10.0
libtpu: 0.0.40
codegen_flags: <defaults>
</compile_context>

<pallas_src>
import functools
import math

import jax
import jax.numpy as jnp
from jax.experimental import pallas as pl
from jax.experimental.pallas import tpu as pltpu

# geometry fixed by the module for a 39x39 single-channel input
H_IN = 39
H_CONV = 17                    # (39 - 7)//2 + 1
H_FEAT = 8                     # ceil((17 - 3)/2) + 1
N_POS = H_FEAT * H_FEAT        # 64 spatial positions after the pool
N_PATCH = H_CONV * H_CONV      # 289 pre-conv output positions
K_PRE = 49                     # 7*7*1 patch size


# ----------------------------------------------------------------------------
# Pallas kernel 1: fused feature net (pre-conv, max-pool, fire1-3, cos window)
# ----------------------------------------------------------------------------
def _featnet_kernel(
    patches_ref,                       # (289, 49)   im2col of the 7x7 conv
    wpre_ref, bpre_ref,                # (49, 96), (1, 96)
    gpool_ref,                         # (576, 289)  stacked pool select mats
    shift_ref,                         # (64, 576)   stacked 3x3 shift mats
    cw_ref,                            # (64, 1)     cosine window
    w1s_ref, b1s_ref, w1e_ref, b1e_ref,
    w2s_ref, b2s_ref, w2e_ref, b2e_ref,
    w3s_ref, b3s_ref, w3e_ref, b3e_ref,
    out_ref,                           # (64, 512) = [f1 | f2 | f3] * cos_window
):
    f32 = jnp.float32

    # --- pre-conv (7x7 / s2) as GEMM + bias + ReLU --------------------------
    pre = jnp.dot(patches_ref[...], wpre_ref[...], preferred_element_type=f32)
    pre = jnp.maximum(pre + bpre_ref[...], 0.0)                    # (289, 96)

    # --- 3x3 / s2 ceil-mode max-pool: one stacked selection GEMM + max ------
    ps = jnp.dot(gpool_ref[...], pre, preferred_element_type=f32)  # (576, 96)
    pooled = ps[0:N_POS, :]
    for t in range(1, 9):
        pooled = jnp.maximum(pooled, ps[t * N_POS:(t + 1) * N_POS, :])
    # pooled: (64, 96)

    shift = shift_ref[...]                                         # (64, 576)

    # --- fire: squeeze 1x1 + (expand1x1 | expand3x3) -------------------------
    #   expand = one wide GEMM over all 9 taps, then one stacked shift GEMM.
    def fire(x, ws_ref, bs_ref, we_ref, be_ref, cexp):
        s = jnp.dot(x, ws_ref[...], preferred_element_type=f32)
        s = jnp.maximum(s + bs_ref[...], 0.0)                      # (64, csq)
        y_all = jnp.dot(s, we_ref[...], preferred_element_type=f32)  # (64, 9*cexp)
        # lane-block slices (multiples of 128/256) stacked on sublanes
        y_stack = jnp.concatenate(
            [y_all[:, t * cexp:(t + 1) * cexp] for t in range(9)],
            axis=0)                                                # (576, cexp)
        acc = jnp.dot(shift, y_stack, preferred_element_type=f32)  # (64, cexp)
        return jnp.maximum(acc + be_ref[...], 0.0)

    f1 = fire(pooled, w1s_ref, b1s_ref, w1e_ref, b1e_ref, 128)
    f2 = fire(f1,     w2s_ref, b2s_ref, w2e_ref, b2e_ref, 128)
    f3 = fire(f2,     w3s_ref, b3s_ref, w3e_ref, b3e_ref, 256)

    # --- channel concat + cosine window, lane-dense stores ------------------
    cw = cw_ref[...]                                               # (64, 1)
    out_ref[:, 0:128] = f1 * cw
    out_ref[:, 128:256] = f2 * cw
    out_ref[:, 256:512] = f3 * cw


def _const_spec(arr):
    nd = arr.ndim

    def idx(b):
        return (0,) * nd

    return pl.BlockSpec(arr.shape, idx)


def feature_net_fused(patches, pk, cw):
    """patches: (B, 289, 49) -> cos-windowed feature map (B, 64, 512)."""
    B = patches.shape[0]
    consts = (
        pk["wpre"], pk["bpre"], pk["gpool"], pk["shift"], cw,
        pk["w1s"], pk["b1s"], pk["w1e"], pk["b1e"],
        pk["w2s"], pk["b2s"], pk["w2e"], pk["b2e"],
        pk["w3s"], pk["b3s"], pk["w3e"], pk["b3e"],
    )
    in_specs = [pl.BlockSpec((None, N_PATCH, K_PRE), lambda b: (b, 0, 0))]
    in_specs += [_const_spec(a) for a in consts]
    return pl.pallas_call(
        _featnet_kernel,
        out_shape=jax.ShapeDtypeStruct((B, N_POS, 512), jnp.float32),
        grid=(B,),
        in_specs=in_specs,
        out_specs=pl.BlockSpec((None, N_POS, 512), lambda b: (b, 0, 0)),
        compiler_params=pltpu.CompilerParams(
            dimension_semantics=("parallel",)),
    )(patches, *consts)


# ----------------------------------------------------------------------------
# Pallas kernel 2: correlation-filter response in the Fourier domain
#   k = sum_c xf * conj(zf) ;  out = k * alphaf      (channels on lanes)
# ----------------------------------------------------------------------------
def _cf_kernel(xr_ref, xi_ref, zr_ref, zi_ref, ar_ref, ai_ref, o_ref):
    xr = xr_ref[...]
    xi = xi_ref[...]
    zr = zr_ref[...]
    zi = zi_ref[...]
    kr = jnp.sum(xr * zr + xi * zi, axis=-1, keepdims=True)       # (M, 1)
    ki = jnp.sum(xi * zr - xr * zi, axis=-1, keepdims=True)
    ar = ar_ref[...]
    ai = ai_ref[...]
    o_ref[:, 0:1] = kr * ar - ki * ai                              # real
    o_ref[:, 1:2] = kr * ai + ki * ar                              # imag


def cf_response(xr, xi, zr, zi, ar, ai):
    M, C = xr.shape
    big = pl.BlockSpec((M, C), lambda: (0, 0))
    small = pl.BlockSpec((M, 1), lambda: (0, 0))
    return pl.pallas_call(
        _cf_kernel,
        out_shape=jax.ShapeDtypeStruct((M, 2), jnp.float32),
        in_specs=[big, big, big, big, small, small],
        out_specs=pl.BlockSpec((M, 2), lambda: (0, 0)),
    )(xr, xi, zr, zi, ar, ai)


# ----------------------------------------------------------------------------
# forward pass
# ----------------------------------------------------------------------------
def squeezecfnet_light_forward(x, pk, model_zf, model_alphaf, cos_window,
                               use_fire_layer="cat"):
    B = x.shape[0]
    assert x.shape[1:] == (1, H_IN, H_IN), x.shape

    # TODO(synk): 7x7/s2 im2col patch extraction stays a single XLA op
    # (strided gather has no clean, aligned Pallas formulation at this size).
    patches = jax.lax.conv_general_dilated_patches(
        x, (7, 7), (2, 2), "VALID")                      # (B, 49, 17, 17)
    patches = patches.transpose(0, 2, 3, 1).reshape(B, N_PATCH, K_PRE)

    cw = cos_window.reshape(N_POS, 1).astype(jnp.float32)
    feat = feature_net_fused(patches, pk, cw)            # (B, 64, 512)

    if use_fire_layer == "1":
        fmap = feat[:, :, 0:128]
    elif use_fire_layer == "2":
        fmap = feat[:, :, 128:256]
    elif use_fire_layer == "3":
        fmap = feat[:, :, 256:512]
    else:
        fmap = feat
    C = fmap.shape[-1]

    # TODO(synk): rfft2 has no Pallas equivalent; done in jnp.fft glue.
    x_map = fmap.transpose(0, 2, 1).reshape(B, C, H_FEAT, H_FEAT)
    xf = jnp.fft.rfft2(x_map, norm="ortho")              # (B, C, 8, 5) complex
    Wr = xf.shape[-1]
    M = B * H_FEAT * Wr

    xr = xf.real.transpose(0, 2, 3, 1).reshape(M, C)
    xi = xf.imag.transpose(0, 2, 3, 1).reshape(M, C)
    zr = model_zf[..., 0].transpose(0, 2, 3, 1).reshape(M, C)
    zi = model_zf[..., 1].transpose(0, 2, 3, 1).reshape(M, C)
    ar = model_alphaf[..., 0].reshape(M, 1)
    ai = model_alphaf[..., 1].reshape(M, 1)

    rf = cf_response(xr, xi, zr, zi, ar, ai)             # (M, 2)
    resp_f = (rf[:, 0] + 1j * rf[:, 1]).reshape(B, 1, H_FEAT, Wr)
    # TODO(synk): irfft2 has no Pallas equivalent; done in jnp.fft glue.
    return jnp.fft.irfft2(resp_f, norm="ortho")


# ----------------------------------------------------------------------------
# deterministic parameter init (kaiming-uniform-like, zero biases) + one-time
# packing into the MXU GEMM layouts consumed by the fused kernel
# ----------------------------------------------------------------------------
def _conv_init(key, cout, cin, kh, kw):
    fan_in = cin * kh * kw
    bound = math.sqrt(6.0 / fan_in)
    w = jax.random.uniform(key, (cout, cin, kh, kw), jnp.float32, -bound, bound)
    b = jnp.zeros((cout,), jnp.float32)
    return w, b


def make_fire_raw(key, inplanes, squeeze, e1, e3):
    k1, k2, k3 = jax.random.split(key, 3)
    sq_w, sq_b = _conv_init(k1, squeeze, inplanes, 1, 1)
    e1_w, e1_b = _conv_init(k2, e1, squeeze, 1, 1)
    e3_w, e3_b = _conv_init(k3, e3, squeeze, 3, 3)
    return dict(sq_w=sq_w, sq_b=sq_b, e1_w=e1_w, e1_b=e1_b, e3_w=e3_w, e3_b=e3_b)


def make_raw_params(key):
    k0, k1, k2, k3 = jax.random.split(key, 4)
    pre_w, pre_b = _conv_init(k0, 96, 1, 7, 7)
    return dict(
        pre_w=pre_w, pre_b=pre_b,
        fire1=make_fire_raw(k1, 96, 16, 64, 64),
        fire2=make_fire_raw(k2, 128, 16, 64, 64),
        fire3=make_fire_raw(k3, 128, 32, 128, 128),
    )


def _make_shift_mats():
    """(64, 9*64) stacked 0/1 matrices: column block t gathers tap-t source."""
    r = jnp.arange(N_POS)
    h, w = r // H_FEAT, r % H_FEAT
    cols = jnp.arange(N_POS)
    mats = []
    for di in range(3):
        for dj in range(3):
            hs, ws = h + di - 1, w + dj - 1
            valid = (hs >= 0) & (hs < H_FEAT) & (ws >= 0) & (ws < H_FEAT)
            src = hs * H_FEAT + ws
            mats.append(((cols[None, :] == src[:, None]) & valid[:, None])
                        .astype(jnp.float32))
    return jnp.concatenate(mats, axis=1)                 # (64, 576)


def _make_pool_select():
    """(9*64, 289) stacked 0/1 matrices selecting 3x3/s2 max-pool window taps."""
    ro = jnp.arange(N_POS)
    ho, wo = ro // H_FEAT, ro % H_FEAT
    cols = jnp.arange(N_PATCH)
    mats = []
    for i in range(3):
        for j in range(3):
            src = (2 * ho + i) * H_CONV + (2 * wo + j)
            mats.append((cols[None, :] == src[:, None]).astype(jnp.float32))
    return jnp.concatenate(mats, axis=0)                 # (576, 289)


def _pack_fire(p, csq, ce):
    wsq = p["sq_w"].reshape(csq, -1).T                       # (Cin, Csq)
    bsq = p["sq_b"].reshape(1, csq)
    we1 = p["e1_w"].reshape(ce, csq).T                       # (Csq, Ce)
    taps = []
    for i in range(3):
        for j in range(3):
            w3 = p["e3_w"][:, :, i, j].T                     # (Csq, Ce)
            w1 = we1 if (i == 1 and j == 1) else jnp.zeros_like(we1)
            taps.append(jnp.concatenate([w1, w3], axis=1))   # (Csq, 2*Ce)
    wexp = jnp.concatenate(taps, axis=1)                     # (Csq, 9*2*Ce)
    bexp = jnp.concatenate([p["e1_b"], p["e3_b"]]).reshape(1, 2 * ce)
    return wsq, bsq, wexp, bexp


def pack_params(raw):
    w1s, b1s, w1e, b1e = _pack_fire(raw["fire1"], 16, 64)
    w2s, b2s, w2e, b2e = _pack_fire(raw["fire2"], 16, 64)
    w3s, b3s, w3e, b3e = _pack_fire(raw["fire3"], 32, 128)
    return dict(
        wpre=raw["pre_w"].reshape(96, K_PRE).T,              # (49, 96)
        bpre=raw["pre_b"].reshape(1, 96),
        gpool=_make_pool_select(),                           # (576, 289)
        shift=_make_shift_mats(),                            # (64, 576)
        w1s=w1s, b1s=b1s, w1e=w1e, b1e=b1e,
        w2s=w2s, b2s=b2s, w2e=w2e, b2e=b2e,
        w3s=w3s, b3s=b3s, w3e=w3e, b3e=b3e,
    )


# ----------------------------------------------------------------------------
if __name__ == "__main__":
    key = jax.random.PRNGKey(0)
    k_param, k_x, k_zf, k_af = jax.random.split(key, 4)

    raw = make_raw_params(k_param)
    packed = pack_params(raw)            # one-time weight packing (not per call)

    # input: batch=2, 1 channel (fixed by module), 39x39 spatial
    x = jax.random.normal(k_x, (2, 1, H_IN, H_IN), jnp.float32)

    Wr = H_FEAT // 2 + 1
    C_tot = 128 + 128 + 256              # use_fire_layer = 'cat'
    cos_window = (jnp.hanning(H_FEAT)[:, None] *
                  jnp.hanning(H_FEAT)[None, :]).astype(jnp.float32)
    model_zf = 0.1 * jax.random.normal(k_zf, (2, C_tot, H_FEAT, Wr, 2),
                                       jnp.float32)
    model_alphaf = 0.1 * jax.random.normal(k_af, (2, 1, H_FEAT, Wr, 2),
                                           jnp.float32)

    fwd = jax.jit(functools.partial(squeezecfnet_light_forward,
                                    use_fire_layer="cat"))
    response = fwd(x, packed, model_zf, model_alphaf, cos_window)
    response = jax.block_until_ready(response)
    assert response.shape == (2, 1, H_FEAT, H_FEAT), response.shape
    print("KERNEL_OK")
</pallas_src>

<mosaic_0001>
module attributes {stable_mosaic.version = 11 : i64} {
  func.func @_featnet_kernel(%arg0: i32, %arg1: memref<1x289x49xf32, #tpu.memory_space<vmem>>, %arg2: memref<49x96xf32, #tpu.memory_space<vmem>>, %arg3: memref<1x96xf32, #tpu.memory_space<vmem>>, %arg4: memref<576x289xf32, #tpu.memory_space<vmem>>, %arg5: memref<64x576xf32, #tpu.memory_space<vmem>>, %arg6: memref<64x1xf32, #tpu.memory_space<vmem>>, %arg7: memref<96x16xf32, #tpu.memory_space<vmem>>, %arg8: memref<1x16xf32, #tpu.memory_space<vmem>>, %arg9: memref<16x1152xf32, #tpu.memory_space<vmem>>, %arg10: memref<1x128xf32, #tpu.memory_space<vmem>>, %arg11: memref<128x16xf32, #tpu.memory_space<vmem>>, %arg12: memref<1x16xf32, #tpu.memory_space<vmem>>, %arg13: memref<16x1152xf32, #tpu.memory_space<vmem>>, %arg14: memref<1x128xf32, #tpu.memory_space<vmem>>, %arg15: memref<128x32xf32, #tpu.memory_space<vmem>>, %arg16: memref<1x32xf32, #tpu.memory_space<vmem>>, %arg17: memref<32x2304xf32, #tpu.memory_space<vmem>>, %arg18: memref<1x256xf32, #tpu.memory_space<vmem>>, %arg19: memref<1x64x512xf32, #tpu.memory_space<vmem>>) attributes {dimension_semantics = [#tpu.dimension_semantics<parallel>], iteration_bounds = array<i64: 2>, scalar_prefetch = 0 : i64, scratch_operands = 0 : i64, tpu.core_type = #tpu.core_type<tc>, window_params = [{transform_indices = @transform_0, window_bounds = array<i64: 1, 289, 49>}, {pipeline_mode = #tpu.pipeline_mode<synchronous>, transform_indices = @transform_1, window_bounds = array<i64: 49, 96>}, {pipeline_mode = #tpu.pipeline_mode<synchronous>, transform_indices = @transform_2, window_bounds = array<i64: 1, 96>}, {pipeline_mode = #tpu.pipeline_mode<synchronous>, transform_indices = @transform_3, window_bounds = array<i64: 576, 289>}, {pipeline_mode = #tpu.pipeline_mode<synchronous>, transform_indices = @transform_4, window_bounds = array<i64: 64, 576>}, {pipeline_mode = #tpu.pipeline_mode<synchronous>, transform_indices = @transform_5, window_bounds = array<i64: 64, 1>}, {pipeline_mode = #tpu.pipeline_mode<synchronous>, transform_indices = @transform_6, window_bounds = array<i64: 96, 16>}, {pipeline_mode = #tpu.pipeline_mode<synchronous>, transform_indices = @transform_7, window_bounds = array<i64: 1, 16>}, {pipeline_mode = #tpu.pipeline_mode<synchronous>, transform_indices = @transform_8, window_bounds = array<i64: 16, 1152>}, {pipeline_mode = #tpu.pipeline_mode<synchronous>, transform_indices = @transform_9, window_bounds = array<i64: 1, 128>}, {pipeline_mode = #tpu.pipeline_mode<synchronous>, transform_indices = @transform_10, window_bounds = array<i64: 128, 16>}, {pipeline_mode = #tpu.pipeline_mode<synchronous>, transform_indices = @transform_11, window_bounds = array<i64: 1, 16>}, {pipeline_mode = #tpu.pipeline_mode<synchronous>, transform_indices = @transform_12, window_bounds = array<i64: 16, 1152>}, {pipeline_mode = #tpu.pipeline_mode<synchronous>, transform_indices = @transform_13, window_bounds = array<i64: 1, 128>}, {pipeline_mode = #tpu.pipeline_mode<synchronous>, transform_indices = @transform_14, window_bounds = array<i64: 128, 32>}, {pipeline_mode = #tpu.pipeline_mode<synchronous>, transform_indices = @transform_15, window_bounds = array<i64: 1, 32>}, {pipeline_mode = #tpu.pipeline_mode<synchronous>, transform_indices = @transform_16, window_bounds = array<i64: 32, 2304>}, {pipeline_mode = #tpu.pipeline_mode<synchronous>, transform_indices = @transform_17, window_bounds = array<i64: 1, 256>}, {transform_indices = @transform_18, window_bounds = array<i64: 1, 64, 512>}]} {
    %c0 = arith.constant 0 : index
    %c0_0 = arith.constant 0 : index
    %c0_1 = arith.constant 0 : index
    %0 = vector.load %arg1[%c0, %c0_0, %c0_1] : memref<1x289x49xf32, #tpu.memory_space<vmem>>, vector<1x289x49xf32>
    %1 = vector.shape_cast %0 : vector<1x289x49xf32> to vector<289x49xf32>
    %c0_2 = arith.constant 0 : index
    %c0_3 = arith.constant 0 : index
    %2 = vector.load %arg2[%c0_2, %c0_3] : memref<49x96xf32, #tpu.memory_space<vmem>>, vector<49x96xf32>
    %cst = arith.constant dense<0.000000e+00> : vector<289x96xf32>
    %3 = tpu.matmul %1, %2, %cst {dimension_numbers = #tpu.dot_dimension_numbers<[1], [0], [0], [1], [0, 0, 1, 1], [], []>} : vector<289x49xf32>, vector<49x96xf32>, vector<289x96xf32> -> vector<289x96xf32>
    %c0_4 = arith.constant 0 : index
    %c0_5 = arith.constant 0 : index
    %4 = vector.load %arg3[%c0_4, %c0_5] : memref<1x96xf32, #tpu.memory_space<vmem>>, vector<1x96xf32>
    %5 = vector.broadcast %4 : vector<1x96xf32> to vector<289x96xf32>
    %6 = arith.addf %3, %5 : vector<289x96xf32>
    %cst_6 = arith.constant 0.000000e+00 : f32
    %7 = vector.broadcast %cst_6 : f32 to vector<289x96xf32>
    %8 = arith.maximumf %6, %7 : vector<289x96xf32>
    %c0_7 = arith.constant 0 : index
    %c0_8 = arith.constant 0 : index
    %9 = vector.load %arg4[%c0_7, %c0_8] : memref<576x289xf32, #tpu.memory_space<vmem>>, vector<576x289xf32>
    %cst_9 = arith.constant dense<0.000000e+00> : vector<576x96xf32>
    %10 = tpu.matmul %9, %8, %cst_9 {dimension_numbers = #tpu.dot_dimension_numbers<[1], [0], [0], [1], [0, 0, 1, 1], [], []>} : vector<576x289xf32>, vector<289x96xf32>, vector<576x96xf32> -> vector<576x96xf32>
    %11 = vector.extract_strided_slice %10 {offsets = [0, 0], sizes = [64, 96], strides = [1, 1]} : vector<576x96xf32> to vector<64x96xf32>
    %12 = vector.extract_strided_slice %10 {offsets = [64, 0], sizes = [64, 96], strides = [1, 1]} : vector<576x96xf32> to vector<64x96xf32>
    %13 = arith.maximumf %11, %12 : vector<64x96xf32>
    %14 = vector.extract_strided_slice %10 {offsets = [128, 0], sizes = [64, 96], strides = [1, 1]} : vector<576x96xf32> to vector<64x96xf32>
    %15 = arith.maximumf %13, %14 : vector<64x96xf32>
    %16 = vector.extract_strided_slice %10 {offsets = [192, 0], sizes = [64, 96], strides = [1, 1]} : vector<576x96xf32> to vector<64x96xf32>
    %17 = arith.maximumf %15, %16 : vector<64x96xf32>
    %18 = vector.extract_strided_slice %10 {offsets = [256, 0], sizes = [64, 96], strides = [1, 1]} : vector<576x96xf32> to vector<64x96xf32>
    %19 = arith.maximumf %17, %18 : vector<64x96xf32>
    %20 = vector.extract_strided_slice %10 {offsets = [320, 0], sizes = [64, 96], strides = [1, 1]} : vector<576x96xf32> to vector<64x96xf32>
    %21 = arith.maximumf %19, %20 : vector<64x96xf32>
    %22 = vector.extract_strided_slice %10 {offsets = [384, 0], sizes = [64, 96], strides = [1, 1]} : vector<576x96xf32> to vector<64x96xf32>
    %23 = arith.maximumf %21, %22 : vector<64x96xf32>
    %24 = vector.extract_strided_slice %10 {offsets = [448, 0], sizes = [64, 96], strides = [1, 1]} : vector<576x96xf32> to vector<64x96xf32>
    %25 = arith.maximumf %23, %24 : vector<64x96xf32>
    %26 = vector.extract_strided_slice %10 {offsets = [512, 0], sizes = [64, 96], strides = [1, 1]} : vector<576x96xf32> to vector<64x96xf32>
    %27 = arith.maximumf %25, %26 : vector<64x96xf32>
    %c0_10 = arith.constant 0 : index
    %c0_11 = arith.constant 0 : index
    %28 = vector.load %arg5[%c0_10, %c0_11] : memref<64x576xf32, #tpu.memory_space<vmem>>, vector<64x576xf32>
    %c0_12 = arith.constant 0 : index
    %c0_13 = arith.constant 0 : index
    %29 = vector.load %arg7[%c0_12, %c0_13] : memref<96x16xf32, #tpu.memory_space<vmem>>, vector<96x16xf32>
    %cst_14 = arith.constant dense<0.000000e+00> : vector<64x16xf32>
    %30 = tpu.matmul %27, %29, %cst_14 {dimension_numbers = #tpu.dot_dimension_numbers<[1], [0], [0], [1], [0, 0, 1, 1], [], []>} : vector<64x96xf32>, vector<96x16xf32>, vector<64x16xf32> -> vector<64x16xf32>
    %c0_15 = arith.constant 0 : index
    %c0_16 = arith.constant 0 : index
    %31 = vector.load %arg8[%c0_15, %c0_16] : memref<1x16xf32, #tpu.memory_space<vmem>>, vector<1x16xf32>
    %32 = vector.broadcast %31 : vector<1x16xf32> to vector<64x16xf32>
    %33 = arith.addf %30, %32 : vector<64x16xf32>
    %cst_17 = arith.constant 0.000000e+00 : f32
    %34 = vector.broadcast %cst_17 : f32 to vector<64x16xf32>
    %35 = arith.maximumf %33, %34 : vector<64x16xf32>
    %c0_18 = arith.constant 0 : index
    %c0_19 = arith.constant 0 : index
    %36 = vector.load %arg9[%c0_18, %c0_19] : memref<16x1152xf32, #tpu.memory_space<vmem>>, vector<16x1152xf32>
    %cst_20 = arith.constant dense<0.000000e+00> : vector<64x1152xf32>
    %37 = tpu.matmul %35, %36, %cst_20 {dimension_numbers = #tpu.dot_dimension_numbers<[1], [0], [0], [1], [0, 0, 1, 1], [], []>} : vector<64x16xf32>, vector<16x1152xf32>, vector<64x1152xf32> -> vector<64x1152xf32>
    %38 = vector.extract_strided_slice %37 {offsets = [0, 0], sizes = [64, 128], strides = [1, 1]} : vector<64x1152xf32> to vector<64x128xf32>
    %39 = vector.extract_strided_slice %37 {offsets = [0, 128], sizes = [64, 128], strides = [1, 1]} : vector<64x1152xf32> to vector<64x128xf32>
    %40 = vector.extract_strided_slice %37 {offsets = [0, 256], sizes = [64, 128], strides = [1, 1]} : vector<64x1152xf32> to vector<64x128xf32>
    %41 = vector.extract_strided_slice %37 {offsets = [0, 384], sizes = [64, 128], strides = [1, 1]} : vector<64x1152xf32> to vector<64x128xf32>
    %42 = vector.extract_strided_slice %37 {offsets = [0, 512], sizes = [64, 128], strides = [1, 1]} : vector<64x1152xf32> to vector<64x128xf32>
    %43 = vector.extract_strided_slice %37 {offsets = [0, 640], sizes = [64, 128], strides = [1, 1]} : vector<64x1152xf32> to vector<64x128xf32>
    %44 = vector.extract_strided_slice %37 {offsets = [0, 768], sizes = [64, 128], strides = [1, 1]} : vector<64x1152xf32> to vector<64x128xf32>
    %45 = vector.extract_strided_slice %37 {offsets = [0, 896], sizes = [64, 128], strides = [1, 1]} : vector<64x1152xf32> to vector<64x128xf32>
    %46 = vector.extract_strided_slice %37 {offsets = [0, 1024], sizes = [64, 128], strides = [1, 1]} : vector<64x1152xf32> to vector<64x128xf32>
    %47 = tpu.concatenate %38, %39, %40, %41, %42, %43, %44, %45, %46 in 0 : vector<64x128xf32>, vector<64x128xf32>, vector<64x128xf32>, vector<64x128xf32>, vector<64x128xf32>, vector<64x128xf32>, vector<64x128xf32>, vector<64x128xf32>, vector<64x128xf32> -> vector<576x128xf32>
    %cst_21 = arith.constant dense<0.000000e+00> : vector<64x128xf32>
    %48 = tpu.matmul %28, %47, %cst_21 {dimension_numbers = #tpu.dot_dimension_numbers<[1], [0], [0], [1], [0, 0, 1, 1], [], []>} : vector<64x576xf32>, vector<576x128xf32>, vector<64x128xf32> -> vector<64x128xf32>
    %c0_22 = arith.constant 0 : index
    %c0_23 = arith.constant 0 : index
    %49 = vector.load %arg10[%c0_22, %c0_23] : memref<1x128xf32, #tpu.memory_space<vmem>>, vector<1x128xf32>
    %50 = vector.broadcast %49 : vector<1x128xf32> to vector<64x128xf32>
    %51 = arith.addf %48, %50 : vector<64x128xf32>
    %cst_24 = arith.constant 0.000000e+00 : f32
    %52 = vector.broadcast %cst_24 : f32 to vector<64x128xf32>
    %53 = arith.maximumf %51, %52 : vector<64x128xf32>
    %c0_25 = arith.constant 0 : index
    %c0_26 = arith.constant 0 : index
    %54 = vector.load %arg11[%c0_25, %c0_26] : memref<128x16xf32, #tpu.memory_space<vmem>>, vector<128x16xf32>
    %cst_27 = arith.constant dense<0.000000e+00> : vector<64x16xf32>
    %55 = tpu.matmul %53, %54, %cst_27 {dimension_numbers = #tpu.dot_dimension_numbers<[1], [0], [0], [1], [0, 0, 1, 1], [], []>} : vector<64x128xf32>, vector<128x16xf32>, vector<64x16xf32> -> vector<64x16xf32>
    %c0_28 = arith.constant 0 : index
    %c0_29 = arith.constant 0 : index
    %56 = vector.load %arg12[%c0_28, %c0_29] : memref<1x16xf32, #tpu.memory_space<vmem>>, vector<1x16xf32>
    %57 = vector.broadcast %56 : vector<1x16xf32> to vector<64x16xf32>
    %58 = arith.addf %55, %57 : vector<64x16xf32>
    %cst_30 = arith.constant 0.000000e+00 : f32
    %59 = vector.broadcast %cst_30 : f32 to vector<64x16xf32>
    %60 = arith.maximumf %58, %59 : vector<64x16xf32>
    %c0_31 = arith.constant 0 : index
    %c0_32 = arith.constant 0 : index
    %61 = vector.load %arg13[%c0_31, %c0_32] : memref<16x1152xf32, #tpu.memory_space<vmem>>, vector<16x1152xf32>
    %cst_33 = arith.constant dense<0.000000e+00> : vector<64x1152xf32>
    %62 = tpu.matmul %60, %61, %cst_33 {dimension_numbers = #tpu.dot_dimension_numbers<[1], [0], [0], [1], [0, 0, 1, 1], [], []>} : vector<64x16xf32>, vector<16x1152xf32>, vector<64x1152xf32> -> vector<64x1152xf32>
    %63 = vector.extract_strided_slice %62 {offsets = [0, 0], sizes = [64, 128], strides = [1, 1]} : vector<64x1152xf32> to vector<64x128xf32>
    %64 = vector.extract_strided_slice %62 {offsets = [0, 128], sizes = [64, 128], strides = [1, 1]} : vector<64x1152xf32> to vector<64x128xf32>
    %65 = vector.extract_strided_slice %62 {offsets = [0, 256], sizes = [64, 128], strides = [1, 1]} : vector<64x1152xf32> to vector<64x128xf32>
    %66 = vector.extract_strided_slice %62 {offsets = [0, 384], sizes = [64, 128], strides = [1, 1]} : vector<64x1152xf32> to vector<64x128xf32>
    %67 = vector.extract_strided_slice %62 {offsets = [0, 512], sizes = [64, 128], strides = [1, 1]} : vector<64x1152xf32> to vector<64x128xf32>
    %68 = vector.extract_strided_slice %62 {offsets = [0, 640], sizes = [64, 128], strides = [1, 1]} : vector<64x1152xf32> to vector<64x128xf32>
    %69 = vector.extract_strided_slice %62 {offsets = [0, 768], sizes = [64, 128], strides = [1, 1]} : vector<64x1152xf32> to vector<64x128xf32>
    %70 = vector.extract_strided_slice %62 {offsets = [0, 896], sizes = [64, 128], strides = [1, 1]} : vector<64x1152xf32> to vector<64x128xf32>
    %71 = vector.extract_strided_slice %62 {offsets = [0, 1024], sizes = [64, 128], strides = [1, 1]} : vector<64x1152xf32> to vector<64x128xf32>
    %72 = tpu.concatenate %63, %64, %65, %66, %67, %68, %69, %70, %71 in 0 : vector<64x128xf32>, vector<64x128xf32>, vector<64x128xf32>, vector<64x128xf32>, vector<64x128xf32>, vector<64x128xf32>, vector<64x128xf32>, vector<64x128xf32>, vector<64x128xf32> -> vector<576x128xf32>
    %cst_34 = arith.constant dense<0.000000e+00> : vector<64x128xf32>
    %73 = tpu.matmul %28, %72, %cst_34 {dimension_numbers = #tpu.dot_dimension_numbers<[1], [0], [0], [1], [0, 0, 1, 1], [], []>} : vector<64x576xf32>, vector<576x128xf32>, vector<64x128xf32> -> vector<64x128xf32>
    %c0_35 = arith.constant 0 : index
    %c0_36 = arith.constant 0 : index
    %74 = vector.load %arg14[%c0_35, %c0_36] : memref<1x128xf32, #tpu.memory_space<vmem>>, vector<1x128xf32>
    %75 = vector.broadcast %74 : vector<1x128xf32> to vector<64x128xf32>
    %76 = arith.addf %73, %75 : vector<64x128xf32>
    %cst_37 = arith.constant 0.000000e+00 : f32
    %77 = vector.broadcast %cst_37 : f32 to vector<64x128xf32>
    %78 = arith.maximumf %76, %77 : vector<64x128xf32>
    %c0_38 = arith.constant 0 : index
    %c0_39 = arith.constant 0 : index
    %79 = vector.load %arg15[%c0_38, %c0_39] : memref<128x32xf32, #tpu.memory_space<vmem>>, vector<128x32xf32>
    %cst_40 = arith.constant dense<0.000000e+00> : vector<64x32xf32>
    %80 = tpu.matmul %78, %79, %cst_40 {dimension_numbers = #tpu.dot_dimension_numbers<[1], [0], [0], [1], [0, 0, 1, 1], [], []>} : vector<64x128xf32>, vector<128x32xf32>, vector<64x32xf32> -> vector<64x32xf32>
    %c0_41 = arith.constant 0 : index
    %c0_42 = arith.constant 0 : index
    %81 = vector.load %arg16[%c0_41, %c0_42] : memref<1x32xf32, #tpu.memory_space<vmem>>, vector<1x32xf32>
    %82 = vector.broadcast %81 : vector<1x32xf32> to vector<64x32xf32>
    %83 = arith.addf %80, %82 : vector<64x32xf32>
    %cst_43 = arith.constant 0.000000e+00 : f32
    %84 = vector.broadcast %cst_43 : f32 to vector<64x32xf32>
    %85 = arith.maximumf %83, %84 : vector<64x32xf32>
    %c0_44 = arith.constant 0 : index
    %c0_45 = arith.constant 0 : index
    %86 = vector.load %arg17[%c0_44, %c0_45] : memref<32x2304xf32, #tpu.memory_space<vmem>>, vector<32x2304xf32>
    %cst_46 = arith.constant dense<0.000000e+00> : vector<64x2304xf32>
    %87 = tpu.matmul %85, %86, %cst_46 {dimension_numbers = #tpu.dot_dimension_numbers<[1], [0], [0], [1], [0, 0, 1, 1], [], []>} : vector<64x32xf32>, vector<32x2304xf32>, vector<64x2304xf32> -> vector<64x2304xf32>
    %88 = vector.extract_strided_slice %87 {offsets = [0, 0], sizes = [64, 256], strides = [1, 1]} : vector<64x2304xf32> to vector<64x256xf32>
    %89 = vector.extract_strided_slice %87 {offsets = [0, 256], sizes = [64, 256], strides = [1, 1]} : vector<64x2304xf32> to vector<64x256xf32>
    %90 = vector.extract_strided_slice %87 {offsets = [0, 512], sizes = [64, 256], strides = [1, 1]} : vector<64x2304xf32> to vector<64x256xf32>
    %91 = vector.extract_strided_slice %87 {offsets = [0, 768], sizes = [64, 256], strides = [1, 1]} : vector<64x2304xf32> to vector<64x256xf32>
    %92 = vector.extract_strided_slice %87 {offsets = [0, 1024], sizes = [64, 256], strides = [1, 1]} : vector<64x2304xf32> to vector<64x256xf32>
    %93 = vector.extract_strided_slice %87 {offsets = [0, 1280], sizes = [64, 256], strides = [1, 1]} : vector<64x2304xf32> to vector<64x256xf32>
    %94 = vector.extract_strided_slice %87 {offsets = [0, 1536], sizes = [64, 256], strides = [1, 1]} : vector<64x2304xf32> to vector<64x256xf32>
    %95 = vector.extract_strided_slice %87 {offsets = [0, 1792], sizes = [64, 256], strides = [1, 1]} : vector<64x2304xf32> to vector<64x256xf32>
    %96 = vector.extract_strided_slice %87 {offsets = [0, 2048], sizes = [64, 256], strides = [1, 1]} : vector<64x2304xf32> to vector<64x256xf32>
    %97 = tpu.concatenate %88, %89, %90, %91, %92, %93, %94, %95, %96 in 0 : vector<64x256xf32>, vector<64x256xf32>, vector<64x256xf32>, vector<64x256xf32>, vector<64x256xf32>, vector<64x256xf32>, vector<64x256xf32>, vector<64x256xf32>, vector<64x256xf32> -> vector<576x256xf32>
    %cst_47 = arith.constant dense<0.000000e+00> : vector<64x256xf32>
    %98 = tpu.matmul %28, %97, %cst_47 {dimension_numbers = #tpu.dot_dimension_numbers<[1], [0], [0], [1], [0, 0, 1, 1], [], []>} : vector<64x576xf32>, vector<576x256xf32>, vector<64x256xf32> -> vector<64x256xf32>
    %c0_48 = arith.constant 0 : index
    %c0_49 = arith.constant 0 : index
    %99 = vector.load %arg18[%c0_48, %c0_49] : memref<1x256xf32, #tpu.memory_space<vmem>>, vector<1x256xf32>
    %100 = vector.broadcast %99 : vector<1x256xf32> to vector<64x256xf32>
    %101 = arith.addf %98, %100 : vector<64x256xf32>
    %cst_50 = arith.constant 0.000000e+00 : f32
    %102 = vector.broadcast %cst_50 : f32 to vector<64x256xf32>
    %103 = arith.maximumf %101, %102 : vector<64x256xf32>
    %c0_51 = arith.constant 0 : index
    %c0_52 = arith.constant 0 : index
    %104 = vector.load %arg6[%c0_51, %c0_52] : memref<64x1xf32, #tpu.memory_space<vmem>>, vector<64x1xf32>
    %105 = vector.broadcast %104 : vector<64x1xf32> to vector<64x128xf32>
    %106 = arith.mulf %53, %105 : vector<64x128xf32>
    %c0_53 = arith.constant 0 : index
    %c0_54 = arith.constant 0 : index
    %c0_55 = arith.constant 0 : index
    %107 = vector.load %arg19[%c0_53, %c0_54, %c0_55] : memref<1x64x512xf32, #tpu.memory_space<vmem>>, vector<1x64x128xf32>
    %108 = vector.shape_cast %107 : vector<1x64x128xf32> to vector<64x128xf32>
    %109 = vector.shape_cast %106 : vector<64x128xf32> to vector<1x64x128xf32>
    tpu.vector_store %arg19[%c0_53, %c0_54, %c0_55], %109 {strides = array<i32>} : memref<1x64x512xf32, #tpu.memory_space<vmem>>, vector<1x64x128xf32>,
    %110 = vector.broadcast %104 : vector<64x1xf32> to vector<64x128xf32>
    %111 = arith.mulf %78, %110 : vector<64x128xf32>
    %c0_56 = arith.constant 0 : index
    %c0_57 = arith.constant 0 : index
    %c128 = arith.constant 128 : index
    %112 = vector.load %arg19[%c0_56, %c0_57, %c128] : memref<1x64x512xf32, #tpu.memory_space<vmem>>, vector<1x64x128xf32>
    %113 = vector.shape_cast %112 : vector<1x64x128xf32> to vector<64x128xf32>
    %114 = vector.shape_cast %111 : vector<64x128xf32> to vector<1x64x128xf32>
    tpu.vector_store %arg19[%c0_56, %c0_57, %c128], %114 {strides = array<i32>} : memref<1x64x512xf32, #tpu.memory_space<vmem>>, vector<1x64x128xf32>,
    %115 = vector.broadcast %104 : vector<64x1xf32> to vector<64x256xf32>
    %116 = arith.mulf %103, %115 : vector<64x256xf32>
    %c0_58 = arith.constant 0 : index
    %c0_59 = arith.constant 0 : index
    %c256 = arith.constant 256 : index
    %117 = vector.load %arg19[%c0_58, %c0_59, %c256] : memref<1x64x512xf32, #tpu.memory_space<vmem>>, vector<1x64x256xf32>
    %118 = vector.shape_cast %117 : vector<1x64x256xf32> to vector<64x256xf32>
    %119 = vector.shape_cast %116 : vector<64x256xf32> to vector<1x64x256xf32>
    tpu.vector_store %arg19[%c0_58, %c0_59, %c256], %119 {strides = array<i32>} : memref<1x64x512xf32, #tpu.memory_space<vmem>>, vector<1x64x256xf32>,
    return
  }
  func.func @transform_0(%arg0: i32) -> (i32, i32, i32) {
    %c0_i32 = arith.constant 0 : i32
    %c0_i32_0 = arith.constant 0 : i32
    %c0_i32_1 = arith.constant 0 : i32
    return %arg0, %c0_i32, %c0_i32_0 : i32, i32, i32
  }
  func.func @transform_1(%arg0: i32) -> (i32, i32) {
    %c0_i32 = arith.constant 0 : i32
    %c0_i32_0 = arith.constant 0 : i32
    %c0_i32_1 = arith.constant 0 : i32
    return %c0_i32, %c0_i32_0 : i32, i32
  }
  func.func @transform_2(%arg0: i32) -> (i32, i32) {
    %c0_i32 = arith.constant 0 : i32
    %c0_i32_0 = arith.constant 0 : i32
    %c0_i32_1 = arith.constant 0 : i32
    return %c0_i32, %c0_i32_0 : i32, i32
  }
  func.func @transform_3(%arg0: i32) -> (i32, i32) {
    %c0_i32 = arith.constant 0 : i32
    %c0_i32_0 = arith.constant 0 : i32
    %c0_i32_1 = arith.constant 0 : i32
    return %c0_i32, %c0_i32_0 : i32, i32
  }
  func.func @transform_4(%arg0: i32) -> (i32, i32) {
    %c0_i32 = arith.constant 0 : i32
    %c0_i32_0 = arith.constant 0 : i32
    %c0_i32_1 = arith.constant 0 : i32
    return %c0_i32, %c0_i32_0 : i32, i32
  }
  func.func @transform_5(%arg0: i32) -> (i32, i32) {
    %c0_i32 = arith.constant 0 : i32
    %c0_i32_0 = arith.constant 0 : i32
    %c0_i32_1 = arith.constant 0 : i32
    return %c0_i32, %c0_i32_0 : i32, i32
  }
  func.func @transform_6(%arg0: i32) -> (i32, i32) {
    %c0_i32 = arith.constant 0 : i32
    %c0_i32_0 = arith.constant 0 : i32
    %c0_i32_1 = arith.constant 0 : i32
    return %c0_i32, %c0_i32_0 : i32, i32
  }
  func.func @transform_7(%arg0: i32) -> (i32, i32) {
    %c0_i32 = arith.constant 0 : i32
    %c0_i32_0 = arith.constant 0 : i32
    %c0_i32_1 = arith.constant 0 : i32
    return %c0_i32, %c0_i32_0 : i32, i32
  }
  func.func @transform_8(%arg0: i32) -> (i32, i32) {
    %c0_i32 = arith.constant 0 : i32
    %c0_i32_0 = arith.constant 0 : i32
    %c0_i32_1 = arith.constant 0 : i32
    return %c0_i32, %c0_i32_0 : i32, i32
  }
  func.func @transform_9(%arg0: i32) -> (i32, i32) {
    %c0_i32 = arith.constant 0 : i32
    %c0_i32_0 = arith.constant 0 : i32
    %c0_i32_1 = arith.constant 0 : i32
    return %c0_i32, %c0_i32_0 : i32, i32
  }
  func.func @transform_10(%arg0: i32) -> (i32, i32) {
    %c0_i32 = arith.constant 0 : i32
    %c0_i32_0 = arith.constant 0 : i32
    %c0_i32_1 = arith.constant 0 : i32
    return %c0_i32, %c0_i32_0 : i32, i32
  }
  func.func @transform_11(%arg0: i32) -> (i32, i32) {
    %c0_i32 = arith.constant 0 : i32
    %c0_i32_0 = arith.constant 0 : i32
    %c0_i32_1 = arith.constant 0 : i32
    return %c0_i32, %c0_i32_0 : i32, i32
  }
  func.func @transform_12(%arg0: i32) -> (i32, i32) {
    %c0_i32 = arith.constant 0 : i32
    %c0_i32_0 = arith.constant 0 : i32
    %c0_i32_1 = arith.constant 0 : i32
    return %c0_i32, %c0_i32_0 : i32, i32
  }
  func.func @transform_13(%arg0: i32) -> (i32, i32) {
    %c0_i32 = arith.constant 0 : i32
    %c0_i32_0 = arith.constant 0 : i32
    %c0_i32_1 = arith.constant 0 : i32
    return %c0_i32, %c0_i32_0 : i32, i32
  }
  func.func @transform_14(%arg0: i32) -> (i32, i32) {
    %c0_i32 = arith.constant 0 : i32
    %c0_i32_0 = arith.constant 0 : i32
    %c0_i32_1 = arith.constant 0 : i32
    return %c0_i32, %c0_i32_0 : i32, i32
  }
  func.func @transform_15(%arg0: i32) -> (i32, i32) {
    %c0_i32 = arith.constant 0 : i32
    %c0_i32_0 = arith.constant 0 : i32
    %c0_i32_1 = arith.constant 0 : i32
    return %c0_i32, %c0_i32_0 : i32, i32
  }
  func.func @transform_16(%arg0: i32) -> (i32, i32) {
    %c0_i32 = arith.constant 0 : i32
    %c0_i32_0 = arith.constant 0 : i32
    %c0_i32_1 = arith.constant 0 : i32
    return %c0_i32, %c0_i32_0 : i32, i32
  }
  func.func @transform_17(%arg0: i32) -> (i32, i32) {
    %c0_i32 = arith.constant 0 : i32
    %c0_i32_0 = arith.constant 0 : i32
    %c0_i32_1 = arith.constant 0 : i32
    return %c0_i32, %c0_i32_0 : i32, i32
  }
  func.func @transform_18(%arg0: i32) -> (i32, i32, i32) {
    %c0_i32 = arith.constant 0 : i32
    %c0_i32_0 = arith.constant 0 : i32
    %c0_i32_1 = arith.constant 0 : i32
    return %arg0, %c0_i32, %c0_i32_0 : i32, i32, i32
  }
}

module attributes {stable_mosaic.version = 11 : i64} {
  func.func @_cf_kernel(%arg0: memref<80x512xf32, #tpu.memory_space<vmem>>, %arg1: memref<80x512xf32, #tpu.memory_space<vmem>>, %arg2: memref<80x512xf32, #tpu.memory_space<vmem>>, %arg3: memref<80x512xf32, #tpu.memory_space<vmem>>, %arg4: memref<80x1xf32, #tpu.memory_space<vmem>>, %arg5: memref<80x1xf32, #tpu.memory_space<vmem>>, %arg6: memref<80x2xf32, #tpu.memory_space<vmem>>) attributes {dimension_semantics = [], scalar_prefetch = 0 : i64, scratch_operands = 0 : i64, tpu.core_type = #tpu.core_type<tc>} {
    %c0 = arith.constant 0 : index
    %c0_0 = arith.constant 0 : index
    %0 = vector.load %arg0[%c0, %c0_0] : memref<80x512xf32, #tpu.memory_space<vmem>>, vector<80x512xf32>
    %c0_1 = arith.constant 0 : index
    %c0_2 = arith.constant 0 : index
    %1 = vector.load %arg1[%c0_1, %c0_2] : memref<80x512xf32, #tpu.memory_space<vmem>>, vector<80x512xf32>
    %c0_3 = arith.constant 0 : index
    %c0_4 = arith.constant 0 : index
    %2 = vector.load %arg2[%c0_3, %c0_4] : memref<80x512xf32, #tpu.memory_space<vmem>>, vector<80x512xf32>
    %c0_5 = arith.constant 0 : index
    %c0_6 = arith.constant 0 : index
    %3 = vector.load %arg3[%c0_5, %c0_6] : memref<80x512xf32, #tpu.memory_space<vmem>>, vector<80x512xf32>
    %4 = arith.mulf %0, %2 : vector<80x512xf32>
    %5 = arith.mulf %1, %3 : vector<80x512xf32>
    %6 = arith.addf %4, %5 : vector<80x512xf32>
    %cst = arith.constant dense<0.000000e+00> : vector<80xf32>
    %7 = vector.multi_reduction <add>, %6, %cst [1] : vector<80x512xf32> to vector<80xf32>
    %8 = vector.shape_cast %7 : vector<80xf32> to vector<80x1xf32>
    %9 = arith.mulf %1, %2 : vector<80x512xf32>
    %10 = arith.mulf %0, %3 : vector<80x512xf32>
    %11 = arith.subf %9, %10 : vector<80x512xf32>
    %cst_7 = arith.constant dense<0.000000e+00> : vector<80xf32>
    %12 = vector.multi_reduction <add>, %11, %cst_7 [1] : vector<80x512xf32> to vector<80xf32>
    %13 = vector.shape_cast %12 : vector<80xf32> to vector<80x1xf32>
    %c0_8 = arith.constant 0 : index
    %c0_9 = arith.constant 0 : index
    %14 = vector.load %arg4[%c0_8, %c0_9] : memref<80x1xf32, #tpu.memory_space<vmem>>, vector<80x1xf32>
    %c0_10 = arith.constant 0 : index
    %c0_11 = arith.constant 0 : index
    %15 = vector.load %arg5[%c0_10, %c0_11] : memref<80x1xf32, #tpu.memory_space<vmem>>, vector<80x1xf32>
    %16 = arith.mulf %8, %14 : vector<80x1xf32>
    %17 = arith.mulf %13, %15 : vector<80x1xf32>
    %18 = arith.subf %16, %17 : vector<80x1xf32>
    %c0_12 = arith.constant 0 : index
    %c0_13 = arith.constant 0 : index
    %19 = vector.load %arg6[%c0_12, %c0_13] : memref<80x2xf32, #tpu.memory_space<vmem>>, vector<80x1xf32>
    tpu.vector_store %arg6[%c0_12, %c0_13], %18 {strides = array<i32>} : memref<80x2xf32, #tpu.memory_space<vmem>>, vector<80x1xf32>,
    %20 = arith.mulf %8, %15 : vector<80x1xf32>
    %21 = arith.mulf %13, %14 : vector<80x1xf32>
    %22 = arith.addf %20, %21 : vector<80x1xf32>
    %c0_14 = arith.constant 0 : index
    %c1 = arith.constant 1 : index
    %23 = vector.load %arg6[%c0_14, %c1] : memref<80x2xf32, #tpu.memory_space<vmem>>, vector<80x1xf32>
    tpu.vector_store %arg6[%c0_14, %c1], %22 {strides = array<i32>} : memref<80x2xf32, #tpu.memory_space<vmem>>, vector<80x1xf32>,
    return
  }
}

</mosaic_0001>

<llo_original>
// kernel: squeezecfnet_light_forward.2
$region0: #{squeezecfnet_light_forward.2}
  #allocation0 [shape = 'u32[]', space=smem, size = 0x4, offset = 0x4, fixed_abs, tag = 'smem constant byte address 0x4 - core index']
  #allocation1 [shape = 'u32[144,128]{1,0:T(1,128)}', space=vmem, size = 0x12000, scoped, tag = 'internal scratch']
  %s0 = inlined_call_operand.vmem [shape: f32[2,289,49], index: 0, kind: input, shape index: {}]
  %s1 = inlined_call_operand.vmem [shape: f32[49,96], index: 1, kind: input, shape index: {}]
  %s2 = inlined_call_operand.vmem [shape: f32[1,96], index: 2, kind: input, shape index: {}]
  %s3 = inlined_call_operand.vmem [shape: f32[576,289], index: 3, kind: input, shape index: {}]
  %s4 = inlined_call_operand.vmem [shape: f32[64,576], index: 4, kind: input, shape index: {}]
  %s5 = inlined_call_operand.vmem [shape: f32[64,1], index: 5, kind: input, shape index: {}]
  %s6 = inlined_call_operand.vmem [shape: f32[96,16], index: 6, kind: input, shape index: {}]
  %s7 = inlined_call_operand.vmem [shape: f32[1,16], index: 7, kind: input, shape index: {}]
  %s8 = inlined_call_operand.vmem [shape: f32[16,1152], index: 8, kind: input, shape index: {}]
  %s9 = inlined_call_operand.vmem [shape: f32[1,128], index: 9, kind: input, shape index: {}]
  %s10 = inlined_call_operand.vmem [shape: f32[128,16], index: 10, kind: input, shape index: {}]
  %s11 = inlined_call_operand.vmem [shape: f32[1,16], index: 11, kind: input, shape index: {}]
  %s12 = inlined_call_operand.vmem [shape: f32[16,1152], index: 12, kind: input, shape index: {}]
  %s13 = inlined_call_operand.vmem [shape: f32[1,128], index: 13, kind: input, shape index: {}]
  %s14 = inlined_call_operand.vmem [shape: f32[128,32], index: 14, kind: input, shape index: {}]
  %s15 = inlined_call_operand.vmem [shape: f32[1,32], index: 15, kind: input, shape index: {}]
  %s16 = inlined_call_operand.vmem [shape: f32[32,2304], index: 16, kind: input, shape index: {}]
  %s17 = inlined_call_operand.vmem [shape: f32[1,256], index: 17, kind: input, shape index: {}]
  %s18 = inlined_call_operand.vmem [shape: f32[2,64,512], index: 18, kind: output, shape index: {}]
  %s19 = sld [smem:[#allocation0]]
  $region105: #{squeezecfnet_light_forward.2} parent=0
    _
  %s21 = ssub.s32 1, %s19
  %s22 = scalar_select 0, %s21, %s19
  loop: start=0, step=1, limit=4
  $region2: #{squeezecfnet_light_forward.2} parent=0 // loop_pre_header
    _
  $region3: #{squeezecfnet_light_forward.2} parent=0 // loop_header
    %s24 = sphi 0, %s28
    %p25 = scmp.ge.s32.totalorder %s24, 4
    %s34 = sphi 0, %s36
    %s37 = sphi 0, %s34
    %s38 = sphi 0, %s37
    %s54 = sphi 0, %s38
    %s58 = sphi 0, %s58
    %s60 = sphi 0, %s58
    %s61 = sphi 0, %s60
    %s75 = sphi 0, %s61
    %s79 = sphi 0, %s79
    %s81 = sphi 0, %s79
    %s82 = sphi 0, %s81
    %s96 = sphi 0, %s82
    %s100 = sphi 0, %s100
    %s102 = sphi 0, %s100
    %s103 = sphi 0, %s102
    %s117 = sphi 0, %s103
    %s121 = sphi 0, %s121
    %s123 = sphi 0, %s121
    %s124 = sphi 0, %s123
    %s138 = sphi 0, %s124
    %s142 = sphi 0, %s142
    %s144 = sphi 0, %s142
    %s145 = sphi 0, %s144
    %s159 = sphi 0, %s145
    %s163 = sphi 0, %s163
    %s165 = sphi 0, %s163
    %s166 = sphi 0, %s165
    %s180 = sphi 0, %s166
    %s184 = sphi 0, %s184
    %s186 = sphi 0, %s184
    %s187 = sphi 0, %s186
    %s201 = sphi 0, %s187
    %s205 = sphi 0, %s205
    %s207 = sphi 0, %s205
    %s208 = sphi 0, %s207
    %s222 = sphi 0, %s208
    %s226 = sphi 0, %s226
    %s228 = sphi 0, %s226
    %s229 = sphi 0, %s228
    %s243 = sphi 0, %s229
    %s247 = sphi 0, %s247
    %s249 = sphi 0, %s247
    %s250 = sphi 0, %s249
    %s264 = sphi 0, %s250
    %s268 = sphi 0, %s268
    %s270 = sphi 0, %s268
    %s271 = sphi 0, %s270
    %s285 = sphi 0, %s271
    %s289 = sphi 0, %s289
    %s291 = sphi 0, %s289
    %s292 = sphi 0, %s291
    %s306 = sphi 0, %s292
    %s310 = sphi 0, %s310
    %s312 = sphi 0, %s310
    %s313 = sphi 0, %s312
    %s327 = sphi 0, %s313
    %s331 = sphi 0, %s331
    %s333 = sphi 0, %s331
    %s334 = sphi 0, %s333
    %s348 = sphi 0, %s334
    %s352 = sphi 0, %s352
    %s354 = sphi 0, %s352
    %s355 = sphi 0, %s354
    %s369 = sphi 0, %s355
    %s373 = sphi 0, %s373
    %s375 = sphi 0, %s373
    %s376 = sphi 0, %s375
    %s390 = sphi 0, %s376
    %s394 = sphi 0, %s394
    %s396 = sphi 0, %s394
    %s397 = sphi 0, %s396
    %s411 = sphi 0, %s397
    %s417 = sphi 0, %s419
    %s420 = sphi 0, %s417
    %s421 = sphi 0, %s420
    %s437 = sphi 0, %s421
  $region4: #{squeezecfnet_light_forward.2} parent=0 // loop_header_branch
    %27 = sbr.rel (%p25) target = $region8
  $region5: #{squeezecfnet_light_forward.2} parent=0 // loop_body
    %s29 = ssub.s32 %s24, 1
    %s30 = ssub.s32 %s24, 2
    %s31 = sadd.s32 %s24, 1
    %s32 = ssub.s32 %s24, %s31
    %p33 = scmp.eq.s32.totalorder %s32, 0
    %s35 = sadd.s32 %s34, 1
    %s36 = scalar_select %p33, %s34, %s35
    %p39 = pneg %p33
    %p40 = scmp.eq.s32.totalorder %s24, 1
    %p41 = por %p39, %p40
    %p42 = scmp.ne.s32.totalorder %s34, %s37
    %p43 = scmp.eq.s32.totalorder %s24, 0
    %p44 = por %p42, %p43
    %p45 = scmp.ne.s32.totalorder %s34, %s37
    %p46 = scmp.eq.s32.totalorder %s29, 1
    %p47 = por %p45, %p46
    %p48 = scmp.ne.s32.totalorder %s37, %s38
    %p49 = scmp.eq.s32.totalorder %s29, 0
    %p50 = por %p48, %p49
    %p51 = scmp.ne.s32.totalorder %s37, %s38
    %p52 = scmp.eq.s32.totalorder %s30, 1
    %p53 = por %p51, %p52
    %p55 = scmp.ne.s32.totalorder %s38, %s54
    %p56 = scmp.eq.s32.totalorder %s30, 0
    %p57 = por %p55, %p56
    %s59 = sadd.s32 %s58, 1
    %p62 = scmp.eq.s32.totalorder %s24, 1
    %p63 = scmp.ne.s32.totalorder %s58, %s60
    %p64 = scmp.eq.s32.totalorder %s24, 0
    %p65 = por %p63, %p64
    %p66 = scmp.ne.s32.totalorder %s58, %s60
    %p67 = scmp.eq.s32.totalorder %s29, 1
    %p68 = por %p66, %p67
    %p69 = scmp.ne.s32.totalorder %s60, %s61
    %p70 = scmp.eq.s32.totalorder %s29, 0
    %p71 = por %p69, %p70
    %p72 = scmp.ne.s32.totalorder %s60, %s61
    %p73 = scmp.eq.s32.totalorder %s30, 1
    %p74 = por %p72, %p73
    %p76 = scmp.ne.s32.totalorder %s61, %s75
    %p77 = scmp.eq.s32.totalorder %s30, 0
    %p78 = por %p76, %p77
    %s80 = sadd.s32 %s79, 1
    %p83 = scmp.eq.s32.totalorder %s24, 1
    %p84 = scmp.ne.s32.totalorder %s79, %s81
    %p85 = scmp.eq.s32.totalorder %s24, 0
    %p86 = por %p84, %p85
    %p87 = scmp.ne.s32.totalorder %s79, %s81
    %p88 = scmp.eq.s32.totalorder %s29, 1
    %p89 = por %p87, %p88
    %p90 = scmp.ne.s32.totalorder %s81, %s82
    %p91 = scmp.eq.s32.totalorder %s29, 0
    %p92 = por %p90, %p91
    %p93 = scmp.ne.s32.totalorder %s81, %s82
    %p94 = scmp.eq.s32.totalorder %s30, 1
    %p95 = por %p93, %p94
    %p97 = scmp.ne.s32.totalorder %s82, %s96
    %p98 = scmp.eq.s32.totalorder %s30, 0
    %p99 = por %p97, %p98
    %s101 = sadd.s32 %s100, 1
    %p104 = scmp.eq.s32.totalorder %s24, 1
    %p105 = scmp.ne.s32.totalorder %s100, %s102
    %p106 = scmp.eq.s32.totalorder %s24, 0
    %p107 = por %p105, %p106
    %p108 = scmp.ne.s32.totalorder %s100, %s102
    %p109 = scmp.eq.s32.totalorder %s29, 1
    %p110 = por %p108, %p109
    %p111 = scmp.ne.s32.totalorder %s102, %s103
    %p112 = scmp.eq.s32.totalorder %s29, 0
    %p113 = por %p111, %p112
    %p114 = scmp.ne.s32.totalorder %s102, %s103
    %p115 = scmp.eq.s32.totalorder %s30, 1
    %p116 = por %p114, %p115
    %p118 = scmp.ne.s32.totalorder %s103, %s117
    %p119 = scmp.eq.s32.totalorder %s30, 0
    %p120 = por %p118, %p119
    %s122 = sadd.s32 %s121, 1
    %p125 = scmp.eq.s32.totalorder %s24, 1
    %p126 = scmp.ne.s32.totalorder %s121, %s123
    %p127 = scmp.eq.s32.totalorder %s24, 0
    %p128 = por %p126, %p127
    %p129 = scmp.ne.s32.totalorder %s121, %s123
    %p130 = scmp.eq.s32.totalorder %s29, 1
    %p131 = por %p129, %p130
    %p132 = scmp.ne.s32.totalorder %s123, %s124
    %p133 = scmp.eq.s32.totalorder %s29, 0
    %p134 = por %p132, %p133
    %p135 = scmp.ne.s32.totalorder %s123, %s124
    %p136 = scmp.eq.s32.totalorder %s30, 1
    %p137 = por %p135, %p136
    %p139 = scmp.ne.s32.totalorder %s124, %s138
    %p140 = scmp.eq.s32.totalorder %s30, 0
    %p141 = por %p139, %p140
    %s143 = sadd.s32 %s142, 1
    %p146 = scmp.eq.s32.totalorder %s24, 1
    %p147 = scmp.ne.s32.totalorder %s142, %s144
    %p148 = scmp.eq.s32.totalorder %s24, 0
    %p149 = por %p147, %p148
    %p150 = scmp.ne.s32.totalorder %s142, %s144
    %p151 = scmp.eq.s32.totalorder %s29, 1
    %p152 = por %p150, %p151
    %p153 = scmp.ne.s32.totalorder %s144, %s145
    %p154 = scmp.eq.s32.totalorder %s29, 0
    %p155 = por %p153, %p154
    %p156 = scmp.ne.s32.totalorder %s144, %s145
    %p157 = scmp.eq.s32.totalorder %s30, 1
    %p158 = por %p156, %p157
    %p160 = scmp.ne.s32.totalorder %s145, %s159
    %p161 = scmp.eq.s32.totalorder %s30, 0
    %p162 = por %p160, %p161
    %s164 = sadd.s32 %s163, 1
    %p167 = scmp.eq.s32.totalorder %s24, 1
    %p168 = scmp.ne.s32.totalorder %s163, %s165
    %p169 = scmp.eq.s32.totalorder %s24, 0
    %p170 = por %p168, %p169
    %p171 = scmp.ne.s32.totalorder %s163, %s165
    %p172 = scmp.eq.s32.totalorder %s29, 1
    %p173 = por %p171, %p172
    %p174 = scmp.ne.s32.totalorder %s165, %s166
    %p175 = scmp.eq.s32.totalorder %s29, 0
    %p176 = por %p174, %p175
    %p177 = scmp.ne.s32.totalorder %s165, %s166
    %p178 = scmp.eq.s32.totalorder %s30, 1
    %p179 = por %p177, %p178
    %p181 = scmp.ne.s32.totalorder %s166, %s180
    %p182 = scmp.eq.s32.totalorder %s30, 0
    %p183 = por %p181, %p182
    %s185 = sadd.s32 %s184, 1
    %p188 = scmp.eq.s32.totalorder %s24, 1
    %p189 = scmp.ne.s32.totalorder %s184, %s186
    %p190 = scmp.eq.s32.totalorder %s24, 0
    %p191 = por %p189, %p190
    %p192 = scmp.ne.s32.totalorder %s184, %s186
    %p193 = scmp.eq.s32.totalorder %s29, 1
    %p194 = por %p192, %p193
    %p195 = scmp.ne.s32.totalorder %s186, %s187
    %p196 = scmp.eq.s32.totalorder %s29, 0
    %p197 = por %p195, %p196
    %p198 = scmp.ne.s32.totalorder %s186, %s187
    %p199 = scmp.eq.s32.totalorder %s30, 1
    %p200 = por %p198, %p199
    %p202 = scmp.ne.s32.totalorder %s187, %s201
    %p203 = scmp.eq.s32.totalorder %s30, 0
    %p204 = por %p202, %p203
    %s206 = sadd.s32 %s205, 1
    %p209 = scmp.eq.s32.totalorder %s24, 1
    %p210 = scmp.ne.s32.totalorder %s205, %s207
    %p211 = scmp.eq.s32.totalorder %s24, 0
    %p212 = por %p210, %p211
    %p213 = scmp.ne.s32.totalorder %s205, %s207
    %p214 = scmp.eq.s32.totalorder %s29, 1
    %p215 = por %p213, %p214
    %p216 = scmp.ne.s32.totalorder %s207, %s208
    %p217 = scmp.eq.s32.totalorder %s29, 0
    %p218 = por %p216, %p217
    %p219 = scmp.ne.s32.totalorder %s207, %s208
    %p220 = scmp.eq.s32.totalorder %s30, 1
    %p221 = por %p219, %p220
    %p223 = scmp.ne.s32.totalorder %s208, %s222
    %p224 = scmp.eq.s32.totalorder %s30, 0
    %p225 = por %p223, %p224
    %s227 = sadd.s32 %s226, 1
    %p230 = scmp.eq.s32.totalorder %s24, 1
    %p231 = scmp.ne.s32.totalorder %s226, %s228
    %p232 = scmp.eq.s32.totalorder %s24, 0
    %p233 = por %p231, %p232
    %p234 = scmp.ne.s32.totalorder %s226, %s228
    %p235 = scmp.eq.s32.totalorder %s29, 1
    %p236 = por %p234, %p235
    %p237 = scmp.ne.s32.totalorder %s228, %s229
    %p238 = scmp.eq.s32.totalorder %s29, 0
    %p239 = por %p237, %p238
    %p240 = scmp.ne.s32.totalorder %s228, %s229
    %p241 = scmp.eq.s32.totalorder %s30, 1
    %p242 = por %p240, %p241
    %p244 = scmp.ne.s32.totalorder %s229, %s243
    %p245 = scmp.eq.s32.totalorder %s30, 0
    %p246 = por %p244, %p245
    %s248 = sadd.s32 %s247, 1
    %p251 = scmp.eq.s32.totalorder %s24, 1
    %p252 = scmp.ne.s32.totalorder %s247, %s249
    %p253 = scmp.eq.s32.totalorder %s24, 0
    %p254 = por %p252, %p253
    %p255 = scmp.ne.s32.totalorder %s247, %s249
    %p256 = scmp.eq.s32.totalorder %s29, 1
    %p257 = por %p255, %p256
    %p258 = scmp.ne.s32.totalorder %s249, %s250
    %p259 = scmp.eq.s32.totalorder %s29, 0
    %p260 = por %p258, %p259
    %p261 = scmp.ne.s32.totalorder %s249, %s250
    %p262 = scmp.eq.s32.totalorder %s30, 1
    %p263 = por %p261, %p262
    %p265 = scmp.ne.s32.totalorder %s250, %s264
    %p266 = scmp.eq.s32.totalorder %s30, 0
    %p267 = por %p265, %p266
    %s269 = sadd.s32 %s268, 1
    %p272 = scmp.eq.s32.totalorder %s24, 1
    %p273 = scmp.ne.s32.totalorder %s268, %s270
    %p274 = scmp.eq.s32.totalorder %s24, 0
    %p275 = por %p273, %p274
    %p276 = scmp.ne.s32.totalorder %s268, %s270
    %p277 = scmp.eq.s32.totalorder %s29, 1
    %p278 = por %p276, %p277
    %p279 = scmp.ne.s32.totalorder %s270, %s271
    %p280 = scmp.eq.s32.totalorder %s29, 0
    %p281 = por %p279, %p280
    %p282 = scmp.ne.s32.totalorder %s270, %s271
    %p283 = scmp.eq.s32.totalorder %s30, 1
    %p284 = por %p282, %p283
    %p286 = scmp.ne.s32.totalorder %s271, %s285
    %p287 = scmp.eq.s32.totalorder %s30, 0
    %p288 = por %p286, %p287
    %s290 = sadd.s32 %s289, 1
    %p293 = scmp.eq.s32.totalorder %s24, 1
    %p294 = scmp.ne.s32.totalorder %s289, %s291
    %p295 = scmp.eq.s32.totalorder %s24, 0
    %p296 = por %p294, %p295
    %p297 = scmp.ne.s32.totalorder %s289, %s291
    %p298 = scmp.eq.s32.totalorder %s29, 1
    %p299 = por %p297, %p298
    %p300 = scmp.ne.s32.totalorder %s291, %s292
    %p301 = scmp.eq.s32.totalorder %s29, 0
    %p302 = por %p300, %p301
    %p303 = scmp.ne.s32.totalorder %s291, %s292
    %p304 = scmp.eq.s32.totalorder %s30, 1
    %p305 = por %p303, %p304
    %p307 = scmp.ne.s32.totalorder %s292, %s306
    %p308 = scmp.eq.s32.totalorder %s30, 0
    %p309 = por %p307, %p308
    %s311 = sadd.s32 %s310, 1
    %p314 = scmp.eq.s32.totalorder %s24, 1
    %p315 = scmp.ne.s32.totalorder %s310, %s312
    %p316 = scmp.eq.s32.totalorder %s24, 0
    %p317 = por %p315, %p316
    %p318 = scmp.ne.s32.totalorder %s310, %s312
    %p319 = scmp.eq.s32.totalorder %s29, 1
    %p320 = por %p318, %p319
    %p321 = scmp.ne.s32.totalorder %s312, %s313
    %p322 = scmp.eq.s32.totalorder %s29, 0
    %p323 = por %p321, %p322
    %p324 = scmp.ne.s32.totalorder %s312, %s313
    %p325 = scmp.eq.s32.totalorder %s30, 1
    %p326 = por %p324, %p325
    %p328 = scmp.ne.s32.totalorder %s313, %s327
    %p329 = scmp.eq.s32.totalorder %s30, 0
    %p330 = por %p328, %p329
    %s332 = sadd.s32 %s331, 1
    %p335 = scmp.eq.s32.totalorder %s24, 1
    %p336 = scmp.ne.s32.totalorder %s331, %s333
    %p337 = scmp.eq.s32.totalorder %s24, 0
    %p338 = por %p336, %p337
    %p339 = scmp.ne.s32.totalorder %s331, %s333
    %p340 = scmp.eq.s32.totalorder %s29, 1
    %p341 = por %p339, %p340
    %p342 = scmp.ne.s32.totalorder %s333, %s334
    %p343 = scmp.eq.s32.totalorder %s29, 0
    %p344 = por %p342, %p343
    %p345 = scmp.ne.s32.totalorder %s333, %s334
    %p346 = scmp.eq.s32.totalorder %s30, 1
    %p347 = por %p345, %p346
    %p349 = scmp.ne.s32.totalorder %s334, %s348
    %p350 = scmp.eq.s32.totalorder %s30, 0
    %p351 = por %p349, %p350
    %s353 = sadd.s32 %s352, 1
    %p356 = scmp.eq.s32.totalorder %s24, 1
    %p357 = scmp.ne.s32.totalorder %s352, %s354
    %p358 = scmp.eq.s32.totalorder %s24, 0
    %p359 = por %p357, %p358
    %p360 = scmp.ne.s32.totalorder %s352, %s354
    %p361 = scmp.eq.s32.totalorder %s29, 1
    %p362 = por %p360, %p361
    %p363 = scmp.ne.s32.totalorder %s354, %s355
    %p364 = scmp.eq.s32.totalorder %s29, 0
    %p365 = por %p363, %p364
    %p366 = scmp.ne.s32.totalorder %s354, %s355
    %p367 = scmp.eq.s32.totalorder %s30, 1
    %p368 = por %p366, %p367
    %p370 = scmp.ne.s32.totalorder %s355, %s369
    %p371 = scmp.eq.s32.totalorder %s30, 0
    %p372 = por %p370, %p371
    %s374 = sadd.s32 %s373, 1
    %p377 = scmp.eq.s32.totalorder %s24, 1
    %p378 = scmp.ne.s32.totalorder %s373, %s375
    %p379 = scmp.eq.s32.totalorder %s24, 0
    %p380 = por %p378, %p379
    %p381 = scmp.ne.s32.totalorder %s373, %s375
    %p382 = scmp.eq.s32.totalorder %s29, 1
    %p383 = por %p381, %p382
    %p384 = scmp.ne.s32.totalorder %s375, %s376
    %p385 = scmp.eq.s32.totalorder %s29, 0
    %p386 = por %p384, %p385
    %p387 = scmp.ne.s32.totalorder %s375, %s376
    %p388 = scmp.eq.s32.totalorder %s30, 1
    %p389 = por %p387, %p388
    %p391 = scmp.ne.s32.totalorder %s376, %s390
    %p392 = scmp.eq.s32.totalorder %s30, 0
    %p393 = por %p391, %p392
    %s395 = sadd.s32 %s394, 1
    %p398 = scmp.eq.s32.totalorder %s24, 1
    %p399 = scmp.ne.s32.totalorder %s394, %s396
    %p400 = scmp.eq.s32.totalorder %s24, 0
    %p401 = por %p399, %p400
    %p402 = scmp.ne.s32.totalorder %s394, %s396
    %p403 = scmp.eq.s32.totalorder %s29, 1
    %p404 = por %p402, %p403
    %p405 = scmp.ne.s32.totalorder %s396, %s397
    %p406 = scmp.eq.s32.totalorder %s29, 0
    %p407 = por %p405, %p406
    %p408 = scmp.ne.s32.totalorder %s396, %s397
    %p409 = scmp.eq.s32.totalorder %s30, 1
    %p410 = por %p408, %p409
    %p412 = scmp.ne.s32.totalorder %s397, %s411
    %p413 = scmp.eq.s32.totalorder %s30, 0
    %p414 = por %p412, %p413
    %s415 = ssub.s32 %s24, %s31
    %p416 = scmp.eq.s32.totalorder %s415, 0
    %s418 = sadd.s32 %s417, 1
    %s419 = scalar_select %p416, %s417, %s418
    %p422 = pneg %p416
    %p423 = scmp.eq.s32.totalorder %s24, 1
    %p424 = por %p422, %p423
    %p425 = scmp.ne.s32.totalorder %s417, %s420
    %p426 = scmp.eq.s32.totalorder %s24, 0
    %p427 = por %p425, %p426
    %p428 = scmp.ne.s32.totalorder %s417, %s420
    %p429 = scmp.eq.s32.totalorder %s29, 1
    %p430 = por %p428, %p429
    %p431 = scmp.ne.s32.totalorder %s420, %s421
    %p432 = scmp.eq.s32.totalorder %s29, 0
    %p433 = por %p431, %p432
    %p434 = scmp.ne.s32.totalorder %s420, %s421
    %p435 = scmp.eq.s32.totalorder %s30, 1
    %p436 = por %p434, %p435
    %p438 = scmp.ne.s32.totalorder %s421, %s437
    %p439 = scmp.eq.s32.totalorder %s30, 0
    %p440 = por %p438, %p439
    %p441 = scmp.le.s32.totalorder 1, %s24
    %p442 = scmp.lt.s32.totalorder %s24, 3
    %p443 = pnand %p441, %p442
    %p444 = pneg %p443
    // Predicated region
    $region9: #{squeezecfnet_light_forward.2} parent=5 // pred_check
      _
    $region10: #{squeezecfnet_light_forward.2} parent=5 // pred_check_branch
      %446 = sbr.rel (%p443) target = $region12
    $region11: #{squeezecfnet_light_forward.2} parent=5 // pred_region
      %s447 = ssub.s32 %s24, 1
      // Predicated region
      $region13: #{squeezecfnet_light_forward.2} parent=11 // pred_check
        %p448 = pneg %p71
      $region14: #{squeezecfnet_light_forward.2} parent=11 // pred_check_branch
        %450 = sbr.rel (%p448) target = $region16
      $region15: #{squeezecfnet_light_forward.2} parent=11 // pred_region
        _
      $region16: #{squeezecfnet_light_forward.2} parent=11 // pred_fallthru
        _
      // Predicated region
      $region17: #{squeezecfnet_light_forward.2} parent=11 // pred_check
        %p451 = pneg %p92
      $region18: #{squeezecfnet_light_forward.2} parent=11 // pred_check_branch
        %453 = sbr.rel (%p451) target = $region20
      $region19: #{squeezecfnet_light_forward.2} parent=11 // pred_region
        _
      $region20: #{squeezecfnet_light_forward.2} parent=11 // pred_fallthru
        _
      // Predicated region
      $region21: #{squeezecfnet_light_forward.2} parent=11 // pred_check
        %p454 = pneg %p113
      $region22: #{squeezecfnet_light_forward.2} parent=11 // pred_check_branch
        %456 = sbr.rel (%p454) target = $region24
      $region23: #{squeezecfnet_light_forward.2} parent=11 // pred_region
        _
      $region24: #{squeezecfnet_light_forward.2} parent=11 // pred_fallthru
        _
      // Predicated region
      $region25: #{squeezecfnet_light_forward.2} parent=11 // pred_check
        %p457 = pneg %p134
      $region26: #{squeezecfnet_light_forward.2} parent=11 // pred_check_branch
        %459 = sbr.rel (%p457) target = $region28
      $region27: #{squeezecfnet_light_forward.2} parent=11 // pred_region
        _
      $region28: #{squeezecfnet_light_forward.2} parent=11 // pred_fallthru
        _
      // Predicated region
      $region29: #{squeezecfnet_light_forward.2} parent=11 // pred_check
        %p460 = pneg %p155
      $region30: #{squeezecfnet_light_forward.2} parent=11 // pred_check_branch
        %462 = sbr.rel (%p460) target = $region32
      $region31: #{squeezecfnet_light_forward.2} parent=11 // pred_region
        _
      $region32: #{squeezecfnet_light_forward.2} parent=11 // pred_fallthru
        _
      // Predicated region
      $region33: #{squeezecfnet_light_forward.2} parent=11 // pred_check
        %p463 = pneg %p176
      $region34: #{squeezecfnet_light_forward.2} parent=11 // pred_check_branch
        %465 = sbr.rel (%p463) target = $region36
      $region35: #{squeezecfnet_light_forward.2} parent=11 // pred_region
        _
      $region36: #{squeezecfnet_light_forward.2} parent=11 // pred_fallthru
        _
      // Predicated region
      $region37: #{squeezecfnet_light_forward.2} parent=11 // pred_check
        %p466 = pneg %p197
      $region38: #{squeezecfnet_light_forward.2} parent=11 // pred_check_branch
        %468 = sbr.rel (%p466) target = $region40
      $region39: #{squeezecfnet_light_forward.2} parent=11 // pred_region
        _
      $region40: #{squeezecfnet_light_forward.2} parent=11 // pred_fallthru
        _
      // Predicated region
      $region41: #{squeezecfnet_light_forward.2} parent=11 // pred_check
        %p469 = pneg %p218
      $region42: #{squeezecfnet_light_forward.2} parent=11 // pred_check_branch
        %471 = sbr.rel (%p469) target = $region44
      $region43: #{squeezecfnet_light_forward.2} parent=11 // pred_region
        _
      $region44: #{squeezecfnet_light_forward.2} parent=11 // pred_fallthru
        _
      // Predicated region
      $region45: #{squeezecfnet_light_forward.2} parent=11 // pred_check
        %p472 = pneg %p239
      $region46: #{squeezecfnet_light_forward.2} parent=11 // pred_check_branch
        %474 = sbr.rel (%p472) target = $region48
      $region47: #{squeezecfnet_light_forward.2} parent=11 // pred_region
        _
      $region48: #{squeezecfnet_light_forward.2} parent=11 // pred_fallthru
        _
      // Predicated region
      $region49: #{squeezecfnet_light_forward.2} parent=11 // pred_check
        %p475 = pneg %p260
      $region50: #{squeezecfnet_light_forward.2} parent=11 // pred_check_branch
        %477 = sbr.rel (%p475) target = $region52
      $region51: #{squeezecfnet_light_forward.2} parent=11 // pred_region
        _
      $region52: #{squeezecfnet_light_forward.2} parent=11 // pred_fallthru
        _
      // Predicated region
      $region53: #{squeezecfnet_light_forward.2} parent=11 // pred_check
        %p478 = pneg %p281
      $region54: #{squeezecfnet_light_forward.2} parent=11 // pred_check_branch
        %480 = sbr.rel (%p478) target = $region56
      $region55: #{squeezecfnet_light_forward.2} parent=11 // pred_region
        _
      $region56: #{squeezecfnet_light_forward.2} parent=11 // pred_fallthru
        _
      // Predicated region
      $region57: #{squeezecfnet_light_forward.2} parent=11 // pred_check
        %p481 = pneg %p302
      $region58: #{squeezecfnet_light_forward.2} parent=11 // pred_check_branch
        %483 = sbr.rel (%p481) target = $region60
      $region59: #{squeezecfnet_light_forward.2} parent=11 // pred_region
        _
      $region60: #{squeezecfnet_light_forward.2} parent=11 // pred_fallthru
        _
      // Predicated region
      $region61: #{squeezecfnet_light_forward.2} parent=11 // pred_check
        %p484 = pneg %p323
      $region62: #{squeezecfnet_light_forward.2} parent=11 // pred_check_branch
        %486 = sbr.rel (%p484) target = $region64
      $region63: #{squeezecfnet_light_forward.2} parent=11 // pred_region
        _
      $region64: #{squeezecfnet_light_forward.2} parent=11 // pred_fallthru
        _
      // Predicated region
      $region65: #{squeezecfnet_light_forward.2} parent=11 // pred_check
        %p487 = pneg %p344
      $region66: #{squeezecfnet_light_forward.2} parent=11 // pred_check_branch
        %489 = sbr.rel (%p487) target = $region68
      $region67: #{squeezecfnet_light_forward.2} parent=11 // pred_region
        _
      $region68: #{squeezecfnet_light_forward.2} parent=11 // pred_fallthru
        _
      // Predicated region
      $region69: #{squeezecfnet_light_forward.2} parent=11 // pred_check
        %p490 = pneg %p365
      $region70: #{squeezecfnet_light_forward.2} parent=11 // pred_check_branch
        %492 = sbr.rel (%p490) target = $region72
      $region71: #{squeezecfnet_light_forward.2} parent=11 // pred_region
        _
      $region72: #{squeezecfnet_light_forward.2} parent=11 // pred_fallthru
        _
      // Predicated region
      $region73: #{squeezecfnet_light_forward.2} parent=11 // pred_check
        %p493 = pneg %p386
      $region74: #{squeezecfnet_light_forward.2} parent=11 // pred_check_branch
        %495 = sbr.rel (%p493) target = $region76
      $region75: #{squeezecfnet_light_forward.2} parent=11 // pred_region
        _
      $region76: #{squeezecfnet_light_forward.2} parent=11 // pred_fallthru
        _
      // Predicated region
      $region77: #{squeezecfnet_light_forward.2} parent=11 // pred_check
        %p496 = pneg %p407
      $region78: #{squeezecfnet_light_forward.2} parent=11 // pred_check_branch
        %498 = sbr.rel (%p496) target = $region80
      $region79: #{squeezecfnet_light_forward.2} parent=11 // pred_region
        _
      $region80: #{squeezecfnet_light_forward.2} parent=11 // pred_fallthru
        _
    $region12: #{squeezecfnet_light_forward.2} parent=5 // pred_fallthru
      _
    %p499 = scmp.lt.s32.totalorder %s24, 2
    // Predicated region
    $region81: #{squeezecfnet_light_forward.2} parent=5 // pred_check
      %p500 = pneg %p499
    $region82: #{squeezecfnet_light_forward.2} parent=5 // pred_check_branch
      %502 = sbr.rel (%p500) target = $region84
    $region83: #{squeezecfnet_light_forward.2} parent=5 // pred_region
      // Predicated region
      $region85: #{squeezecfnet_light_forward.2} parent=83 // pred_check
        %p503 = pneg %p44
      $region86: #{squeezecfnet_light_forward.2} parent=83 // pred_check_branch
        %505 = sbr.rel (%p503) target = $region88
      $region87: #{squeezecfnet_light_forward.2} parent=83 // pred_region
        %p506 = scmp.lt.s32.totalorder %s24, 1
        %s507 = scalar_select %p506, %s24, 1
        %s508 = smul.addr %s507, 37
        %s509 = smul.addr %s508, 8
        %s510 = scalar_lea.vmem %s0, %s509
      $region88: #{squeezecfnet_light_forward.2} parent=83 // pred_fallthru
        _
    $region84: #{squeezecfnet_light_forward.2} parent=5 // pred_fallthru
      _
    %p511 = scmp.le.s32.totalorder 1, %s24
    %p512 = scmp.lt.s32.totalorder %s24, 3
    %p513 = pnand %p511, %p512
    %p514 = pneg %p513
    // Predicated region
    $region89: #{squeezecfnet_light_forward.2} parent=5 // pred_check
      _
    $region90: #{squeezecfnet_light_forward.2} parent=5 // pred_check_branch
      %516 = sbr.rel (%p513) target = $region92
    $region91: #{squeezecfnet_light_forward.2} parent=5 // pred_region
      %s517 = ssub.s32 %s24, 1
      %p518 = scmp.lt.s32.totalorder %s29, 1
      %s519 = scalar_select %p518, %s29, 1
      %s520 = smul.addr %s519, 37
      %s521 = smul.addr %s520, 8
      %s522 = scalar_lea.vmem %s0, %s521
      %p523 = pneg %p50
      %p524 = pneg %p47
      %p525 = pneg %p71
      %p526 = pneg %p68
      %p527 = pneg %p92
      %p528 = pneg %p89
      %p529 = pneg %p113
      %p530 = pneg %p110
      %p531 = pneg %p134
      %p532 = pneg %p131
      %p533 = pneg %p155
      %p534 = pneg %p152
      %p535 = pneg %p176
      %p536 = pneg %p173
      %p537 = pneg %p197
      %p538 = pneg %p194
      %p539 = pneg %p218
      %p540 = pneg %p215
      %p541 = pneg %p239
      %p542 = pneg %p236
      %p543 = pneg %p260
      %p544 = pneg %p257
      %p545 = pneg %p281
      %p546 = pneg %p278
      %p547 = pneg %p302
      %p548 = pneg %p299
      %p549 = pneg %p323
      %p550 = pneg %p320
      %p551 = pneg %p344
      %p552 = pneg %p341
      %p553 = pneg %p365
      %p554 = pneg %p362
      %p555 = pneg %p386
      %p556 = pneg %p383
      %p557 = pneg %p407
      %p558 = pneg %p404
      %p559 = pneg %p433
      %p560 = pneg %p430
      %p561 = scmp.lt.s32.totalorder %s29, 1
      %s562 = scalar_select %p561, %s29, 1
      %s563 = smul.addr %s562, 32
      %s564 = smul.addr %s563, 8
      %s565 = scalar_lea.vmem %s18, %s564
      %p566 = scmp.lt.s32.totalorder %s29, 1
      %s567 = scalar_select %p566, %s29, 1
      %s568 = smul.addr %s567, 37
      %s569 = smul.addr %s568, 8
      %s570 = scalar_lea.vmem %s0, %s569
      %p571 = scmp.lt.s32.totalorder %s29, 1
      %s572 = scalar_select %p571, %s29, 1
      %s573 = smul.addr %s572, 32
      %s574 = smul.addr %s573, 8
      %s575 = scalar_lea.vmem %s18, %s574
      %v576 = vld [vmem:[%s570] sm:$0xff]
      %v577 = vld [vmem:[%s570 + $0x8] sm:$0xff]
      %v578 = vld [vmem:[%s570 + $0x10] sm:$0xff]
      %v579 = vld [vmem:[%s570 + $0x18] sm:$0xff]
      %v580 = vld [vmem:[%s570 + $0x20] sm:$0xff]
      %v581 = vld [vmem:[%s570 + $0x28] sm:$0xff]
      %v582 = vld [vmem:[%s570 + $0x30] sm:$0xff]
      %v583 = vld [vmem:[%s570 + $0x38] sm:$0xff]
      %v584 = vld [vmem:[%s570 + $0x40] sm:$0xff]
      %v585 = vld [vmem:[%s570 + $0x48] sm:$0xff]
      %v586 = vld [vmem:[%s570 + $0x50] sm:$0xff]
      %v587 = vld [vmem:[%s570 + $0x58] sm:$0xff]
      %v588 = vld [vmem:[%s570 + $0x60] sm:$0xff]
      %v589 = vld [vmem:[%s570 + $0x68] sm:$0xff]
      %v590 = vld [vmem:[%s570 + $0x70] sm:$0xff]
      %v591 = vld [vmem:[%s570 + $0x78] sm:$0xff]
      %v592 = vld [vmem:[%s570 + $0x80] sm:$0xff]
      %v593 = vld [vmem:[%s570 + $0x88] sm:$0xff]
      %v594 = vld [vmem:[%s570 + $0x90] sm:$0xff]
      %v595 = vld [vmem:[%s570 + $0x98] sm:$0xff]
      %v596 = vld [vmem:[%s570 + $0xa0] sm:$0xff]
      %v597 = vld [vmem:[%s570 + $0xa8] sm:$0xff]
      %v598 = vld [vmem:[%s570 + $0xb0] sm:$0xff]
      %v599 = vld [vmem:[%s570 + $0xb8] sm:$0xff]
      %v600 = vld [vmem:[%s570 + $0xc0] sm:$0xff]
      %v601 = vld [vmem:[%s570 + $0xc8] sm:$0xff]
      %v602 = vld [vmem:[%s570 + $0xd0] sm:$0xff]
      %v603 = vld [vmem:[%s570 + $0xd8] sm:$0xff]
      %v604 = vld [vmem:[%s570 + $0xe0] sm:$0xff]
      %v605 = vld [vmem:[%s570 + $0xe8] sm:$0xff]
      %v606 = vld [vmem:[%s570 + $0xf0] sm:$0xff]
      %v607 = vld [vmem:[%s570 + $0xf8] sm:$0xff]
      %v608 = vld [vmem:[%s570 + $0x100] sm:$0xff]
      %v609 = vld [vmem:[%s570 + $0x108] sm:$0xff]
      %v610 = vld [vmem:[%s570 + $0x110] sm:$0xff]
      %v611 = vld [vmem:[%s570 + $0x118] sm:$0xff]
      %v612 = vld [vmem:[%s570 + $0x120] sm:$0x1]
      %v613 = vld [vmem:[%s1] sm:$0xff]
      %v614 = vld [vmem:[%s1 + $0x8] sm:$0xff]
      %v615 = vld [vmem:[%s1 + $0x10] sm:$0xff]
      %v616 = vld [vmem:[%s1 + $0x18] sm:$0xff]
      %v617 = vld [vmem:[%s1 + $0x20] sm:$0xff]
      %v618 = vld [vmem:[%s1 + $0x28] sm:$0xff]
      %v619 = vld [vmem:[%s1 + $0x30] sm:$0x1]
      %v620 = vld [vmem:[%s2] sm:$0x1]
      %v622 = vlaneseq
      %v623 = vshrl.u32 %v622, 7
      %v624 = vsub.s32 0, %v623
      %v625 = vrot.slane %v620, %v624
      %vm627 = vcmask 400384
      %v629 = vsel %vm627, %v576, 0
      %v632 = vsel %vm627, %v577, 0
      %v635 = vsel %vm627, %v578, 0
      %v638 = vsel %vm627, %v579, 0
      %v641 = vsel %vm627, %v580, 0
      %v644 = vsel %vm627, %v581, 0
      %v647 = vsel %vm627, %v582, 0
      %v650 = vsel %vm627, %v583, 0
      %v653 = vsel %vm627, %v584, 0
      %v656 = vsel %vm627, %v585, 0
      %v659 = vsel %vm627, %v586, 0
      %v662 = vsel %vm627, %v587, 0
      %v665 = vsel %vm627, %v588, 0
      %v668 = vsel %vm627, %v589, 0
      %v671 = vsel %vm627, %v590, 0
      %v674 = vsel %vm627, %v591, 0
      %v677 = vsel %vm627, %v592, 0
      %v680 = vsel %vm627, %v593, 0
      %v683 = vsel %vm627, %v594, 0
      %v686 = vsel %vm627, %v595, 0
      %v689 = vsel %vm627, %v596, 0
      %v692 = vsel %vm627, %v597, 0
      %v695 = vsel %vm627, %v598, 0
      %v698 = vsel %vm627, %v599, 0
      %v701 = vsel %vm627, %v600, 0
      %v704 = vsel %vm627, %v601, 0
      %v707 = vsel %vm627, %v602, 0
      %v710 = vsel %vm627, %v603, 0
      %v713 = vsel %vm627, %v604, 0
      %v716 = vsel %vm627, %v605, 0
      %v719 = vsel %vm627, %v606, 0
      %v722 = vsel %vm627, %v607, 0
      %v725 = vsel %vm627, %v608, 0
      %v728 = vsel %vm627, %v609, 0
      %v731 = vsel %vm627, %v610, 0
      %v734 = vsel %vm627, %v611, 0
      %v737 = vsel %vm627, %v612, 0
      %vm739 = vcmask 1040384
      %v741 = vsel %vm739, %v619, 0
      %743 = vmatprep.subr.mxu0 0.0
      %744 = vmatpush1.msra.mxu0 0.0
      %745 = vmatprep.subr.mxu0 0.0
      %746 = vmatpush1.msra.mxu0 0.0
      %747 = vmatprep.subr.mxu0 0.0
      %748 = vmatpush1.msra.mxu0 0.0
      %749 = vmatprep.subr.mxu0 0.0
      %750 = vmatpush1.msra.mxu0 0.0
      %751 = vmatprep.subr.mxu0 0.0
      %752 = vmatpush1.msra.mxu0 0.0
      %753 = vmatprep.subr.mxu0 0.0
      %754 = vmatpush1.msra.mxu0 0.0
      %755 = vmatprep.subr.mxu0 0.0
      %756 = vmatpush1.msra.mxu0 0.0
      %757 = vmatprep.subr.mxu0 0.0
      %758 = vmatpush1.msra.mxu0 0.0
      %759 = vmatprep.subr.mxu0 0.0
      %760 = vmatpush1.msra.mxu0 0.0
      %761 = vmatprep.subr.mxu0 0.0
      %762 = vmatpush1.msra.mxu0 %v741
      %763 = vmatprep.subr.mxu0 0.0
      %764 = vmatpush1.msra.mxu0 %v618
      %765 = vmatprep.subr.mxu0 0.0
      %766 = vmatpush1.msra.mxu0 %v617
      %767 = vmatprep.subr.mxu0 0.0
      %768 = vmatpush1.msra.mxu0 %v616
      %769 = vmatprep.subr.mxu0 0.0
      %770 = vmatpush1.msra.mxu0 %v615
      %771 = vmatprep.subr.mxu0 0.0
      %772 = vmatpush1.msra.mxu0 %v614
      %773 = vmatprep.subr.mxu0 0.0
      %774 = vmatpush1.msra.mxu0 %v613
      %775 = vmatprep.subr.mxu0 0.0
      %776 = vmatpush2.msra.mxu0 0.0
      %777 = vmatprep.subr.mxu0 0.0
      %778 = vmatpush2.msra.mxu0 0.0
      %779 = vmatprep.subr.mxu0 0.0
      %780 = vmatpush2.msra.mxu0 0.0
      %781 = vmatprep.subr.mxu0 0.0
      %782 = vmatpush2.msra.mxu0 0.0
      %783 = vmatprep.subr.mxu0 0.0
      %784 = vmatpush2.msra.mxu0 0.0
      %785 = vmatprep.subr.mxu0 0.0
      %786 = vmatpush2.msra.mxu0 0.0
      %787 = vmatprep.subr.mxu0 0.0
      %788 = vmatpush2.msra.mxu0 0.0
      %789 = vmatprep.subr.mxu0 0.0
      %790 = vmatpush2.msra.mxu0 0.0
      %791 = vmatprep.subr.mxu0 0.0
      %792 = vmatpush2.msra.mxu0 0.0
      %793 = vmatprep.subr.mxu0 0.0
      %794 = vmatpush2.msra.mxu0 0.0
      %795 = vmatprep.subr.mxu0 0.0
      %796 = vmatpush2.msra.mxu0 0.0
      %797 = vmatprep.subr.mxu0 0.0
      %798 = vmatpush2.msra.mxu0 0.0
      %799 = vmatprep.subr.mxu0 0.0
      %800 = vmatpush2.msra.mxu0 0.0
      %801 = vmatprep.subr.mxu0 0.0
      %802 = vmatpush2.msra.mxu0 0.0
      %803 = vmatprep.subr.mxu0 0.0
      %804 = vmatpush2.msra.mxu0 0.0
      %805 = vmatprep.subr.mxu0 0.0
      %806 = vmatpush2.msra.mxu0 0.0
      %807 = vmatprep.mubr.f32.mxu0 0.0
      %808 = vmatmul.mubr.f32.gmra.mxu0 %v629
      %v809 = vpop.f32.mrf.mxu0
      %v810 = vadd.f32 %v625, %v809
      %v811 = vpop.f32.mrf.mxu0
      %812 = vmatprep.mubr.f32.mxu0 0.0
      %813 = vmatmul.mubr.f32.gmra.mxu0 %v632
      %v814 = vpop.f32.mrf.mxu0
      %v815 = vadd.f32 %v625, %v814
      %v816 = vpop.f32.mrf.mxu0
      %817 = vmatprep.mubr.f32.mxu0 0.0
      %818 = vmatmul.mubr.f32.gmra.mxu0 %v635
      %v819 = vpop.f32.mrf.mxu0
      %v820 = vadd.f32 %v625, %v819
      %v821 = vpop.f32.mrf.mxu0
      %822 = vmatprep.mubr.f32.mxu0 0.0
      %823 = vmatmul.mubr.f32.gmra.mxu0 %v638
      %v824 = vpop.f32.mrf.mxu0
      %v825 = vadd.f32 %v625, %v824
      %v826 = vpop.f32.mrf.mxu0
      %827 = vmatprep.mubr.f32.mxu0 0.0
      %828 = vmatmul.mubr.f32.gmra.mxu0 %v641
      %v829 = vpop.f32.mrf.mxu0
      %v830 = vadd.f32 %v625, %v829
      %v831 = vpop.f32.mrf.mxu0
      %832 = vmatprep.mubr.f32.mxu0 0.0
      %833 = vmatmul.mubr.f32.gmra.mxu0 %v644
      %v834 = vpop.f32.mrf.mxu0
      %v835 = vadd.f32 %v625, %v834
      %v836 = vpop.f32.mrf.mxu0
      %837 = vmatprep.mubr.f32.mxu0 0.0
      %838 = vmatmul.mubr.f32.gmra.mxu0 %v647
      %v839 = vpop.f32.mrf.mxu0
      %v840 = vadd.f32 %v625, %v839
      %v841 = vpop.f32.mrf.mxu0
      %842 = vmatprep.mubr.f32.mxu0 0.0
      %843 = vmatmul.mubr.f32.gmra.mxu0 %v650
      %v844 = vpop.f32.mrf.mxu0
      %v845 = vadd.f32 %v625, %v844
      %v846 = vpop.f32.mrf.mxu0
      %847 = vmatprep.mubr.f32.mxu0 0.0
      %848 = vmatmul.mubr.f32.gmra.mxu0 %v653
      %v849 = vpop.f32.mrf.mxu0
      %v850 = vadd.f32 %v625, %v849
      %v851 = vpop.f32.mrf.mxu0
      %852 = vmatprep.mubr.f32.mxu0 0.0
      %853 = vmatmul.mubr.f32.gmra.mxu0 %v656
      %v854 = vpop.f32.mrf.mxu0
      %v855 = vadd.f32 %v625, %v854
      %v856 = vpop.f32.mrf.mxu0
      %857 = vmatprep.mubr.f32.mxu0 0.0
      %858 = vmatmul.mubr.f32.gmra.mxu0 %v659
      %v859 = vpop.f32.mrf.mxu0
      %v860 = vadd.f32 %v625, %v859
      %v861 = vpop.f32.mrf.mxu0
      %862 = vmatprep.mubr.f32.mxu0 0.0
      %863 = vmatmul.mubr.f32.gmra.mxu0 %v662
      %v864 = vpop.f32.mrf.mxu0
      %v865 = vadd.f32 %v625, %v864
      %v866 = vpop.f32.mrf.mxu0
      %867 = vmatprep.mubr.f32.mxu0 0.0
      %868 = vmatmul.mubr.f32.gmra.mxu0 %v665
      %v869 = vpop.f32.mrf.mxu0
      %v870 = vadd.f32 %v625, %v869
      %v871 = vpop.f32.mrf.mxu0
      %872 = vmatprep.mubr.f32.mxu0 0.0
      %873 = vmatmul.mubr.f32.gmra.mxu0 %v668
      %v874 = vpop.f32.mrf.mxu0
      %v875 = vadd.f32 %v625, %v874
      %v876 = vpop.f32.mrf.mxu0
      %877 = vmatprep.mubr.f32.mxu0 0.0
      %878 = vmatmul.mubr.f32.gmra.mxu0 %v671
      %v879 = vpop.f32.mrf.mxu0
      %v880 = vadd.f32 %v625, %v879
      %v881 = vpop.f32.mrf.mxu0
      %882 = vmatprep.mubr.f32.mxu0 0.0
      %883 = vmatmul.mubr.f32.gmra.mxu0 %v674
      %v884 = vpop.f32.mrf.mxu0
      %v885 = vadd.f32 %v625, %v884
      %v886 = vpop.f32.mrf.mxu0
      %887 = vmatprep.mubr.f32.mxu0 0.0
      %888 = vmatmul.mubr.f32.gmra.mxu0 %v677
      %v889 = vpop.f32.mrf.mxu0
      %v890 = vadd.f32 %v625, %v889
      %v891 = vpop.f32.mrf.mxu0
      %892 = vmatprep.mubr.f32.mxu0 0.0
      %893 = vmatmul.mubr.f32.gmra.mxu0 %v680
      %v894 = vpop.f32.mrf.mxu0
      %v895 = vadd.f32 %v625, %v894
      %v896 = vpop.f32.mrf.mxu0
      %897 = vmatprep.mubr.f32.mxu0 0.0
      %898 = vmatmul.mubr.f32.gmra.mxu0 %v683
      %v899 = vpop.f32.mrf.mxu0
      %v900 = vadd.f32 %v625, %v899
      %v901 = vpop.f32.mrf.mxu0
      %902 = vmatprep.mubr.f32.mxu0 0.0
      %903 = vmatmul.mubr.f32.gmra.mxu0 %v686
      %v904 = vpop.f32.mrf.mxu0
      %v905 = vadd.f32 %v625, %v904
      %v906 = vpop.f32.mrf.mxu0
      %907 = vmatprep.mubr.f32.mxu0 0.0
      %908 = vmatmul.mubr.f32.gmra.mxu0 %v689
      %v909 = vpop.f32.mrf.mxu0
      %v910 = vadd.f32 %v625, %v909
      %v911 = vpop.f32.mrf.mxu0
      %912 = vmatprep.mubr.f32.mxu0 0.0
      %913 = vmatmul.mubr.f32.gmra.mxu0 %v692
      %v914 = vpop.f32.mrf.mxu0
      %v915 = vadd.f32 %v625, %v914
      %v916 = vpop.f32.mrf.mxu0
      %917 = vmatprep.mubr.f32.mxu0 0.0
      %918 = vmatmul.mubr.f32.gmra.mxu0 %v695
      %v919 = vpop.f32.mrf.mxu0
      %v920 = vadd.f32 %v625, %v919
      %v921 = vpop.f32.mrf.mxu0
      %922 = vmatprep.mubr.f32.mxu0 0.0
      %923 = vmatmul.mubr.f32.gmra.mxu0 %v698
      %v924 = vpop.f32.mrf.mxu0
      %v925 = vadd.f32 %v625, %v924
      %v926 = vpop.f32.mrf.mxu0
      %927 = vmatprep.mubr.f32.mxu0 0.0
      %928 = vmatmul.mubr.f32.gmra.mxu0 %v701
      %v929 = vpop.f32.mrf.mxu0
      %v930 = vadd.f32 %v625, %v929
      %v931 = vpop.f32.mrf.mxu0
      %932 = vmatprep.mubr.f32.mxu0 0.0
      %933 = vmatmul.mubr.f32.gmra.mxu0 %v704
      %v934 = vpop.f32.mrf.mxu0
      %v935 = vadd.f32 %v625, %v934
      %v936 = vpop.f32.mrf.mxu0
      %937 = vmatprep.mubr.f32.mxu0 0.0
      %938 = vmatmul.mubr.f32.gmra.mxu0 %v707
      %v939 = vpop.f32.mrf.mxu0
      %v940 = vadd.f32 %v625, %v939
      %v941 = vpop.f32.mrf.mxu0
      %942 = vmatprep.mubr.f32.mxu0 0.0
      %943 = vmatmul.mubr.f32.gmra.mxu0 %v710
      %v944 = vpop.f32.mrf.mxu0
      %v945 = vadd.f32 %v625, %v944
      %v946 = vpop.f32.mrf.mxu0
      %947 = vmatprep.mubr.f32.mxu0 0.0
      %948 = vmatmul.mubr.f32.gmra.mxu0 %v713
      %v949 = vpop.f32.mrf.mxu0
      %v950 = vadd.f32 %v625, %v949
      %v951 = vpop.f32.mrf.mxu0
      %952 = vmatprep.mubr.f32.mxu0 0.0
      %953 = vmatmul.mubr.f32.gmra.mxu0 %v716
      %v954 = vpop.f32.mrf.mxu0
      %v955 = vadd.f32 %v625, %v954
      %v956 = vpop.f32.mrf.mxu0
      %957 = vmatprep.mubr.f32.mxu0 0.0
      %958 = vmatmul.mubr.f32.gmra.mxu0 %v719
      %v959 = vpop.f32.mrf.mxu0
      %v960 = vadd.f32 %v625, %v959
      %v961 = vpop.f32.mrf.mxu0
      %962 = vmatprep.mubr.f32.mxu0 0.0
      %963 = vmatmul.mubr.f32.gmra.mxu0 %v722
      %v964 = vpop.f32.mrf.mxu0
      %v965 = vadd.f32 %v625, %v964
      %v966 = vpop.f32.mrf.mxu0
      %967 = vmatprep.mubr.f32.mxu0 0.0
      %968 = vmatmul.mubr.f32.gmra.mxu0 %v725
      %v969 = vpop.f32.mrf.mxu0
      %v970 = vadd.f32 %v625, %v969
      %v971 = vpop.f32.mrf.mxu0
      %972 = vmatprep.mubr.f32.mxu0 0.0
      %973 = vmatmul.mubr.f32.gmra.mxu0 %v728
      %v974 = vpop.f32.mrf.mxu0
      %v975 = vadd.f32 %v625, %v974
      %v976 = vpop.f32.mrf.mxu0
      %977 = vmatprep.mubr.f32.mxu0 0.0
      %978 = vmatmul.mubr.f32.gmra.mxu0 %v731
      %v979 = vpop.f32.mrf.mxu0
      %v980 = vadd.f32 %v625, %v979
      %v981 = vpop.f32.mrf.mxu0
      %982 = vmatprep.mubr.f32.mxu0 0.0
      %983 = vmatmul.mubr.f32.gmra.mxu0 %v734
      %v984 = vpop.f32.mrf.mxu0
      %v985 = vadd.f32 %v625, %v984
      %v986 = vpop.f32.mrf.mxu0
      %987 = vmatprep.mubr.f32.mxu0 0.0
      %988 = vmatmul.mubr.f32.gmra.mxu0 %v737
      %v989 = vpop.f32.mrf.mxu0
      %v990 = vadd.f32 %v625, %v989
      %v991 = vpop.f32.mrf.mxu0
      %992 = vdwg.mxu0
      %v993 = vmax.f32 %v810, 0.0
      %v994 = vmax.f32 %v815, 0.0
      %v995 = vmax.f32 %v820, 0.0
      %v996 = vmax.f32 %v825, 0.0
      %v997 = vmax.f32 %v830, 0.0
      %v998 = vmax.f32 %v835, 0.0
      %v999 = vmax.f32 %v840, 0.0
      %v1000 = vmax.f32 %v845, 0.0
      %v1001 = vmax.f32 %v850, 0.0
      %v1002 = vmax.f32 %v855, 0.0
      %v1003 = vmax.f32 %v860, 0.0
      %v1004 = vmax.f32 %v865, 0.0
      %v1005 = vmax.f32 %v870, 0.0
      %v1006 = vmax.f32 %v875, 0.0
      %v1007 = vmax.f32 %v880, 0.0
      %v1008 = vmax.f32 %v885, 0.0
      %v1009 = vmax.f32 %v890, 0.0
      %v1010 = vmax.f32 %v895, 0.0
      %v1011 = vmax.f32 %v900, 0.0
      %v1012 = vmax.f32 %v905, 0.0
      %v1013 = vmax.f32 %v910, 0.0
      %v1014 = vmax.f32 %v915, 0.0
      %v1015 = vmax.f32 %v920, 0.0
      %v1016 = vmax.f32 %v925, 0.0
      %v1017 = vmax.f32 %v930, 0.0
      %v1018 = vmax.f32 %v935, 0.0
      %v1019 = vmax.f32 %v940, 0.0
      %v1020 = vmax.f32 %v945, 0.0
      %v1021 = vmax.f32 %v950, 0.0
      %v1022 = vmax.f32 %v955, 0.0
      %v1023 = vmax.f32 %v960, 0.0
      %v1024 = vmax.f32 %v965, 0.0
      %v1025 = vmax.f32 %v970, 0.0
      %v1026 = vmax.f32 %v975, 0.0
      %v1027 = vmax.f32 %v980, 0.0
      %v1028 = vmax.f32 %v985, 0.0
      %v1029 = vmax.f32 %v990, 0.0
      %v1030 = vld [vmem:[%s3] sm:$0xff]
      %v1031 = vld [vmem:[%s3 + $0x8] sm:$0xff]
      %v1032 = vld [vmem:[%s3 + $0x10] sm:$0xff]
      %v1033 = vld [vmem:[%s3 + $0x18] sm:$0xff]
      %v1034 = vld [vmem:[%s3 + $0x20] sm:$0xff]
      %v1035 = vld [vmem:[%s3 + $0x28] sm:$0xff]
      %v1036 = vld [vmem:[%s3 + $0x30] sm:$0xff]
      %v1037 = vld [vmem:[%s3 + $0x38] sm:$0xff]
      %v1038 = vld [vmem:[%s3 + $0x40] sm:$0xff]
      %v1039 = vld [vmem:[%s3 + $0x48] sm:$0xff]
      %v1040 = vld [vmem:[%s3 + $0x50] sm:$0xff]
      %v1041 = vld [vmem:[%s3 + $0x58] sm:$0xff]
      %v1042 = vld [vmem:[%s3 + $0x60] sm:$0xff]
      %v1043 = vld [vmem:[%s3 + $0x68] sm:$0xff]
      %v1044 = vld [vmem:[%s3 + $0x70] sm:$0xff]
      %v1045 = vld [vmem:[%s3 + $0x78] sm:$0xff]
      %v1046 = vld [vmem:[%s3 + $0x80] sm:$0xff]
      %v1047 = vld [vmem:[%s3 + $0x88] sm:$0xff]
      %v1048 = vld [vmem:[%s3 + $0x90] sm:$0xff]
      %v1049 = vld [vmem:[%s3 + $0x98] sm:$0xff]
      %v1050 = vld [vmem:[%s3 + $0xa0] sm:$0xff]
      %v1051 = vld [vmem:[%s3 + $0xa8] sm:$0xff]
      %v1052 = vld [vmem:[%s3 + $0xb0] sm:$0xff]
      %v1053 = vld [vmem:[%s3 + $0xb8] sm:$0xff]
      %v1054 = vld [vmem:[%s3 + $0xc0] sm:$0xff]
      %v1055 = vld [vmem:[%s3 + $0xc8] sm:$0xff]
      %v1056 = vld [vmem:[%s3 + $0xd0] sm:$0xff]
      %v1057 = vld [vmem:[%s3 + $0xd8] sm:$0xff]
      %v1058 = vld [vmem:[%s3 + $0xe0] sm:$0xff]
      %v1059 = vld [vmem:[%s3 + $0xe8] sm:$0xff]
      %v1060 = vld [vmem:[%s3 + $0xf0] sm:$0xff]
      %v1061 = vld [vmem:[%s3 + $0xf8] sm:$0xff]
      %v1062 = vld [vmem:[%s3 + $0x100] sm:$0xff]
      %v1063 = vld [vmem:[%s3 + $0x108] sm:$0xff]
      %v1064 = vld [vmem:[%s3 + $0x110] sm:$0xff]
      %v1065 = vld [vmem:[%s3 + $0x118] sm:$0xff]
      %v1066 = vld [vmem:[%s3 + $0x120] sm:$0xff]
      %v1067 = vld [vmem:[%s3 + $0x128] sm:$0xff]
      %v1068 = vld [vmem:[%s3 + $0x130] sm:$0xff]
      %v1069 = vld [vmem:[%s3 + $0x138] sm:$0xff]
      %v1070 = vld [vmem:[%s3 + $0x140] sm:$0xff]
      %v1071 = vld [vmem:[%s3 + $0x148] sm:$0xff]
      %v1072 = vld [vmem:[%s3 + $0x150] sm:$0xff]
      %v1073 = vld [vmem:[%s3 + $0x158] sm:$0xff]
      %v1074 = vld [vmem:[%s3 + $0x160] sm:$0xff]
      %v1075 = vld [vmem:[%s3 + $0x168] sm:$0xff]
      %v1076 = vld [vmem:[%s3 + $0x170] sm:$0xff]
      %v1077 = vld [vmem:[%s3 + $0x178] sm:$0xff]
      %v1078 = vld [vmem:[%s3 + $0x180] sm:$0xff]
      %v1079 = vld [vmem:[%s3 + $0x188] sm:$0xff]
      %v1080 = vld [vmem:[%s3 + $0x190] sm:$0xff]
      %v1081 = vld [vmem:[%s3 + $0x198] sm:$0xff]
      %v1082 = vld [vmem:[%s3 + $0x1a0] sm:$0xff]
      %v1083 = vld [vmem:[%s3 + $0x1a8] sm:$0xff]
      %v1084 = vld [vmem:[%s3 + $0x1b0] sm:$0xff]
      %v1085 = vld [vmem:[%s3 + $0x1b8] sm:$0xff]
      %v1086 = vld [vmem:[%s3 + $0x1c0] sm:$0xff]
      %v1087 = vld [vmem:[%s3 + $0x1c8] sm:$0xff]
      %v1088 = vld [vmem:[%s3 + $0x1d0] sm:$0xff]
      %v1089 = vld [vmem:[%s3 + $0x1d8] sm:$0xff]
      %v1090 = vld [vmem:[%s3 + $0x1e0] sm:$0xff]
      %v1091 = vld [vmem:[%s3 + $0x1e8] sm:$0xff]
      %v1092 = vld [vmem:[%s3 + $0x1f0] sm:$0xff]
      %v1093 = vld [vmem:[%s3 + $0x1f8] sm:$0xff]
      %v1094 = vld [vmem:[%s3 + $0x200] sm:$0xff]
      %v1095 = vld [vmem:[%s3 + $0x208] sm:$0xff]
      %v1096 = vld [vmem:[%s3 + $0x210] sm:$0xff]
      %v1097 = vld [vmem:[%s3 + $0x218] sm:$0xff]
      %v1098 = vld [vmem:[%s3 + $0x220] sm:$0xff]
      %v1099 = vld [vmem:[%s3 + $0x228] sm:$0xff]
      %v1100 = vld [vmem:[%s3 + $0x230] sm:$0xff]
      %v1101 = vld [vmem:[%s3 + $0x238] sm:$0xff]
      %v1102 = vld [vmem:[%s3 + $0x240] sm:$0xff]
      %v1103 = vld [vmem:[%s3 + $0x248] sm:$0xff]
      %v1104 = vld [vmem:[%s3 + $0x250] sm:$0xff]
      %v1105 = vld [vmem:[%s3 + $0x258] sm:$0xff]
      %v1106 = vld [vmem:[%s3 + $0x260] sm:$0xff]
      %v1107 = vld [vmem:[%s3 + $0x268] sm:$0xff]
      %v1108 = vld [vmem:[%s3 + $0x270] sm:$0xff]
      %v1109 = vld [vmem:[%s3 + $0x278] sm:$0xff]
      %v1110 = vld [vmem:[%s3 + $0x280] sm:$0xff]
      %v1111 = vld [vmem:[%s3 + $0x288] sm:$0xff]
      %v1112 = vld [vmem:[%s3 + $0x290] sm:$0xff]
      %v1113 = vld [vmem:[%s3 + $0x298] sm:$0xff]
      %v1114 = vld [vmem:[%s3 + $0x2a0] sm:$0xff]
      %v1115 = vld [vmem:[%s3 + $0x2a8] sm:$0xff]
      %v1116 = vld [vmem:[%s3 + $0x2b0] sm:$0xff]
      %v1117 = vld [vmem:[%s3 + $0x2b8] sm:$0xff]
      %v1118 = vld [vmem:[%s3 + $0x2c0] sm:$0xff]
      %v1119 = vld [vmem:[%s3 + $0x2c8] sm:$0xff]
      %v1120 = vld [vmem:[%s3 + $0x2d0] sm:$0xff]
      %v1121 = vld [vmem:[%s3 + $0x2d8] sm:$0xff]
      %v1122 = vld [vmem:[%s3 + $0x2e0] sm:$0xff]
      %v1123 = vld [vmem:[%s3 + $0x2e8] sm:$0xff]
      %v1124 = vld [vmem:[%s3 + $0x2f0] sm:$0xff]
      %v1125 = vld [vmem:[%s3 + $0x2f8] sm:$0xff]
      %v1126 = vld [vmem:[%s3 + $0x300] sm:$0xff]
      %v1127 = vld [vmem:[%s3 + $0x308] sm:$0xff]
      %v1128 = vld [vmem:[%s3 + $0x310] sm:$0xff]
      %v1129 = vld [vmem:[%s3 + $0x318] sm:$0xff]
      %v1130 = vld [vmem:[%s3 + $0x320] sm:$0xff]
      %v1131 = vld [vmem:[%s3 + $0x328] sm:$0xff]
      %v1132 = vld [vmem:[%s3 + $0x330] sm:$0xff]
      %v1133 = vld [vmem:[%s3 + $0x338] sm:$0xff]
      %v1134 = vld [vmem:[%s3 + $0x340] sm:$0xff]
      %v1135 = vld [vmem:[%s3 + $0x348] sm:$0xff]
      %v1136 = vld [vmem:[%s3 + $0x350] sm:$0xff]
      %v1137 = vld [vmem:[%s3 + $0x358] sm:$0xff]
      %v1138 = vld [vmem:[%s3 + $0x360] sm:$0xff]
      %v1139 = vld [vmem:[%s3 + $0x368] sm:$0xff]
      %v1140 = vld [vmem:[%s3 + $0x370] sm:$0xff]
      %v1141 = vld [vmem:[%s3 + $0x378] sm:$0xff]
      %v1142 = vld [vmem:[%s3 + $0x380] sm:$0xff]
      %v1143 = vld [vmem:[%s3 + $0x388] sm:$0xff]
      %v1144 = vld [vmem:[%s3 + $0x390] sm:$0xff]
      %v1145 = vld [vmem:[%s3 + $0x398] sm:$0xff]
      %v1146 = vld [vmem:[%s3 + $0x3a0] sm:$0xff]
      %v1147 = vld [vmem:[%s3 + $0x3a8] sm:$0xff]
      %v1148 = vld [vmem:[%s3 + $0x3b0] sm:$0xff]
      %v1149 = vld [vmem:[%s3 + $0x3b8] sm:$0xff]
      %v1150 = vld [vmem:[%s3 + $0x3c0] sm:$0xff]
      %v1151 = vld [vmem:[%s3 + $0x3c8] sm:$0xff]
      %v1152 = vld [vmem:[%s3 + $0x3d0] sm:$0xff]
      %v1153 = vld [vmem:[%s3 + $0x3d8] sm:$0xff]
      %v1154 = vld [vmem:[%s3 + $0x3e0] sm:$0xff]
      %v1155 = vld [vmem:[%s3 + $0x3e8] sm:$0xff]
      %v1156 = vld [vmem:[%s3 + $0x3f0] sm:$0xff]
      %v1157 = vld [vmem:[%s3 + $0x3f8] sm:$0xff]
      %v1158 = vld [vmem:[%s3 + $0x400] sm:$0xff]
      %v1159 = vld [vmem:[%s3 + $0x408] sm:$0xff]
      %v1160 = vld [vmem:[%s3 + $0x410] sm:$0xff]
      %v1161 = vld [vmem:[%s3 + $0x418] sm:$0xff]
      %v1162 = vld [vmem:[%s3 + $0x420] sm:$0xff]
      %v1163 = vld [vmem:[%s3 + $0x428] sm:$0xff]
      %v1164 = vld [vmem:[%s3 + $0x430] sm:$0xff]
      %v1165 = vld [vmem:[%s3 + $0x438] sm:$0xff]
      %v1166 = vld [vmem:[%s3 + $0x440] sm:$0xff]
      %v1167 = vld [vmem:[%s3 + $0x448] sm:$0xff]
      %v1168 = vld [vmem:[%s3 + $0x450] sm:$0xff]
      %v1169 = vld [vmem:[%s3 + $0x458] sm:$0xff]
      %v1170 = vld [vmem:[%s3 + $0x460] sm:$0xff]
      %v1171 = vld [vmem:[%s3 + $0x468] sm:$0xff]
      %v1172 = vld [vmem:[%s3 + $0x470] sm:$0xff]
      %v1173 = vld [vmem:[%s3 + $0x478] sm:$0xff]
      %v1174 = vld [vmem:[%s3 + $0x480] sm:$0xff]
      %v1175 = vld [vmem:[%s3 + $0x488] sm:$0xff]
      %v1176 = vld [vmem:[%s3 + $0x490] sm:$0xff]
      %v1177 = vld [vmem:[%s3 + $0x498] sm:$0xff]
      %v1178 = vld [vmem:[%s3 + $0x4a0] sm:$0xff]
      %v1179 = vld [vmem:[%s3 + $0x4a8] sm:$0xff]
      %v1180 = vld [vmem:[%s3 + $0x4b0] sm:$0xff]
      %v1181 = vld [vmem:[%s3 + $0x4b8] sm:$0xff]
      %v1182 = vld [vmem:[%s3 + $0x4c0] sm:$0xff]
      %v1183 = vld [vmem:[%s3 + $0x4c8] sm:$0xff]
      %v1184 = vld [vmem:[%s3 + $0x4d0] sm:$0xff]
      %v1185 = vld [vmem:[%s3 + $0x4d8] sm:$0xff]
      %v1186 = vld [vmem:[%s3 + $0x4e0] sm:$0xff]
      %v1187 = vld [vmem:[%s3 + $0x4e8] sm:$0xff]
      %v1188 = vld [vmem:[%s3 + $0x4f0] sm:$0xff]
      %v1189 = vld [vmem:[%s3 + $0x4f8] sm:$0xff]
      %v1190 = vld [vmem:[%s3 + $0x500] sm:$0xff]
      %v1191 = vld [vmem:[%s3 + $0x508] sm:$0xff]
      %v1192 = vld [vmem:[%s3 + $0x510] sm:$0xff]
      %v1193 = vld [vmem:[%s3 + $0x518] sm:$0xff]
      %v1194 = vld [vmem:[%s3 + $0x520] sm:$0xff]
      %v1195 = vld [vmem:[%s3 + $0x528] sm:$0xff]
      %v1196 = vld [vmem:[%s3 + $0x530] sm:$0xff]
      %v1197 = vld [vmem:[%s3 + $0x538] sm:$0xff]
      %v1198 = vld [vmem:[%s3 + $0x540] sm:$0xff]
      %v1199 = vld [vmem:[%s3 + $0x548] sm:$0xff]
      %v1200 = vld [vmem:[%s3 + $0x550] sm:$0xff]
      %v1201 = vld [vmem:[%s3 + $0x558] sm:$0xff]
      %v1202 = vld [vmem:[%s3 + $0x560] sm:$0xff]
      %v1203 = vld [vmem:[%s3 + $0x568] sm:$0xff]
      %v1204 = vld [vmem:[%s3 + $0x570] sm:$0xff]
      %v1205 = vld [vmem:[%s3 + $0x578] sm:$0xff]
      %v1206 = vld [vmem:[%s3 + $0x580] sm:$0xff]
      %v1207 = vld [vmem:[%s3 + $0x588] sm:$0xff]
      %v1208 = vld [vmem:[%s3 + $0x590] sm:$0xff]
      %v1209 = vld [vmem:[%s3 + $0x598] sm:$0xff]
      %v1210 = vld [vmem:[%s3 + $0x5a0] sm:$0xff]
      %v1211 = vld [vmem:[%s3 + $0x5a8] sm:$0xff]
      %v1212 = vld [vmem:[%s3 + $0x5b0] sm:$0xff]
      %v1213 = vld [vmem:[%s3 + $0x5b8] sm:$0xff]
      %v1214 = vld [vmem:[%s3 + $0x5c0] sm:$0xff]
      %v1215 = vld [vmem:[%s3 + $0x5c8] sm:$0xff]
      %v1216 = vld [vmem:[%s3 + $0x5d0] sm:$0xff]
      %v1217 = vld [vmem:[%s3 + $0x5d8] sm:$0xff]
      %v1218 = vld [vmem:[%s3 + $0x5e0] sm:$0xff]
      %v1219 = vld [vmem:[%s3 + $0x5e8] sm:$0xff]
      %v1220 = vld [vmem:[%s3 + $0x5f0] sm:$0xff]
      %v1221 = vld [vmem:[%s3 + $0x5f8] sm:$0xff]
      %v1222 = vld [vmem:[%s3 + $0x600] sm:$0xff]
      %v1223 = vld [vmem:[%s3 + $0x608] sm:$0xff]
      %v1224 = vld [vmem:[%s3 + $0x610] sm:$0xff]
      %v1225 = vld [vmem:[%s3 + $0x618] sm:$0xff]
      %v1226 = vld [vmem:[%s3 + $0x620] sm:$0xff]
      %v1227 = vld [vmem:[%s3 + $0x628] sm:$0xff]
      %v1228 = vld [vmem:[%s3 + $0x630] sm:$0xff]
      %v1229 = vld [vmem:[%s3 + $0x638] sm:$0xff]
      %v1230 = vld [vmem:[%s3 + $0x640] sm:$0xff]
      %v1231 = vld [vmem:[%s3 + $0x648] sm:$0xff]
      %v1232 = vld [vmem:[%s3 + $0x650] sm:$0xff]
      %v1233 = vld [vmem:[%s3 + $0x658] sm:$0xff]
      %v1234 = vld [vmem:[%s3 + $0x660] sm:$0xff]
      %v1235 = vld [vmem:[%s3 + $0x668] sm:$0xff]
      %v1236 = vld [vmem:[%s3 + $0x670] sm:$0xff]
      %v1237 = vld [vmem:[%s3 + $0x678] sm:$0xff]
      %v1238 = vld [vmem:[%s3 + $0x680] sm:$0xff]
      %v1239 = vld [vmem:[%s3 + $0x688] sm:$0xff]
      %v1240 = vld [vmem:[%s3 + $0x690] sm:$0xff]
      %v1241 = vld [vmem:[%s3 + $0x698] sm:$0xff]
      %v1242 = vld [vmem:[%s3 + $0x6a0] sm:$0xff]
      %v1243 = vld [vmem:[%s3 + $0x6a8] sm:$0xff]
      %v1244 = vld [vmem:[%s3 + $0x6b0] sm:$0xff]
      %v1245 = vld [vmem:[%s3 + $0x6b8] sm:$0xff]
      %vm1246 = vcmask 269312
      %v1248 = vsel %vm1246, %v1032, 0
      %v1251 = vsel %vm1246, %v1035, 0
      %v1254 = vsel %vm1246, %v1038, 0
      %v1257 = vsel %vm1246, %v1041, 0
      %v1260 = vsel %vm1246, %v1044, 0
      %v1263 = vsel %vm1246, %v1047, 0
      %v1266 = vsel %vm1246, %v1050, 0
      %v1269 = vsel %vm1246, %v1053, 0
      %v1272 = vsel %vm1246, %v1056, 0
      %v1275 = vsel %vm1246, %v1059, 0
      %v1278 = vsel %vm1246, %v1062, 0
      %v1281 = vsel %vm1246, %v1065, 0
      %v1284 = vsel %vm1246, %v1068, 0
      %v1287 = vsel %vm1246, %v1071, 0
      %v1290 = vsel %vm1246, %v1074, 0
      %v1293 = vsel %vm1246, %v1077, 0
      %v1296 = vsel %vm1246, %v1080, 0
      %v1299 = vsel %vm1246, %v1083, 0
      %v1302 = vsel %vm1246, %v1086, 0
      %v1305 = vsel %vm1246, %v1089, 0
      %v1308 = vsel %vm1246, %v1092, 0
      %v1311 = vsel %vm1246, %v1095, 0
      %v1314 = vsel %vm1246, %v1098, 0
      %v1317 = vsel %vm1246, %v1101, 0
      %v1320 = vsel %vm1246, %v1104, 0
      %v1323 = vsel %vm1246, %v1107, 0
      %v1326 = vsel %vm1246, %v1110, 0
      %v1329 = vsel %vm1246, %v1113, 0
      %v1332 = vsel %vm1246, %v1116, 0
      %v1335 = vsel %vm1246, %v1119, 0
      %v1338 = vsel %vm1246, %v1122, 0
      %v1341 = vsel %vm1246, %v1125, 0
      %v1344 = vsel %vm1246, %v1128, 0
      %v1347 = vsel %vm1246, %v1131, 0
      %v1350 = vsel %vm1246, %v1134, 0
      %v1353 = vsel %vm1246, %v1137, 0
      %v1356 = vsel %vm1246, %v1140, 0
      %v1359 = vsel %vm1246, %v1143, 0
      %v1362 = vsel %vm1246, %v1146, 0
      %v1365 = vsel %vm1246, %v1149, 0
      %v1368 = vsel %vm1246, %v1152, 0
      %v1371 = vsel %vm1246, %v1155, 0
      %v1374 = vsel %vm1246, %v1158, 0
      %v1377 = vsel %vm1246, %v1161, 0
      %v1380 = vsel %vm1246, %v1164, 0
      %v1383 = vsel %vm1246, %v1167, 0
      %v1386 = vsel %vm1246, %v1170, 0
      %v1389 = vsel %vm1246, %v1173, 0
      %v1392 = vsel %vm1246, %v1176, 0
      %v1395 = vsel %vm1246, %v1179, 0
      %v1398 = vsel %vm1246, %v1182, 0
      %v1401 = vsel %vm1246, %v1185, 0
      %v1404 = vsel %vm1246, %v1188, 0
      %v1407 = vsel %vm1246, %v1191, 0
      %v1410 = vsel %vm1246, %v1194, 0
      %v1413 = vsel %vm1246, %v1197, 0
      %v1416 = vsel %vm1246, %v1200, 0
      %v1419 = vsel %vm1246, %v1203, 0
      %v1422 = vsel %vm1246, %v1206, 0
      %v1425 = vsel %vm1246, %v1209, 0
      %v1428 = vsel %vm1246, %v1212, 0
      %v1431 = vsel %vm1246, %v1215, 0
      %v1434 = vsel %vm1246, %v1218, 0
      %v1437 = vsel %vm1246, %v1221, 0
      %v1440 = vsel %vm1246, %v1224, 0
      %v1443 = vsel %vm1246, %v1227, 0
      %v1446 = vsel %vm1246, %v1230, 0
      %v1449 = vsel %vm1246, %v1233, 0
      %v1452 = vsel %vm1246, %v1236, 0
      %v1455 = vsel %vm1246, %v1239, 0
      %v1458 = vsel %vm1246, %v1242, 0
      %v1461 = vsel %vm1246, %v1245, 0
      %v1464 = vsel %vm739, %v1029, 0
      %1466 = vmatprep.subr.mxu0 0.0
      %1467 = vmatpush1.msra.mxu0 %v1008
      %1468 = vmatprep.subr.mxu0 0.0
      %1469 = vmatpush1.msra.mxu0 %v1007
      %1470 = vmatprep.subr.mxu0 0.0
      %1471 = vmatpush1.msra.mxu0 %v1006
      %1472 = vmatprep.subr.mxu0 0.0
      %1473 = vmatpush1.msra.mxu0 %v1005
      %1474 = vmatprep.subr.mxu0 0.0
      %1475 = vmatpush1.msra.mxu0 %v1004
      %1476 = vmatprep.subr.mxu0 0.0
      %1477 = vmatpush1.msra.mxu0 %v1003
      %1478 = vmatprep.subr.mxu0 0.0
      %1479 = vmatpush1.msra.mxu0 %v1002
      %1480 = vmatprep.subr.mxu0 0.0
      %1481 = vmatpush1.msra.mxu0 %v1001
      %1482 = vmatprep.subr.mxu0 0.0
      %1483 = vmatpush1.msra.mxu0 %v1000
      %1484 = vmatprep.subr.mxu0 0.0
      %1485 = vmatpush1.msra.mxu0 %v999
      %1486 = vmatprep.subr.mxu0 0.0
      %1487 = vmatpush1.msra.mxu0 %v998
      %1488 = vmatprep.subr.mxu0 0.0
      %1489 = vmatpush1.msra.mxu0 %v997
      %1490 = vmatprep.subr.mxu0 0.0
      %1491 = vmatpush1.msra.mxu0 %v996
      %1492 = vmatprep.subr.mxu0 0.0
      %1493 = vmatpush1.msra.mxu0 %v995
      %1494 = vmatprep.subr.mxu0 0.0
      %1495 = vmatpush1.msra.mxu0 %v994
      %1496 = vmatprep.subr.mxu0 0.0
      %1497 = vmatpush1.msra.mxu0 %v993
      %1498 = vmatprep.subr.mxu0 0.0
      %1499 = vmatpush2.msra.mxu0 %v1024
      %1500 = vmatprep.subr.mxu0 0.0
      %1501 = vmatpush2.msra.mxu0 %v1023
      %1502 = vmatprep.subr.mxu0 0.0
      %1503 = vmatpush2.msra.mxu0 %v1022
      %1504 = vmatprep.subr.mxu0 0.0
      %1505 = vmatpush2.msra.mxu0 %v1021
      %1506 = vmatprep.subr.mxu0 0.0
      %1507 = vmatpush2.msra.mxu0 %v1020
      %1508 = vmatprep.subr.mxu0 0.0
      %1509 = vmatpush2.msra.mxu0 %v1019
      %1510 = vmatprep.subr.mxu0 0.0
      %1511 = vmatpush2.msra.mxu0 %v1018
      %1512 = vmatprep.subr.mxu0 0.0
      %1513 = vmatpush2.msra.mxu0 %v1017
      %1514 = vmatprep.subr.mxu0 0.0
      %1515 = vmatpush2.msra.mxu0 %v1016
      %1516 = vmatprep.subr.mxu0 0.0
      %1517 = vmatpush2.msra.mxu0 %v1015
      %1518 = vmatprep.subr.mxu0 0.0
      %1519 = vmatpush2.msra.mxu0 %v1014
      %1520 = vmatprep.subr.mxu0 0.0
      %1521 = vmatpush2.msra.mxu0 %v1013
      %1522 = vmatprep.subr.mxu0 0.0
      %1523 = vmatpush2.msra.mxu0 %v1012
      %1524 = vmatprep.subr.mxu0 0.0
      %1525 = vmatpush2.msra.mxu0 %v1011
      %1526 = vmatprep.subr.mxu0 0.0
      %1527 = vmatpush2.msra.mxu0 %v1010
      %1528 = vmatprep.subr.mxu0 0.0
      %1529 = vmatpush2.msra.mxu0 %v1009
      %1530 = vmatprep.mubr.f32.mxu0 %v1031
      %1531 = vmatmul.mubr.f32.gmra.mxu0 %v1030
      %v1532 = vpop.f32.mrf.mxu0
      %v1533 = vadd.f32 0.0, %v1532
      %v1534 = vpop.f32.mrf.mxu0
      %1535 = vmatprep.mubr.f32.mxu0 %v1034
      %1536 = vmatmul.mubr.f32.gmra.mxu0 %v1033
      %v1537 = vpop.f32.mrf.mxu0
      %v1538 = vadd.f32 0.0, %v1537
      %v1539 = vpop.f32.mrf.mxu0
      %1540 = vmatprep.mubr.f32.mxu0 %v1037
      %1541 = vmatmul.mubr.f32.gmra.mxu0 %v1036
      %v1542 = vpop.f32.mrf.mxu0
      %v1543 = vadd.f32 0.0, %v1542
      %v1544 = vpop.f32.mrf.mxu0
      %1545 = vmatprep.mubr.f32.mxu0 %v1040
      %1546 = vmatmul.mubr.f32.gmra.mxu0 %v1039
      %v1547 = vpop.f32.mrf.mxu0
      %v1548 = vadd.f32 0.0, %v1547
      %v1549 = vpop.f32.mrf.mxu0
      %1550 = vmatprep.mubr.f32.mxu0 %v1043
      %1551 = vmatmul.mubr.f32.gmra.mxu0 %v1042
      %v1552 = vpop.f32.mrf.mxu0
      %v1553 = vadd.f32 0.0, %v1552
      %v1554 = vpop.f32.mrf.mxu0
      %1555 = vmatprep.mubr.f32.mxu0 %v1046
      %1556 = vmatmul.mubr.f32.gmra.mxu0 %v1045
      %v1557 = vpop.f32.mrf.mxu0
      %v1558 = vadd.f32 0.0, %v1557
      %v1559 = vpop.f32.mrf.mxu0
      %1560 = vmatprep.mubr.f32.mxu0 %v1049
      %1561 = vmatmul.mubr.f32.gmra.mxu0 %v1048
      %v1562 = vpop.f32.mrf.mxu0
      %v1563 = vadd.f32 0.0, %v1562
      %v1564 = vpop.f32.mrf.mxu0
      %1565 = vmatprep.mubr.f32.mxu0 %v1052
      %1566 = vmatmul.mubr.f32.gmra.mxu0 %v1051
      %v1567 = vpop.f32.mrf.mxu0
      %v1568 = vadd.f32 0.0, %v1567
      %v1569 = vpop.f32.mrf.mxu0
      %1570 = vmatprep.mubr.f32.mxu0 %v1055
      %1571 = vmatmul.mubr.f32.gmra.mxu0 %v1054
      %v1572 = vpop.f32.mrf.mxu0
      %v1573 = vadd.f32 0.0, %v1572
      %v1574 = vpop.f32.mrf.mxu0
      %1575 = vmatprep.mubr.f32.mxu0 %v1058
      %1576 = vmatmul.mubr.f32.gmra.mxu0 %v1057
      %v1577 = vpop.f32.mrf.mxu0
      %v1578 = vadd.f32 0.0, %v1577
      %v1579 = vpop.f32.mrf.mxu0
      %1580 = vmatprep.mubr.f32.mxu0 %v1061
      %1581 = vmatmul.mubr.f32.gmra.mxu0 %v1060
      %v1582 = vpop.f32.mrf.mxu0
      %v1583 = vadd.f32 0.0, %v1582
      %v1584 = vpop.f32.mrf.mxu0
      %1585 = vmatprep.mubr.f32.mxu0 %v1064
      %1586 = vmatmul.mubr.f32.gmra.mxu0 %v1063
      %v1587 = vpop.f32.mrf.mxu0
      %v1588 = vadd.f32 0.0, %v1587
      %v1589 = vpop.f32.mrf.mxu0
      %1590 = vmatprep.mubr.f32.mxu0 %v1067
      %1591 = vmatmul.mubr.f32.gmra.mxu0 %v1066
      %v1592 = vpop.f32.mrf.mxu0
      %v1593 = vadd.f32 0.0, %v1592
      %v1594 = vpop.f32.mrf.mxu0
      %1595 = vmatprep.mubr.f32.mxu0 %v1070
      %1596 = vmatmul.mubr.f32.gmra.mxu0 %v1069
      %v1597 = vpop.f32.mrf.mxu0
      %v1598 = vadd.f32 0.0, %v1597
      %v1599 = vpop.f32.mrf.mxu0
      %1600 = vmatprep.mubr.f32.mxu0 %v1073
      %1601 = vmatmul.mubr.f32.gmra.mxu0 %v1072
      %v1602 = vpop.f32.mrf.mxu0
      %v1603 = vadd.f32 0.0, %v1602
      %v1604 = vpop.f32.mrf.mxu0
      %1605 = vmatprep.mubr.f32.mxu0 %v1076
      %1606 = vmatmul.mubr.f32.gmra.mxu0 %v1075
      %v1607 = vpop.f32.mrf.mxu0
      %v1608 = vadd.f32 0.0, %v1607
      %v1609 = vpop.f32.mrf.mxu0
      %1610 = vmatprep.mubr.f32.mxu0 %v1079
      %1611 = vmatmul.mubr.f32.gmra.mxu0 %v1078
      %v1612 = vpop.f32.mrf.mxu0
      %v1613 = vadd.f32 0.0, %v1612
      %v1614 = vpop.f32.mrf.mxu0
      %1615 = vmatprep.mubr.f32.mxu0 %v1082
      %1616 = vmatmul.mubr.f32.gmra.mxu0 %v1081
      %v1617 = vpop.f32.mrf.mxu0
      %v1618 = vadd.f32 0.0, %v1617
      %v1619 = vpop.f32.mrf.mxu0
      %1620 = vmatprep.mubr.f32.mxu0 %v1085
      %1621 = vmatmul.mubr.f32.gmra.mxu0 %v1084
      %v1622 = vpop.f32.mrf.mxu0
      %v1623 = vadd.f32 0.0, %v1622
      %v1624 = vpop.f32.mrf.mxu0
      %1625 = vmatprep.mubr.f32.mxu0 %v1088
      %1626 = vmatmul.mubr.f32.gmra.mxu0 %v1087
      %v1627 = vpop.f32.mrf.mxu0
      %v1628 = vadd.f32 0.0, %v1627
      %v1629 = vpop.f32.mrf.mxu0
      %1630 = vmatprep.mubr.f32.mxu0 %v1091
      %1631 = vmatmul.mubr.f32.gmra.mxu0 %v1090
      %v1632 = vpop.f32.mrf.mxu0
      %v1633 = vadd.f32 0.0, %v1632
      %v1634 = vpop.f32.mrf.mxu0
      %1635 = vmatprep.mubr.f32.mxu0 %v1094
      %1636 = vmatmul.mubr.f32.gmra.mxu0 %v1093
      %v1637 = vpop.f32.mrf.mxu0
      %v1638 = vadd.f32 0.0, %v1637
      %v1639 = vpop.f32.mrf.mxu0
      %1640 = vmatprep.mubr.f32.mxu0 %v1097
      %1641 = vmatmul.mubr.f32.gmra.mxu0 %v1096
      %v1642 = vpop.f32.mrf.mxu0
      %v1643 = vadd.f32 0.0, %v1642
      %v1644 = vpop.f32.mrf.mxu0
      %1645 = vmatprep.mubr.f32.mxu0 %v1100
      %1646 = vmatmul.mubr.f32.gmra.mxu0 %v1099
      %v1647 = vpop.f32.mrf.mxu0
      %v1648 = vadd.f32 0.0, %v1647
      %v1649 = vpop.f32.mrf.mxu0
      %1650 = vmatprep.mubr.f32.mxu0 %v1103
      %1651 = vmatmul.mubr.f32.gmra.mxu0 %v1102
      %v1652 = vpop.f32.mrf.mxu0
      %v1653 = vadd.f32 0.0, %v1652
      %v1654 = vpop.f32.mrf.mxu0
      %1655 = vmatprep.mubr.f32.mxu0 %v1106
      %1656 = vmatmul.mubr.f32.gmra.mxu0 %v1105
      %v1657 = vpop.f32.mrf.mxu0
      %v1658 = vadd.f32 0.0, %v1657
      %v1659 = vpop.f32.mrf.mxu0
      %1660 = vmatprep.mubr.f32.mxu0 %v1109
      %1661 = vmatmul.mubr.f32.gmra.mxu0 %v1108
      %v1662 = vpop.f32.mrf.mxu0
      %v1663 = vadd.f32 0.0, %v1662
      %v1664 = vpop.f32.mrf.mxu0
      %1665 = vmatprep.mubr.f32.mxu0 %v1112
      %1666 = vmatmul.mubr.f32.gmra.mxu0 %v1111
      %v1667 = vpop.f32.mrf.mxu0
      %v1668 = vadd.f32 0.0, %v1667
      %v1669 = vpop.f32.mrf.mxu0
      %1670 = vmatprep.mubr.f32.mxu0 %v1115
      %1671 = vmatmul.mubr.f32.gmra.mxu0 %v1114
      %v1672 = vpop.f32.mrf.mxu0
      %v1673 = vadd.f32 0.0, %v1672
      %v1674 = vpop.f32.mrf.mxu0
      %1675 = vmatprep.mubr.f32.mxu0 %v1118
      %1676 = vmatmul.mubr.f32.gmra.mxu0 %v1117
      %v1677 = vpop.f32.mrf.mxu0
      %v1678 = vadd.f32 0.0, %v1677
      %v1679 = vpop.f32.mrf.mxu0
      %1680 = vmatprep.mubr.f32.mxu0 %v1121
      %1681 = vmatmul.mubr.f32.gmra.mxu0 %v1120
      %v1682 = vpop.f32.mrf.mxu0
      %v1683 = vadd.f32 0.0, %v1682
      %v1684 = vpop.f32.mrf.mxu0
      %1685 = vmatprep.mubr.f32.mxu0 %v1124
      %1686 = vmatmul.mubr.f32.gmra.mxu0 %v1123
      %v1687 = vpop.f32.mrf.mxu0
      %v1688 = vadd.f32 0.0, %v1687
      %v1689 = vpop.f32.mrf.mxu0
      %1690 = vmatprep.mubr.f32.mxu0 %v1127
      %1691 = vmatmul.mubr.f32.gmra.mxu0 %v1126
      %v1692 = vpop.f32.mrf.mxu0
      %v1693 = vadd.f32 0.0, %v1692
      %v1694 = vpop.f32.mrf.mxu0
      %1695 = vmatprep.mubr.f32.mxu0 %v1130
      %1696 = vmatmul.mubr.f32.gmra.mxu0 %v1129
      %v1697 = vpop.f32.mrf.mxu0
      %v1698 = vadd.f32 0.0, %v1697
      %v1699 = vpop.f32.mrf.mxu0
      %1700 = vmatprep.mubr.f32.mxu0 %v1133
      %1701 = vmatmul.mubr.f32.gmra.mxu0 %v1132
      %v1702 = vpop.f32.mrf.mxu0
      %v1703 = vadd.f32 0.0, %v1702
      %v1704 = vpop.f32.mrf.mxu0
      %1705 = vmatprep.mubr.f32.mxu0 %v1136
      %1706 = vmatmul.mubr.f32.gmra.mxu0 %v1135
      %v1707 = vpop.f32.mrf.mxu0
      %v1708 = vadd.f32 0.0, %v1707
      %v1709 = vpop.f32.mrf.mxu0
      %1710 = vmatprep.mubr.f32.mxu0 %v1139
      %1711 = vmatmul.mubr.f32.gmra.mxu0 %v1138
      %v1712 = vpop.f32.mrf.mxu0
      %v1713 = vadd.f32 0.0, %v1712
      %v1714 = vpop.f32.mrf.mxu0
      %1715 = vmatprep.mubr.f32.mxu0 %v1142
      %1716 = vmatmul.mubr.f32.gmra.mxu0 %v1141
      %v1717 = vpop.f32.mrf.mxu0
      %v1718 = vadd.f32 0.0, %v1717
      %v1719 = vpop.f32.mrf.mxu0
      %1720 = vmatprep.mubr.f32.mxu0 %v1145
      %1721 = vmatmul.mubr.f32.gmra.mxu0 %v1144
      %v1722 = vpop.f32.mrf.mxu0
      %v1723 = vadd.f32 0.0, %v1722
      %v1724 = vpop.f32.mrf.mxu0
      %1725 = vmatprep.mubr.f32.mxu0 %v1148
      %1726 = vmatmul.mubr.f32.gmra.mxu0 %v1147
      %v1727 = vpop.f32.mrf.mxu0
      %v1728 = vadd.f32 0.0, %v1727
      %v1729 = vpop.f32.mrf.mxu0
      %1730 = vmatprep.mubr.f32.mxu0 %v1151
      %1731 = vmatmul.mubr.f32.gmra.mxu0 %v1150
      %v1732 = vpop.f32.mrf.mxu0
      %v1733 = vadd.f32 0.0, %v1732
      %v1734 = vpop.f32.mrf.mxu0
      %1735 = vmatprep.mubr.f32.mxu0 %v1154
      %1736 = vmatmul.mubr.f32.gmra.mxu0 %v1153
      %v1737 = vpop.f32.mrf.mxu0
      %v1738 = vadd.f32 0.0, %v1737
      %v1739 = vpop.f32.mrf.mxu0
      %1740 = vmatprep.mubr.f32.mxu0 %v1157
      %1741 = vmatmul.mubr.f32.gmra.mxu0 %v1156
      %v1742 = vpop.f32.mrf.mxu0
      %v1743 = vadd.f32 0.0, %v1742
      %v1744 = vpop.f32.mrf.mxu0
      %1745 = vmatprep.mubr.f32.mxu0 %v1160
      %1746 = vmatmul.mubr.f32.gmra.mxu0 %v1159
      %v1747 = vpop.f32.mrf.mxu0
      %v1748 = vadd.f32 0.0, %v1747
      %v1749 = vpop.f32.mrf.mxu0
      %1750 = vmatprep.mubr.f32.mxu0 %v1163
      %1751 = vmatmul.mubr.f32.gmra.mxu0 %v1162
      %v1752 = vpop.f32.mrf.mxu0
      %v1753 = vadd.f32 0.0, %v1752
      %v1754 = vpop.f32.mrf.mxu0
      %1755 = vmatprep.mubr.f32.mxu0 %v1166
      %1756 = vmatmul.mubr.f32.gmra.mxu0 %v1165
      %v1757 = vpop.f32.mrf.mxu0
      %v1758 = vadd.f32 0.0, %v1757
      %v1759 = vpop.f32.mrf.mxu0
      %1760 = vmatprep.mubr.f32.mxu0 %v1169
      %1761 = vmatmul.mubr.f32.gmra.mxu0 %v1168
      %v1762 = vpop.f32.mrf.mxu0
      %v1763 = vadd.f32 0.0, %v1762
      %v1764 = vpop.f32.mrf.mxu0
      %1765 = vmatprep.mubr.f32.mxu0 %v1172
      %1766 = vmatmul.mubr.f32.gmra.mxu0 %v1171
      %v1767 = vpop.f32.mrf.mxu0
      %v1768 = vadd.f32 0.0, %v1767
      %v1769 = vpop.f32.mrf.mxu0
      %1770 = vmatprep.mubr.f32.mxu0 %v1175
      %1771 = vmatmul.mubr.f32.gmra.mxu0 %v1174
      %v1772 = vpop.f32.mrf.mxu0
      %v1773 = vadd.f32 0.0, %v1772
      %v1774 = vpop.f32.mrf.mxu0
      %1775 = vmatprep.mubr.f32.mxu0 %v1178
      %1776 = vmatmul.mubr.f32.gmra.mxu0 %v1177
      %v1777 = vpop.f32.mrf.mxu0
      %v1778 = vadd.f32 0.0, %v1777
      %v1779 = vpop.f32.mrf.mxu0
      %1780 = vmatprep.mubr.f32.mxu0 %v1181
      %1781 = vmatmul.mubr.f32.gmra.mxu0 %v1180
      %v1782 = vpop.f32.mrf.mxu0
      %v1783 = vadd.f32 0.0, %v1782
      %v1784 = vpop.f32.mrf.mxu0
      %1785 = vmatprep.mubr.f32.mxu0 %v1184
      %1786 = vmatmul.mubr.f32.gmra.mxu0 %v1183
      %v1787 = vpop.f32.mrf.mxu0
      %v1788 = vadd.f32 0.0, %v1787
      %v1789 = vpop.f32.mrf.mxu0
      %1790 = vmatprep.mubr.f32.mxu0 %v1187
      %1791 = vmatmul.mubr.f32.gmra.mxu0 %v1186
      %v1792 = vpop.f32.mrf.mxu0
      %v1793 = vadd.f32 0.0, %v1792
      %v1794 = vpop.f32.mrf.mxu0
      %1795 = vmatprep.mubr.f32.mxu0 %v1190
      %1796 = vmatmul.mubr.f32.gmra.mxu0 %v1189
      %v1797 = vpop.f32.mrf.mxu0
      %v1798 = vadd.f32 0.0, %v1797
      %v1799 = vpop.f32.mrf.mxu0
      %1800 = vmatprep.mubr.f32.mxu0 %v1193
      %1801 = vmatmul.mubr.f32.gmra.mxu0 %v1192
      %v1802 = vpop.f32.mrf.mxu0
      %v1803 = vadd.f32 0.0, %v1802
      %v1804 = vpop.f32.mrf.mxu0
      %1805 = vmatprep.mubr.f32.mxu0 %v1196
      %1806 = vmatmul.mubr.f32.gmra.mxu0 %v1195
      %v1807 = vpop.f32.mrf.mxu0
      %v1808 = vadd.f32 0.0, %v1807
      %v1809 = vpop.f32.mrf.mxu0
      %1810 = vmatprep.mubr.f32.mxu0 %v1199
      %1811 = vmatmul.mubr.f32.gmra.mxu0 %v1198
      %v1812 = vpop.f32.mrf.mxu0
      %v1813 = vadd.f32 0.0, %v1812
      %v1814 = vpop.f32.mrf.mxu0
      %1815 = vmatprep.mubr.f32.mxu0 %v1202
      %1816 = vmatmul.mubr.f32.gmra.mxu0 %v1201
      %v1817 = vpop.f32.mrf.mxu0
      %v1818 = vadd.f32 0.0, %v1817
      %v1819 = vpop.f32.mrf.mxu0
      %1820 = vmatprep.mubr.f32.mxu0 %v1205
      %1821 = vmatmul.mubr.f32.gmra.mxu0 %v1204
      %v1822 = vpop.f32.mrf.mxu0
      %v1823 = vadd.f32 0.0, %v1822
      %v1824 = vpop.f32.mrf.mxu0
      %1825 = vmatprep.mubr.f32.mxu0 %v1208
      %1826 = vmatmul.mubr.f32.gmra.mxu0 %v1207
      %v1827 = vpop.f32.mrf.mxu0
      %v1828 = vadd.f32 0.0, %v1827
      %v1829 = vpop.f32.mrf.mxu0
      %1830 = vmatprep.mubr.f32.mxu0 %v1211
      %1831 = vmatmul.mubr.f32.gmra.mxu0 %v1210
      %v1832 = vpop.f32.mrf.mxu0
      %v1833 = vadd.f32 0.0, %v1832
      %v1834 = vpop.f32.mrf.mxu0
      %1835 = vmatprep.mubr.f32.mxu0 %v1214
      %1836 = vmatmul.mubr.f32.gmra.mxu0 %v1213
      %v1837 = vpop.f32.mrf.mxu0
      %v1838 = vadd.f32 0.0, %v1837
      %v1839 = vpop.f32.mrf.mxu0
      %1840 = vmatprep.mubr.f32.mxu0 %v1217
      %1841 = vmatmul.mubr.f32.gmra.mxu0 %v1216
      %v1842 = vpop.f32.mrf.mxu0
      %v1843 = vadd.f32 0.0, %v1842
      %v1844 = vpop.f32.mrf.mxu0
      %1845 = vmatprep.mubr.f32.mxu0 %v1220
      %1846 = vmatmul.mubr.f32.gmra.mxu0 %v1219
      %v1847 = vpop.f32.mrf.mxu0
      %v1848 = vadd.f32 0.0, %v1847
      %v1849 = vpop.f32.mrf.mxu0
      %1850 = vmatprep.mubr.f32.mxu0 %v1223
      %1851 = vmatmul.mubr.f32.gmra.mxu0 %v1222
      %v1852 = vpop.f32.mrf.mxu0
      %v1853 = vadd.f32 0.0, %v1852
      %v1854 = vpop.f32.mrf.mxu0
      %1855 = vmatprep.mubr.f32.mxu0 %v1226
      %1856 = vmatmul.mubr.f32.gmra.mxu0 %v1225
      %v1857 = vpop.f32.mrf.mxu0
      %v1858 = vadd.f32 0.0, %v1857
      %v1859 = vpop.f32.mrf.mxu0
      %1860 = vmatprep.mubr.f32.mxu0 %v1229
      %1861 = vmatmul.mubr.f32.gmra.mxu0 %v1228
      %v1862 = vpop.f32.mrf.mxu0
      %v1863 = vadd.f32 0.0, %v1862
      %v1864 = vpop.f32.mrf.mxu0
      %1865 = vmatprep.mubr.f32.mxu0 %v1232
      %1866 = vmatmul.mubr.f32.gmra.mxu0 %v1231
      %v1867 = vpop.f32.mrf.mxu0
      %v1868 = vadd.f32 0.0, %v1867
      %v1869 = vpop.f32.mrf.mxu0
      %1870 = vmatprep.mubr.f32.mxu0 %v1235
      %1871 = vmatmul.mubr.f32.gmra.mxu0 %v1234
      %v1872 = vpop.f32.mrf.mxu0
      %v1873 = vadd.f32 0.0, %v1872
      %v1874 = vpop.f32.mrf.mxu0
      %1875 = vmatprep.mubr.f32.mxu0 %v1238
      %1876 = vmatmul.mubr.f32.gmra.mxu0 %v1237
      %v1877 = vpop.f32.mrf.mxu0
      %v1878 = vadd.f32 0.0, %v1877
      %v1879 = vpop.f32.mrf.mxu0
      %1880 = vmatprep.mubr.f32.mxu0 %v1241
      %1881 = vmatmul.mubr.f32.gmra.mxu0 %v1240
      %v1882 = vpop.f32.mrf.mxu0
      %v1883 = vadd.f32 0.0, %v1882
      %v1884 = vpop.f32.mrf.mxu0
      %1885 = vmatprep.mubr.f32.mxu0 %v1244
      %1886 = vmatmul.mubr.f32.gmra.mxu0 %v1243
      %v1887 = vpop.f32.mrf.mxu0
      %v1888 = vadd.f32 0.0, %v1887
      %v1889 = vpop.f32.mrf.mxu0
      %1890 = vdwg.mxu0
      %1891 = vmatprep.subr.mxu0 0.0
      %1892 = vmatpush1.msra.mxu0 0.0
      %1893 = vmatprep.subr.mxu0 0.0
      %1894 = vmatpush1.msra.mxu0 0.0
      %1895 = vmatprep.subr.mxu0 0.0
      %1896 = vmatpush1.msra.mxu0 0.0
      %1897 = vmatprep.subr.mxu0 0.0
      %1898 = vmatpush1.msra.mxu0 0.0
      %1899 = vmatprep.subr.mxu0 0.0
      %1900 = vmatpush1.msra.mxu0 0.0
      %1901 = vmatprep.subr.mxu0 0.0
      %1902 = vmatpush1.msra.mxu0 0.0
      %1903 = vmatprep.subr.mxu0 0.0
      %1904 = vmatpush1.msra.mxu0 0.0
      %1905 = vmatprep.subr.mxu0 0.0
      %1906 = vmatpush1.msra.mxu0 0.0
      %1907 = vmatprep.subr.mxu0 0.0
      %1908 = vmatpush1.msra.mxu0 0.0
      %1909 = vmatprep.subr.mxu0 0.0
      %1910 = vmatpush1.msra.mxu0 0.0
      %1911 = vmatprep.subr.mxu0 0.0
      %1912 = vmatpush1.msra.mxu0 0.0
      %1913 = vmatprep.subr.mxu0 0.0
      %1914 = vmatpush1.msra.mxu0 %v1464
      %1915 = vmatprep.subr.mxu0 0.0
      %1916 = vmatpush1.msra.mxu0 %v1028
      %1917 = vmatprep.subr.mxu0 0.0
      %1918 = vmatpush1.msra.mxu0 %v1027
      %1919 = vmatprep.subr.mxu0 0.0
      %1920 = vmatpush1.msra.mxu0 %v1026
      %1921 = vmatprep.subr.mxu0 0.0
      %1922 = vmatpush1.msra.mxu0 %v1025
      %1923 = vmatprep.subr.mxu0 0.0
      %1924 = vmatpush2.msra.mxu0 0.0
      %1925 = vmatprep.subr.mxu0 0.0
      %1926 = vmatpush2.msra.mxu0 0.0
      %1927 = vmatprep.subr.mxu0 0.0
      %1928 = vmatpush2.msra.mxu0 0.0
      %1929 = vmatprep.subr.mxu0 0.0
      %1930 = vmatpush2.msra.mxu0 0.0
      %1931 = vmatprep.subr.mxu0 0.0
      %1932 = vmatpush2.msra.mxu0 0.0
      %1933 = vmatprep.subr.mxu0 0.0
      %1934 = vmatpush2.msra.mxu0 0.0
      %1935 = vmatprep.subr.mxu0 0.0
      %1936 = vmatpush2.msra.mxu0 0.0
      %1937 = vmatprep.subr.mxu0 0.0
      %1938 = vmatpush2.msra.mxu0 0.0
      %1939 = vmatprep.subr.mxu0 0.0
      %1940 = vmatpush2.msra.mxu0 0.0
      %1941 = vmatprep.subr.mxu0 0.0
      %1942 = vmatpush2.msra.mxu0 0.0
      %1943 = vmatprep.subr.mxu0 0.0
      %1944 = vmatpush2.msra.mxu0 0.0
      %1945 = vmatprep.subr.mxu0 0.0
      %1946 = vmatpush2.msra.mxu0 0.0
      %1947 = vmatprep.subr.mxu0 0.0
      %1948 = vmatpush2.msra.mxu0 0.0
      %1949 = vmatprep.subr.mxu0 0.0
      %1950 = vmatpush2.msra.mxu0 0.0
      %1951 = vmatprep.subr.mxu0 0.0
      %1952 = vmatpush2.msra.mxu0 0.0
      %1953 = vmatprep.subr.mxu0 0.0
      %1954 = vmatpush2.msra.mxu0 0.0
      %1955 = vmatprep.mubr.f32.mxu0 0.0
      %1956 = vmatmul.mubr.f32.gmra.mxu0 %v1248
      %v1957 = vpop.f32.mrf.mxu0
      %v1958 = vadd.f32 %v1533, %v1957
      %v1959 = vpop.f32.mrf.mxu0
      %1960 = vmatprep.mubr.f32.mxu0 0.0
      %1961 = vmatmul.mubr.f32.gmra.mxu0 %v1251
      %v1962 = vpop.f32.mrf.mxu0
      %v1963 = vadd.f32 %v1538, %v1962
      %v1964 = vpop.f32.mrf.mxu0
      %1965 = vmatprep.mubr.f32.mxu0 0.0
      %1966 = vmatmul.mubr.f32.gmra.mxu0 %v1254
      %v1967 = vpop.f32.mrf.mxu0
      %v1968 = vadd.f32 %v1543, %v1967
      %v1969 = vpop.f32.mrf.mxu0
      %1970 = vmatprep.mubr.f32.mxu0 0.0
      %1971 = vmatmul.mubr.f32.gmra.mxu0 %v1257
      %v1972 = vpop.f32.mrf.mxu0
      %v1973 = vadd.f32 %v1548, %v1972
      %v1974 = vpop.f32.mrf.mxu0
      %1975 = vmatprep.mubr.f32.mxu0 0.0
      %1976 = vmatmul.mubr.f32.gmra.mxu0 %v1260
      %v1977 = vpop.f32.mrf.mxu0
      %v1978 = vadd.f32 %v1553, %v1977
      %v1979 = vpop.f32.mrf.mxu0
      %1980 = vmatprep.mubr.f32.mxu0 0.0
      %1981 = vmatmul.mubr.f32.gmra.mxu0 %v1263
      %v1982 = vpop.f32.mrf.mxu0
      %v1983 = vadd.f32 %v1558, %v1982
      %v1984 = vpop.f32.mrf.mxu0
      %1985 = vmatprep.mubr.f32.mxu0 0.0
      %1986 = vmatmul.mubr.f32.gmra.mxu0 %v1266
      %v1987 = vpop.f32.mrf.mxu0
      %v1988 = vadd.f32 %v1563, %v1987
      %v1989 = vpop.f32.mrf.mxu0
      %1990 = vmatprep.mubr.f32.mxu0 0.0
      %1991 = vmatmul.mubr.f32.gmra.mxu0 %v1269
      %v1992 = vpop.f32.mrf.mxu0
      %v1993 = vadd.f32 %v1568, %v1992
      %v1994 = vpop.f32.mrf.mxu0
      %1995 = vmatprep.mubr.f32.mxu0 0.0
      %1996 = vmatmul.mubr.f32.gmra.mxu0 %v1272
      %v1997 = vpop.f32.mrf.mxu0
      %v1998 = vadd.f32 %v1573, %v1997
      %v1999 = vpop.f32.mrf.mxu0
      %2000 = vmatprep.mubr.f32.mxu0 0.0
      %2001 = vmatmul.mubr.f32.gmra.mxu0 %v1275
      %v2002 = vpop.f32.mrf.mxu0
      %v2003 = vadd.f32 %v1578, %v2002
      %v2004 = vpop.f32.mrf.mxu0
      %2005 = vmatprep.mubr.f32.mxu0 0.0
      %2006 = vmatmul.mubr.f32.gmra.mxu0 %v1278
      %v2007 = vpop.f32.mrf.mxu0
      %v2008 = vadd.f32 %v1583, %v2007
      %v2009 = vpop.f32.mrf.mxu0
      %2010 = vmatprep.mubr.f32.mxu0 0.0
      %2011 = vmatmul.mubr.f32.gmra.mxu0 %v1281
      %v2012 = vpop.f32.mrf.mxu0
      %v2013 = vadd.f32 %v1588, %v2012
      %v2014 = vpop.f32.mrf.mxu0
      %2015 = vmatprep.mubr.f32.mxu0 0.0
      %2016 = vmatmul.mubr.f32.gmra.mxu0 %v1284
      %v2017 = vpop.f32.mrf.mxu0
      %v2018 = vadd.f32 %v1593, %v2017
      %v2019 = vpop.f32.mrf.mxu0
      %2020 = vmatprep.mubr.f32.mxu0 0.0
      %2021 = vmatmul.mubr.f32.gmra.mxu0 %v1287
      %v2022 = vpop.f32.mrf.mxu0
      %v2023 = vadd.f32 %v1598, %v2022
      %v2024 = vpop.f32.mrf.mxu0
      %2025 = vmatprep.mubr.f32.mxu0 0.0
      %2026 = vmatmul.mubr.f32.gmra.mxu0 %v1290
      %v2027 = vpop.f32.mrf.mxu0
      %v2028 = vadd.f32 %v1603, %v2027
      %v2029 = vpop.f32.mrf.mxu0
      %2030 = vmatprep.mubr.f32.mxu0 0.0
      %2031 = vmatmul.mubr.f32.gmra.mxu0 %v1293
      %v2032 = vpop.f32.mrf.mxu0
      %v2033 = vadd.f32 %v1608, %v2032
      %v2034 = vpop.f32.mrf.mxu0
      %2035 = vmatprep.mubr.f32.mxu0 0.0
      %2036 = vmatmul.mubr.f32.gmra.mxu0 %v1296
      %v2037 = vpop.f32.mrf.mxu0
      %v2038 = vadd.f32 %v1613, %v2037
      %v2039 = vpop.f32.mrf.mxu0
      %2040 = vmatprep.mubr.f32.mxu0 0.0
      %2041 = vmatmul.mubr.f32.gmra.mxu0 %v1299
      %v2042 = vpop.f32.mrf.mxu0
      %v2043 = vadd.f32 %v1618, %v2042
      %v2044 = vpop.f32.mrf.mxu0
      %2045 = vmatprep.mubr.f32.mxu0 0.0
      %2046 = vmatmul.mubr.f32.gmra.mxu0 %v1302
      %v2047 = vpop.f32.mrf.mxu0
      %v2048 = vadd.f32 %v1623, %v2047
      %v2049 = vpop.f32.mrf.mxu0
      %2050 = vmatprep.mubr.f32.mxu0 0.0
      %2051 = vmatmul.mubr.f32.gmra.mxu0 %v1305
      %v2052 = vpop.f32.mrf.mxu0
      %v2053 = vadd.f32 %v1628, %v2052
      %v2054 = vpop.f32.mrf.mxu0
      %2055 = vmatprep.mubr.f32.mxu0 0.0
      %2056 = vmatmul.mubr.f32.gmra.mxu0 %v1308
      %v2057 = vpop.f32.mrf.mxu0
      %v2058 = vadd.f32 %v1633, %v2057
      %v2059 = vpop.f32.mrf.mxu0
      %2060 = vmatprep.mubr.f32.mxu0 0.0
      %2061 = vmatmul.mubr.f32.gmra.mxu0 %v1311
      %v2062 = vpop.f32.mrf.mxu0
      %v2063 = vadd.f32 %v1638, %v2062
      %v2064 = vpop.f32.mrf.mxu0
      %2065 = vmatprep.mubr.f32.mxu0 0.0
      %2066 = vmatmul.mubr.f32.gmra.mxu0 %v1314
      %v2067 = vpop.f32.mrf.mxu0
      %v2068 = vadd.f32 %v1643, %v2067
      %v2069 = vpop.f32.mrf.mxu0
      %2070 = vmatprep.mubr.f32.mxu0 0.0
      %2071 = vmatmul.mubr.f32.gmra.mxu0 %v1317
      %v2072 = vpop.f32.mrf.mxu0
      %v2073 = vadd.f32 %v1648, %v2072
      %v2074 = vpop.f32.mrf.mxu0
      %2075 = vmatprep.mubr.f32.mxu0 0.0
      %2076 = vmatmul.mubr.f32.gmra.mxu0 %v1320
      %v2077 = vpop.f32.mrf.mxu0
      %v2078 = vadd.f32 %v1653, %v2077
      %v2079 = vpop.f32.mrf.mxu0
      %2080 = vmatprep.mubr.f32.mxu0 0.0
      %2081 = vmatmul.mubr.f32.gmra.mxu0 %v1323
      %v2082 = vpop.f32.mrf.mxu0
      %v2083 = vadd.f32 %v1658, %v2082
      %v2084 = vpop.f32.mrf.mxu0
      %2085 = vmatprep.mubr.f32.mxu0 0.0
      %2086 = vmatmul.mubr.f32.gmra.mxu0 %v1326
      %v2087 = vpop.f32.mrf.mxu0
      %v2088 = vadd.f32 %v1663, %v2087
      %v2089 = vpop.f32.mrf.mxu0
      %2090 = vmatprep.mubr.f32.mxu0 0.0
      %2091 = vmatmul.mubr.f32.gmra.mxu0 %v1329
      %v2092 = vpop.f32.mrf.mxu0
      %v2093 = vadd.f32 %v1668, %v2092
      %v2094 = vpop.f32.mrf.mxu0
      %2095 = vmatprep.mubr.f32.mxu0 0.0
      %2096 = vmatmul.mubr.f32.gmra.mxu0 %v1332
      %v2097 = vpop.f32.mrf.mxu0
      %v2098 = vadd.f32 %v1673, %v2097
      %v2099 = vpop.f32.mrf.mxu0
      %2100 = vmatprep.mubr.f32.mxu0 0.0
      %2101 = vmatmul.mubr.f32.gmra.mxu0 %v1335
      %v2102 = vpop.f32.mrf.mxu0
      %v2103 = vadd.f32 %v1678, %v2102
      %v2104 = vpop.f32.mrf.mxu0
      %2105 = vmatprep.mubr.f32.mxu0 0.0
      %2106 = vmatmul.mubr.f32.gmra.mxu0 %v1338
      %v2107 = vpop.f32.mrf.mxu0
      %v2108 = vadd.f32 %v1683, %v2107
      %v2109 = vpop.f32.mrf.mxu0
      %2110 = vmatprep.mubr.f32.mxu0 0.0
      %2111 = vmatmul.mubr.f32.gmra.mxu0 %v1341
      %v2112 = vpop.f32.mrf.mxu0
      %v2113 = vadd.f32 %v1688, %v2112
      %v2114 = vpop.f32.mrf.mxu0
      %2115 = vmatprep.mubr.f32.mxu0 0.0
      %2116 = vmatmul.mubr.f32.gmra.mxu0 %v1344
      %v2117 = vpop.f32.mrf.mxu0
      %v2118 = vadd.f32 %v1693, %v2117
      %v2119 = vpop.f32.mrf.mxu0
      %2120 = vmatprep.mubr.f32.mxu0 0.0
      %2121 = vmatmul.mubr.f32.gmra.mxu0 %v1347
      %v2122 = vpop.f32.mrf.mxu0
      %v2123 = vadd.f32 %v1698, %v2122
      %v2124 = vpop.f32.mrf.mxu0
      %2125 = vmatprep.mubr.f32.mxu0 0.0
      %2126 = vmatmul.mubr.f32.gmra.mxu0 %v1350
      %v2127 = vpop.f32.mrf.mxu0
      %v2128 = vadd.f32 %v1703, %v2127
      %v2129 = vpop.f32.mrf.mxu0
      %2130 = vmatprep.mubr.f32.mxu0 0.0
      %2131 = vmatmul.mubr.f32.gmra.mxu0 %v1353
      %v2132 = vpop.f32.mrf.mxu0
      %v2133 = vadd.f32 %v1708, %v2132
      %v2134 = vpop.f32.mrf.mxu0
      %2135 = vmatprep.mubr.f32.mxu0 0.0
      %2136 = vmatmul.mubr.f32.gmra.mxu0 %v1356
      %v2137 = vpop.f32.mrf.mxu0
      %v2138 = vadd.f32 %v1713, %v2137
      %v2139 = vpop.f32.mrf.mxu0
      %2140 = vmatprep.mubr.f32.mxu0 0.0
      %2141 = vmatmul.mubr.f32.gmra.mxu0 %v1359
      %v2142 = vpop.f32.mrf.mxu0
      %v2143 = vadd.f32 %v1718, %v2142
      %v2144 = vpop.f32.mrf.mxu0
      %2145 = vmatprep.mubr.f32.mxu0 0.0
      %2146 = vmatmul.mubr.f32.gmra.mxu0 %v1362
      %v2147 = vpop.f32.mrf.mxu0
      %v2148 = vadd.f32 %v1723, %v2147
      %v2149 = vpop.f32.mrf.mxu0
      %2150 = vmatprep.mubr.f32.mxu0 0.0
      %2151 = vmatmul.mubr.f32.gmra.mxu0 %v1365
      %v2152 = vpop.f32.mrf.mxu0
      %v2153 = vadd.f32 %v1728, %v2152
      %v2154 = vpop.f32.mrf.mxu0
      %2155 = vmatprep.mubr.f32.mxu0 0.0
      %2156 = vmatmul.mubr.f32.gmra.mxu0 %v1368
      %v2157 = vpop.f32.mrf.mxu0
      %v2158 = vadd.f32 %v1733, %v2157
      %v2159 = vpop.f32.mrf.mxu0
      %2160 = vmatprep.mubr.f32.mxu0 0.0
      %2161 = vmatmul.mubr.f32.gmra.mxu0 %v1371
      %v2162 = vpop.f32.mrf.mxu0
      %v2163 = vadd.f32 %v1738, %v2162
      %v2164 = vpop.f32.mrf.mxu0
      %2165 = vmatprep.mubr.f32.mxu0 0.0
      %2166 = vmatmul.mubr.f32.gmra.mxu0 %v1374
      %v2167 = vpop.f32.mrf.mxu0
      %v2168 = vadd.f32 %v1743, %v2167
      %v2169 = vpop.f32.mrf.mxu0
      %2170 = vmatprep.mubr.f32.mxu0 0.0
      %2171 = vmatmul.mubr.f32.gmra.mxu0 %v1377
      %v2172 = vpop.f32.mrf.mxu0
      %v2173 = vadd.f32 %v1748, %v2172
      %v2174 = vpop.f32.mrf.mxu0
      %2175 = vmatprep.mubr.f32.mxu0 0.0
      %2176 = vmatmul.mubr.f32.gmra.mxu0 %v1380
      %v2177 = vpop.f32.mrf.mxu0
      %v2178 = vadd.f32 %v1753, %v2177
      %v2179 = vpop.f32.mrf.mxu0
      %2180 = vmatprep.mubr.f32.mxu0 0.0
      %2181 = vmatmul.mubr.f32.gmra.mxu0 %v1383
      %v2182 = vpop.f32.mrf.mxu0
      %v2183 = vadd.f32 %v1758, %v2182
      %v2184 = vpop.f32.mrf.mxu0
      %2185 = vmatprep.mubr.f32.mxu0 0.0
      %2186 = vmatmul.mubr.f32.gmra.mxu0 %v1386
      %v2187 = vpop.f32.mrf.mxu0
      %v2188 = vadd.f32 %v1763, %v2187
      %v2189 = vpop.f32.mrf.mxu0
      %2190 = vmatprep.mubr.f32.mxu0 0.0
      %2191 = vmatmul.mubr.f32.gmra.mxu0 %v1389
      %v2192 = vpop.f32.mrf.mxu0
      %v2193 = vadd.f32 %v1768, %v2192
      %v2194 = vpop.f32.mrf.mxu0
      %2195 = vmatprep.mubr.f32.mxu0 0.0
      %2196 = vmatmul.mubr.f32.gmra.mxu0 %v1392
      %v2197 = vpop.f32.mrf.mxu0
      %v2198 = vadd.f32 %v1773, %v2197
      %v2199 = vpop.f32.mrf.mxu0
      %2200 = vmatprep.mubr.f32.mxu0 0.0
      %2201 = vmatmul.mubr.f32.gmra.mxu0 %v1395
      %v2202 = vpop.f32.mrf.mxu0
      %v2203 = vadd.f32 %v1778, %v2202
      %v2204 = vpop.f32.mrf.mxu0
      %2205 = vmatprep.mubr.f32.mxu0 0.0
      %2206 = vmatmul.mubr.f32.gmra.mxu0 %v1398
      %v2207 = vpop.f32.mrf.mxu0
      %v2208 = vadd.f32 %v1783, %v2207
      %v2209 = vpop.f32.mrf.mxu0
      %2210 = vmatprep.mubr.f32.mxu0 0.0
      %2211 = vmatmul.mubr.f32.gmra.mxu0 %v1401
      %v2212 = vpop.f32.mrf.mxu0
      %v2213 = vadd.f32 %v1788, %v2212
      %v2214 = vpop.f32.mrf.mxu0
      %2215 = vmatprep.mubr.f32.mxu0 0.0
      %2216 = vmatmul.mubr.f32.gmra.mxu0 %v1404
      %v2217 = vpop.f32.mrf.mxu0
      %v2218 = vadd.f32 %v1793, %v2217
      %v2219 = vpop.f32.mrf.mxu0
      %2220 = vmatprep.mubr.f32.mxu0 0.0
      %2221 = vmatmul.mubr.f32.gmra.mxu0 %v1407
      %v2222 = vpop.f32.mrf.mxu0
      %v2223 = vadd.f32 %v1798, %v2222
      %v2224 = vpop.f32.mrf.mxu0
      %2225 = vmatprep.mubr.f32.mxu0 0.0
      %2226 = vmatmul.mubr.f32.gmra.mxu0 %v1410
      %v2227 = vpop.f32.mrf.mxu0
      %v2228 = vadd.f32 %v1803, %v2227
      %v2229 = vpop.f32.mrf.mxu0
      %2230 = vmatprep.mubr.f32.mxu0 0.0
      %2231 = vmatmul.mubr.f32.gmra.mxu0 %v1413
      %v2232 = vpop.f32.mrf.mxu0
      %v2233 = vadd.f32 %v1808, %v2232
      %v2234 = vpop.f32.mrf.mxu0
      %2235 = vmatprep.mubr.f32.mxu0 0.0
      %2236 = vmatmul.mubr.f32.gmra.mxu0 %v1416
      %v2237 = vpop.f32.mrf.mxu0
      %v2238 = vadd.f32 %v1813, %v2237
      %v2239 = vpop.f32.mrf.mxu0
      %2240 = vmatprep.mubr.f32.mxu0 0.0
      %2241 = vmatmul.mubr.f32.gmra.mxu0 %v1419
      %v2242 = vpop.f32.mrf.mxu0
      %v2243 = vadd.f32 %v1818, %v2242
      %v2244 = vpop.f32.mrf.mxu0
      %2245 = vmatprep.mubr.f32.mxu0 0.0
      %2246 = vmatmul.mubr.f32.gmra.mxu0 %v1422
      %v2247 = vpop.f32.mrf.mxu0
      %v2248 = vadd.f32 %v1823, %v2247
      %v2249 = vpop.f32.mrf.mxu0
      %2250 = vmatprep.mubr.f32.mxu0 0.0
      %2251 = vmatmul.mubr.f32.gmra.mxu0 %v1425
      %v2252 = vpop.f32.mrf.mxu0
      %v2253 = vadd.f32 %v1828, %v2252
      %v2254 = vpop.f32.mrf.mxu0
      %2255 = vmatprep.mubr.f32.mxu0 0.0
      %2256 = vmatmul.mubr.f32.gmra.mxu0 %v1428
      %v2257 = vpop.f32.mrf.mxu0
      %v2258 = vadd.f32 %v1833, %v2257
      %v2259 = vpop.f32.mrf.mxu0
      %2260 = vmatprep.mubr.f32.mxu0 0.0
      %2261 = vmatmul.mubr.f32.gmra.mxu0 %v1431
      %v2262 = vpop.f32.mrf.mxu0
      %v2263 = vadd.f32 %v1838, %v2262
      %v2264 = vpop.f32.mrf.mxu0
      %2265 = vmatprep.mubr.f32.mxu0 0.0
      %2266 = vmatmul.mubr.f32.gmra.mxu0 %v1434
      %v2267 = vpop.f32.mrf.mxu0
      %v2268 = vadd.f32 %v1843, %v2267
      %v2269 = vpop.f32.mrf.mxu0
      %2270 = vmatprep.mubr.f32.mxu0 0.0
      %2271 = vmatmul.mubr.f32.gmra.mxu0 %v1437
      %v2272 = vpop.f32.mrf.mxu0
      %v2273 = vadd.f32 %v1848, %v2272
      %v2274 = vpop.f32.mrf.mxu0
      %2275 = vmatprep.mubr.f32.mxu0 0.0
      %2276 = vmatmul.mubr.f32.gmra.mxu0 %v1440
      %v2277 = vpop.f32.mrf.mxu0
      %v2278 = vadd.f32 %v1853, %v2277
      %v2279 = vpop.f32.mrf.mxu0
      %2280 = vmatprep.mubr.f32.mxu0 0.0
      %2281 = vmatmul.mubr.f32.gmra.mxu0 %v1443
      %v2282 = vpop.f32.mrf.mxu0
      %v2283 = vadd.f32 %v1858, %v2282
      %v2284 = vpop.f32.mrf.mxu0
      %2285 = vmatprep.mubr.f32.mxu0 0.0
      %2286 = vmatmul.mubr.f32.gmra.mxu0 %v1446
      %v2287 = vpop.f32.mrf.mxu0
      %v2288 = vadd.f32 %v1863, %v2287
      %v2289 = vpop.f32.mrf.mxu0
      %2290 = vmatprep.mubr.f32.mxu0 0.0
      %2291 = vmatmul.mubr.f32.gmra.mxu0 %v1449
      %v2292 = vpop.f32.mrf.mxu0
      %v2293 = vadd.f32 %v1868, %v2292
      %v2294 = vpop.f32.mrf.mxu0
      %2295 = vmatprep.mubr.f32.mxu0 0.0
      %2296 = vmatmul.mubr.f32.gmra.mxu0 %v1452
      %v2297 = vpop.f32.mrf.mxu0
      %v2298 = vadd.f32 %v1873, %v2297
      %v2299 = vpop.f32.mrf.mxu0
      %2300 = vmatprep.mubr.f32.mxu0 0.0
      %2301 = vmatmul.mubr.f32.gmra.mxu0 %v1455
      %v2302 = vpop.f32.mrf.mxu0
      %v2303 = vadd.f32 %v1878, %v2302
      %v2304 = vpop.f32.mrf.mxu0
      %2305 = vmatprep.mubr.f32.mxu0 0.0
      %2306 = vmatmul.mubr.f32.gmra.mxu0 %v1458
      %v2307 = vpop.f32.mrf.mxu0
      %v2308 = vadd.f32 %v1883, %v2307
      %v2309 = vpop.f32.mrf.mxu0
      %2310 = vmatprep.mubr.f32.mxu0 0.0
      %2311 = vmatmul.mubr.f32.gmra.mxu0 %v1461
      %v2312 = vpop.f32.mrf.mxu0
      %v2313 = vadd.f32 %v1888, %v2312
      %v2314 = vpop.f32.mrf.mxu0
      %2315 = vdwg.mxu0
      %v2316 = vmax.f32 %v1958, %v1998
      %v2317 = vmax.f32 %v1963, %v2003
      %v2318 = vmax.f32 %v1968, %v2008
      %v2319 = vmax.f32 %v1973, %v2013
      %v2320 = vmax.f32 %v1978, %v2018
      %v2321 = vmax.f32 %v1983, %v2023
      %v2322 = vmax.f32 %v1988, %v2028
      %v2323 = vmax.f32 %v1993, %v2033
      %v2324 = vmax.f32 %v2316, %v2038
      %v2325 = vmax.f32 %v2317, %v2043
      %v2326 = vmax.f32 %v2318, %v2048
      %v2327 = vmax.f32 %v2319, %v2053
      %v2328 = vmax.f32 %v2320, %v2058
      %v2329 = vmax.f32 %v2321, %v2063
      %v2330 = vmax.f32 %v2322, %v2068
      %v2331 = vmax.f32 %v2323, %v2073
      %v2332 = vmax.f32 %v2324, %v2078
      %v2333 = vmax.f32 %v2325, %v2083
      %v2334 = vmax.f32 %v2326, %v2088
      %v2335 = vmax.f32 %v2327, %v2093
      %v2336 = vmax.f32 %v2328, %v2098
      %v2337 = vmax.f32 %v2329, %v2103
      %v2338 = vmax.f32 %v2330, %v2108
      %v2339 = vmax.f32 %v2331, %v2113
      %v2340 = vmax.f32 %v2332, %v2118
      %v2341 = vmax.f32 %v2333, %v2123
      %v2342 = vmax.f32 %v2334, %v2128
      %v2343 = vmax.f32 %v2335, %v2133
      %v2344 = vmax.f32 %v2336, %v2138
      %v2345 = vmax.f32 %v2337, %v2143
      %v2346 = vmax.f32 %v2338, %v2148
      %v2347 = vmax.f32 %v2339, %v2153
      %v2348 = vmax.f32 %v2340, %v2158
      %v2349 = vmax.f32 %v2341, %v2163
      %v2350 = vmax.f32 %v2342, %v2168
      %v2351 = vmax.f32 %v2343, %v2173
      %v2352 = vmax.f32 %v2344, %v2178
      %v2353 = vmax.f32 %v2345, %v2183
      %v2354 = vmax.f32 %v2346, %v2188
      %v2355 = vmax.f32 %v2347, %v2193
      %v2356 = vmax.f32 %v2348, %v2198
      %v2357 = vmax.f32 %v2349, %v2203
      %v2358 = vmax.f32 %v2350, %v2208
      %v2359 = vmax.f32 %v2351, %v2213
      %v2360 = vmax.f32 %v2352, %v2218
      %v2361 = vmax.f32 %v2353, %v2223
      %v2362 = vmax.f32 %v2354, %v2228
      %v2363 = vmax.f32 %v2355, %v2233
      %v2364 = vmax.f32 %v2356, %v2238
      %v2365 = vmax.f32 %v2357, %v2243
      %v2366 = vmax.f32 %v2358, %v2248
      %v2367 = vmax.f32 %v2359, %v2253
      %v2368 = vmax.f32 %v2360, %v2258
      %v2369 = vmax.f32 %v2361, %v2263
      %v2370 = vmax.f32 %v2362, %v2268
      %v2371 = vmax.f32 %v2363, %v2273
      %v2372 = vmax.f32 %v2364, %v2278
      %v2373 = vmax.f32 %v2365, %v2283
      %v2374 = vmax.f32 %v2366, %v2288
      %v2375 = vmax.f32 %v2367, %v2293
      %v2376 = vmax.f32 %v2368, %v2298
      %v2377 = vmax.f32 %v2369, %v2303
      %v2378 = vmax.f32 %v2370, %v2308
      %v2379 = vmax.f32 %v2371, %v2313
      %v2380 = vld [vmem:[%s4] sm:$0xff]
      %v2381 = vld [vmem:[%s4 + $0x8] sm:$0xff]
      %v2382 = vld [vmem:[%s4 + $0x10] sm:$0xff]
      %v2383 = vld [vmem:[%s4 + $0x18] sm:$0xff]
      %v2384 = vld [vmem:[%s4 + $0x20] sm:$0xff]
      %v2385 = vld [vmem:[%s4 + $0x28] sm:$0xff]
      %v2386 = vld [vmem:[%s4 + $0x30] sm:$0xff]
      %v2387 = vld [vmem:[%s4 + $0x38] sm:$0xff]
      %v2388 = vld [vmem:[%s4 + $0x40] sm:$0xff]
      %v2389 = vld [vmem:[%s4 + $0x48] sm:$0xff]
      %v2390 = vld [vmem:[%s4 + $0x50] sm:$0xff]
      %v2391 = vld [vmem:[%s4 + $0x58] sm:$0xff]
      %v2392 = vld [vmem:[%s4 + $0x60] sm:$0xff]
      %v2393 = vld [vmem:[%s4 + $0x68] sm:$0xff]
      %v2394 = vld [vmem:[%s4 + $0x70] sm:$0xff]
      %v2395 = vld [vmem:[%s4 + $0x78] sm:$0xff]
      %v2396 = vld [vmem:[%s4 + $0x80] sm:$0xff]
      %v2397 = vld [vmem:[%s4 + $0x88] sm:$0xff]
      %v2398 = vld [vmem:[%s4 + $0x90] sm:$0xff]
      %v2399 = vld [vmem:[%s4 + $0x98] sm:$0xff]
      %v2400 = vld [vmem:[%s4 + $0xa0] sm:$0xff]
      %v2401 = vld [vmem:[%s4 + $0xa8] sm:$0xff]
      %v2402 = vld [vmem:[%s4 + $0xb0] sm:$0xff]
      %v2403 = vld [vmem:[%s4 + $0xb8] sm:$0xff]
      %v2404 = vld [vmem:[%s4 + $0xc0] sm:$0xff]
      %v2405 = vld [vmem:[%s4 + $0xc8] sm:$0xff]
      %v2406 = vld [vmem:[%s4 + $0xd0] sm:$0xff]
      %v2407 = vld [vmem:[%s4 + $0xd8] sm:$0xff]
      %v2408 = vld [vmem:[%s4 + $0xe0] sm:$0xff]
      %v2409 = vld [vmem:[%s4 + $0xe8] sm:$0xff]
      %v2410 = vld [vmem:[%s4 + $0xf0] sm:$0xff]
      %v2411 = vld [vmem:[%s4 + $0xf8] sm:$0xff]
      %v2412 = vld [vmem:[%s4 + $0x100] sm:$0xff]
      %v2413 = vld [vmem:[%s4 + $0x108] sm:$0xff]
      %v2414 = vld [vmem:[%s4 + $0x110] sm:$0xff]
      %v2415 = vld [vmem:[%s4 + $0x118] sm:$0xff]
      %v2416 = vld [vmem:[%s4 + $0x120] sm:$0xff]
      %v2417 = vld [vmem:[%s4 + $0x128] sm:$0xff]
      %v2418 = vld [vmem:[%s4 + $0x130] sm:$0xff]
      %v2419 = vld [vmem:[%s4 + $0x138] sm:$0xff]
      %v2420 = vld [vmem:[%s6] sm:$0xff]
      %v2421 = vld [vmem:[%s6 + $0x8] sm:$0xff]
      %v2422 = vld [vmem:[%s6 + $0x10] sm:$0xff]
      %v2423 = vld [vmem:[%s6 + $0x18] sm:$0xff]
      %v2424 = vld [vmem:[%s6 + $0x20] sm:$0xff]
      %v2425 = vld [vmem:[%s6 + $0x28] sm:$0xff]
      %v2426 = vld [vmem:[%s6 + $0x30] sm:$0xff]
      %v2427 = vld [vmem:[%s6 + $0x38] sm:$0xff]
      %v2428 = vld [vmem:[%s6 + $0x40] sm:$0xff]
      %v2429 = vld [vmem:[%s6 + $0x48] sm:$0xff]
      %v2430 = vld [vmem:[%s6 + $0x50] sm:$0xff]
      %v2431 = vld [vmem:[%s6 + $0x58] sm:$0xff]
      %v2432 = vld [vmem:[%s7] sm:$0x1]
      %v2434 = vlaneseq
      %v2435 = vshrl.u32 %v2434, 7
      %v2436 = vsub.s32 0, %v2435
      %v2437 = vrot.slane %v2432, %v2436
      %vm2439 = vcmask 785408
      %v2441 = vsel %vm2439, %v2372, 0
      %v2444 = vsel %vm2439, %v2373, 0
      %v2447 = vsel %vm2439, %v2374, 0
      %v2450 = vsel %vm2439, %v2375, 0
      %v2453 = vsel %vm2439, %v2376, 0
      %v2456 = vsel %vm2439, %v2377, 0
      %v2459 = vsel %vm2439, %v2378, 0
      %v2462 = vsel %vm2439, %v2379, 0
      %2464 = vmatprep.subr.mxu0 0.0
      %2465 = vmatpush1.msra.mxu0 0.0
      %2466 = vmatprep.subr.mxu0 0.0
      %2467 = vmatpush1.msra.mxu0 0.0
      %2468 = vmatprep.subr.mxu0 0.0
      %2469 = vmatpush1.msra.mxu0 0.0
      %2470 = vmatprep.subr.mxu0 0.0
      %2471 = vmatpush1.msra.mxu0 0.0
      %2472 = vmatprep.subr.mxu0 0.0
      %2473 = vmatpush1.msra.mxu0 %v2431
      %2474 = vmatprep.subr.mxu0 0.0
      %2475 = vmatpush1.msra.mxu0 %v2430
      %2476 = vmatprep.subr.mxu0 0.0
      %2477 = vmatpush1.msra.mxu0 %v2429
      %2478 = vmatprep.subr.mxu0 0.0
      %2479 = vmatpush1.msra.mxu0 %v2428
      %2480 = vmatprep.subr.mxu0 0.0
      %2481 = vmatpush1.msra.mxu0 %v2427
      %2482 = vmatprep.subr.mxu0 0.0
      %2483 = vmatpush1.msra.mxu0 %v2426
      %2484 = vmatprep.subr.mxu0 0.0
      %2485 = vmatpush1.msra.mxu0 %v2425
      %2486 = vmatprep.subr.mxu0 0.0
      %2487 = vmatpush1.msra.mxu0 %v2424
      %2488 = vmatprep.subr.mxu0 0.0
      %2489 = vmatpush1.msra.mxu0 %v2423
      %2490 = vmatprep.subr.mxu0 0.0
      %2491 = vmatpush1.msra.mxu0 %v2422
      %2492 = vmatprep.subr.mxu0 0.0
      %2493 = vmatpush1.msra.mxu0 %v2421
      %2494 = vmatprep.subr.mxu0 0.0
      %2495 = vmatpush1.msra.mxu0 %v2420
      %2496 = vmatprep.subr.mxu0 0.0
      %2497 = vmatpush2.msra.mxu0 0.0
      %2498 = vmatprep.subr.mxu0 0.0
      %2499 = vmatpush2.msra.mxu0 0.0
      %2500 = vmatprep.subr.mxu0 0.0
      %2501 = vmatpush2.msra.mxu0 0.0
      %2502 = vmatprep.subr.mxu0 0.0
      %2503 = vmatpush2.msra.mxu0 0.0
      %2504 = vmatprep.subr.mxu0 0.0
      %2505 = vmatpush2.msra.mxu0 0.0
      %2506 = vmatprep.subr.mxu0 0.0
      %2507 = vmatpush2.msra.mxu0 0.0
      %2508 = vmatprep.subr.mxu0 0.0
      %2509 = vmatpush2.msra.mxu0 0.0
      %2510 = vmatprep.subr.mxu0 0.0
      %2511 = vmatpush2.msra.mxu0 0.0
      %2512 = vmatprep.subr.mxu0 0.0
      %2513 = vmatpush2.msra.mxu0 0.0
      %2514 = vmatprep.subr.mxu0 0.0
      %2515 = vmatpush2.msra.mxu0 0.0
      %2516 = vmatprep.subr.mxu0 0.0
      %2517 = vmatpush2.msra.mxu0 0.0
      %2518 = vmatprep.subr.mxu0 0.0
      %2519 = vmatpush2.msra.mxu0 0.0
      %2520 = vmatprep.subr.mxu0 0.0
      %2521 = vmatpush2.msra.mxu0 0.0
      %2522 = vmatprep.subr.mxu0 0.0
      %2523 = vmatpush2.msra.mxu0 0.0
      %2524 = vmatprep.subr.mxu0 0.0
      %2525 = vmatpush2.msra.mxu0 0.0
      %2526 = vmatprep.subr.mxu0 0.0
      %2527 = vmatpush2.msra.mxu0 0.0
      %2528 = vmatprep.mubr.f32.mxu0 0.0
      %2529 = vmatmul.mubr.f32.gmra.mxu0 %v2441
      %v2530 = vpop.f32.mrf.mxu0
      %v2531 = vadd.f32 %v2437, %v2530
      %v2532 = vpop.f32.mrf.mxu0
      %2533 = vmatprep.mubr.f32.mxu0 0.0
      %2534 = vmatmul.mubr.f32.gmra.mxu0 %v2444
      %v2535 = vpop.f32.mrf.mxu0
      %v2536 = vadd.f32 %v2437, %v2535
      %v2537 = vpop.f32.mrf.mxu0
      %2538 = vmatprep.mubr.f32.mxu0 0.0
      %2539 = vmatmul.mubr.f32.gmra.mxu0 %v2447
      %v2540 = vpop.f32.mrf.mxu0
      %v2541 = vadd.f32 %v2437, %v2540
      %v2542 = vpop.f32.mrf.mxu0
      %2543 = vmatprep.mubr.f32.mxu0 0.0
      %2544 = vmatmul.mubr.f32.gmra.mxu0 %v2450
      %v2545 = vpop.f32.mrf.mxu0
      %v2546 = vadd.f32 %v2437, %v2545
      %v2547 = vpop.f32.mrf.mxu0
      %2548 = vmatprep.mubr.f32.mxu0 0.0
      %2549 = vmatmul.mubr.f32.gmra.mxu0 %v2453
      %v2550 = vpop.f32.mrf.mxu0
      %v2551 = vadd.f32 %v2437, %v2550
      %v2552 = vpop.f32.mrf.mxu0
      %2553 = vmatprep.mubr.f32.mxu0 0.0
      %2554 = vmatmul.mubr.f32.gmra.mxu0 %v2456
      %v2555 = vpop.f32.mrf.mxu0
      %v2556 = vadd.f32 %v2437, %v2555
      %v2557 = vpop.f32.mrf.mxu0
      %2558 = vmatprep.mubr.f32.mxu0 0.0
      %2559 = vmatmul.mubr.f32.gmra.mxu0 %v2459
      %v2560 = vpop.f32.mrf.mxu0
      %v2561 = vadd.f32 %v2437, %v2560
      %v2562 = vpop.f32.mrf.mxu0
      %2563 = vmatprep.mubr.f32.mxu0 0.0
      %2564 = vmatmul.mubr.f32.gmra.mxu0 %v2462
      %v2565 = vpop.f32.mrf.mxu0
      %v2566 = vadd.f32 %v2437, %v2565
      %v2567 = vpop.f32.mrf.mxu0
      %2568 = vdwg.mxu0
      %v2569 = vmax.f32 %v2531, 0.0
      %v2570 = vmax.f32 %v2536, 0.0
      %v2571 = vmax.f32 %v2541, 0.0
      %v2572 = vmax.f32 %v2546, 0.0
      %v2573 = vmax.f32 %v2551, 0.0
      %v2574 = vmax.f32 %v2556, 0.0
      %v2575 = vmax.f32 %v2561, 0.0
      %v2576 = vmax.f32 %v2566, 0.0
      %v2577 = vld [vmem:[%s8] sm:$0xff]
      %v2578 = vld [vmem:[%s8 + $0x8] sm:$0xff]
      %v2579 = vld [vmem:[%s8 + $0x10] sm:$0xff]
      %v2580 = vld [vmem:[%s8 + $0x18] sm:$0xff]
      %v2581 = vld [vmem:[%s8 + $0x20] sm:$0xff]
      %v2582 = vld [vmem:[%s8 + $0x28] sm:$0xff]
      %v2583 = vld [vmem:[%s8 + $0x30] sm:$0xff]
      %v2584 = vld [vmem:[%s8 + $0x38] sm:$0xff]
      %v2585 = vld [vmem:[%s8 + $0x40] sm:$0xff]
      %v2586 = vld [vmem:[%s8 + $0x48] sm:$0xff]
      %v2587 = vld [vmem:[%s8 + $0x50] sm:$0xff]
      %v2588 = vld [vmem:[%s8 + $0x58] sm:$0xff]
      %v2589 = vld [vmem:[%s8 + $0x60] sm:$0xff]
      %v2590 = vld [vmem:[%s8 + $0x68] sm:$0xff]
      %v2591 = vld [vmem:[%s8 + $0x70] sm:$0xff]
      %v2592 = vld [vmem:[%s8 + $0x78] sm:$0xff]
      %v2593 = vld [vmem:[%s8 + $0x80] sm:$0xff]
      %v2594 = vld [vmem:[%s8 + $0x88] sm:$0xff]
      %vm2595 = vcmask 130048
      %v2597 = vsel %vm2595, %v2569, 0
      %v2600 = vsel %vm2595, %v2570, 0
      %v2603 = vsel %vm2595, %v2571, 0
      %v2606 = vsel %vm2595, %v2572, 0
      %v2609 = vsel %vm2595, %v2573, 0
      %v2612 = vsel %vm2595, %v2574, 0
      %v2615 = vsel %vm2595, %v2575, 0
      %v2618 = vsel %vm2595, %v2576, 0
      %2620 = vmatprep.subr.mxu0 0.0
      %2621 = vmatpush1.msra.mxu0 0.0
      %2622 = vmatprep.subr.mxu0 0.0
      %2623 = vmatpush1.msra.mxu0 0.0
      %2624 = vmatprep.subr.mxu0 0.0
      %2625 = vmatpush1.msra.mxu0 0.0
      %2626 = vmatprep.subr.mxu0 0.0
      %2627 = vmatpush1.msra.mxu0 0.0
      %2628 = vmatprep.subr.mxu0 0.0
      %2629 = vmatpush1.msra.mxu0 0.0
      %2630 = vmatprep.subr.mxu0 0.0
      %2631 = vmatpush1.msra.mxu0 0.0
      %2632 = vmatprep.subr.mxu0 0.0
      %2633 = vmatpush1.msra.mxu0 0.0
      %2634 = vmatprep.subr.mxu0 0.0
      %2635 = vmatpush1.msra.mxu0 0.0
      %2636 = vmatprep.subr.mxu0 0.0
      %2637 = vmatpush1.msra.mxu0 0.0
      %2638 = vmatprep.subr.mxu0 0.0
      %2639 = vmatpush1.msra.mxu0 0.0
      %2640 = vmatprep.subr.mxu0 0.0
      %2641 = vmatpush1.msra.mxu0 0.0
      %2642 = vmatprep.subr.mxu0 0.0
      %2643 = vmatpush1.msra.mxu0 0.0
      %2644 = vmatprep.subr.mxu0 0.0
      %2645 = vmatpush1.msra.mxu0 0.0
      %2646 = vmatprep.subr.mxu0 0.0
      %2647 = vmatpush1.msra.mxu0 0.0
      %2648 = vmatprep.subr.mxu0 %v2587
      %2649 = vmatpush1.msra.mxu0 %v2586
      %2650 = vmatprep.subr.mxu0 %v2578
      %2651 = vmatpush1.msra.mxu0 %v2577
      %2652 = vmatprep.subr.mxu0 0.0
      %2653 = vmatpush2.msra.mxu0 0.0
      %2654 = vmatprep.subr.mxu0 0.0
      %2655 = vmatpush2.msra.mxu0 0.0
      %2656 = vmatprep.subr.mxu0 0.0
      %2657 = vmatpush2.msra.mxu0 0.0
      %2658 = vmatprep.subr.mxu0 0.0
      %2659 = vmatpush2.msra.mxu0 0.0
      %2660 = vmatprep.subr.mxu0 0.0
      %2661 = vmatpush2.msra.mxu0 0.0
      %2662 = vmatprep.subr.mxu0 0.0
      %2663 = vmatpush2.msra.mxu0 0.0
      %2664 = vmatprep.subr.mxu0 0.0
      %2665 = vmatpush2.msra.mxu0 0.0
      %2666 = vmatprep.subr.mxu0 0.0
      %2667 = vmatpush2.msra.mxu0 0.0
      %2668 = vmatprep.subr.mxu0 0.0
      %2669 = vmatpush2.msra.mxu0 0.0
      %2670 = vmatprep.subr.mxu0 0.0
      %2671 = vmatpush2.msra.mxu0 0.0
      %2672 = vmatprep.subr.mxu0 0.0
      %2673 = vmatpush2.msra.mxu0 0.0
      %2674 = vmatprep.subr.mxu0 0.0
      %2675 = vmatpush2.msra.mxu0 0.0
      %2676 = vmatprep.subr.mxu0 0.0
      %2677 = vmatpush2.msra.mxu0 0.0
      %2678 = vmatprep.subr.mxu0 0.0
      %2679 = vmatpush2.msra.mxu0 0.0
      %2680 = vmatprep.subr.mxu0 0.0
      %2681 = vmatpush2.msra.mxu0 0.0
      %2682 = vmatprep.subr.mxu0 0.0
      %2683 = vmatpush2.msra.mxu0 0.0
      %2684 = vmatprep.mubr.f32.mxu0 0.0
      %2685 = vmatmul.mubr.f32.gmra.mxu0 %v2597
      %v2686 = vpop.f32.mrf.mxu0
      %v2687 = vadd.f32 0.0, %v2686
      %v2688 = vpop.f32.mrf.mxu0
      %v2689 = vadd.f32 0.0, %v2688
      %2690 = vmatprep.mubr.f32.mxu0 0.0
      %2691 = vmatmul.mubr.f32.gmra.mxu0 %v2600
      %v2692 = vpop.f32.mrf.mxu0
      %v2693 = vadd.f32 0.0, %v2692
      %v2694 = vpop.f32.mrf.mxu0
      %v2695 = vadd.f32 0.0, %v2694
      %2696 = vmatprep.mubr.f32.mxu0 0.0
      %2697 = vmatmul.mubr.f32.gmra.mxu0 %v2603
      %v2698 = vpop.f32.mrf.mxu0
      %v2699 = vadd.f32 0.0, %v2698
      %v2700 = vpop.f32.mrf.mxu0
      %v2701 = vadd.f32 0.0, %v2700
      %2702 = vmatprep.mubr.f32.mxu0 0.0
      %2703 = vmatmul.mubr.f32.gmra.mxu0 %v2606
      %v2704 = vpop.f32.mrf.mxu0
      %v2705 = vadd.f32 0.0, %v2704
      %v2706 = vpop.f32.mrf.mxu0
      %v2707 = vadd.f32 0.0, %v2706
      %2708 = vmatprep.mubr.f32.mxu0 0.0
      %2709 = vmatmul.mubr.f32.gmra.mxu0 %v2609
      %v2710 = vpop.f32.mrf.mxu0
      %v2711 = vadd.f32 0.0, %v2710
      %v2712 = vpop.f32.mrf.mxu0
      %v2713 = vadd.f32 0.0, %v2712
      %2714 = vmatprep.mubr.f32.mxu0 0.0
      %2715 = vmatmul.mubr.f32.gmra.mxu0 %v2612
      %v2716 = vpop.f32.mrf.mxu0
      %v2717 = vadd.f32 0.0, %v2716
      %v2718 = vpop.f32.mrf.mxu0
      %v2719 = vadd.f32 0.0, %v2718
      %2720 = vmatprep.mubr.f32.mxu0 0.0
      %2721 = vmatmul.mubr.f32.gmra.mxu0 %v2615
      %v2722 = vpop.f32.mrf.mxu0
      %v2723 = vadd.f32 0.0, %v2722
      %v2724 = vpop.f32.mrf.mxu0
      %v2725 = vadd.f32 0.0, %v2724
      %2726 = vmatprep.mubr.f32.mxu0 0.0
      %2727 = vmatmul.mubr.f32.gmra.mxu0 %v2618
      %v2728 = vpop.f32.mrf.mxu0
      %v2729 = vadd.f32 0.0, %v2728
      %v2730 = vpop.f32.mrf.mxu0
      %v2731 = vadd.f32 0.0, %v2730
      %2732 = vdwg.mxu0
      %2733 = vmatprep.subr.mxu0 0.0
      %2734 = vmatpush1.msra.mxu0 0.0
      %2735 = vmatprep.subr.mxu0 0.0
      %2736 = vmatpush1.msra.mxu0 0.0
      %2737 = vmatprep.subr.mxu0 0.0
      %2738 = vmatpush1.msra.mxu0 0.0
      %2739 = vmatprep.subr.mxu0 0.0
      %2740 = vmatpush1.msra.mxu0 0.0
      %2741 = vmatprep.subr.mxu0 0.0
      %2742 = vmatpush1.msra.mxu0 0.0
      %2743 = vmatprep.subr.mxu0 0.0
      %2744 = vmatpush1.msra.mxu0 0.0
      %2745 = vmatprep.subr.mxu0 0.0
      %2746 = vmatpush1.msra.mxu0 0.0
      %2747 = vmatprep.subr.mxu0 0.0
      %2748 = vmatpush1.msra.mxu0 0.0
      %2749 = vmatprep.subr.mxu0 0.0
      %2750 = vmatpush1.msra.mxu0 0.0
      %2751 = vmatprep.subr.mxu0 0.0
      %2752 = vmatpush1.msra.mxu0 0.0
      %2753 = vmatprep.subr.mxu0 0.0
      %2754 = vmatpush1.msra.mxu0 0.0
      %2755 = vmatprep.subr.mxu0 0.0
      %2756 = vmatpush1.msra.mxu0 0.0
      %2757 = vmatprep.subr.mxu0 0.0
      %2758 = vmatpush1.msra.mxu0 0.0
      %2759 = vmatprep.subr.mxu0 0.0
      %2760 = vmatpush1.msra.mxu0 0.0
      %2761 = vmatprep.subr.mxu0 %v2589
      %2762 = vmatpush1.msra.mxu0 %v2588
      %2763 = vmatprep.subr.mxu0 %v2580
      %2764 = vmatpush1.msra.mxu0 %v2579
      %2765 = vmatprep.subr.mxu0 0.0
      %2766 = vmatpush2.msra.mxu0 0.0
      %2767 = vmatprep.subr.mxu0 0.0
      %2768 = vmatpush2.msra.mxu0 0.0
      %2769 = vmatprep.subr.mxu0 0.0
      %2770 = vmatpush2.msra.mxu0 0.0
      %2771 = vmatprep.subr.mxu0 0.0
      %2772 = vmatpush2.msra.mxu0 0.0
      %2773 = vmatprep.subr.mxu0 0.0
      %2774 = vmatpush2.msra.mxu0 0.0
      %2775 = vmatprep.subr.mxu0 0.0
      %2776 = vmatpush2.msra.mxu0 0.0
      %2777 = vmatprep.subr.mxu0 0.0
      %2778 = vmatpush2.msra.mxu0 0.0
      %2779 = vmatprep.subr.mxu0 0.0
      %2780 = vmatpush2.msra.mxu0 0.0
      %2781 = vmatprep.subr.mxu0 0.0
      %2782 = vmatpush2.msra.mxu0 0.0
      %2783 = vmatprep.subr.mxu0 0.0
      %2784 = vmatpush2.msra.mxu0 0.0
      %2785 = vmatprep.subr.mxu0 0.0
      %2786 = vmatpush2.msra.mxu0 0.0
      %2787 = vmatprep.subr.mxu0 0.0
      %2788 = vmatpush2.msra.mxu0 0.0
      %2789 = vmatprep.subr.mxu0 0.0
      %2790 = vmatpush2.msra.mxu0 0.0
      %2791 = vmatprep.subr.mxu0 0.0
      %2792 = vmatpush2.msra.mxu0 0.0
      %2793 = vmatprep.subr.mxu0 0.0
      %2794 = vmatpush2.msra.mxu0 0.0
      %2795 = vmatprep.subr.mxu0 0.0
      %2796 = vmatpush2.msra.mxu0 0.0
      %2797 = vmatprep.mubr.f32.mxu0 0.0
      %2798 = vmatmul.mubr.f32.gmra.mxu0 %v2597
      %v2799 = vpop.f32.mrf.mxu0
      %v2800 = vadd.f32 0.0, %v2799
      %v2801 = vpop.f32.mrf.mxu0
      %v2802 = vadd.f32 0.0, %v2801
      %2803 = vmatprep.mubr.f32.mxu0 0.0
      %2804 = vmatmul.mubr.f32.gmra.mxu0 %v2600
      %v2805 = vpop.f32.mrf.mxu0
      %v2806 = vadd.f32 0.0, %v2805
      %v2807 = vpop.f32.mrf.mxu0
      %v2808 = vadd.f32 0.0, %v2807
      %2809 = vmatprep.mubr.f32.mxu0 0.0
      %2810 = vmatmul.mubr.f32.gmra.mxu0 %v2603
      %v2811 = vpop.f32.mrf.mxu0
      %v2812 = vadd.f32 0.0, %v2811
      %v2813 = vpop.f32.mrf.mxu0
      %v2814 = vadd.f32 0.0, %v2813
      %2815 = vmatprep.mubr.f32.mxu0 0.0
      %2816 = vmatmul.mubr.f32.gmra.mxu0 %v2606
      %v2817 = vpop.f32.mrf.mxu0
      %v2818 = vadd.f32 0.0, %v2817
      %v2819 = vpop.f32.mrf.mxu0
      %v2820 = vadd.f32 0.0, %v2819
      %2821 = vmatprep.mubr.f32.mxu0 0.0
      %2822 = vmatmul.mubr.f32.gmra.mxu0 %v2609
      %v2823 = vpop.f32.mrf.mxu0
      %v2824 = vadd.f32 0.0, %v2823
      %v2825 = vpop.f32.mrf.mxu0
      %v2826 = vadd.f32 0.0, %v2825
      %2827 = vmatprep.mubr.f32.mxu0 0.0
      %2828 = vmatmul.mubr.f32.gmra.mxu0 %v2612
      %v2829 = vpop.f32.mrf.mxu0
      %v2830 = vadd.f32 0.0, %v2829
      %v2831 = vpop.f32.mrf.mxu0
      %v2832 = vadd.f32 0.0, %v2831
      %2833 = vmatprep.mubr.f32.mxu0 0.0
      %2834 = vmatmul.mubr.f32.gmra.mxu0 %v2615
      %v2835 = vpop.f32.mrf.mxu0
      %v2836 = vadd.f32 0.0, %v2835
      %v2837 = vpop.f32.mrf.mxu0
      %v2838 = vadd.f32 0.0, %v2837
      %2839 = vmatprep.mubr.f32.mxu0 0.0
      %2840 = vmatmul.mubr.f32.gmra.mxu0 %v2618
      %v2841 = vpop.f32.mrf.mxu0
      %v2842 = vadd.f32 0.0, %v2841
      %v2843 = vpop.f32.mrf.mxu0
      %v2844 = vadd.f32 0.0, %v2843
      %2845 = vdwg.mxu0
      %2846 = vmatprep.subr.mxu0 0.0
      %2847 = vmatpush1.msra.mxu0 0.0
      %2848 = vmatprep.subr.mxu0 0.0
      %2849 = vmatpush1.msra.mxu0 0.0
      %2850 = vmatprep.subr.mxu0 0.0
      %2851 = vmatpush1.msra.mxu0 0.0
      %2852 = vmatprep.subr.mxu0 0.0
      %2853 = vmatpush1.msra.mxu0 0.0
      %2854 = vmatprep.subr.mxu0 0.0
      %2855 = vmatpush1.msra.mxu0 0.0
      %2856 = vmatprep.subr.mxu0 0.0
      %2857 = vmatpush1.msra.mxu0 0.0
      %2858 = vmatprep.subr.mxu0 0.0
      %2859 = vmatpush1.msra.mxu0 0.0
      %2860 = vmatprep.subr.mxu0 0.0
      %2861 = vmatpush1.msra.mxu0 0.0
      %2862 = vmatprep.subr.mxu0 0.0
      %2863 = vmatpush1.msra.mxu0 0.0
      %2864 = vmatprep.subr.mxu0 0.0
      %2865 = vmatpush1.msra.mxu0 0.0
      %2866 = vmatprep.subr.mxu0 0.0
      %2867 = vmatpush1.msra.mxu0 0.0
      %2868 = vmatprep.subr.mxu0 0.0
      %2869 = vmatpush1.msra.mxu0 0.0
      %2870 = vmatprep.subr.mxu0 0.0
      %2871 = vmatpush1.msra.mxu0 0.0
      %2872 = vmatprep.subr.mxu0 0.0
      %2873 = vmatpush1.msra.mxu0 0.0
      %2874 = vmatprep.subr.mxu0 %v2591
      %2875 = vmatpush1.msra.mxu0 %v2590
      %2876 = vmatprep.subr.mxu0 %v2582
      %2877 = vmatpush1.msra.mxu0 %v2581
      %2878 = vmatprep.subr.mxu0 0.0
      %2879 = vmatpush2.msra.mxu0 0.0
      %2880 = vmatprep.subr.mxu0 0.0
      %2881 = vmatpush2.msra.mxu0 0.0
      %2882 = vmatprep.subr.mxu0 0.0
      %2883 = vmatpush2.msra.mxu0 0.0
      %2884 = vmatprep.subr.mxu0 0.0
      %2885 = vmatpush2.msra.mxu0 0.0
      %2886 = vmatprep.subr.mxu0 0.0
      %2887 = vmatpush2.msra.mxu0 0.0
      %2888 = vmatprep.subr.mxu0 0.0
      %2889 = vmatpush2.msra.mxu0 0.0
      %2890 = vmatprep.subr.mxu0 0.0
      %2891 = vmatpush2.msra.mxu0 0.0
      %2892 = vmatprep.subr.mxu0 0.0
      %2893 = vmatpush2.msra.mxu0 0.0
      %2894 = vmatprep.subr.mxu0 0.0
      %2895 = vmatpush2.msra.mxu0 0.0
      %2896 = vmatprep.subr.mxu0 0.0
      %2897 = vmatpush2.msra.mxu0 0.0
      %2898 = vmatprep.subr.mxu0 0.0
      %2899 = vmatpush2.msra.mxu0 0.0
      %2900 = vmatprep.subr.mxu0 0.0
      %2901 = vmatpush2.msra.mxu0 0.0
      %2902 = vmatprep.subr.mxu0 0.0
      %2903 = vmatpush2.msra.mxu0 0.0
      %2904 = vmatprep.subr.mxu0 0.0
      %2905 = vmatpush2.msra.mxu0 0.0
      %2906 = vmatprep.subr.mxu0 0.0
      %2907 = vmatpush2.msra.mxu0 0.0
      %2908 = vmatprep.subr.mxu0 0.0
      %2909 = vmatpush2.msra.mxu0 0.0
      %2910 = vmatprep.mubr.f32.mxu0 0.0
      %2911 = vmatmul.mubr.f32.gmra.mxu0 %v2597
      %v2912 = vpop.f32.mrf.mxu0
      %v2913 = vadd.f32 0.0, %v2912
      %v2914 = vpop.f32.mrf.mxu0
      %v2915 = vadd.f32 0.0, %v2914
      %2916 = vmatprep.mubr.f32.mxu0 0.0
      %2917 = vmatmul.mubr.f32.gmra.mxu0 %v2600
      %v2918 = vpop.f32.mrf.mxu0
      %v2919 = vadd.f32 0.0, %v2918
      %v2920 = vpop.f32.mrf.mxu0
      %v2921 = vadd.f32 0.0, %v2920
      %2922 = vmatprep.mubr.f32.mxu0 0.0
      %2923 = vmatmul.mubr.f32.gmra.mxu0 %v2603
      %v2924 = vpop.f32.mrf.mxu0
      %v2925 = vadd.f32 0.0, %v2924
      %v2926 = vpop.f32.mrf.mxu0
      %v2927 = vadd.f32 0.0, %v2926
      %2928 = vmatprep.mubr.f32.mxu0 0.0
      %2929 = vmatmul.mubr.f32.gmra.mxu0 %v2606
      %v2930 = vpop.f32.mrf.mxu0
      %v2931 = vadd.f32 0.0, %v2930
      %v2932 = vpop.f32.mrf.mxu0
      %v2933 = vadd.f32 0.0, %v2932
      %2934 = vmatprep.mubr.f32.mxu0 0.0
      %2935 = vmatmul.mubr.f32.gmra.mxu0 %v2609
      %v2936 = vpop.f32.mrf.mxu0
      %v2937 = vadd.f32 0.0, %v2936
      %v2938 = vpop.f32.mrf.mxu0
      %v2939 = vadd.f32 0.0, %v2938
      %2940 = vmatprep.mubr.f32.mxu0 0.0
      %2941 = vmatmul.mubr.f32.gmra.mxu0 %v2612
      %v2942 = vpop.f32.mrf.mxu0
      %v2943 = vadd.f32 0.0, %v2942
      %v2944 = vpop.f32.mrf.mxu0
      %v2945 = vadd.f32 0.0, %v2944
      %2946 = vmatprep.mubr.f32.mxu0 0.0
      %2947 = vmatmul.mubr.f32.gmra.mxu0 %v2615
      %v2948 = vpop.f32.mrf.mxu0
      %v2949 = vadd.f32 0.0, %v2948
      %v2950 = vpop.f32.mrf.mxu0
      %v2951 = vadd.f32 0.0, %v2950
      %2952 = vmatprep.mubr.f32.mxu0 0.0
      %2953 = vmatmul.mubr.f32.gmra.mxu0 %v2618
      %v2954 = vpop.f32.mrf.mxu0
      %v2955 = vadd.f32 0.0, %v2954
      %v2956 = vpop.f32.mrf.mxu0
      %v2957 = vadd.f32 0.0, %v2956
      %2958 = vdwg.mxu0
      %2959 = vmatprep.subr.mxu0 0.0
      %2960 = vmatpush1.msra.mxu0 0.0
      %2961 = vmatprep.subr.mxu0 0.0
      %2962 = vmatpush1.msra.mxu0 0.0
      %2963 = vmatprep.subr.mxu0 0.0
      %2964 = vmatpush1.msra.mxu0 0.0
      %2965 = vmatprep.subr.mxu0 0.0
      %2966 = vmatpush1.msra.mxu0 0.0
      %2967 = vmatprep.subr.mxu0 0.0
      %2968 = vmatpush1.msra.mxu0 0.0
      %2969 = vmatprep.subr.mxu0 0.0
      %2970 = vmatpush1.msra.mxu0 0.0
      %2971 = vmatprep.subr.mxu0 0.0
      %2972 = vmatpush1.msra.mxu0 0.0
      %2973 = vmatprep.subr.mxu0 0.0
      %2974 = vmatpush1.msra.mxu0 0.0
      %2975 = vmatprep.subr.mxu0 0.0
      %2976 = vmatpush1.msra.mxu0 0.0
      %2977 = vmatprep.subr.mxu0 0.0
      %2978 = vmatpush1.msra.mxu0 0.0
      %2979 = vmatprep.subr.mxu0 0.0
      %2980 = vmatpush1.msra.mxu0 0.0
      %2981 = vmatprep.subr.mxu0 0.0
      %2982 = vmatpush1.msra.mxu0 0.0
      %2983 = vmatprep.subr.mxu0 0.0
      %2984 = vmatpush1.msra.mxu0 0.0
      %2985 = vmatprep.subr.mxu0 0.0
      %2986 = vmatpush1.msra.mxu0 0.0
      %2987 = vmatprep.subr.mxu0 %v2593
      %2988 = vmatpush1.msra.mxu0 %v2592
      %2989 = vmatprep.subr.mxu0 %v2584
      %2990 = vmatpush1.msra.mxu0 %v2583
      %2991 = vmatprep.subr.mxu0 0.0
      %2992 = vmatpush2.msra.mxu0 0.0
      %2993 = vmatprep.subr.mxu0 0.0
      %2994 = vmatpush2.msra.mxu0 0.0
      %2995 = vmatprep.subr.mxu0 0.0
      %2996 = vmatpush2.msra.mxu0 0.0
      %2997 = vmatprep.subr.mxu0 0.0
      %2998 = vmatpush2.msra.mxu0 0.0
      %2999 = vmatprep.subr.mxu0 0.0
      %3000 = vmatpush2.msra.mxu0 0.0
      %3001 = vmatprep.subr.mxu0 0.0
      %3002 = vmatpush2.msra.mxu0 0.0
      %3003 = vmatprep.subr.mxu0 0.0
      %3004 = vmatpush2.msra.mxu0 0.0
      %3005 = vmatprep.subr.mxu0 0.0
      %3006 = vmatpush2.msra.mxu0 0.0
      %3007 = vmatprep.subr.mxu0 0.0
      %3008 = vmatpush2.msra.mxu0 0.0
      %3009 = vmatprep.subr.mxu0 0.0
      %3010 = vmatpush2.msra.mxu0 0.0
      %3011 = vmatprep.subr.mxu0 0.0
      %3012 = vmatpush2.msra.mxu0 0.0
      %3013 = vmatprep.subr.mxu0 0.0
      %3014 = vmatpush2.msra.mxu0 0.0
      %3015 = vmatprep.subr.mxu0 0.0
      %3016 = vmatpush2.msra.mxu0 0.0
      %3017 = vmatprep.subr.mxu0 0.0
      %3018 = vmatpush2.msra.mxu0 0.0
      %3019 = vmatprep.subr.mxu0 0.0
      %3020 = vmatpush2.msra.mxu0 0.0
      %3021 = vmatprep.subr.mxu0 0.0
      %3022 = vmatpush2.msra.mxu0 0.0
      %3023 = vmatprep.mubr.f32.mxu0 0.0
      %3024 = vmatmul.mubr.f32.gmra.mxu0 %v2597
      %v3025 = vpop.f32.mrf.mxu0
      %v3026 = vadd.f32 0.0, %v3025
      %v3027 = vpop.f32.mrf.mxu0
      %v3028 = vadd.f32 0.0, %v3027
      %3029 = vmatprep.mubr.f32.mxu0 0.0
      %3030 = vmatmul.mubr.f32.gmra.mxu0 %v2600
      %v3031 = vpop.f32.mrf.mxu0
      %v3032 = vadd.f32 0.0, %v3031
      %v3033 = vpop.f32.mrf.mxu0
      %v3034 = vadd.f32 0.0, %v3033
      %3035 = vmatprep.mubr.f32.mxu0 0.0
      %3036 = vmatmul.mubr.f32.gmra.mxu0 %v2603
      %v3037 = vpop.f32.mrf.mxu0
      %v3038 = vadd.f32 0.0, %v3037
      %v3039 = vpop.f32.mrf.mxu0
      %v3040 = vadd.f32 0.0, %v3039
      %3041 = vmatprep.mubr.f32.mxu0 0.0
      %3042 = vmatmul.mubr.f32.gmra.mxu0 %v2606
      %v3043 = vpop.f32.mrf.mxu0
      %v3044 = vadd.f32 0.0, %v3043
      %v3045 = vpop.f32.mrf.mxu0
      %v3046 = vadd.f32 0.0, %v3045
      %3047 = vmatprep.mubr.f32.mxu0 0.0
      %3048 = vmatmul.mubr.f32.gmra.mxu0 %v2609
      %v3049 = vpop.f32.mrf.mxu0
      %v3050 = vadd.f32 0.0, %v3049
      %v3051 = vpop.f32.mrf.mxu0
      %v3052 = vadd.f32 0.0, %v3051
      %3053 = vmatprep.mubr.f32.mxu0 0.0
      %3054 = vmatmul.mubr.f32.gmra.mxu0 %v2612
      %v3055 = vpop.f32.mrf.mxu0
      %v3056 = vadd.f32 0.0, %v3055
      %v3057 = vpop.f32.mrf.mxu0
      %v3058 = vadd.f32 0.0, %v3057
      %3059 = vmatprep.mubr.f32.mxu0 0.0
      %3060 = vmatmul.mubr.f32.gmra.mxu0 %v2615
      %v3061 = vpop.f32.mrf.mxu0
      %v3062 = vadd.f32 0.0, %v3061
      %v3063 = vpop.f32.mrf.mxu0
      %v3064 = vadd.f32 0.0, %v3063
      %3065 = vmatprep.mubr.f32.mxu0 0.0
      %3066 = vmatmul.mubr.f32.gmra.mxu0 %v2618
      %v3067 = vpop.f32.mrf.mxu0
      %v3068 = vadd.f32 0.0, %v3067
      %v3069 = vpop.f32.mrf.mxu0
      %v3070 = vadd.f32 0.0, %v3069
      %3071 = vdwg.mxu0
      %3072 = vmatprep.subr.mxu0 0.0
      %3073 = vmatpush1.msra.mxu0 0.0
      %3074 = vmatprep.subr.mxu0 0.0
      %3075 = vmatpush1.msra.mxu0 0.0
      %3076 = vmatprep.subr.mxu0 0.0
      %3077 = vmatpush1.msra.mxu0 0.0
      %3078 = vmatprep.subr.mxu0 0.0
      %3079 = vmatpush1.msra.mxu0 0.0
      %3080 = vmatprep.subr.mxu0 0.0
      %3081 = vmatpush1.msra.mxu0 0.0
      %3082 = vmatprep.subr.mxu0 0.0
      %3083 = vmatpush1.msra.mxu0 0.0
      %3084 = vmatprep.subr.mxu0 0.0
      %3085 = vmatpush1.msra.mxu0 0.0
      %3086 = vmatprep.subr.mxu0 0.0
      %3087 = vmatpush1.msra.mxu0 0.0
      %3088 = vmatprep.subr.mxu0 0.0
      %3089 = vmatpush1.msra.mxu0 0.0
      %3090 = vmatprep.subr.mxu0 0.0
      %3091 = vmatpush1.msra.mxu0 0.0
      %3092 = vmatprep.subr.mxu0 0.0
      %3093 = vmatpush1.msra.mxu0 0.0
      %3094 = vmatprep.subr.mxu0 0.0
      %3095 = vmatpush1.msra.mxu0 0.0
      %3096 = vmatprep.subr.mxu0 0.0
      %3097 = vmatpush1.msra.mxu0 0.0
      %3098 = vmatprep.subr.mxu0 0.0
      %3099 = vmatpush1.msra.mxu0 0.0
      %3100 = vmatprep.subr.mxu0 0.0
      %3101 = vmatpush1.msra.mxu0 %v2594
      %3102 = vmatprep.subr.mxu0 0.0
      %3103 = vmatpush1.msra.mxu0 %v2585
      %3104 = vmatprep.subr.mxu0 0.0
      %3105 = vmatpush2.msra.mxu0 0.0
      %3106 = vmatprep.subr.mxu0 0.0
      %3107 = vmatpush2.msra.mxu0 0.0
      %3108 = vmatprep.subr.mxu0 0.0
      %3109 = vmatpush2.msra.mxu0 0.0
      %3110 = vmatprep.subr.mxu0 0.0
      %3111 = vmatpush2.msra.mxu0 0.0
      %3112 = vmatprep.subr.mxu0 0.0
      %3113 = vmatpush2.msra.mxu0 0.0
      %3114 = vmatprep.subr.mxu0 0.0
      %3115 = vmatpush2.msra.mxu0 0.0
      %3116 = vmatprep.subr.mxu0 0.0
      %3117 = vmatpush2.msra.mxu0 0.0
      %3118 = vmatprep.subr.mxu0 0.0
      %3119 = vmatpush2.msra.mxu0 0.0
      %3120 = vmatprep.subr.mxu0 0.0
      %3121 = vmatpush2.msra.mxu0 0.0
      %3122 = vmatprep.subr.mxu0 0.0
      %3123 = vmatpush2.msra.mxu0 0.0
      %3124 = vmatprep.subr.mxu0 0.0
      %3125 = vmatpush2.msra.mxu0 0.0
      %3126 = vmatprep.subr.mxu0 0.0
      %3127 = vmatpush2.msra.mxu0 0.0
      %3128 = vmatprep.subr.mxu0 0.0
      %3129 = vmatpush2.msra.mxu0 0.0
      %3130 = vmatprep.subr.mxu0 0.0
      %3131 = vmatpush2.msra.mxu0 0.0
      %3132 = vmatprep.subr.mxu0 0.0
      %3133 = vmatpush2.msra.mxu0 0.0
      %3134 = vmatprep.subr.mxu0 0.0
      %3135 = vmatpush2.msra.mxu0 0.0
      %3136 = vmatprep.mubr.f32.mxu0 0.0
      %3137 = vmatmul.mubr.f32.gmra.mxu0 %v2597
      %v3138 = vpop.f32.mrf.mxu0
      %v3139 = vadd.f32 0.0, %v3138
      %v3140 = vpop.f32.mrf.mxu0
      %3141 = vmatprep.mubr.f32.mxu0 0.0
      %3142 = vmatmul.mubr.f32.gmra.mxu0 %v2600
      %v3143 = vpop.f32.mrf.mxu0
      %v3144 = vadd.f32 0.0, %v3143
      %v3145 = vpop.f32.mrf.mxu0
      %3146 = vmatprep.mubr.f32.mxu0 0.0
      %3147 = vmatmul.mubr.f32.gmra.mxu0 %v2603
      %v3148 = vpop.f32.mrf.mxu0
      %v3149 = vadd.f32 0.0, %v3148
      %v3150 = vpop.f32.mrf.mxu0
      %3151 = vmatprep.mubr.f32.mxu0 0.0
      %3152 = vmatmul.mubr.f32.gmra.mxu0 %v2606
      %v3153 = vpop.f32.mrf.mxu0
      %v3154 = vadd.f32 0.0, %v3153
      %v3155 = vpop.f32.mrf.mxu0
      %3156 = vmatprep.mubr.f32.mxu0 0.0
      %3157 = vmatmul.mubr.f32.gmra.mxu0 %v2609
      %v3158 = vpop.f32.mrf.mxu0
      %v3159 = vadd.f32 0.0, %v3158
      %v3160 = vpop.f32.mrf.mxu0
      %3161 = vmatprep.mubr.f32.mxu0 0.0
      %3162 = vmatmul.mubr.f32.gmra.mxu0 %v2612
      %v3163 = vpop.f32.mrf.mxu0
      %v3164 = vadd.f32 0.0, %v3163
      %v3165 = vpop.f32.mrf.mxu0
      %3166 = vmatprep.mubr.f32.mxu0 0.0
      %3167 = vmatmul.mubr.f32.gmra.mxu0 %v2615
      %v3168 = vpop.f32.mrf.mxu0
      %v3169 = vadd.f32 0.0, %v3168
      %v3170 = vpop.f32.mrf.mxu0
      %3171 = vmatprep.mubr.f32.mxu0 0.0
      %3172 = vmatmul.mubr.f32.gmra.mxu0 %v2618
      %v3173 = vpop.f32.mrf.mxu0
      %v3174 = vadd.f32 0.0, %v3173
      %v3175 = vpop.f32.mrf.mxu0
      %3176 = vdwg.mxu0
      %v3177 = vld [vmem:[%s9] sm:$0x1]
      %v3179 = vlaneseq
      %v3180 = vshrl.u32 %v3179, 7
      %v3181 = vsub.s32 0, %v3180
      %v3182 = vrot.slane %v3177, %v3181
      %vm3184 = vcmask 523264
      %v3186 = vsel %vm3184, %v2384, 0
      %v3189 = vsel %vm3184, %v2389, 0
      %v3192 = vsel %vm3184, %v2394, 0
      %v3195 = vsel %vm3184, %v2399, 0
      %v3198 = vsel %vm3184, %v2404, 0
      %v3201 = vsel %vm3184, %v2409, 0
      %v3204 = vsel %vm3184, %v2414, 0
      %v3207 = vsel %vm3184, %v2419, 0
      %3209 = vmatprep.subr.mxu0 0.0
      %3210 = vmatpush1.msra.mxu0 %v2731
      %3211 = vmatprep.subr.mxu0 0.0
      %3212 = vmatpush1.msra.mxu0 %v2725
      %3213 = vmatprep.subr.mxu0 0.0
      %3214 = vmatpush1.msra.mxu0 %v2719
      %3215 = vmatprep.subr.mxu0 0.0
      %3216 = vmatpush1.msra.mxu0 %v2713
      %3217 = vmatprep.subr.mxu0 0.0
      %3218 = vmatpush1.msra.mxu0 %v2707
      %3219 = vmatprep.subr.mxu0 0.0
      %3220 = vmatpush1.msra.mxu0 %v2701
      %3221 = vmatprep.subr.mxu0 0.0
      %3222 = vmatpush1.msra.mxu0 %v2695
      %3223 = vmatprep.subr.mxu0 0.0
      %3224 = vmatpush1.msra.mxu0 %v2689
      %3225 = vmatprep.subr.mxu0 0.0
      %3226 = vmatpush1.msra.mxu0 %v2729
      %3227 = vmatprep.subr.mxu0 0.0
      %3228 = vmatpush1.msra.mxu0 %v2723
      %3229 = vmatprep.subr.mxu0 0.0
      %3230 = vmatpush1.msra.mxu0 %v2717
      %3231 = vmatprep.subr.mxu0 0.0
      %3232 = vmatpush1.msra.mxu0 %v2711
      %3233 = vmatprep.subr.mxu0 0.0
      %3234 = vmatpush1.msra.mxu0 %v2705
      %3235 = vmatprep.subr.mxu0 0.0
      %3236 = vmatpush1.msra.mxu0 %v2699
      %3237 = vmatprep.subr.mxu0 0.0
      %3238 = vmatpush1.msra.mxu0 %v2693
      %3239 = vmatprep.subr.mxu0 0.0
      %3240 = vmatpush1.msra.mxu0 %v2687
      %3241 = vmatprep.subr.mxu0 0.0
      %3242 = vmatpush2.msra.mxu0 %v2844
      %3243 = vmatprep.subr.mxu0 0.0
      %3244 = vmatpush2.msra.mxu0 %v2838
      %3245 = vmatprep.subr.mxu0 0.0
      %3246 = vmatpush2.msra.mxu0 %v2832
      %3247 = vmatprep.subr.mxu0 0.0
      %3248 = vmatpush2.msra.mxu0 %v2826
      %3249 = vmatprep.subr.mxu0 0.0
      %3250 = vmatpush2.msra.mxu0 %v2820
      %3251 = vmatprep.subr.mxu0 0.0
      %3252 = vmatpush2.msra.mxu0 %v2814
      %3253 = vmatprep.subr.mxu0 0.0
      %3254 = vmatpush2.msra.mxu0 %v2808
      %3255 = vmatprep.subr.mxu0 0.0
      %3256 = vmatpush2.msra.mxu0 %v2802
      %3257 = vmatprep.subr.mxu0 0.0
      %3258 = vmatpush2.msra.mxu0 %v2842
      %3259 = vmatprep.subr.mxu0 0.0
      %3260 = vmatpush2.msra.mxu0 %v2836
      %3261 = vmatprep.subr.mxu0 0.0
      %3262 = vmatpush2.msra.mxu0 %v2830
      %3263 = vmatprep.subr.mxu0 0.0
      %3264 = vmatpush2.msra.mxu0 %v2824
      %3265 = vmatprep.subr.mxu0 0.0
      %3266 = vmatpush2.msra.mxu0 %v2818
      %3267 = vmatprep.subr.mxu0 0.0
      %3268 = vmatpush2.msra.mxu0 %v2812
      %3269 = vmatprep.subr.mxu0 0.0
      %3270 = vmatpush2.msra.mxu0 %v2806
      %3271 = vmatprep.subr.mxu0 0.0
      %3272 = vmatpush2.msra.mxu0 %v2800
      %3273 = vmatprep.mubr.f32.mxu0 %v2381
      %3274 = vmatmul.mubr.f32.gmra.mxu0 %v2380
      %v3275 = vpop.f32.mrf.mxu0
      %v3276 = vadd.f32 %v3182, %v3275
      %v3277 = vpop.f32.mrf.mxu0
      %3278 = vmatprep.mubr.f32.mxu0 %v2386
      %3279 = vmatmul.mubr.f32.gmra.mxu0 %v2385
      %v3280 = vpop.f32.mrf.mxu0
      %v3281 = vadd.f32 %v3182, %v3280
      %v3282 = vpop.f32.mrf.mxu0
      %3283 = vmatprep.mubr.f32.mxu0 %v2391
      %3284 = vmatmul.mubr.f32.gmra.mxu0 %v2390
      %v3285 = vpop.f32.mrf.mxu0
      %v3286 = vadd.f32 %v3182, %v3285
      %v3287 = vpop.f32.mrf.mxu0
      %3288 = vmatprep.mubr.f32.mxu0 %v2396
      %3289 = vmatmul.mubr.f32.gmra.mxu0 %v2395
      %v3290 = vpop.f32.mrf.mxu0
      %v3291 = vadd.f32 %v3182, %v3290
      %v3292 = vpop.f32.mrf.mxu0
      %3293 = vmatprep.mubr.f32.mxu0 %v2401
      %3294 = vmatmul.mubr.f32.gmra.mxu0 %v2400
      %v3295 = vpop.f32.mrf.mxu0
      %v3296 = vadd.f32 %v3182, %v3295
      %v3297 = vpop.f32.mrf.mxu0
      %3298 = vmatprep.mubr.f32.mxu0 %v2406
      %3299 = vmatmul.mubr.f32.gmra.mxu0 %v2405
      %v3300 = vpop.f32.mrf.mxu0
      %v3301 = vadd.f32 %v3182, %v3300
      %v3302 = vpop.f32.mrf.mxu0
      %3303 = vmatprep.mubr.f32.mxu0 %v2411
      %3304 = vmatmul.mubr.f32.gmra.mxu0 %v2410
      %v3305 = vpop.f32.mrf.mxu0
      %v3306 = vadd.f32 %v3182, %v3305
      %v3307 = vpop.f32.mrf.mxu0
      %3308 = vmatprep.mubr.f32.mxu0 %v2416
      %3309 = vmatmul.mubr.f32.gmra.mxu0 %v2415
      %v3310 = vpop.f32.mrf.mxu0
      %v3311 = vadd.f32 %v3182, %v3310
      %v3312 = vpop.f32.mrf.mxu0
      %3313 = vdwg.mxu0
      %3314 = vmatprep.subr.mxu0 0.0
      %3315 = vmatpush1.msra.mxu0 %v2957
      %3316 = vmatprep.subr.mxu0 0.0
      %3317 = vmatpush1.msra.mxu0 %v2951
      %3318 = vmatprep.subr.mxu0 0.0
      %3319 = vmatpush1.msra.mxu0 %v2945
      %3320 = vmatprep.subr.mxu0 0.0
      %3321 = vmatpush1.msra.mxu0 %v2939
      %3322 = vmatprep.subr.mxu0 0.0
      %3323 = vmatpush1.msra.mxu0 %v2933
      %3324 = vmatprep.subr.mxu0 0.0
      %3325 = vmatpush1.msra.mxu0 %v2927
      %3326 = vmatprep.subr.mxu0 0.0
      %3327 = vmatpush1.msra.mxu0 %v2921
      %3328 = vmatprep.subr.mxu0 0.0
      %3329 = vmatpush1.msra.mxu0 %v2915
      %3330 = vmatprep.subr.mxu0 0.0
      %3331 = vmatpush1.msra.mxu0 %v2955
      %3332 = vmatprep.subr.mxu0 0.0
      %3333 = vmatpush1.msra.mxu0 %v2949
      %3334 = vmatprep.subr.mxu0 0.0
      %3335 = vmatpush1.msra.mxu0 %v2943
      %3336 = vmatprep.subr.mxu0 0.0
      %3337 = vmatpush1.msra.mxu0 %v2937
      %3338 = vmatprep.subr.mxu0 0.0
      %3339 = vmatpush1.msra.mxu0 %v2931
      %3340 = vmatprep.subr.mxu0 0.0
      %3341 = vmatpush1.msra.mxu0 %v2925
      %3342 = vmatprep.subr.mxu0 0.0
      %3343 = vmatpush1.msra.mxu0 %v2919
      %3344 = vmatprep.subr.mxu0 0.0
      %3345 = vmatpush1.msra.mxu0 %v2913
      %3346 = vmatprep.subr.mxu0 0.0
      %3347 = vmatpush2.msra.mxu0 %v3070
      %3348 = vmatprep.subr.mxu0 0.0
      %3349 = vmatpush2.msra.mxu0 %v3064
      %3350 = vmatprep.subr.mxu0 0.0
      %3351 = vmatpush2.msra.mxu0 %v3058
      %3352 = vmatprep.subr.mxu0 0.0
      %3353 = vmatpush2.msra.mxu0 %v3052
      %3354 = vmatprep.subr.mxu0 0.0
      %3355 = vmatpush2.msra.mxu0 %v3046
      %3356 = vmatprep.subr.mxu0 0.0
      %3357 = vmatpush2.msra.mxu0 %v3040
      %3358 = vmatprep.subr.mxu0 0.0
      %3359 = vmatpush2.msra.mxu0 %v3034
      %3360 = vmatprep.subr.mxu0 0.0
      %3361 = vmatpush2.msra.mxu0 %v3028
      %3362 = vmatprep.subr.mxu0 0.0
      %3363 = vmatpush2.msra.mxu0 %v3068
      %3364 = vmatprep.subr.mxu0 0.0
      %3365 = vmatpush2.msra.mxu0 %v3062
      %3366 = vmatprep.subr.mxu0 0.0
      %3367 = vmatpush2.msra.mxu0 %v3056
      %3368 = vmatprep.subr.mxu0 0.0
      %3369 = vmatpush2.msra.mxu0 %v3050
      %3370 = vmatprep.subr.mxu0 0.0
      %3371 = vmatpush2.msra.mxu0 %v3044
      %3372 = vmatprep.subr.mxu0 0.0
      %3373 = vmatpush2.msra.mxu0 %v3038
      %3374 = vmatprep.subr.mxu0 0.0
      %3375 = vmatpush2.msra.mxu0 %v3032
      %3376 = vmatprep.subr.mxu0 0.0
      %3377 = vmatpush2.msra.mxu0 %v3026
      %3378 = vmatprep.mubr.f32.mxu0 %v2383
      %3379 = vmatmul.mubr.f32.gmra.mxu0 %v2382
      %v3380 = vpop.f32.mrf.mxu0
      %v3381 = vadd.f32 %v3276, %v3380
      %v3382 = vpop.f32.mrf.mxu0
      %3383 = vmatprep.mubr.f32.mxu0 %v2388
      %3384 = vmatmul.mubr.f32.gmra.mxu0 %v2387
      %v3385 = vpop.f32.mrf.mxu0
      %v3386 = vadd.f32 %v3281, %v3385
      %v3387 = vpop.f32.mrf.mxu0
      %3388 = vmatprep.mubr.f32.mxu0 %v2393
      %3389 = vmatmul.mubr.f32.gmra.mxu0 %v2392
      %v3390 = vpop.f32.mrf.mxu0
      %v3391 = vadd.f32 %v3286, %v3390
      %v3392 = vpop.f32.mrf.mxu0
      %3393 = vmatprep.mubr.f32.mxu0 %v2398
      %3394 = vmatmul.mubr.f32.gmra.mxu0 %v2397
      %v3395 = vpop.f32.mrf.mxu0
      %v3396 = vadd.f32 %v3291, %v3395
      %v3397 = vpop.f32.mrf.mxu0
      %3398 = vmatprep.mubr.f32.mxu0 %v2403
      %3399 = vmatmul.mubr.f32.gmra.mxu0 %v2402
      %v3400 = vpop.f32.mrf.mxu0
      %v3401 = vadd.f32 %v3296, %v3400
      %v3402 = vpop.f32.mrf.mxu0
      %3403 = vmatprep.mubr.f32.mxu0 %v2408
      %3404 = vmatmul.mubr.f32.gmra.mxu0 %v2407
      %v3405 = vpop.f32.mrf.mxu0
      %v3406 = vadd.f32 %v3301, %v3405
      %v3407 = vpop.f32.mrf.mxu0
      %3408 = vmatprep.mubr.f32.mxu0 %v2413
      %3409 = vmatmul.mubr.f32.gmra.mxu0 %v2412
      %v3410 = vpop.f32.mrf.mxu0
      %v3411 = vadd.f32 %v3306, %v3410
      %v3412 = vpop.f32.mrf.mxu0
      %3413 = vmatprep.mubr.f32.mxu0 %v2418
      %3414 = vmatmul.mubr.f32.gmra.mxu0 %v2417
      %v3415 = vpop.f32.mrf.mxu0
      %v3416 = vadd.f32 %v3311, %v3415
      %v3417 = vpop.f32.mrf.mxu0
      %3418 = vdwg.mxu0
      %3419 = vmatprep.subr.mxu0 0.0
      %3420 = vmatpush1.msra.mxu0 0.0
      %3421 = vmatprep.subr.mxu0 0.0
      %3422 = vmatpush1.msra.mxu0 0.0
      %3423 = vmatprep.subr.mxu0 0.0
      %3424 = vmatpush1.msra.mxu0 0.0
      %3425 = vmatprep.subr.mxu0 0.0
      %3426 = vmatpush1.msra.mxu0 0.0
      %3427 = vmatprep.subr.mxu0 0.0
      %3428 = vmatpush1.msra.mxu0 0.0
      %3429 = vmatprep.subr.mxu0 0.0
      %3430 = vmatpush1.msra.mxu0 0.0
      %3431 = vmatprep.subr.mxu0 0.0
      %3432 = vmatpush1.msra.mxu0 0.0
      %3433 = vmatprep.subr.mxu0 0.0
      %3434 = vmatpush1.msra.mxu0 0.0
      %3435 = vmatprep.subr.mxu0 0.0
      %3436 = vmatpush1.msra.mxu0 %v3174
      %3437 = vmatprep.subr.mxu0 0.0
      %3438 = vmatpush1.msra.mxu0 %v3169
      %3439 = vmatprep.subr.mxu0 0.0
      %3440 = vmatpush1.msra.mxu0 %v3164
      %3441 = vmatprep.subr.mxu0 0.0
      %3442 = vmatpush1.msra.mxu0 %v3159
      %3443 = vmatprep.subr.mxu0 0.0
      %3444 = vmatpush1.msra.mxu0 %v3154
      %3445 = vmatprep.subr.mxu0 0.0
      %3446 = vmatpush1.msra.mxu0 %v3149
      %3447 = vmatprep.subr.mxu0 0.0
      %3448 = vmatpush1.msra.mxu0 %v3144
      %3449 = vmatprep.subr.mxu0 0.0
      %3450 = vmatpush1.msra.mxu0 %v3139
      %3451 = vmatprep.subr.mxu0 0.0
      %3452 = vmatpush2.msra.mxu0 0.0
      %3453 = vmatprep.subr.mxu0 0.0
      %3454 = vmatpush2.msra.mxu0 0.0
      %3455 = vmatprep.subr.mxu0 0.0
      %3456 = vmatpush2.msra.mxu0 0.0
      %3457 = vmatprep.subr.mxu0 0.0
      %3458 = vmatpush2.msra.mxu0 0.0
      %3459 = vmatprep.subr.mxu0 0.0
      %3460 = vmatpush2.msra.mxu0 0.0
      %3461 = vmatprep.subr.mxu0 0.0
      %3462 = vmatpush2.msra.mxu0 0.0
      %3463 = vmatprep.subr.mxu0 0.0
      %3464 = vmatpush2.msra.mxu0 0.0
      %3465 = vmatprep.subr.mxu0 0.0
      %3466 = vmatpush2.msra.mxu0 0.0
      %3467 = vmatprep.subr.mxu0 0.0
      %3468 = vmatpush2.msra.mxu0 0.0
      %3469 = vmatprep.subr.mxu0 0.0
      %3470 = vmatpush2.msra.mxu0 0.0
      %3471 = vmatprep.subr.mxu0 0.0
      %3472 = vmatpush2.msra.mxu0 0.0
      %3473 = vmatprep.subr.mxu0 0.0
      %3474 = vmatpush2.msra.mxu0 0.0
      %3475 = vmatprep.subr.mxu0 0.0
      %3476 = vmatpush2.msra.mxu0 0.0
      %3477 = vmatprep.subr.mxu0 0.0
      %3478 = vmatpush2.msra.mxu0 0.0
      %3479 = vmatprep.subr.mxu0 0.0
      %3480 = vmatpush2.msra.mxu0 0.0
      %3481 = vmatprep.subr.mxu0 0.0
      %3482 = vmatpush2.msra.mxu0 0.0
      %3483 = vmatprep.mubr.f32.mxu0 0.0
      %3484 = vmatmul.mubr.f32.gmra.mxu0 %v3186
      %v3485 = vpop.f32.mrf.mxu0
      %v3486 = vadd.f32 %v3381, %v3485
      %v3487 = vpop.f32.mrf.mxu0
      %3488 = vmatprep.mubr.f32.mxu0 0.0
      %3489 = vmatmul.mubr.f32.gmra.mxu0 %v3189
      %v3490 = vpop.f32.mrf.mxu0
      %v3491 = vadd.f32 %v3386, %v3490
      %v3492 = vpop.f32.mrf.mxu0
      %3493 = vmatprep.mubr.f32.mxu0 0.0
      %3494 = vmatmul.mubr.f32.gmra.mxu0 %v3192
      %v3495 = vpop.f32.mrf.mxu0
      %v3496 = vadd.f32 %v3391, %v3495
      %v3497 = vpop.f32.mrf.mxu0
      %3498 = vmatprep.mubr.f32.mxu0 0.0
      %3499 = vmatmul.mubr.f32.gmra.mxu0 %v3195
      %v3500 = vpop.f32.mrf.mxu0
      %v3501 = vadd.f32 %v3396, %v3500
      %v3502 = vpop.f32.mrf.mxu0
      %3503 = vmatprep.mubr.f32.mxu0 0.0
      %3504 = vmatmul.mubr.f32.gmra.mxu0 %v3198
      %v3505 = vpop.f32.mrf.mxu0
      %v3506 = vadd.f32 %v3401, %v3505
      %v3507 = vpop.f32.mrf.mxu0
      %3508 = vmatprep.mubr.f32.mxu0 0.0
      %3509 = vmatmul.mubr.f32.gmra.mxu0 %v3201
      %v3510 = vpop.f32.mrf.mxu0
      %v3511 = vadd.f32 %v3406, %v3510
      %v3512 = vpop.f32.mrf.mxu0
      %3513 = vmatprep.mubr.f32.mxu0 0.0
      %3514 = vmatmul.mubr.f32.gmra.mxu0 %v3204
      %v3515 = vpop.f32.mrf.mxu0
      %v3516 = vadd.f32 %v3411, %v3515
      %v3517 = vpop.f32.mrf.mxu0
      %3518 = vmatprep.mubr.f32.mxu0 0.0
      %3519 = vmatmul.mubr.f32.gmra.mxu0 %v3207
      %v3520 = vpop.f32.mrf.mxu0
      %v3521 = vadd.f32 %v3416, %v3520
      %v3522 = vpop.f32.mrf.mxu0
      %3523 = vdwg.mxu0
      %v3524 = vmax.f32 %v3486, 0.0
      %v3525 = vmax.f32 %v3491, 0.0
      %v3526 = vmax.f32 %v3496, 0.0
      %v3527 = vmax.f32 %v3501, 0.0
      %v3528 = vmax.f32 %v3506, 0.0
      %v3529 = vmax.f32 %v3511, 0.0
      %v3530 = vmax.f32 %v3516, 0.0
      %v3531 = vmax.f32 %v3521, 0.0
      %v3532 = vld [vmem:[%s10] sm:$0xff]
      %v3533 = vld [vmem:[%s10 + $0x8] sm:$0xff]
      %v3534 = vld [vmem:[%s10 + $0x10] sm:$0xff]
      %v3535 = vld [vmem:[%s10 + $0x18] sm:$0xff]
      %v3536 = vld [vmem:[%s10 + $0x20] sm:$0xff]
      %v3537 = vld [vmem:[%s10 + $0x28] sm:$0xff]
      %v3538 = vld [vmem:[%s10 + $0x30] sm:$0xff]
      %v3539 = vld [vmem:[%s10 + $0x38] sm:$0xff]
      %v3540 = vld [vmem:[%s10 + $0x40] sm:$0xff]
      %v3541 = vld [vmem:[%s10 + $0x48] sm:$0xff]
      %v3542 = vld [vmem:[%s10 + $0x50] sm:$0xff]
      %v3543 = vld [vmem:[%s10 + $0x58] sm:$0xff]
      %v3544 = vld [vmem:[%s10 + $0x60] sm:$0xff]
      %v3545 = vld [vmem:[%s10 + $0x68] sm:$0xff]
      %v3546 = vld [vmem:[%s10 + $0x70] sm:$0xff]
      %v3547 = vld [vmem:[%s10 + $0x78] sm:$0xff]
      %v3548 = vld [vmem:[%s11] sm:$0x1]
      %v3550 = vlaneseq
      %v3551 = vshrl.u32 %v3550, 7
      %v3552 = vsub.s32 0, %v3551
      %v3553 = vrot.slane %v3548, %v3552
      %3555 = vmatprep.subr.mxu0 0.0
      %3556 = vmatpush1.msra.mxu0 %v3547
      %3557 = vmatprep.subr.mxu0 0.0
      %3558 = vmatpush1.msra.mxu0 %v3546
      %3559 = vmatprep.subr.mxu0 0.0
      %3560 = vmatpush1.msra.mxu0 %v3545
      %3561 = vmatprep.subr.mxu0 0.0
      %3562 = vmatpush1.msra.mxu0 %v3544
      %3563 = vmatprep.subr.mxu0 0.0
      %3564 = vmatpush1.msra.mxu0 %v3543
      %3565 = vmatprep.subr.mxu0 0.0
      %3566 = vmatpush1.msra.mxu0 %v3542
      %3567 = vmatprep.subr.mxu0 0.0
      %3568 = vmatpush1.msra.mxu0 %v3541
      %3569 = vmatprep.subr.mxu0 0.0
      %3570 = vmatpush1.msra.mxu0 %v3540
      %3571 = vmatprep.subr.mxu0 0.0
      %3572 = vmatpush1.msra.mxu0 %v3539
      %3573 = vmatprep.subr.mxu0 0.0
      %3574 = vmatpush1.msra.mxu0 %v3538
      %3575 = vmatprep.subr.mxu0 0.0
      %3576 = vmatpush1.msra.mxu0 %v3537
      %3577 = vmatprep.subr.mxu0 0.0
      %3578 = vmatpush1.msra.mxu0 %v3536
      %3579 = vmatprep.subr.mxu0 0.0
      %3580 = vmatpush1.msra.mxu0 %v3535
      %3581 = vmatprep.subr.mxu0 0.0
      %3582 = vmatpush1.msra.mxu0 %v3534
      %3583 = vmatprep.subr.mxu0 0.0
      %3584 = vmatpush1.msra.mxu0 %v3533
      %3585 = vmatprep.subr.mxu0 0.0
      %3586 = vmatpush1.msra.mxu0 %v3532
      %3587 = vmatprep.subr.mxu0 0.0
      %3588 = vmatpush2.msra.mxu0 0.0
      %3589 = vmatprep.subr.mxu0 0.0
      %3590 = vmatpush2.msra.mxu0 0.0
      %3591 = vmatprep.subr.mxu0 0.0
      %3592 = vmatpush2.msra.mxu0 0.0
      %3593 = vmatprep.subr.mxu0 0.0
      %3594 = vmatpush2.msra.mxu0 0.0
      %3595 = vmatprep.subr.mxu0 0.0
      %3596 = vmatpush2.msra.mxu0 0.0
      %3597 = vmatprep.subr.mxu0 0.0
      %3598 = vmatpush2.msra.mxu0 0.0
      %3599 = vmatprep.subr.mxu0 0.0
      %3600 = vmatpush2.msra.mxu0 0.0
      %3601 = vmatprep.subr.mxu0 0.0
      %3602 = vmatpush2.msra.mxu0 0.0
      %3603 = vmatprep.subr.mxu0 0.0
      %3604 = vmatpush2.msra.mxu0 0.0
      %3605 = vmatprep.subr.mxu0 0.0
      %3606 = vmatpush2.msra.mxu0 0.0
      %3607 = vmatprep.subr.mxu0 0.0
      %3608 = vmatpush2.msra.mxu0 0.0
      %3609 = vmatprep.subr.mxu0 0.0
      %3610 = vmatpush2.msra.mxu0 0.0
      %3611 = vmatprep.subr.mxu0 0.0
      %3612 = vmatpush2.msra.mxu0 0.0
      %3613 = vmatprep.subr.mxu0 0.0
      %3614 = vmatpush2.msra.mxu0 0.0
      %3615 = vmatprep.subr.mxu0 0.0
      %3616 = vmatpush2.msra.mxu0 0.0
      %3617 = vmatprep.subr.mxu0 0.0
      %3618 = vmatpush2.msra.mxu0 0.0
      %3619 = vmatprep.mubr.f32.mxu0 0.0
      %3620 = vmatmul.mubr.f32.gmra.mxu0 %v3524
      %v3621 = vpop.f32.mrf.mxu0
      %v3622 = vadd.f32 %v3553, %v3621
      %v3623 = vpop.f32.mrf.mxu0
      %3624 = vmatprep.mubr.f32.mxu0 0.0
      %3625 = vmatmul.mubr.f32.gmra.mxu0 %v3525
      %v3626 = vpop.f32.mrf.mxu0
      %v3627 = vadd.f32 %v3553, %v3626
      %v3628 = vpop.f32.mrf.mxu0
      %3629 = vmatprep.mubr.f32.mxu0 0.0
      %3630 = vmatmul.mubr.f32.gmra.mxu0 %v3526
      %v3631 = vpop.f32.mrf.mxu0
      %v3632 = vadd.f32 %v3553, %v3631
      %v3633 = vpop.f32.mrf.mxu0
      %3634 = vmatprep.mubr.f32.mxu0 0.0
      %3635 = vmatmul.mubr.f32.gmra.mxu0 %v3527
      %v3636 = vpop.f32.mrf.mxu0
      %v3637 = vadd.f32 %v3553, %v3636
      %v3638 = vpop.f32.mrf.mxu0
      %3639 = vmatprep.mubr.f32.mxu0 0.0
      %3640 = vmatmul.mubr.f32.gmra.mxu0 %v3528
      %v3641 = vpop.f32.mrf.mxu0
      %v3642 = vadd.f32 %v3553, %v3641
      %v3643 = vpop.f32.mrf.mxu0
      %3644 = vmatprep.mubr.f32.mxu0 0.0
      %3645 = vmatmul.mubr.f32.gmra.mxu0 %v3529
      %v3646 = vpop.f32.mrf.mxu0
      %v3647 = vadd.f32 %v3553, %v3646
      %v3648 = vpop.f32.mrf.mxu0
      %3649 = vmatprep.mubr.f32.mxu0 0.0
      %3650 = vmatmul.mubr.f32.gmra.mxu0 %v3530
      %v3651 = vpop.f32.mrf.mxu0
      %v3652 = vadd.f32 %v3553, %v3651
      %v3653 = vpop.f32.mrf.mxu0
      %3654 = vmatprep.mubr.f32.mxu0 0.0
      %3655 = vmatmul.mubr.f32.gmra.mxu0 %v3531
      %v3656 = vpop.f32.mrf.mxu0
      %v3657 = vadd.f32 %v3553, %v3656
      %v3658 = vpop.f32.mrf.mxu0
      %3659 = vdwg.mxu0
      %v3660 = vmax.f32 %v3622, 0.0
      %v3661 = vmax.f32 %v3627, 0.0
      %v3662 = vmax.f32 %v3632, 0.0
      %v3663 = vmax.f32 %v3637, 0.0
      %v3664 = vmax.f32 %v3642, 0.0
      %v3665 = vmax.f32 %v3647, 0.0
      %v3666 = vmax.f32 %v3652, 0.0
      %v3667 = vmax.f32 %v3657, 0.0
      %v3668 = vld [vmem:[%s12] sm:$0xff]
      %v3669 = vld [vmem:[%s12 + $0x8] sm:$0xff]
      %v3670 = vld [vmem:[%s12 + $0x10] sm:$0xff]
      %v3671 = vld [vmem:[%s12 + $0x18] sm:$0xff]
      %v3672 = vld [vmem:[%s12 + $0x20] sm:$0xff]
      %v3673 = vld [vmem:[%s12 + $0x28] sm:$0xff]
      %v3674 = vld [vmem:[%s12 + $0x30] sm:$0xff]
      %v3675 = vld [vmem:[%s12 + $0x38] sm:$0xff]
      %v3676 = vld [vmem:[%s12 + $0x40] sm:$0xff]
      %v3677 = vld [vmem:[%s12 + $0x48] sm:$0xff]
      %v3678 = vld [vmem:[%s12 + $0x50] sm:$0xff]
      %v3679 = vld [vmem:[%s12 + $0x58] sm:$0xff]
      %v3680 = vld [vmem:[%s12 + $0x60] sm:$0xff]
      %v3681 = vld [vmem:[%s12 + $0x68] sm:$0xff]
      %v3682 = vld [vmem:[%s12 + $0x70] sm:$0xff]
      %v3683 = vld [vmem:[%s12 + $0x78] sm:$0xff]
      %v3684 = vld [vmem:[%s12 + $0x80] sm:$0xff]
      %v3685 = vld [vmem:[%s12 + $0x88] sm:$0xff]
      %v3687 = vsel %vm2595, %v3660, 0
      %v3690 = vsel %vm2595, %v3661, 0
      %v3693 = vsel %vm2595, %v3662, 0
      %v3696 = vsel %vm2595, %v3663, 0
      %v3699 = vsel %vm2595, %v3664, 0
      %v3702 = vsel %vm2595, %v3665, 0
      %v3705 = vsel %vm2595, %v3666, 0
      %v3708 = vsel %vm2595, %v3667, 0
      %3710 = vmatprep.subr.mxu0 0.0
      %3711 = vmatpush1.msra.mxu0 0.0
      %3712 = vmatprep.subr.mxu0 0.0
      %3713 = vmatpush1.msra.mxu0 0.0
      %3714 = vmatprep.subr.mxu0 0.0
      %3715 = vmatpush1.msra.mxu0 0.0
      %3716 = vmatprep.subr.mxu0 0.0
      %3717 = vmatpush1.msra.mxu0 0.0
      %3718 = vmatprep.subr.mxu0 0.0
      %3719 = vmatpush1.msra.mxu0 0.0
      %3720 = vmatprep.subr.mxu0 0.0
      %3721 = vmatpush1.msra.mxu0 0.0
      %3722 = vmatprep.subr.mxu0 0.0
      %3723 = vmatpush1.msra.mxu0 0.0
      %3724 = vmatprep.subr.mxu0 0.0
      %3725 = vmatpush1.msra.mxu0 0.0
      %3726 = vmatprep.subr.mxu0 0.0
      %3727 = vmatpush1.msra.mxu0 0.0
      %3728 = vmatprep.subr.mxu0 0.0
      %3729 = vmatpush1.msra.mxu0 0.0
      %3730 = vmatprep.subr.mxu0 0.0
      %3731 = vmatpush1.msra.mxu0 0.0
      %3732 = vmatprep.subr.mxu0 0.0
      %3733 = vmatpush1.msra.mxu0 0.0
      %3734 = vmatprep.subr.mxu0 0.0
      %3735 = vmatpush1.msra.mxu0 0.0
      %3736 = vmatprep.subr.mxu0 0.0
      %3737 = vmatpush1.msra.mxu0 0.0
      %3738 = vmatprep.subr.mxu0 %v3678
      %3739 = vmatpush1.msra.mxu0 %v3677
      %3740 = vmatprep.subr.mxu0 %v3669
      %3741 = vmatpush1.msra.mxu0 %v3668
      %3742 = vmatprep.subr.mxu0 0.0
      %3743 = vmatpush2.msra.mxu0 0.0
      %3744 = vmatprep.subr.mxu0 0.0
      %3745 = vmatpush2.msra.mxu0 0.0
      %3746 = vmatprep.subr.mxu0 0.0
      %3747 = vmatpush2.msra.mxu0 0.0
      %3748 = vmatprep.subr.mxu0 0.0
      %3749 = vmatpush2.msra.mxu0 0.0
      %3750 = vmatprep.subr.mxu0 0.0
      %3751 = vmatpush2.msra.mxu0 0.0
      %3752 = vmatprep.subr.mxu0 0.0
      %3753 = vmatpush2.msra.mxu0 0.0
      %3754 = vmatprep.subr.mxu0 0.0
      %3755 = vmatpush2.msra.mxu0 0.0
      %3756 = vmatprep.subr.mxu0 0.0
      %3757 = vmatpush2.msra.mxu0 0.0
      %3758 = vmatprep.subr.mxu0 0.0
      %3759 = vmatpush2.msra.mxu0 0.0
      %3760 = vmatprep.subr.mxu0 0.0
      %3761 = vmatpush2.msra.mxu0 0.0
      %3762 = vmatprep.subr.mxu0 0.0
      %3763 = vmatpush2.msra.mxu0 0.0
      %3764 = vmatprep.subr.mxu0 0.0
      %3765 = vmatpush2.msra.mxu0 0.0
      %3766 = vmatprep.subr.mxu0 0.0
      %3767 = vmatpush2.msra.mxu0 0.0
      %3768 = vmatprep.subr.mxu0 0.0
      %3769 = vmatpush2.msra.mxu0 0.0
      %3770 = vmatprep.subr.mxu0 0.0
      %3771 = vmatpush2.msra.mxu0 0.0
      %3772 = vmatprep.subr.mxu0 0.0
      %3773 = vmatpush2.msra.mxu0 0.0
      %3774 = vmatprep.mubr.f32.mxu0 0.0
      %3775 = vmatmul.mubr.f32.gmra.mxu0 %v3687
      %v3776 = vpop.f32.mrf.mxu0
      %v3777 = vadd.f32 0.0, %v3776
      %v3778 = vpop.f32.mrf.mxu0
      %v3779 = vadd.f32 0.0, %v3778
      %3780 = vmatprep.mubr.f32.mxu0 0.0
      %3781 = vmatmul.mubr.f32.gmra.mxu0 %v3690
      %v3782 = vpop.f32.mrf.mxu0
      %v3783 = vadd.f32 0.0, %v3782
      %v3784 = vpop.f32.mrf.mxu0
      %v3785 = vadd.f32 0.0, %v3784
      %3786 = vmatprep.mubr.f32.mxu0 0.0
      %3787 = vmatmul.mubr.f32.gmra.mxu0 %v3693
      %v3788 = vpop.f32.mrf.mxu0
      %v3789 = vadd.f32 0.0, %v3788
      %v3790 = vpop.f32.mrf.mxu0
      %v3791 = vadd.f32 0.0, %v3790
      %3792 = vmatprep.mubr.f32.mxu0 0.0
      %3793 = vmatmul.mubr.f32.gmra.mxu0 %v3696
      %v3794 = vpop.f32.mrf.mxu0
      %v3795 = vadd.f32 0.0, %v3794
      %v3796 = vpop.f32.mrf.mxu0
      %v3797 = vadd.f32 0.0, %v3796
      %3798 = vmatprep.mubr.f32.mxu0 0.0
      %3799 = vmatmul.mubr.f32.gmra.mxu0 %v3699
      %v3800 = vpop.f32.mrf.mxu0
      %v3801 = vadd.f32 0.0, %v3800
      %v3802 = vpop.f32.mrf.mxu0
      %v3803 = vadd.f32 0.0, %v3802
      %3804 = vmatprep.mubr.f32.mxu0 0.0
      %3805 = vmatmul.mubr.f32.gmra.mxu0 %v3702
      %v3806 = vpop.f32.mrf.mxu0
      %v3807 = vadd.f32 0.0, %v3806
      %v3808 = vpop.f32.mrf.mxu0
      %v3809 = vadd.f32 0.0, %v3808
      %3810 = vmatprep.mubr.f32.mxu0 0.0
      %3811 = vmatmul.mubr.f32.gmra.mxu0 %v3705
      %v3812 = vpop.f32.mrf.mxu0
      %v3813 = vadd.f32 0.0, %v3812
      %v3814 = vpop.f32.mrf.mxu0
      %v3815 = vadd.f32 0.0, %v3814
      %3816 = vmatprep.mubr.f32.mxu0 0.0
      %3817 = vmatmul.mubr.f32.gmra.mxu0 %v3708
      %v3818 = vpop.f32.mrf.mxu0
      %v3819 = vadd.f32 0.0, %v3818
      %v3820 = vpop.f32.mrf.mxu0
      %v3821 = vadd.f32 0.0, %v3820
      %3822 = vdwg.mxu0
      %3823 = vmatprep.subr.mxu0 0.0
      %3824 = vmatpush1.msra.mxu0 0.0
      %3825 = vmatprep.subr.mxu0 0.0
      %3826 = vmatpush1.msra.mxu0 0.0
      %3827 = vmatprep.subr.mxu0 0.0
      %3828 = vmatpush1.msra.mxu0 0.0
      %3829 = vmatprep.subr.mxu0 0.0
      %3830 = vmatpush1.msra.mxu0 0.0
      %3831 = vmatprep.subr.mxu0 0.0
      %3832 = vmatpush1.msra.mxu0 0.0
      %3833 = vmatprep.subr.mxu0 0.0
      %3834 = vmatpush1.msra.mxu0 0.0
      %3835 = vmatprep.subr.mxu0 0.0
      %3836 = vmatpush1.msra.mxu0 0.0
      %3837 = vmatprep.subr.mxu0 0.0
      %3838 = vmatpush1.msra.mxu0 0.0
      %3839 = vmatprep.subr.mxu0 0.0
      %3840 = vmatpush1.msra.mxu0 0.0
      %3841 = vmatprep.subr.mxu0 0.0
      %3842 = vmatpush1.msra.mxu0 0.0
      %3843 = vmatprep.subr.mxu0 0.0
      %3844 = vmatpush1.msra.mxu0 0.0
      %3845 = vmatprep.subr.mxu0 0.0
      %3846 = vmatpush1.msra.mxu0 0.0
      %3847 = vmatprep.subr.mxu0 0.0
      %3848 = vmatpush1.msra.mxu0 0.0
      %3849 = vmatprep.subr.mxu0 0.0
      %3850 = vmatpush1.msra.mxu0 0.0
      %3851 = vmatprep.subr.mxu0 %v3680
      %3852 = vmatpush1.msra.mxu0 %v3679
      %3853 = vmatprep.subr.mxu0 %v3671
      %3854 = vmatpush1.msra.mxu0 %v3670
      %3855 = vmatprep.subr.mxu0 0.0
      %3856 = vmatpush2.msra.mxu0 0.0
      %3857 = vmatprep.subr.mxu0 0.0
      %3858 = vmatpush2.msra.mxu0 0.0
      %3859 = vmatprep.subr.mxu0 0.0
      %3860 = vmatpush2.msra.mxu0 0.0
      %3861 = vmatprep.subr.mxu0 0.0
      %3862 = vmatpush2.msra.mxu0 0.0
      %3863 = vmatprep.subr.mxu0 0.0
      %3864 = vmatpush2.msra.mxu0 0.0
      %3865 = vmatprep.subr.mxu0 0.0
      %3866 = vmatpush2.msra.mxu0 0.0
      %3867 = vmatprep.subr.mxu0 0.0
      %3868 = vmatpush2.msra.mxu0 0.0
      %3869 = vmatprep.subr.mxu0 0.0
      %3870 = vmatpush2.msra.mxu0 0.0
      %3871 = vmatprep.subr.mxu0 0.0
      %3872 = vmatpush2.msra.mxu0 0.0
      %3873 = vmatprep.subr.mxu0 0.0
      %3874 = vmatpush2.msra.mxu0 0.0
      %3875 = vmatprep.subr.mxu0 0.0
      %3876 = vmatpush2.msra.mxu0 0.0
      %3877 = vmatprep.subr.mxu0 0.0
      %3878 = vmatpush2.msra.mxu0 0.0
      %3879 = vmatprep.subr.mxu0 0.0
      %3880 = vmatpush2.msra.mxu0 0.0
      %3881 = vmatprep.subr.mxu0 0.0
      %3882 = vmatpush2.msra.mxu0 0.0
      %3883 = vmatprep.subr.mxu0 0.0
      %3884 = vmatpush2.msra.mxu0 0.0
      %3885 = vmatprep.subr.mxu0 0.0
      %3886 = vmatpush2.msra.mxu0 0.0
      %3887 = vmatprep.mubr.f32.mxu0 0.0
      %3888 = vmatmul.mubr.f32.gmra.mxu0 %v3687
      %v3889 = vpop.f32.mrf.mxu0
      %v3890 = vadd.f32 0.0, %v3889
      %v3891 = vpop.f32.mrf.mxu0
      %v3892 = vadd.f32 0.0, %v3891
      %3893 = vmatprep.mubr.f32.mxu0 0.0
      %3894 = vmatmul.mubr.f32.gmra.mxu0 %v3690
      %v3895 = vpop.f32.mrf.mxu0
      %v3896 = vadd.f32 0.0, %v3895
      %v3897 = vpop.f32.mrf.mxu0
      %v3898 = vadd.f32 0.0, %v3897
      %3899 = vmatprep.mubr.f32.mxu0 0.0
      %3900 = vmatmul.mubr.f32.gmra.mxu0 %v3693
      %v3901 = vpop.f32.mrf.mxu0
      %v3902 = vadd.f32 0.0, %v3901
      %v3903 = vpop.f32.mrf.mxu0
      %v3904 = vadd.f32 0.0, %v3903
      %3905 = vmatprep.mubr.f32.mxu0 0.0
      %3906 = vmatmul.mubr.f32.gmra.mxu0 %v3696
      %v3907 = vpop.f32.mrf.mxu0
      %v3908 = vadd.f32 0.0, %v3907
      %v3909 = vpop.f32.mrf.mxu0
      %v3910 = vadd.f32 0.0, %v3909
      %3911 = vmatprep.mubr.f32.mxu0 0.0
      %3912 = vmatmul.mubr.f32.gmra.mxu0 %v3699
      %v3913 = vpop.f32.mrf.mxu0
      %v3914 = vadd.f32 0.0, %v3913
      %v3915 = vpop.f32.mrf.mxu0
      %v3916 = vadd.f32 0.0, %v3915
      %3917 = vmatprep.mubr.f32.mxu0 0.0
      %3918 = vmatmul.mubr.f32.gmra.mxu0 %v3702
      %v3919 = vpop.f32.mrf.mxu0
      %v3920 = vadd.f32 0.0, %v3919
      %v3921 = vpop.f32.mrf.mxu0
      %v3922 = vadd.f32 0.0, %v3921
      %3923 = vmatprep.mubr.f32.mxu0 0.0
      %3924 = vmatmul.mubr.f32.gmra.mxu0 %v3705
      %v3925 = vpop.f32.mrf.mxu0
      %v3926 = vadd.f32 0.0, %v3925
      %v3927 = vpop.f32.mrf.mxu0
      %v3928 = vadd.f32 0.0, %v3927
      %3929 = vmatprep.mubr.f32.mxu0 0.0
      %3930 = vmatmul.mubr.f32.gmra.mxu0 %v3708
      %v3931 = vpop.f32.mrf.mxu0
      %v3932 = vadd.f32 0.0, %v3931
      %v3933 = vpop.f32.mrf.mxu0
      %v3934 = vadd.f32 0.0, %v3933
      %3935 = vdwg.mxu0
      %3936 = vmatprep.subr.mxu0 0.0
      %3937 = vmatpush1.msra.mxu0 0.0
      %3938 = vmatprep.subr.mxu0 0.0
      %3939 = vmatpush1.msra.mxu0 0.0
      %3940 = vmatprep.subr.mxu0 0.0
      %3941 = vmatpush1.msra.mxu0 0.0
      %3942 = vmatprep.subr.mxu0 0.0
      %3943 = vmatpush1.msra.mxu0 0.0
      %3944 = vmatprep.subr.mxu0 0.0
      %3945 = vmatpush1.msra.mxu0 0.0
      %3946 = vmatprep.subr.mxu0 0.0
      %3947 = vmatpush1.msra.mxu0 0.0
      %3948 = vmatprep.subr.mxu0 0.0
      %3949 = vmatpush1.msra.mxu0 0.0
      %3950 = vmatprep.subr.mxu0 0.0
      %3951 = vmatpush1.msra.mxu0 0.0
      %3952 = vmatprep.subr.mxu0 0.0
      %3953 = vmatpush1.msra.mxu0 0.0
      %3954 = vmatprep.subr.mxu0 0.0
      %3955 = vmatpush1.msra.mxu0 0.0
      %3956 = vmatprep.subr.mxu0 0.0
      %3957 = vmatpush1.msra.mxu0 0.0
      %3958 = vmatprep.subr.mxu0 0.0
      %3959 = vmatpush1.msra.mxu0 0.0
      %3960 = vmatprep.subr.mxu0 0.0
      %3961 = vmatpush1.msra.mxu0 0.0
      %3962 = vmatprep.subr.mxu0 0.0
      %3963 = vmatpush1.msra.mxu0 0.0
      %3964 = vmatprep.subr.mxu0 %v3682
      %3965 = vmatpush1.msra.mxu0 %v3681
      %3966 = vmatprep.subr.mxu0 %v3673
      %3967 = vmatpush1.msra.mxu0 %v3672
      %3968 = vmatprep.subr.mxu0 0.0
      %3969 = vmatpush2.msra.mxu0 0.0
      %3970 = vmatprep.subr.mxu0 0.0
      %3971 = vmatpush2.msra.mxu0 0.0
      %3972 = vmatprep.subr.mxu0 0.0
      %3973 = vmatpush2.msra.mxu0 0.0
      %3974 = vmatprep.subr.mxu0 0.0
      %3975 = vmatpush2.msra.mxu0 0.0
      %3976 = vmatprep.subr.mxu0 0.0
      %3977 = vmatpush2.msra.mxu0 0.0
      %3978 = vmatprep.subr.mxu0 0.0
      %3979 = vmatpush2.msra.mxu0 0.0
      %3980 = vmatprep.subr.mxu0 0.0
      %3981 = vmatpush2.msra.mxu0 0.0
      %3982 = vmatprep.subr.mxu0 0.0
      %3983 = vmatpush2.msra.mxu0 0.0
      %3984 = vmatprep.subr.mxu0 0.0
      %3985 = vmatpush2.msra.mxu0 0.0
      %3986 = vmatprep.subr.mxu0 0.0
      %3987 = vmatpush2.msra.mxu0 0.0
      %3988 = vmatprep.subr.mxu0 0.0
      %3989 = vmatpush2.msra.mxu0 0.0
      %3990 = vmatprep.subr.mxu0 0.0
      %3991 = vmatpush2.msra.mxu0 0.0
      %3992 = vmatprep.subr.mxu0 0.0
      %3993 = vmatpush2.msra.mxu0 0.0
      %3994 = vmatprep.subr.mxu0 0.0
      %3995 = vmatpush2.msra.mxu0 0.0
      %3996 = vmatprep.subr.mxu0 0.0
      %3997 = vmatpush2.msra.mxu0 0.0
      %3998 = vmatprep.subr.mxu0 0.0
      %3999 = vmatpush2.msra.mxu0 0.0
      %4000 = vmatprep.mubr.f32.mxu0 0.0
      %4001 = vmatmul.mubr.f32.gmra.mxu0 %v3687
      %v4002 = vpop.f32.mrf.mxu0
      %v4003 = vadd.f32 0.0, %v4002
      %v4004 = vpop.f32.mrf.mxu0
      %v4005 = vadd.f32 0.0, %v4004
      %4006 = vmatprep.mubr.f32.mxu0 0.0
      %4007 = vmatmul.mubr.f32.gmra.mxu0 %v3690
      %v4008 = vpop.f32.mrf.mxu0
      %v4009 = vadd.f32 0.0, %v4008
      %v4010 = vpop.f32.mrf.mxu0
      %v4011 = vadd.f32 0.0, %v4010
      %4012 = vmatprep.mubr.f32.mxu0 0.0
      %4013 = vmatmul.mubr.f32.gmra.mxu0 %v3693
      %v4014 = vpop.f32.mrf.mxu0
      %v4015 = vadd.f32 0.0, %v4014
      %v4016 = vpop.f32.mrf.mxu0
      %v4017 = vadd.f32 0.0, %v4016
      %4018 = vmatprep.mubr.f32.mxu0 0.0
      %4019 = vmatmul.mubr.f32.gmra.mxu0 %v3696
      %v4020 = vpop.f32.mrf.mxu0
      %v4021 = vadd.f32 0.0, %v4020
      %v4022 = vpop.f32.mrf.mxu0
      %v4023 = vadd.f32 0.0, %v4022
      %4024 = vmatprep.mubr.f32.mxu0 0.0
      %4025 = vmatmul.mubr.f32.gmra.mxu0 %v3699
      %v4026 = vpop.f32.mrf.mxu0
      %v4027 = vadd.f32 0.0, %v4026
      %v4028 = vpop.f32.mrf.mxu0
      %v4029 = vadd.f32 0.0, %v4028
      %4030 = vmatprep.mubr.f32.mxu0 0.0
      %4031 = vmatmul.mubr.f32.gmra.mxu0 %v3702
      %v4032 = vpop.f32.mrf.mxu0
      %v4033 = vadd.f32 0.0, %v4032
      %v4034 = vpop.f32.mrf.mxu0
      %v4035 = vadd.f32 0.0, %v4034
      %4036 = vmatprep.mubr.f32.mxu0 0.0
      %4037 = vmatmul.mubr.f32.gmra.mxu0 %v3705
      %v4038 = vpop.f32.mrf.mxu0
      %v4039 = vadd.f32 0.0, %v4038
      %v4040 = vpop.f32.mrf.mxu0
      %v4041 = vadd.f32 0.0, %v4040
      %4042 = vmatprep.mubr.f32.mxu0 0.0
      %4043 = vmatmul.mubr.f32.gmra.mxu0 %v3708
      %v4044 = vpop.f32.mrf.mxu0
      %v4045 = vadd.f32 0.0, %v4044
      %v4046 = vpop.f32.mrf.mxu0
      %v4047 = vadd.f32 0.0, %v4046
      %4048 = vdwg.mxu0
      %4049 = vmatprep.subr.mxu0 0.0
      %4050 = vmatpush1.msra.mxu0 0.0
      %4051 = vmatprep.subr.mxu0 0.0
      %4052 = vmatpush1.msra.mxu0 0.0
      %4053 = vmatprep.subr.mxu0 0.0
      %4054 = vmatpush1.msra.mxu0 0.0
      %4055 = vmatprep.subr.mxu0 0.0
      %4056 = vmatpush1.msra.mxu0 0.0
      %4057 = vmatprep.subr.mxu0 0.0
      %4058 = vmatpush1.msra.mxu0 0.0
      %4059 = vmatprep.subr.mxu0 0.0
      %4060 = vmatpush1.msra.mxu0 0.0
      %4061 = vmatprep.subr.mxu0 0.0
      %4062 = vmatpush1.msra.mxu0 0.0
      %4063 = vmatprep.subr.mxu0 0.0
      %4064 = vmatpush1.msra.mxu0 0.0
      %4065 = vmatprep.subr.mxu0 0.0
      %4066 = vmatpush1.msra.mxu0 0.0
      %4067 = vmatprep.subr.mxu0 0.0
      %4068 = vmatpush1.msra.mxu0 0.0
      %4069 = vmatprep.subr.mxu0 0.0
      %4070 = vmatpush1.msra.mxu0 0.0
      %4071 = vmatprep.subr.mxu0 0.0
      %4072 = vmatpush1.msra.mxu0 0.0
      %4073 = vmatprep.subr.mxu0 0.0
      %4074 = vmatpush1.msra.mxu0 0.0
      %4075 = vmatprep.subr.mxu0 0.0
      %4076 = vmatpush1.msra.mxu0 0.0
      %4077 = vmatprep.subr.mxu0 %v3684
      %4078 = vmatpush1.msra.mxu0 %v3683
      %4079 = vmatprep.subr.mxu0 %v3675
      %4080 = vmatpush1.msra.mxu0 %v3674
      %4081 = vmatprep.subr.mxu0 0.0
      %4082 = vmatpush2.msra.mxu0 0.0
      %4083 = vmatprep.subr.mxu0 0.0
      %4084 = vmatpush2.msra.mxu0 0.0
      %4085 = vmatprep.subr.mxu0 0.0
      %4086 = vmatpush2.msra.mxu0 0.0
      %4087 = vmatprep.subr.mxu0 0.0
      %4088 = vmatpush2.msra.mxu0 0.0
      %4089 = vmatprep.subr.mxu0 0.0
      %4090 = vmatpush2.msra.mxu0 0.0
      %4091 = vmatprep.subr.mxu0 0.0
      %4092 = vmatpush2.msra.mxu0 0.0
      %4093 = vmatprep.subr.mxu0 0.0
      %4094 = vmatpush2.msra.mxu0 0.0
      %4095 = vmatprep.subr.mxu0 0.0
      %4096 = vmatpush2.msra.mxu0 0.0
      %4097 = vmatprep.subr.mxu0 0.0
      %4098 = vmatpush2.msra.mxu0 0.0
      %4099 = vmatprep.subr.mxu0 0.0
      %4100 = vmatpush2.msra.mxu0 0.0
      %4101 = vmatprep.subr.mxu0 0.0
      %4102 = vmatpush2.msra.mxu0 0.0
      %4103 = vmatprep.subr.mxu0 0.0
      %4104 = vmatpush2.msra.mxu0 0.0
      %4105 = vmatprep.subr.mxu0 0.0
      %4106 = vmatpush2.msra.mxu0 0.0
      %4107 = vmatprep.subr.mxu0 0.0
      %4108 = vmatpush2.msra.mxu0 0.0
      %4109 = vmatprep.subr.mxu0 0.0
      %4110 = vmatpush2.msra.mxu0 0.0
      %4111 = vmatprep.subr.mxu0 0.0
      %4112 = vmatpush2.msra.mxu0 0.0
      %4113 = vmatprep.mubr.f32.mxu0 0.0
      %4114 = vmatmul.mubr.f32.gmra.mxu0 %v3687
      %v4115 = vpop.f32.mrf.mxu0
      %v4116 = vadd.f32 0.0, %v4115
      %v4117 = vpop.f32.mrf.mxu0
      %v4118 = vadd.f32 0.0, %v4117
      %4119 = vmatprep.mubr.f32.mxu0 0.0
      %4120 = vmatmul.mubr.f32.gmra.mxu0 %v3690
      %v4121 = vpop.f32.mrf.mxu0
      %v4122 = vadd.f32 0.0, %v4121
      %v4123 = vpop.f32.mrf.mxu0
      %v4124 = vadd.f32 0.0, %v4123
      %4125 = vmatprep.mubr.f32.mxu0 0.0
      %4126 = vmatmul.mubr.f32.gmra.mxu0 %v3693
      %v4127 = vpop.f32.mrf.mxu0
      %v4128 = vadd.f32 0.0, %v4127
      %v4129 = vpop.f32.mrf.mxu0
      %v4130 = vadd.f32 0.0, %v4129
      %4131 = vmatprep.mubr.f32.mxu0 0.0
      %4132 = vmatmul.mubr.f32.gmra.mxu0 %v3696
      %v4133 = vpop.f32.mrf.mxu0
      %v4134 = vadd.f32 0.0, %v4133
      %v4135 = vpop.f32.mrf.mxu0
      %v4136 = vadd.f32 0.0, %v4135
      %4137 = vmatprep.mubr.f32.mxu0 0.0
      %4138 = vmatmul.mubr.f32.gmra.mxu0 %v3699
      %v4139 = vpop.f32.mrf.mxu0
      %v4140 = vadd.f32 0.0, %v4139
      %v4141 = vpop.f32.mrf.mxu0
      %v4142 = vadd.f32 0.0, %v4141
      %4143 = vmatprep.mubr.f32.mxu0 0.0
      %4144 = vmatmul.mubr.f32.gmra.mxu0 %v3702
      %v4145 = vpop.f32.mrf.mxu0
      %v4146 = vadd.f32 0.0, %v4145
      %v4147 = vpop.f32.mrf.mxu0
      %v4148 = vadd.f32 0.0, %v4147
      %4149 = vmatprep.mubr.f32.mxu0 0.0
      %4150 = vmatmul.mubr.f32.gmra.mxu0 %v3705
      %v4151 = vpop.f32.mrf.mxu0
      %v4152 = vadd.f32 0.0, %v4151
      %v4153 = vpop.f32.mrf.mxu0
      %v4154 = vadd.f32 0.0, %v4153
      %4155 = vmatprep.mubr.f32.mxu0 0.0
      %4156 = vmatmul.mubr.f32.gmra.mxu0 %v3708
      %v4157 = vpop.f32.mrf.mxu0
      %v4158 = vadd.f32 0.0, %v4157
      %v4159 = vpop.f32.mrf.mxu0
      %v4160 = vadd.f32 0.0, %v4159
      %4161 = vdwg.mxu0
      %4162 = vmatprep.subr.mxu0 0.0
      %4163 = vmatpush1.msra.mxu0 0.0
      %4164 = vmatprep.subr.mxu0 0.0
      %4165 = vmatpush1.msra.mxu0 0.0
      %4166 = vmatprep.subr.mxu0 0.0
      %4167 = vmatpush1.msra.mxu0 0.0
      %4168 = vmatprep.subr.mxu0 0.0
      %4169 = vmatpush1.msra.mxu0 0.0
      %4170 = vmatprep.subr.mxu0 0.0
      %4171 = vmatpush1.msra.mxu0 0.0
      %4172 = vmatprep.subr.mxu0 0.0
      %4173 = vmatpush1.msra.mxu0 0.0
      %4174 = vmatprep.subr.mxu0 0.0
      %4175 = vmatpush1.msra.mxu0 0.0
      %4176 = vmatprep.subr.mxu0 0.0
      %4177 = vmatpush1.msra.mxu0 0.0
      %4178 = vmatprep.subr.mxu0 0.0
      %4179 = vmatpush1.msra.mxu0 0.0
      %4180 = vmatprep.subr.mxu0 0.0
      %4181 = vmatpush1.msra.mxu0 0.0
      %4182 = vmatprep.subr.mxu0 0.0
      %4183 = vmatpush1.msra.mxu0 0.0
      %4184 = vmatprep.subr.mxu0 0.0
      %4185 = vmatpush1.msra.mxu0 0.0
      %4186 = vmatprep.subr.mxu0 0.0
      %4187 = vmatpush1.msra.mxu0 0.0
      %4188 = vmatprep.subr.mxu0 0.0
      %4189 = vmatpush1.msra.mxu0 0.0
      %4190 = vmatprep.subr.mxu0 0.0
      %4191 = vmatpush1.msra.mxu0 %v3685
      %4192 = vmatprep.subr.mxu0 0.0
      %4193 = vmatpush1.msra.mxu0 %v3676
      %4194 = vmatprep.subr.mxu0 0.0
      %4195 = vmatpush2.msra.mxu0 0.0
      %4196 = vmatprep.subr.mxu0 0.0
      %4197 = vmatpush2.msra.mxu0 0.0
      %4198 = vmatprep.subr.mxu0 0.0
      %4199 = vmatpush2.msra.mxu0 0.0
      %4200 = vmatprep.subr.mxu0 0.0
      %4201 = vmatpush2.msra.mxu0 0.0
      %4202 = vmatprep.subr.mxu0 0.0
      %4203 = vmatpush2.msra.mxu0 0.0
      %4204 = vmatprep.subr.mxu0 0.0
      %4205 = vmatpush2.msra.mxu0 0.0
      %4206 = vmatprep.subr.mxu0 0.0
      %4207 = vmatpush2.msra.mxu0 0.0
      %4208 = vmatprep.subr.mxu0 0.0
      %4209 = vmatpush2.msra.mxu0 0.0
      %4210 = vmatprep.subr.mxu0 0.0
      %4211 = vmatpush2.msra.mxu0 0.0
      %4212 = vmatprep.subr.mxu0 0.0
      %4213 = vmatpush2.msra.mxu0 0.0
      %4214 = vmatprep.subr.mxu0 0.0
      %4215 = vmatpush2.msra.mxu0 0.0
      %4216 = vmatprep.subr.mxu0 0.0
      %4217 = vmatpush2.msra.mxu0 0.0
      %4218 = vmatprep.subr.mxu0 0.0
      %4219 = vmatpush2.msra.mxu0 0.0
      %4220 = vmatprep.subr.mxu0 0.0
      %4221 = vmatpush2.msra.mxu0 0.0
      %4222 = vmatprep.subr.mxu0 0.0
      %4223 = vmatpush2.msra.mxu0 0.0
      %4224 = vmatprep.subr.mxu0 0.0
      %4225 = vmatpush2.msra.mxu0 0.0
      %4226 = vmatprep.mubr.f32.mxu0 0.0
      %4227 = vmatmul.mubr.f32.gmra.mxu0 %v3687
      %v4228 = vpop.f32.mrf.mxu0
      %v4229 = vadd.f32 0.0, %v4228
      %v4230 = vpop.f32.mrf.mxu0
      %4231 = vmatprep.mubr.f32.mxu0 0.0
      %4232 = vmatmul.mubr.f32.gmra.mxu0 %v3690
      %v4233 = vpop.f32.mrf.mxu0
      %v4234 = vadd.f32 0.0, %v4233
      %v4235 = vpop.f32.mrf.mxu0
      %4236 = vmatprep.mubr.f32.mxu0 0.0
      %4237 = vmatmul.mubr.f32.gmra.mxu0 %v3693
      %v4238 = vpop.f32.mrf.mxu0
      %v4239 = vadd.f32 0.0, %v4238
      %v4240 = vpop.f32.mrf.mxu0
      %4241 = vmatprep.mubr.f32.mxu0 0.0
      %4242 = vmatmul.mubr.f32.gmra.mxu0 %v3696
      %v4243 = vpop.f32.mrf.mxu0
      %v4244 = vadd.f32 0.0, %v4243
      %v4245 = vpop.f32.mrf.mxu0
      %4246 = vmatprep.mubr.f32.mxu0 0.0
      %4247 = vmatmul.mubr.f32.gmra.mxu0 %v3699
      %v4248 = vpop.f32.mrf.mxu0
      %v4249 = vadd.f32 0.0, %v4248
      %v4250 = vpop.f32.mrf.mxu0
      %4251 = vmatprep.mubr.f32.mxu0 0.0
      %4252 = vmatmul.mubr.f32.gmra.mxu0 %v3702
      %v4253 = vpop.f32.mrf.mxu0
      %v4254 = vadd.f32 0.0, %v4253
      %v4255 = vpop.f32.mrf.mxu0
      %4256 = vmatprep.mubr.f32.mxu0 0.0
      %4257 = vmatmul.mubr.f32.gmra.mxu0 %v3705
      %v4258 = vpop.f32.mrf.mxu0
      %v4259 = vadd.f32 0.0, %v4258
      %v4260 = vpop.f32.mrf.mxu0
      %4261 = vmatprep.mubr.f32.mxu0 0.0
      %4262 = vmatmul.mubr.f32.gmra.mxu0 %v3708
      %v4263 = vpop.f32.mrf.mxu0
      %v4264 = vadd.f32 0.0, %v4263
      %v4265 = vpop.f32.mrf.mxu0
      %4266 = vdwg.mxu0
      %v4267 = vld [vmem:[%s13] sm:$0x1]
      %v4269 = vlaneseq
      %v4270 = vshrl.u32 %v4269, 7
      %v4271 = vsub.s32 0, %v4270
      %v4272 = vrot.slane %v4267, %v4271
      %4274 = vmatprep.subr.mxu0 0.0
      %4275 = vmatpush1.msra.mxu0 %v3821
      %4276 = vmatprep.subr.mxu0 0.0
      %4277 = vmatpush1.msra.mxu0 %v3815
      %4278 = vmatprep.subr.mxu0 0.0
      %4279 = vmatpush1.msra.mxu0 %v3809
      %4280 = vmatprep.subr.mxu0 0.0
      %4281 = vmatpush1.msra.mxu0 %v3803
      %4282 = vmatprep.subr.mxu0 0.0
      %4283 = vmatpush1.msra.mxu0 %v3797
      %4284 = vmatprep.subr.mxu0 0.0
      %4285 = vmatpush1.msra.mxu0 %v3791
      %4286 = vmatprep.subr.mxu0 0.0
      %4287 = vmatpush1.msra.mxu0 %v3785
      %4288 = vmatprep.subr.mxu0 0.0
      %4289 = vmatpush1.msra.mxu0 %v3779
      %4290 = vmatprep.subr.mxu0 0.0
      %4291 = vmatpush1.msra.mxu0 %v3819
      %4292 = vmatprep.subr.mxu0 0.0
      %4293 = vmatpush1.msra.mxu0 %v3813
      %4294 = vmatprep.subr.mxu0 0.0
      %4295 = vmatpush1.msra.mxu0 %v3807
      %4296 = vmatprep.subr.mxu0 0.0
      %4297 = vmatpush1.msra.mxu0 %v3801
      %4298 = vmatprep.subr.mxu0 0.0
      %4299 = vmatpush1.msra.mxu0 %v3795
      %4300 = vmatprep.subr.mxu0 0.0
      %4301 = vmatpush1.msra.mxu0 %v3789
      %4302 = vmatprep.subr.mxu0 0.0
      %4303 = vmatpush1.msra.mxu0 %v3783
      %4304 = vmatprep.subr.mxu0 0.0
      %4305 = vmatpush1.msra.mxu0 %v3777
      %4306 = vmatprep.subr.mxu0 0.0
      %4307 = vmatpush2.msra.mxu0 %v3934
      %4308 = vmatprep.subr.mxu0 0.0
      %4309 = vmatpush2.msra.mxu0 %v3928
      %4310 = vmatprep.subr.mxu0 0.0
      %4311 = vmatpush2.msra.mxu0 %v3922
      %4312 = vmatprep.subr.mxu0 0.0
      %4313 = vmatpush2.msra.mxu0 %v3916
      %4314 = vmatprep.subr.mxu0 0.0
      %4315 = vmatpush2.msra.mxu0 %v3910
      %4316 = vmatprep.subr.mxu0 0.0
      %4317 = vmatpush2.msra.mxu0 %v3904
      %4318 = vmatprep.subr.mxu0 0.0
      %4319 = vmatpush2.msra.mxu0 %v3898
      %4320 = vmatprep.subr.mxu0 0.0
      %4321 = vmatpush2.msra.mxu0 %v3892
      %4322 = vmatprep.subr.mxu0 0.0
      %4323 = vmatpush2.msra.mxu0 %v3932
      %4324 = vmatprep.subr.mxu0 0.0
      %4325 = vmatpush2.msra.mxu0 %v3926
      %4326 = vmatprep.subr.mxu0 0.0
      %4327 = vmatpush2.msra.mxu0 %v3920
      %4328 = vmatprep.subr.mxu0 0.0
      %4329 = vmatpush2.msra.mxu0 %v3914
      %4330 = vmatprep.subr.mxu0 0.0
      %4331 = vmatpush2.msra.mxu0 %v3908
      %4332 = vmatprep.subr.mxu0 0.0
      %4333 = vmatpush2.msra.mxu0 %v3902
      %4334 = vmatprep.subr.mxu0 0.0
      %4335 = vmatpush2.msra.mxu0 %v3896
      %4336 = vmatprep.subr.mxu0 0.0
      %4337 = vmatpush2.msra.mxu0 %v3890
      %4338 = vmatprep.mubr.f32.mxu0 %v2381
      %4339 = vmatmul.mubr.f32.gmra.mxu0 %v2380
      %v4340 = vpop.f32.mrf.mxu0
      %v4341 = vadd.f32 %v4272, %v4340
      %v4342 = vpop.f32.mrf.mxu0
      %4343 = vmatprep.mubr.f32.mxu0 %v2386
      %4344 = vmatmul.mubr.f32.gmra.mxu0 %v2385
      %v4345 = vpop.f32.mrf.mxu0
      %v4346 = vadd.f32 %v4272, %v4345
      %v4347 = vpop.f32.mrf.mxu0
      %4348 = vmatprep.mubr.f32.mxu0 %v2391
      %4349 = vmatmul.mubr.f32.gmra.mxu0 %v2390
      %v4350 = vpop.f32.mrf.mxu0
      %v4351 = vadd.f32 %v4272, %v4350
      %v4352 = vpop.f32.mrf.mxu0
      %4353 = vmatprep.mubr.f32.mxu0 %v2396
      %4354 = vmatmul.mubr.f32.gmra.mxu0 %v2395
      %v4355 = vpop.f32.mrf.mxu0
      %v4356 = vadd.f32 %v4272, %v4355
      %v4357 = vpop.f32.mrf.mxu0
      %4358 = vmatprep.mubr.f32.mxu0 %v2401
      %4359 = vmatmul.mubr.f32.gmra.mxu0 %v2400
      %v4360 = vpop.f32.mrf.mxu0
      %v4361 = vadd.f32 %v4272, %v4360
      %v4362 = vpop.f32.mrf.mxu0
      %4363 = vmatprep.mubr.f32.mxu0 %v2406
      %4364 = vmatmul.mubr.f32.gmra.mxu0 %v2405
      %v4365 = vpop.f32.mrf.mxu0
      %v4366 = vadd.f32 %v4272, %v4365
      %v4367 = vpop.f32.mrf.mxu0
      %4368 = vmatprep.mubr.f32.mxu0 %v2411
      %4369 = vmatmul.mubr.f32.gmra.mxu0 %v2410
      %v4370 = vpop.f32.mrf.mxu0
      %v4371 = vadd.f32 %v4272, %v4370
      %v4372 = vpop.f32.mrf.mxu0
      %4373 = vmatprep.mubr.f32.mxu0 %v2416
      %4374 = vmatmul.mubr.f32.gmra.mxu0 %v2415
      %v4375 = vpop.f32.mrf.mxu0
      %v4376 = vadd.f32 %v4272, %v4375
      %v4377 = vpop.f32.mrf.mxu0
      %4378 = vdwg.mxu0
      %4379 = vmatprep.subr.mxu0 0.0
      %4380 = vmatpush1.msra.mxu0 %v4047
      %4381 = vmatprep.subr.mxu0 0.0
      %4382 = vmatpush1.msra.mxu0 %v4041
      %4383 = vmatprep.subr.mxu0 0.0
      %4384 = vmatpush1.msra.mxu0 %v4035
      %4385 = vmatprep.subr.mxu0 0.0
      %4386 = vmatpush1.msra.mxu0 %v4029
      %4387 = vmatprep.subr.mxu0 0.0
      %4388 = vmatpush1.msra.mxu0 %v4023
      %4389 = vmatprep.subr.mxu0 0.0
      %4390 = vmatpush1.msra.mxu0 %v4017
      %4391 = vmatprep.subr.mxu0 0.0
      %4392 = vmatpush1.msra.mxu0 %v4011
      %4393 = vmatprep.subr.mxu0 0.0
      %4394 = vmatpush1.msra.mxu0 %v4005
      %4395 = vmatprep.subr.mxu0 0.0
      %4396 = vmatpush1.msra.mxu0 %v4045
      %4397 = vmatprep.subr.mxu0 0.0
      %4398 = vmatpush1.msra.mxu0 %v4039
      %4399 = vmatprep.subr.mxu0 0.0
      %4400 = vmatpush1.msra.mxu0 %v4033
      %4401 = vmatprep.subr.mxu0 0.0
      %4402 = vmatpush1.msra.mxu0 %v4027
      %4403 = vmatprep.subr.mxu0 0.0
      %4404 = vmatpush1.msra.mxu0 %v4021
      %4405 = vmatprep.subr.mxu0 0.0
      %4406 = vmatpush1.msra.mxu0 %v4015
      %4407 = vmatprep.subr.mxu0 0.0
      %4408 = vmatpush1.msra.mxu0 %v4009
      %4409 = vmatprep.subr.mxu0 0.0
      %4410 = vmatpush1.msra.mxu0 %v4003
      %4411 = vmatprep.subr.mxu0 0.0
      %4412 = vmatpush2.msra.mxu0 %v4160
      %4413 = vmatprep.subr.mxu0 0.0
      %4414 = vmatpush2.msra.mxu0 %v4154
      %4415 = vmatprep.subr.mxu0 0.0
      %4416 = vmatpush2.msra.mxu0 %v4148
      %4417 = vmatprep.subr.mxu0 0.0
      %4418 = vmatpush2.msra.mxu0 %v4142
      %4419 = vmatprep.subr.mxu0 0.0
      %4420 = vmatpush2.msra.mxu0 %v4136
      %4421 = vmatprep.subr.mxu0 0.0
      %4422 = vmatpush2.msra.mxu0 %v4130
      %4423 = vmatprep.subr.mxu0 0.0
      %4424 = vmatpush2.msra.mxu0 %v4124
      %4425 = vmatprep.subr.mxu0 0.0
      %4426 = vmatpush2.msra.mxu0 %v4118
      %4427 = vmatprep.subr.mxu0 0.0
      %4428 = vmatpush2.msra.mxu0 %v4158
      %4429 = vmatprep.subr.mxu0 0.0
      %4430 = vmatpush2.msra.mxu0 %v4152
      %4431 = vmatprep.subr.mxu0 0.0
      %4432 = vmatpush2.msra.mxu0 %v4146
      %4433 = vmatprep.subr.mxu0 0.0
      %4434 = vmatpush2.msra.mxu0 %v4140
      %4435 = vmatprep.subr.mxu0 0.0
      %4436 = vmatpush2.msra.mxu0 %v4134
      %4437 = vmatprep.subr.mxu0 0.0
      %4438 = vmatpush2.msra.mxu0 %v4128
      %4439 = vmatprep.subr.mxu0 0.0
      %4440 = vmatpush2.msra.mxu0 %v4122
      %4441 = vmatprep.subr.mxu0 0.0
      %4442 = vmatpush2.msra.mxu0 %v4116
      %4443 = vmatprep.mubr.f32.mxu0 %v2383
      %4444 = vmatmul.mubr.f32.gmra.mxu0 %v2382
      %v4445 = vpop.f32.mrf.mxu0
      %v4446 = vadd.f32 %v4341, %v4445
      %v4447 = vpop.f32.mrf.mxu0
      %4448 = vmatprep.mubr.f32.mxu0 %v2388
      %4449 = vmatmul.mubr.f32.gmra.mxu0 %v2387
      %v4450 = vpop.f32.mrf.mxu0
      %v4451 = vadd.f32 %v4346, %v4450
      %v4452 = vpop.f32.mrf.mxu0
      %4453 = vmatprep.mubr.f32.mxu0 %v2393
      %4454 = vmatmul.mubr.f32.gmra.mxu0 %v2392
      %v4455 = vpop.f32.mrf.mxu0
      %v4456 = vadd.f32 %v4351, %v4455
      %v4457 = vpop.f32.mrf.mxu0
      %4458 = vmatprep.mubr.f32.mxu0 %v2398
      %4459 = vmatmul.mubr.f32.gmra.mxu0 %v2397
      %v4460 = vpop.f32.mrf.mxu0
      %v4461 = vadd.f32 %v4356, %v4460
      %v4462 = vpop.f32.mrf.mxu0
      %4463 = vmatprep.mubr.f32.mxu0 %v2403
      %4464 = vmatmul.mubr.f32.gmra.mxu0 %v2402
      %v4465 = vpop.f32.mrf.mxu0
      %v4466 = vadd.f32 %v4361, %v4465
      %v4467 = vpop.f32.mrf.mxu0
      %4468 = vmatprep.mubr.f32.mxu0 %v2408
      %4469 = vmatmul.mubr.f32.gmra.mxu0 %v2407
      %v4470 = vpop.f32.mrf.mxu0
      %v4471 = vadd.f32 %v4366, %v4470
      %v4472 = vpop.f32.mrf.mxu0
      %4473 = vmatprep.mubr.f32.mxu0 %v2413
      %4474 = vmatmul.mubr.f32.gmra.mxu0 %v2412
      %v4475 = vpop.f32.mrf.mxu0
      %v4476 = vadd.f32 %v4371, %v4475
      %v4477 = vpop.f32.mrf.mxu0
      %4478 = vmatprep.mubr.f32.mxu0 %v2418
      %4479 = vmatmul.mubr.f32.gmra.mxu0 %v2417
      %v4480 = vpop.f32.mrf.mxu0
      %v4481 = vadd.f32 %v4376, %v4480
      %v4482 = vpop.f32.mrf.mxu0
      %4483 = vdwg.mxu0
      %4484 = vmatprep.subr.mxu0 0.0
      %4485 = vmatpush1.msra.mxu0 0.0
      %4486 = vmatprep.subr.mxu0 0.0
      %4487 = vmatpush1.msra.mxu0 0.0
      %4488 = vmatprep.subr.mxu0 0.0
      %4489 = vmatpush1.msra.mxu0 0.0
      %4490 = vmatprep.subr.mxu0 0.0
      %4491 = vmatpush1.msra.mxu0 0.0
      %4492 = vmatprep.subr.mxu0 0.0
      %4493 = vmatpush1.msra.mxu0 0.0
      %4494 = vmatprep.subr.mxu0 0.0
      %4495 = vmatpush1.msra.mxu0 0.0
      %4496 = vmatprep.subr.mxu0 0.0
      %4497 = vmatpush1.msra.mxu0 0.0
      %4498 = vmatprep.subr.mxu0 0.0
      %4499 = vmatpush1.msra.mxu0 0.0
      %4500 = vmatprep.subr.mxu0 0.0
      %4501 = vmatpush1.msra.mxu0 %v4264
      %4502 = vmatprep.subr.mxu0 0.0
      %4503 = vmatpush1.msra.mxu0 %v4259
      %4504 = vmatprep.subr.mxu0 0.0
      %4505 = vmatpush1.msra.mxu0 %v4254
      %4506 = vmatprep.subr.mxu0 0.0
      %4507 = vmatpush1.msra.mxu0 %v4249
      %4508 = vmatprep.subr.mxu0 0.0
      %4509 = vmatpush1.msra.mxu0 %v4244
      %4510 = vmatprep.subr.mxu0 0.0
      %4511 = vmatpush1.msra.mxu0 %v4239
      %4512 = vmatprep.subr.mxu0 0.0
      %4513 = vmatpush1.msra.mxu0 %v4234
      %4514 = vmatprep.subr.mxu0 0.0
      %4515 = vmatpush1.msra.mxu0 %v4229
      %4516 = vmatprep.subr.mxu0 0.0
      %4517 = vmatpush2.msra.mxu0 0.0
      %4518 = vmatprep.subr.mxu0 0.0
      %4519 = vmatpush2.msra.mxu0 0.0
      %4520 = vmatprep.subr.mxu0 0.0
      %4521 = vmatpush2.msra.mxu0 0.0
      %4522 = vmatprep.subr.mxu0 0.0
      %4523 = vmatpush2.msra.mxu0 0.0
      %4524 = vmatprep.subr.mxu0 0.0
      %4525 = vmatpush2.msra.mxu0 0.0
      %4526 = vmatprep.subr.mxu0 0.0
      %4527 = vmatpush2.msra.mxu0 0.0
      %4528 = vmatprep.subr.mxu0 0.0
      %4529 = vmatpush2.msra.mxu0 0.0
      %4530 = vmatprep.subr.mxu0 0.0
      %4531 = vmatpush2.msra.mxu0 0.0
      %4532 = vmatprep.subr.mxu0 0.0
      %4533 = vmatpush2.msra.mxu0 0.0
      %4534 = vmatprep.subr.mxu0 0.0
      %4535 = vmatpush2.msra.mxu0 0.0
      %4536 = vmatprep.subr.mxu0 0.0
      %4537 = vmatpush2.msra.mxu0 0.0
      %4538 = vmatprep.subr.mxu0 0.0
      %4539 = vmatpush2.msra.mxu0 0.0
      %4540 = vmatprep.subr.mxu0 0.0
      %4541 = vmatpush2.msra.mxu0 0.0
      %4542 = vmatprep.subr.mxu0 0.0
      %4543 = vmatpush2.msra.mxu0 0.0
      %4544 = vmatprep.subr.mxu0 0.0
      %4545 = vmatpush2.msra.mxu0 0.0
      %4546 = vmatprep.subr.mxu0 0.0
      %4547 = vmatpush2.msra.mxu0 0.0
      %4548 = vmatprep.mubr.f32.mxu0 0.0
      %4549 = vmatmul.mubr.f32.gmra.mxu0 %v3186
      %v4550 = vpop.f32.mrf.mxu0
      %v4551 = vadd.f32 %v4446, %v4550
      %v4552 = vpop.f32.mrf.mxu0
      %4553 = vmatprep.mubr.f32.mxu0 0.0
      %4554 = vmatmul.mubr.f32.gmra.mxu0 %v3189
      %v4555 = vpop.f32.mrf.mxu0
      %v4556 = vadd.f32 %v4451, %v4555
      %v4557 = vpop.f32.mrf.mxu0
      %4558 = vmatprep.mubr.f32.mxu0 0.0
      %4559 = vmatmul.mubr.f32.gmra.mxu0 %v3192
      %v4560 = vpop.f32.mrf.mxu0
      %v4561 = vadd.f32 %v4456, %v4560
      %v4562 = vpop.f32.mrf.mxu0
      %4563 = vmatprep.mubr.f32.mxu0 0.0
      %4564 = vmatmul.mubr.f32.gmra.mxu0 %v3195
      %v4565 = vpop.f32.mrf.mxu0
      %v4566 = vadd.f32 %v4461, %v4565
      %v4567 = vpop.f32.mrf.mxu0
      %4568 = vmatprep.mubr.f32.mxu0 0.0
      %4569 = vmatmul.mubr.f32.gmra.mxu0 %v3198
      %v4570 = vpop.f32.mrf.mxu0
      %v4571 = vadd.f32 %v4466, %v4570
      %v4572 = vpop.f32.mrf.mxu0
      %4573 = vmatprep.mubr.f32.mxu0 0.0
      %4574 = vmatmul.mubr.f32.gmra.mxu0 %v3201
      %v4575 = vpop.f32.mrf.mxu0
      %v4576 = vadd.f32 %v4471, %v4575
      %v4577 = vpop.f32.mrf.mxu0
      %4578 = vmatprep.mubr.f32.mxu0 0.0
      %4579 = vmatmul.mubr.f32.gmra.mxu0 %v3204
      %v4580 = vpop.f32.mrf.mxu0
      %v4581 = vadd.f32 %v4476, %v4580
      %v4582 = vpop.f32.mrf.mxu0
      %4583 = vmatprep.mubr.f32.mxu0 0.0
      %4584 = vmatmul.mubr.f32.gmra.mxu0 %v3207
      %v4585 = vpop.f32.mrf.mxu0
      %v4586 = vadd.f32 %v4481, %v4585
      %v4587 = vpop.f32.mrf.mxu0
      %4588 = vdwg.mxu0
      %v4589 = vmax.f32 %v4551, 0.0
      %v4590 = vmax.f32 %v4556, 0.0
      %v4591 = vmax.f32 %v4561, 0.0
      %v4592 = vmax.f32 %v4566, 0.0
      %v4593 = vmax.f32 %v4571, 0.0
      %v4594 = vmax.f32 %v4576, 0.0
      %v4595 = vmax.f32 %v4581, 0.0
      %v4596 = vmax.f32 %v4586, 0.0
      %v4597 = vld [vmem:[%s14] sm:$0xff]
      %v4598 = vld [vmem:[%s14 + $0x8] sm:$0xff]
      %v4599 = vld [vmem:[%s14 + $0x10] sm:$0xff]
      %v4600 = vld [vmem:[%s14 + $0x18] sm:$0xff]
      %v4601 = vld [vmem:[%s14 + $0x20] sm:$0xff]
      %v4602 = vld [vmem:[%s14 + $0x28] sm:$0xff]
      %v4603 = vld [vmem:[%s14 + $0x30] sm:$0xff]
      %v4604 = vld [vmem:[%s14 + $0x38] sm:$0xff]
      %v4605 = vld [vmem:[%s14 + $0x40] sm:$0xff]
      %v4606 = vld [vmem:[%s14 + $0x48] sm:$0xff]
      %v4607 = vld [vmem:[%s14 + $0x50] sm:$0xff]
      %v4608 = vld [vmem:[%s14 + $0x58] sm:$0xff]
      %v4609 = vld [vmem:[%s14 + $0x60] sm:$0xff]
      %v4610 = vld [vmem:[%s14 + $0x68] sm:$0xff]
      %v4611 = vld [vmem:[%s14 + $0x70] sm:$0xff]
      %v4612 = vld [vmem:[%s14 + $0x78] sm:$0xff]
      %v4613 = vld [vmem:[%s15] sm:$0x1]
      %v4615 = vlaneseq
      %v4616 = vshrl.u32 %v4615, 7
      %v4617 = vsub.s32 0, %v4616
      %v4618 = vrot.slane %v4613, %v4617
      %4620 = vmatprep.subr.mxu0 0.0
      %4621 = vmatpush1.msra.mxu0 %v4612
      %4622 = vmatprep.subr.mxu0 0.0
      %4623 = vmatpush1.msra.mxu0 %v4611
      %4624 = vmatprep.subr.mxu0 0.0
      %4625 = vmatpush1.msra.mxu0 %v4610
      %4626 = vmatprep.subr.mxu0 0.0
      %4627 = vmatpush1.msra.mxu0 %v4609
      %4628 = vmatprep.subr.mxu0 0.0
      %4629 = vmatpush1.msra.mxu0 %v4608
      %4630 = vmatprep.subr.mxu0 0.0
      %4631 = vmatpush1.msra.mxu0 %v4607
      %4632 = vmatprep.subr.mxu0 0.0
      %4633 = vmatpush1.msra.mxu0 %v4606
      %4634 = vmatprep.subr.mxu0 0.0
      %4635 = vmatpush1.msra.mxu0 %v4605
      %4636 = vmatprep.subr.mxu0 0.0
      %4637 = vmatpush1.msra.mxu0 %v4604
      %4638 = vmatprep.subr.mxu0 0.0
      %4639 = vmatpush1.msra.mxu0 %v4603
      %4640 = vmatprep.subr.mxu0 0.0
      %4641 = vmatpush1.msra.mxu0 %v4602
      %4642 = vmatprep.subr.mxu0 0.0
      %4643 = vmatpush1.msra.mxu0 %v4601
      %4644 = vmatprep.subr.mxu0 0.0
      %4645 = vmatpush1.msra.mxu0 %v4600
      %4646 = vmatprep.subr.mxu0 0.0
      %4647 = vmatpush1.msra.mxu0 %v4599
      %4648 = vmatprep.subr.mxu0 0.0
      %4649 = vmatpush1.msra.mxu0 %v4598
      %4650 = vmatprep.subr.mxu0 0.0
      %4651 = vmatpush1.msra.mxu0 %v4597
      %4652 = vmatprep.subr.mxu0 0.0
      %4653 = vmatpush2.msra.mxu0 0.0
      %4654 = vmatprep.subr.mxu0 0.0
      %4655 = vmatpush2.msra.mxu0 0.0
      %4656 = vmatprep.subr.mxu0 0.0
      %4657 = vmatpush2.msra.mxu0 0.0
      %4658 = vmatprep.subr.mxu0 0.0
      %4659 = vmatpush2.msra.mxu0 0.0
      %4660 = vmatprep.subr.mxu0 0.0
      %4661 = vmatpush2.msra.mxu0 0.0
      %4662 = vmatprep.subr.mxu0 0.0
      %4663 = vmatpush2.msra.mxu0 0.0
      %4664 = vmatprep.subr.mxu0 0.0
      %4665 = vmatpush2.msra.mxu0 0.0
      %4666 = vmatprep.subr.mxu0 0.0
      %4667 = vmatpush2.msra.mxu0 0.0
      %4668 = vmatprep.subr.mxu0 0.0
      %4669 = vmatpush2.msra.mxu0 0.0
      %4670 = vmatprep.subr.mxu0 0.0
      %4671 = vmatpush2.msra.mxu0 0.0
      %4672 = vmatprep.subr.mxu0 0.0
      %4673 = vmatpush2.msra.mxu0 0.0
      %4674 = vmatprep.subr.mxu0 0.0
      %4675 = vmatpush2.msra.mxu0 0.0
      %4676 = vmatprep.subr.mxu0 0.0
      %4677 = vmatpush2.msra.mxu0 0.0
      %4678 = vmatprep.subr.mxu0 0.0
      %4679 = vmatpush2.msra.mxu0 0.0
      %4680 = vmatprep.subr.mxu0 0.0
      %4681 = vmatpush2.msra.mxu0 0.0
      %4682 = vmatprep.subr.mxu0 0.0
      %4683 = vmatpush2.msra.mxu0 0.0
      %4684 = vmatprep.mubr.f32.mxu0 0.0
      %4685 = vmatmul.mubr.f32.gmra.mxu0 %v4589
      %v4686 = vpop.f32.mrf.mxu0
      %v4687 = vadd.f32 %v4618, %v4686
      %v4688 = vpop.f32.mrf.mxu0
      %4689 = vmatprep.mubr.f32.mxu0 0.0
      %4690 = vmatmul.mubr.f32.gmra.mxu0 %v4590
      %v4691 = vpop.f32.mrf.mxu0
      %v4692 = vadd.f32 %v4618, %v4691
      %v4693 = vpop.f32.mrf.mxu0
      %4694 = vmatprep.mubr.f32.mxu0 0.0
      %4695 = vmatmul.mubr.f32.gmra.mxu0 %v4591
      %v4696 = vpop.f32.mrf.mxu0
      %v4697 = vadd.f32 %v4618, %v4696
      %v4698 = vpop.f32.mrf.mxu0
      %4699 = vmatprep.mubr.f32.mxu0 0.0
      %4700 = vmatmul.mubr.f32.gmra.mxu0 %v4592
      %v4701 = vpop.f32.mrf.mxu0
      %v4702 = vadd.f32 %v4618, %v4701
      %v4703 = vpop.f32.mrf.mxu0
      %4704 = vmatprep.mubr.f32.mxu0 0.0
      %4705 = vmatmul.mubr.f32.gmra.mxu0 %v4593
      %v4706 = vpop.f32.mrf.mxu0
      %v4707 = vadd.f32 %v4618, %v4706
      %v4708 = vpop.f32.mrf.mxu0
      %4709 = vmatprep.mubr.f32.mxu0 0.0
      %4710 = vmatmul.mubr.f32.gmra.mxu0 %v4594
      %v4711 = vpop.f32.mrf.mxu0
      %v4712 = vadd.f32 %v4618, %v4711
      %v4713 = vpop.f32.mrf.mxu0
      %4714 = vmatprep.mubr.f32.mxu0 0.0
      %4715 = vmatmul.mubr.f32.gmra.mxu0 %v4595
      %v4716 = vpop.f32.mrf.mxu0
      %v4717 = vadd.f32 %v4618, %v4716
      %v4718 = vpop.f32.mrf.mxu0
      %4719 = vmatprep.mubr.f32.mxu0 0.0
      %4720 = vmatmul.mubr.f32.gmra.mxu0 %v4596
      %v4721 = vpop.f32.mrf.mxu0
      %v4722 = vadd.f32 %v4618, %v4721
      %v4723 = vpop.f32.mrf.mxu0
      %4724 = vdwg.mxu0
      %v4725 = vmax.f32 %v4687, 0.0
      %v4726 = vmax.f32 %v4692, 0.0
      %v4727 = vmax.f32 %v4697, 0.0
      %v4728 = vmax.f32 %v4702, 0.0
      %v4729 = vmax.f32 %v4707, 0.0
      %v4730 = vmax.f32 %v4712, 0.0
      %v4731 = vmax.f32 %v4717, 0.0
      %v4732 = vmax.f32 %v4722, 0.0
      %v4733 = vld [vmem:[%s16] sm:$0xff]
      %v4734 = vld [vmem:[%s16 + $0x8] sm:$0xff]
      %v4735 = vld [vmem:[%s16 + $0x10] sm:$0xff]
      %v4736 = vld [vmem:[%s16 + $0x18] sm:$0xff]
      %v4737 = vld [vmem:[%s16 + $0x20] sm:$0xff]
      %v4738 = vld [vmem:[%s16 + $0x28] sm:$0xff]
      %v4739 = vld [vmem:[%s16 + $0x30] sm:$0xff]
      %v4740 = vld [vmem:[%s16 + $0x38] sm:$0xff]
      %v4741 = vld [vmem:[%s16 + $0x40] sm:$0xff]
      %v4742 = vld [vmem:[%s16 + $0x48] sm:$0xff]
      %v4743 = vld [vmem:[%s16 + $0x50] sm:$0xff]
      %v4744 = vld [vmem:[%s16 + $0x58] sm:$0xff]
      %v4745 = vld [vmem:[%s16 + $0x60] sm:$0xff]
      %v4746 = vld [vmem:[%s16 + $0x68] sm:$0xff]
      %v4747 = vld [vmem:[%s16 + $0x70] sm:$0xff]
      %v4748 = vld [vmem:[%s16 + $0x78] sm:$0xff]
      %v4749 = vld [vmem:[%s16 + $0x80] sm:$0xff]
      %v4750 = vld [vmem:[%s16 + $0x88] sm:$0xff]
      %v4751 = vld [vmem:[%s16 + $0x90] sm:$0xff]
      %v4752 = vld [vmem:[%s16 + $0x98] sm:$0xff]
      %v4753 = vld [vmem:[%s16 + $0xa0] sm:$0xff]
      %v4754 = vld [vmem:[%s16 + $0xa8] sm:$0xff]
      %v4755 = vld [vmem:[%s16 + $0xb0] sm:$0xff]
      %v4756 = vld [vmem:[%s16 + $0xb8] sm:$0xff]
      %v4757 = vld [vmem:[%s16 + $0xc0] sm:$0xff]
      %v4758 = vld [vmem:[%s16 + $0xc8] sm:$0xff]
      %v4759 = vld [vmem:[%s16 + $0xd0] sm:$0xff]
      %v4760 = vld [vmem:[%s16 + $0xd8] sm:$0xff]
      %v4761 = vld [vmem:[%s16 + $0xe0] sm:$0xff]
      %v4762 = vld [vmem:[%s16 + $0xe8] sm:$0xff]
      %v4763 = vld [vmem:[%s16 + $0xf0] sm:$0xff]
      %v4764 = vld [vmem:[%s16 + $0xf8] sm:$0xff]
      %v4765 = vld [vmem:[%s16 + $0x100] sm:$0xff]
      %v4766 = vld [vmem:[%s16 + $0x108] sm:$0xff]
      %v4767 = vld [vmem:[%s16 + $0x110] sm:$0xff]
      %v4768 = vld [vmem:[%s16 + $0x118] sm:$0xff]
      %v4769 = vld [vmem:[%s16 + $0x120] sm:$0xff]
      %v4770 = vld [vmem:[%s16 + $0x128] sm:$0xff]
      %v4771 = vld [vmem:[%s16 + $0x130] sm:$0xff]
      %v4772 = vld [vmem:[%s16 + $0x138] sm:$0xff]
      %v4773 = vld [vmem:[%s16 + $0x140] sm:$0xff]
      %v4774 = vld [vmem:[%s16 + $0x148] sm:$0xff]
      %v4775 = vld [vmem:[%s16 + $0x150] sm:$0xff]
      %v4776 = vld [vmem:[%s16 + $0x158] sm:$0xff]
      %v4777 = vld [vmem:[%s16 + $0x160] sm:$0xff]
      %v4778 = vld [vmem:[%s16 + $0x168] sm:$0xff]
      %v4779 = vld [vmem:[%s16 + $0x170] sm:$0xff]
      %v4780 = vld [vmem:[%s16 + $0x178] sm:$0xff]
      %v4781 = vld [vmem:[%s16 + $0x180] sm:$0xff]
      %v4782 = vld [vmem:[%s16 + $0x188] sm:$0xff]
      %v4783 = vld [vmem:[%s16 + $0x190] sm:$0xff]
      %v4784 = vld [vmem:[%s16 + $0x198] sm:$0xff]
      %v4785 = vld [vmem:[%s16 + $0x1a0] sm:$0xff]
      %v4786 = vld [vmem:[%s16 + $0x1a8] sm:$0xff]
      %v4787 = vld [vmem:[%s16 + $0x1b0] sm:$0xff]
      %v4788 = vld [vmem:[%s16 + $0x1b8] sm:$0xff]
      %v4789 = vld [vmem:[%s16 + $0x1c0] sm:$0xff]
      %v4790 = vld [vmem:[%s16 + $0x1c8] sm:$0xff]
      %v4791 = vld [vmem:[%s16 + $0x1d0] sm:$0xff]
      %v4792 = vld [vmem:[%s16 + $0x1d8] sm:$0xff]
      %v4793 = vld [vmem:[%s16 + $0x1e0] sm:$0xff]
      %v4794 = vld [vmem:[%s16 + $0x1e8] sm:$0xff]
      %v4795 = vld [vmem:[%s16 + $0x1f0] sm:$0xff]
      %v4796 = vld [vmem:[%s16 + $0x1f8] sm:$0xff]
      %v4797 = vld [vmem:[%s16 + $0x200] sm:$0xff]
      %v4798 = vld [vmem:[%s16 + $0x208] sm:$0xff]
      %v4799 = vld [vmem:[%s16 + $0x210] sm:$0xff]
      %v4800 = vld [vmem:[%s16 + $0x218] sm:$0xff]
      %v4801 = vld [vmem:[%s16 + $0x220] sm:$0xff]
      %v4802 = vld [vmem:[%s16 + $0x228] sm:$0xff]
      %v4803 = vld [vmem:[%s16 + $0x230] sm:$0xff]
      %v4804 = vld [vmem:[%s16 + $0x238] sm:$0xff]
      %vm4805 = vcmask 261120
      %v4807 = vsel %vm4805, %v4725, 0
      %v4810 = vsel %vm4805, %v4726, 0
      %v4813 = vsel %vm4805, %v4727, 0
      %v4816 = vsel %vm4805, %v4728, 0
      %v4819 = vsel %vm4805, %v4729, 0
      %v4822 = vsel %vm4805, %v4730, 0
      %v4825 = vsel %vm4805, %v4731, 0
      %v4828 = vsel %vm4805, %v4732, 0
      %4830 = vmatprep.subr.mxu0 0.0
      %4831 = vmatpush1.msra.mxu0 0.0
      %4832 = vmatprep.subr.mxu0 0.0
      %4833 = vmatpush1.msra.mxu0 0.0
      %4834 = vmatprep.subr.mxu0 0.0
      %4835 = vmatpush1.msra.mxu0 0.0
      %4836 = vmatprep.subr.mxu0 0.0
      %4837 = vmatpush1.msra.mxu0 0.0
      %4838 = vmatprep.subr.mxu0 0.0
      %4839 = vmatpush1.msra.mxu0 0.0
      %4840 = vmatprep.subr.mxu0 0.0
      %4841 = vmatpush1.msra.mxu0 0.0
      %4842 = vmatprep.subr.mxu0 0.0
      %4843 = vmatpush1.msra.mxu0 0.0
      %4844 = vmatprep.subr.mxu0 0.0
      %4845 = vmatpush1.msra.mxu0 0.0
      %4846 = vmatprep.subr.mxu0 0.0
      %4847 = vmatpush1.msra.mxu0 0.0
      %4848 = vmatprep.subr.mxu0 0.0
      %4849 = vmatpush1.msra.mxu0 0.0
      %4850 = vmatprep.subr.mxu0 0.0
      %4851 = vmatpush1.msra.mxu0 0.0
      %4852 = vmatprep.subr.mxu0 0.0
      %4853 = vmatpush1.msra.mxu0 0.0
      %4854 = vmatprep.subr.mxu0 %v4788
      %4855 = vmatpush1.msra.mxu0 %v4787
      %4856 = vmatprep.subr.mxu0 %v4770
      %4857 = vmatpush1.msra.mxu0 %v4769
      %4858 = vmatprep.subr.mxu0 %v4752
      %4859 = vmatpush1.msra.mxu0 %v4751
      %4860 = vmatprep.subr.mxu0 %v4734
      %4861 = vmatpush1.msra.mxu0 %v4733
      %4862 = vmatprep.subr.mxu0 0.0
      %4863 = vmatpush2.msra.mxu0 0.0
      %4864 = vmatprep.subr.mxu0 0.0
      %4865 = vmatpush2.msra.mxu0 0.0
      %4866 = vmatprep.subr.mxu0 0.0
      %4867 = vmatpush2.msra.mxu0 0.0
      %4868 = vmatprep.subr.mxu0 0.0
      %4869 = vmatpush2.msra.mxu0 0.0
      %4870 = vmatprep.subr.mxu0 0.0
      %4871 = vmatpush2.msra.mxu0 0.0
      %4872 = vmatprep.subr.mxu0 0.0
      %4873 = vmatpush2.msra.mxu0 0.0
      %4874 = vmatprep.subr.mxu0 0.0
      %4875 = vmatpush2.msra.mxu0 0.0
      %4876 = vmatprep.subr.mxu0 0.0
      %4877 = vmatpush2.msra.mxu0 0.0
      %4878 = vmatprep.subr.mxu0 0.0
      %4879 = vmatpush2.msra.mxu0 0.0
      %4880 = vmatprep.subr.mxu0 0.0
      %4881 = vmatpush2.msra.mxu0 0.0
      %4882 = vmatprep.subr.mxu0 0.0
      %4883 = vmatpush2.msra.mxu0 0.0
      %4884 = vmatprep.subr.mxu0 0.0
      %4885 = vmatpush2.msra.mxu0 0.0
      %4886 = vmatprep.subr.mxu0 0.0
      %4887 = vmatpush2.msra.mxu0 0.0
      %4888 = vmatprep.subr.mxu0 0.0
      %4889 = vmatpush2.msra.mxu0 0.0
      %4890 = vmatprep.subr.mxu0 0.0
      %4891 = vmatpush2.msra.mxu0 0.0
      %4892 = vmatprep.subr.mxu0 0.0
      %4893 = vmatpush2.msra.mxu0 0.0
      %4894 = vmatprep.mubr.f32.mxu0 0.0
      %4895 = vmatmul.mubr.f32.gmra.mxu0 %v4807
      %v4896 = vpop.f32.mrf.mxu0
      %v4897 = vadd.f32 0.0, %v4896
      %v4898 = vpop.f32.mrf.mxu0
      %v4899 = vadd.f32 0.0, %v4898
      %4900 = vmatprep.mubr.f32.mxu0 0.0
      %4901 = vmatmul.mubr.f32.gmra.mxu0 %v4810
      %v4902 = vpop.f32.mrf.mxu0
      %v4903 = vadd.f32 0.0, %v4902
      %v4904 = vpop.f32.mrf.mxu0
      %v4905 = vadd.f32 0.0, %v4904
      %4906 = vmatprep.mubr.f32.mxu0 0.0
      %4907 = vmatmul.mubr.f32.gmra.mxu0 %v4813
      %v4908 = vpop.f32.mrf.mxu0
      %v4909 = vadd.f32 0.0, %v4908
      %v4910 = vpop.f32.mrf.mxu0
      %v4911 = vadd.f32 0.0, %v4910
      %4912 = vmatprep.mubr.f32.mxu0 0.0
      %4913 = vmatmul.mubr.f32.gmra.mxu0 %v4816
      %v4914 = vpop.f32.mrf.mxu0
      %v4915 = vadd.f32 0.0, %v4914
      %v4916 = vpop.f32.mrf.mxu0
      %v4917 = vadd.f32 0.0, %v4916
      %4918 = vmatprep.mubr.f32.mxu0 0.0
      %4919 = vmatmul.mubr.f32.gmra.mxu0 %v4819
      %v4920 = vpop.f32.mrf.mxu0
      %v4921 = vadd.f32 0.0, %v4920
      %v4922 = vpop.f32.mrf.mxu0
      %v4923 = vadd.f32 0.0, %v4922
      %4924 = vmatprep.mubr.f32.mxu0 0.0
      %4925 = vmatmul.mubr.f32.gmra.mxu0 %v4822
      %v4926 = vpop.f32.mrf.mxu0
      %v4927 = vadd.f32 0.0, %v4926
      %v4928 = vpop.f32.mrf.mxu0
      %v4929 = vadd.f32 0.0, %v4928
      %4930 = vmatprep.mubr.f32.mxu0 0.0
      %4931 = vmatmul.mubr.f32.gmra.mxu0 %v4825
      %v4932 = vpop.f32.mrf.mxu0
      %v4933 = vadd.f32 0.0, %v4932
      %v4934 = vpop.f32.mrf.mxu0
      %v4935 = vadd.f32 0.0, %v4934
      %4936 = vmatprep.mubr.f32.mxu0 0.0
      %4937 = vmatmul.mubr.f32.gmra.mxu0 %v4828
      %v4938 = vpop.f32.mrf.mxu0
      %v4939 = vadd.f32 0.0, %v4938
      %v4940 = vpop.f32.mrf.mxu0
      %v4941 = vadd.f32 0.0, %v4940
      %4942 = vdwg.mxu0
      %4943 = vmatprep.subr.mxu0 0.0
      %4944 = vmatpush1.msra.mxu0 0.0
      %4945 = vmatprep.subr.mxu0 0.0
      %4946 = vmatpush1.msra.mxu0 0.0
      %4947 = vmatprep.subr.mxu0 0.0
      %4948 = vmatpush1.msra.mxu0 0.0
      %4949 = vmatprep.subr.mxu0 0.0
      %4950 = vmatpush1.msra.mxu0 0.0
      %4951 = vmatprep.subr.mxu0 0.0
      %4952 = vmatpush1.msra.mxu0 0.0
      %4953 = vmatprep.subr.mxu0 0.0
      %4954 = vmatpush1.msra.mxu0 0.0
      %4955 = vmatprep.subr.mxu0 0.0
      %4956 = vmatpush1.msra.mxu0 0.0
      %4957 = vmatprep.subr.mxu0 0.0
      %4958 = vmatpush1.msra.mxu0 0.0
      %4959 = vmatprep.subr.mxu0 0.0
      %4960 = vmatpush1.msra.mxu0 0.0
      %4961 = vmatprep.subr.mxu0 0.0
      %4962 = vmatpush1.msra.mxu0 0.0
      %4963 = vmatprep.subr.mxu0 0.0
      %4964 = vmatpush1.msra.mxu0 0.0
      %4965 = vmatprep.subr.mxu0 0.0
      %4966 = vmatpush1.msra.mxu0 0.0
      %4967 = vmatprep.subr.mxu0 %v4790
      %4968 = vmatpush1.msra.mxu0 %v4789
      %4969 = vmatprep.subr.mxu0 %v4772
      %4970 = vmatpush1.msra.mxu0 %v4771
      %4971 = vmatprep.subr.mxu0 %v4754
      %4972 = vmatpush1.msra.mxu0 %v4753
      %4973 = vmatprep.subr.mxu0 %v4736
      %4974 = vmatpush1.msra.mxu0 %v4735
      %4975 = vmatprep.subr.mxu0 0.0
      %4976 = vmatpush2.msra.mxu0 0.0
      %4977 = vmatprep.subr.mxu0 0.0
      %4978 = vmatpush2.msra.mxu0 0.0
      %4979 = vmatprep.subr.mxu0 0.0
      %4980 = vmatpush2.msra.mxu0 0.0
      %4981 = vmatprep.subr.mxu0 0.0
      %4982 = vmatpush2.msra.mxu0 0.0
      %4983 = vmatprep.subr.mxu0 0.0
      %4984 = vmatpush2.msra.mxu0 0.0
      %4985 = vmatprep.subr.mxu0 0.0
      %4986 = vmatpush2.msra.mxu0 0.0
      %4987 = vmatprep.subr.mxu0 0.0
      %4988 = vmatpush2.msra.mxu0 0.0
      %4989 = vmatprep.subr.mxu0 0.0
      %4990 = vmatpush2.msra.mxu0 0.0
      %4991 = vmatprep.subr.mxu0 0.0
      %4992 = vmatpush2.msra.mxu0 0.0
      %4993 = vmatprep.subr.mxu0 0.0
      %4994 = vmatpush2.msra.mxu0 0.0
      %4995 = vmatprep.subr.mxu0 0.0
      %4996 = vmatpush2.msra.mxu0 0.0
      %4997 = vmatprep.subr.mxu0 0.0
      %4998 = vmatpush2.msra.mxu0 0.0
      %4999 = vmatprep.subr.mxu0 0.0
      %5000 = vmatpush2.msra.mxu0 0.0
      %5001 = vmatprep.subr.mxu0 0.0
      %5002 = vmatpush2.msra.mxu0 0.0
      %5003 = vmatprep.subr.mxu0 0.0
      %5004 = vmatpush2.msra.mxu0 0.0
      %5005 = vmatprep.subr.mxu0 0.0
      %5006 = vmatpush2.msra.mxu0 0.0
      %5007 = vmatprep.mubr.f32.mxu0 0.0
      %5008 = vmatmul.mubr.f32.gmra.mxu0 %v4807
      %v5009 = vpop.f32.mrf.mxu0
      %v5010 = vadd.f32 0.0, %v5009
      %v5011 = vpop.f32.mrf.mxu0
      %v5012 = vadd.f32 0.0, %v5011
      %5013 = vmatprep.mubr.f32.mxu0 0.0
      %5014 = vmatmul.mubr.f32.gmra.mxu0 %v4810
      %v5015 = vpop.f32.mrf.mxu0
      %v5016 = vadd.f32 0.0, %v5015
      %v5017 = vpop.f32.mrf.mxu0
      %v5018 = vadd.f32 0.0, %v5017
      %5019 = vmatprep.mubr.f32.mxu0 0.0
      %5020 = vmatmul.mubr.f32.gmra.mxu0 %v4813
      %v5021 = vpop.f32.mrf.mxu0
      %v5022 = vadd.f32 0.0, %v5021
      %v5023 = vpop.f32.mrf.mxu0
      %v5024 = vadd.f32 0.0, %v5023
      %5025 = vmatprep.mubr.f32.mxu0 0.0
      %5026 = vmatmul.mubr.f32.gmra.mxu0 %v4816
      %v5027 = vpop.f32.mrf.mxu0
      %v5028 = vadd.f32 0.0, %v5027
      %v5029 = vpop.f32.mrf.mxu0
      %v5030 = vadd.f32 0.0, %v5029
      %5031 = vmatprep.mubr.f32.mxu0 0.0
      %5032 = vmatmul.mubr.f32.gmra.mxu0 %v4819
      %v5033 = vpop.f32.mrf.mxu0
      %v5034 = vadd.f32 0.0, %v5033
      %v5035 = vpop.f32.mrf.mxu0
      %v5036 = vadd.f32 0.0, %v5035
      %5037 = vmatprep.mubr.f32.mxu0 0.0
      %5038 = vmatmul.mubr.f32.gmra.mxu0 %v4822
      %v5039 = vpop.f32.mrf.mxu0
      %v5040 = vadd.f32 0.0, %v5039
      %v5041 = vpop.f32.mrf.mxu0
      %v5042 = vadd.f32 0.0, %v5041
      %5043 = vmatprep.mubr.f32.mxu0 0.0
      %5044 = vmatmul.mubr.f32.gmra.mxu0 %v4825
      %v5045 = vpop.f32.mrf.mxu0
      %v5046 = vadd.f32 0.0, %v5045
      %v5047 = vpop.f32.mrf.mxu0
      %v5048 = vadd.f32 0.0, %v5047
      %5049 = vmatprep.mubr.f32.mxu0 0.0
      %5050 = vmatmul.mubr.f32.gmra.mxu0 %v4828
      %v5051 = vpop.f32.mrf.mxu0
      %v5052 = vadd.f32 0.0, %v5051
      %v5053 = vpop.f32.mrf.mxu0
      %v5054 = vadd.f32 0.0, %v5053
      %5055 = vdwg.mxu0
      %5056 = vmatprep.subr.mxu0 0.0
      %5057 = vmatpush1.msra.mxu0 0.0
      %5058 = vmatprep.subr.mxu0 0.0
      %5059 = vmatpush1.msra.mxu0 0.0
      %5060 = vmatprep.subr.mxu0 0.0
      %5061 = vmatpush1.msra.mxu0 0.0
      %5062 = vmatprep.subr.mxu0 0.0
      %5063 = vmatpush1.msra.mxu0 0.0
      %5064 = vmatprep.subr.mxu0 0.0
      %5065 = vmatpush1.msra.mxu0 0.0
      %5066 = vmatprep.subr.mxu0 0.0
      %5067 = vmatpush1.msra.mxu0 0.0
      %5068 = vmatprep.subr.mxu0 0.0
      %5069 = vmatpush1.msra.mxu0 0.0
      %5070 = vmatprep.subr.mxu0 0.0
      %5071 = vmatpush1.msra.mxu0 0.0
      %5072 = vmatprep.subr.mxu0 0.0
      %5073 = vmatpush1.msra.mxu0 0.0
      %5074 = vmatprep.subr.mxu0 0.0
      %5075 = vmatpush1.msra.mxu0 0.0
      %5076 = vmatprep.subr.mxu0 0.0
      %5077 = vmatpush1.msra.mxu0 0.0
      %5078 = vmatprep.subr.mxu0 0.0
      %5079 = vmatpush1.msra.mxu0 0.0
      %5080 = vmatprep.subr.mxu0 %v4792
      %5081 = vmatpush1.msra.mxu0 %v4791
      %5082 = vmatprep.subr.mxu0 %v4774
      %5083 = vmatpush1.msra.mxu0 %v4773
      %5084 = vmatprep.subr.mxu0 %v4756
      %5085 = vmatpush1.msra.mxu0 %v4755
      %5086 = vmatprep.subr.mxu0 %v4738
      %5087 = vmatpush1.msra.mxu0 %v4737
      %5088 = vmatprep.subr.mxu0 0.0
      %5089 = vmatpush2.msra.mxu0 0.0
      %5090 = vmatprep.subr.mxu0 0.0
      %5091 = vmatpush2.msra.mxu0 0.0
      %5092 = vmatprep.subr.mxu0 0.0
      %5093 = vmatpush2.msra.mxu0 0.0
      %5094 = vmatprep.subr.mxu0 0.0
      %5095 = vmatpush2.msra.mxu0 0.0
      %5096 = vmatprep.subr.mxu0 0.0
      %5097 = vmatpush2.msra.mxu0 0.0
      %5098 = vmatprep.subr.mxu0 0.0
      %5099 = vmatpush2.msra.mxu0 0.0
      %5100 = vmatprep.subr.mxu0 0.0
      %5101 = vmatpush2.msra.mxu0 0.0
      %5102 = vmatprep.subr.mxu0 0.0
      %5103 = vmatpush2.msra.mxu0 0.0
      %5104 = vmatprep.subr.mxu0 0.0
      %5105 = vmatpush2.msra.mxu0 0.0
      %5106 = vmatprep.subr.mxu0 0.0
      %5107 = vmatpush2.msra.mxu0 0.0
      %5108 = vmatprep.subr.mxu0 0.0
      %5109 = vmatpush2.msra.mxu0 0.0
      %5110 = vmatprep.subr.mxu0 0.0
      %5111 = vmatpush2.msra.mxu0 0.0
      %5112 = vmatprep.subr.mxu0 0.0
      %5113 = vmatpush2.msra.mxu0 0.0
      %5114 = vmatprep.subr.mxu0 0.0
      %5115 = vmatpush2.msra.mxu0 0.0
      %5116 = vmatprep.subr.mxu0 0.0
      %5117 = vmatpush2.msra.mxu0 0.0
      %5118 = vmatprep.subr.mxu0 0.0
      %5119 = vmatpush2.msra.mxu0 0.0
      %5120 = vmatprep.mubr.f32.mxu0 0.0
      %5121 = vmatmul.mubr.f32.gmra.mxu0 %v4807
      %v5122 = vpop.f32.mrf.mxu0
      %v5123 = vadd.f32 0.0, %v5122
      %v5124 = vpop.f32.mrf.mxu0
      %v5125 = vadd.f32 0.0, %v5124
      %5126 = vmatprep.mubr.f32.mxu0 0.0
      %5127 = vmatmul.mubr.f32.gmra.mxu0 %v4810
      %v5128 = vpop.f32.mrf.mxu0
      %v5129 = vadd.f32 0.0, %v5128
      %v5130 = vpop.f32.mrf.mxu0
      %v5131 = vadd.f32 0.0, %v5130
      %5132 = vmatprep.mubr.f32.mxu0 0.0
      %5133 = vmatmul.mubr.f32.gmra.mxu0 %v4813
      %v5134 = vpop.f32.mrf.mxu0
      %v5135 = vadd.f32 0.0, %v5134
      %v5136 = vpop.f32.mrf.mxu0
      %v5137 = vadd.f32 0.0, %v5136
      %5138 = vmatprep.mubr.f32.mxu0 0.0
      %5139 = vmatmul.mubr.f32.gmra.mxu0 %v4816
      %v5140 = vpop.f32.mrf.mxu0
      %v5141 = vadd.f32 0.0, %v5140
      %v5142 = vpop.f32.mrf.mxu0
      %v5143 = vadd.f32 0.0, %v5142
      %5144 = vmatprep.mubr.f32.mxu0 0.0
      %5145 = vmatmul.mubr.f32.gmra.mxu0 %v4819
      %v5146 = vpop.f32.mrf.mxu0
      %v5147 = vadd.f32 0.0, %v5146
      %v5148 = vpop.f32.mrf.mxu0
      %v5149 = vadd.f32 0.0, %v5148
      %5150 = vmatprep.mubr.f32.mxu0 0.0
      %5151 = vmatmul.mubr.f32.gmra.mxu0 %v4822
      %v5152 = vpop.f32.mrf.mxu0
      %v5153 = vadd.f32 0.0, %v5152
      %v5154 = vpop.f32.mrf.mxu0
      %v5155 = vadd.f32 0.0, %v5154
      %5156 = vmatprep.mubr.f32.mxu0 0.0
      %5157 = vmatmul.mubr.f32.gmra.mxu0 %v4825
      %v5158 = vpop.f32.mrf.mxu0
      %v5159 = vadd.f32 0.0, %v5158
      %v5160 = vpop.f32.mrf.mxu0
      %v5161 = vadd.f32 0.0, %v5160
      %5162 = vmatprep.mubr.f32.mxu0 0.0
      %5163 = vmatmul.mubr.f32.gmra.mxu0 %v4828
      %v5164 = vpop.f32.mrf.mxu0
      %v5165 = vadd.f32 0.0, %v5164
      %v5166 = vpop.f32.mrf.mxu0
      %v5167 = vadd.f32 0.0, %v5166
      %5168 = vdwg.mxu0
      %5169 = vmatprep.subr.mxu0 0.0
      %5170 = vmatpush1.msra.mxu0 0.0
      %5171 = vmatprep.subr.mxu0 0.0
      %5172 = vmatpush1.msra.mxu0 0.0
      %5173 = vmatprep.subr.mxu0 0.0
      %5174 = vmatpush1.msra.mxu0 0.0
      %5175 = vmatprep.subr.mxu0 0.0
      %5176 = vmatpush1.msra.mxu0 0.0
      %5177 = vmatprep.subr.mxu0 0.0
      %5178 = vmatpush1.msra.mxu0 0.0
      %5179 = vmatprep.subr.mxu0 0.0
      %5180 = vmatpush1.msra.mxu0 0.0
      %5181 = vmatprep.subr.mxu0 0.0
      %5182 = vmatpush1.msra.mxu0 0.0
      %5183 = vmatprep.subr.mxu0 0.0
      %5184 = vmatpush1.msra.mxu0 0.0
      %5185 = vmatprep.subr.mxu0 0.0
      %5186 = vmatpush1.msra.mxu0 0.0
      %5187 = vmatprep.subr.mxu0 0.0
      %5188 = vmatpush1.msra.mxu0 0.0
      %5189 = vmatprep.subr.mxu0 0.0
      %5190 = vmatpush1.msra.mxu0 0.0
      %5191 = vmatprep.subr.mxu0 0.0
      %5192 = vmatpush1.msra.mxu0 0.0
      %5193 = vmatprep.subr.mxu0 %v4794
      %5194 = vmatpush1.msra.mxu0 %v4793
      %5195 = vmatprep.subr.mxu0 %v4776
      %5196 = vmatpush1.msra.mxu0 %v4775
      %5197 = vmatprep.subr.mxu0 %v4758
      %5198 = vmatpush1.msra.mxu0 %v4757
      %5199 = vmatprep.subr.mxu0 %v4740
      %5200 = vmatpush1.msra.mxu0 %v4739
      %5201 = vmatprep.subr.mxu0 0.0
      %5202 = vmatpush2.msra.mxu0 0.0
      %5203 = vmatprep.subr.mxu0 0.0
      %5204 = vmatpush2.msra.mxu0 0.0
      %5205 = vmatprep.subr.mxu0 0.0
      %5206 = vmatpush2.msra.mxu0 0.0
      %5207 = vmatprep.subr.mxu0 0.0
      %5208 = vmatpush2.msra.mxu0 0.0
      %5209 = vmatprep.subr.mxu0 0.0
      %5210 = vmatpush2.msra.mxu0 0.0
      %5211 = vmatprep.subr.mxu0 0.0
      %5212 = vmatpush2.msra.mxu0 0.0
      %5213 = vmatprep.subr.mxu0 0.0
      %5214 = vmatpush2.msra.mxu0 0.0
      %5215 = vmatprep.subr.mxu0 0.0
      %5216 = vmatpush2.msra.mxu0 0.0
      %5217 = vmatprep.subr.mxu0 0.0
      %5218 = vmatpush2.msra.mxu0 0.0
      %5219 = vmatprep.subr.mxu0 0.0
      %5220 = vmatpush2.msra.mxu0 0.0
      %5221 = vmatprep.subr.mxu0 0.0
      %5222 = vmatpush2.msra.mxu0 0.0
      %5223 = vmatprep.subr.mxu0 0.0
      %5224 = vmatpush2.msra.mxu0 0.0
      %5225 = vmatprep.subr.mxu0 0.0
      %5226 = vmatpush2.msra.mxu0 0.0
      %5227 = vmatprep.subr.mxu0 0.0
      %5228 = vmatpush2.msra.mxu0 0.0
      %5229 = vmatprep.subr.mxu0 0.0
      %5230 = vmatpush2.msra.mxu0 0.0
      %5231 = vmatprep.subr.mxu0 0.0
      %5232 = vmatpush2.msra.mxu0 0.0
      %5233 = vmatprep.mubr.f32.mxu0 0.0
      %5234 = vmatmul.mubr.f32.gmra.mxu0 %v4807
      %v5235 = vpop.f32.mrf.mxu0
      %v5236 = vadd.f32 0.0, %v5235
      %v5237 = vpop.f32.mrf.mxu0
      %v5238 = vadd.f32 0.0, %v5237
      %5239 = vmatprep.mubr.f32.mxu0 0.0
      %5240 = vmatmul.mubr.f32.gmra.mxu0 %v4810
      %v5241 = vpop.f32.mrf.mxu0
      %v5242 = vadd.f32 0.0, %v5241
      %v5243 = vpop.f32.mrf.mxu0
      %v5244 = vadd.f32 0.0, %v5243
      %5245 = vmatprep.mubr.f32.mxu0 0.0
      %5246 = vmatmul.mubr.f32.gmra.mxu0 %v4813
      %v5247 = vpop.f32.mrf.mxu0
      %v5248 = vadd.f32 0.0, %v5247
      %v5249 = vpop.f32.mrf.mxu0
      %v5250 = vadd.f32 0.0, %v5249
      %5251 = vmatprep.mubr.f32.mxu0 0.0
      %5252 = vmatmul.mubr.f32.gmra.mxu0 %v4816
      %v5253 = vpop.f32.mrf.mxu0
      %v5254 = vadd.f32 0.0, %v5253
      %v5255 = vpop.f32.mrf.mxu0
      %v5256 = vadd.f32 0.0, %v5255
      %5257 = vmatprep.mubr.f32.mxu0 0.0
      %5258 = vmatmul.mubr.f32.gmra.mxu0 %v4819
      %v5259 = vpop.f32.mrf.mxu0
      %v5260 = vadd.f32 0.0, %v5259
      %v5261 = vpop.f32.mrf.mxu0
      %v5262 = vadd.f32 0.0, %v5261
      %5263 = vmatprep.mubr.f32.mxu0 0.0
      %5264 = vmatmul.mubr.f32.gmra.mxu0 %v4822
      %v5265 = vpop.f32.mrf.mxu0
      %v5266 = vadd.f32 0.0, %v5265
      %v5267 = vpop.f32.mrf.mxu0
      %v5268 = vadd.f32 0.0, %v5267
      %5269 = vmatprep.mubr.f32.mxu0 0.0
      %5270 = vmatmul.mubr.f32.gmra.mxu0 %v4825
      %v5271 = vpop.f32.mrf.mxu0
      %v5272 = vadd.f32 0.0, %v5271
      %v5273 = vpop.f32.mrf.mxu0
      %v5274 = vadd.f32 0.0, %v5273
      %5275 = vmatprep.mubr.f32.mxu0 0.0
      %5276 = vmatmul.mubr.f32.gmra.mxu0 %v4828
      %v5277 = vpop.f32.mrf.mxu0
      %v5278 = vadd.f32 0.0, %v5277
      %v5279 = vpop.f32.mrf.mxu0
      %v5280 = vadd.f32 0.0, %v5279
      %5281 = vdwg.mxu0
      %5282 = vmatprep.subr.mxu0 0.0
      %5283 = vmatpush1.msra.mxu0 0.0
      %5284 = vmatprep.subr.mxu0 0.0
      %5285 = vmatpush1.msra.mxu0 0.0
      %5286 = vmatprep.subr.mxu0 0.0
      %5287 = vmatpush1.msra.mxu0 0.0
      %5288 = vmatprep.subr.mxu0 0.0
      %5289 = vmatpush1.msra.mxu0 0.0
      %5290 = vmatprep.subr.mxu0 0.0
      %5291 = vmatpush1.msra.mxu0 0.0
      %5292 = vmatprep.subr.mxu0 0.0
      %5293 = vmatpush1.msra.mxu0 0.0
      %5294 = vmatprep.subr.mxu0 0.0
      %5295 = vmatpush1.msra.mxu0 0.0
      %5296 = vmatprep.subr.mxu0 0.0
      %5297 = vmatpush1.msra.mxu0 0.0
      %5298 = vmatprep.subr.mxu0 0.0
      %5299 = vmatpush1.msra.mxu0 0.0
      %5300 = vmatprep.subr.mxu0 0.0
      %5301 = vmatpush1.msra.mxu0 0.0
      %5302 = vmatprep.subr.mxu0 0.0
      %5303 = vmatpush1.msra.mxu0 0.0
      %5304 = vmatprep.subr.mxu0 0.0
      %5305 = vmatpush1.msra.mxu0 0.0
      %5306 = vmatprep.subr.mxu0 %v4796
      %5307 = vmatpush1.msra.mxu0 %v4795
      %5308 = vmatprep.subr.mxu0 %v4778
      %5309 = vmatpush1.msra.mxu0 %v4777
      %5310 = vmatprep.subr.mxu0 %v4760
      %5311 = vmatpush1.msra.mxu0 %v4759
      %5312 = vmatprep.subr.mxu0 %v4742
      %5313 = vmatpush1.msra.mxu0 %v4741
      %5314 = vmatprep.subr.mxu0 0.0
      %5315 = vmatpush2.msra.mxu0 0.0
      %5316 = vmatprep.subr.mxu0 0.0
      %5317 = vmatpush2.msra.mxu0 0.0
      %5318 = vmatprep.subr.mxu0 0.0
      %5319 = vmatpush2.msra.mxu0 0.0
      %5320 = vmatprep.subr.mxu0 0.0
      %5321 = vmatpush2.msra.mxu0 0.0
      %5322 = vmatprep.subr.mxu0 0.0
      %5323 = vmatpush2.msra.mxu0 0.0
      %5324 = vmatprep.subr.mxu0 0.0
      %5325 = vmatpush2.msra.mxu0 0.0
      %5326 = vmatprep.subr.mxu0 0.0
      %5327 = vmatpush2.msra.mxu0 0.0
      %5328 = vmatprep.subr.mxu0 0.0
      %5329 = vmatpush2.msra.mxu0 0.0
      %5330 = vmatprep.subr.mxu0 0.0
      %5331 = vmatpush2.msra.mxu0 0.0
      %5332 = vmatprep.subr.mxu0 0.0
      %5333 = vmatpush2.msra.mxu0 0.0
      %5334 = vmatprep.subr.mxu0 0.0
      %5335 = vmatpush2.msra.mxu0 0.0
      %5336 = vmatprep.subr.mxu0 0.0
      %5337 = vmatpush2.msra.mxu0 0.0
      %5338 = vmatprep.subr.mxu0 0.0
      %5339 = vmatpush2.msra.mxu0 0.0
      %5340 = vmatprep.subr.mxu0 0.0
      %5341 = vmatpush2.msra.mxu0 0.0
      %5342 = vmatprep.subr.mxu0 0.0
      %5343 = vmatpush2.msra.mxu0 0.0
      %5344 = vmatprep.subr.mxu0 0.0
      %5345 = vmatpush2.msra.mxu0 0.0
      %5346 = vmatprep.mubr.f32.mxu0 0.0
      %5347 = vmatmul.mubr.f32.gmra.mxu0 %v4807
      %v5348 = vpop.f32.mrf.mxu0
      %v5349 = vadd.f32 0.0, %v5348
      %v5350 = vpop.f32.mrf.mxu0
      %v5351 = vadd.f32 0.0, %v5350
      %5352 = vmatprep.mubr.f32.mxu0 0.0
      %5353 = vmatmul.mubr.f32.gmra.mxu0 %v4810
      %v5354 = vpop.f32.mrf.mxu0
      %v5355 = vadd.f32 0.0, %v5354
      %v5356 = vpop.f32.mrf.mxu0
      %v5357 = vadd.f32 0.0, %v5356
      %5358 = vmatprep.mubr.f32.mxu0 0.0
      %5359 = vmatmul.mubr.f32.gmra.mxu0 %v4813
      %v5360 = vpop.f32.mrf.mxu0
      %v5361 = vadd.f32 0.0, %v5360
      %v5362 = vpop.f32.mrf.mxu0
      %v5363 = vadd.f32 0.0, %v5362
      %5364 = vmatprep.mubr.f32.mxu0 0.0
      %5365 = vmatmul.mubr.f32.gmra.mxu0 %v4816
      %v5366 = vpop.f32.mrf.mxu0
      %v5367 = vadd.f32 0.0, %v5366
      %v5368 = vpop.f32.mrf.mxu0
      %v5369 = vadd.f32 0.0, %v5368
      %5370 = vmatprep.mubr.f32.mxu0 0.0
      %5371 = vmatmul.mubr.f32.gmra.mxu0 %v4819
      %v5372 = vpop.f32.mrf.mxu0
      %v5373 = vadd.f32 0.0, %v5372
      %v5374 = vpop.f32.mrf.mxu0
      %v5375 = vadd.f32 0.0, %v5374
      %5376 = vmatprep.mubr.f32.mxu0 0.0
      %5377 = vmatmul.mubr.f32.gmra.mxu0 %v4822
      %v5378 = vpop.f32.mrf.mxu0
      %v5379 = vadd.f32 0.0, %v5378
      %v5380 = vpop.f32.mrf.mxu0
      %v5381 = vadd.f32 0.0, %v5380
      %5382 = vmatprep.mubr.f32.mxu0 0.0
      %5383 = vmatmul.mubr.f32.gmra.mxu0 %v4825
      %v5384 = vpop.f32.mrf.mxu0
      %v5385 = vadd.f32 0.0, %v5384
      %v5386 = vpop.f32.mrf.mxu0
      %v5387 = vadd.f32 0.0, %v5386
      %5388 = vmatprep.mubr.f32.mxu0 0.0
      %5389 = vmatmul.mubr.f32.gmra.mxu0 %v4828
      %v5390 = vpop.f32.mrf.mxu0
      %v5391 = vadd.f32 0.0, %v5390
      %v5392 = vpop.f32.mrf.mxu0
      %v5393 = vadd.f32 0.0, %v5392
      %5394 = vdwg.mxu0
      %5395 = vmatprep.subr.mxu0 0.0
      %5396 = vmatpush1.msra.mxu0 0.0
      %5397 = vmatprep.subr.mxu0 0.0
      %5398 = vmatpush1.msra.mxu0 0.0
      %5399 = vmatprep.subr.mxu0 0.0
      %5400 = vmatpush1.msra.mxu0 0.0
      %5401 = vmatprep.subr.mxu0 0.0
      %5402 = vmatpush1.msra.mxu0 0.0
      %5403 = vmatprep.subr.mxu0 0.0
      %5404 = vmatpush1.msra.mxu0 0.0
      %5405 = vmatprep.subr.mxu0 0.0
      %5406 = vmatpush1.msra.mxu0 0.0
      %5407 = vmatprep.subr.mxu0 0.0
      %5408 = vmatpush1.msra.mxu0 0.0
      %5409 = vmatprep.subr.mxu0 0.0
      %5410 = vmatpush1.msra.mxu0 0.0
      %5411 = vmatprep.subr.mxu0 0.0
      %5412 = vmatpush1.msra.mxu0 0.0
      %5413 = vmatprep.subr.mxu0 0.0
      %5414 = vmatpush1.msra.mxu0 0.0
      %5415 = vmatprep.subr.mxu0 0.0
      %5416 = vmatpush1.msra.mxu0 0.0
      %5417 = vmatprep.subr.mxu0 0.0
      %5418 = vmatpush1.msra.mxu0 0.0
      %5419 = vmatprep.subr.mxu0 %v4798
      %5420 = vmatpush1.msra.mxu0 %v4797
      %5421 = vmatprep.subr.mxu0 %v4780
      %5422 = vmatpush1.msra.mxu0 %v4779
      %5423 = vmatprep.subr.mxu0 %v4762
      %5424 = vmatpush1.msra.mxu0 %v4761
      %5425 = vmatprep.subr.mxu0 %v4744
      %5426 = vmatpush1.msra.mxu0 %v4743
      %5427 = vmatprep.subr.mxu0 0.0
      %5428 = vmatpush2.msra.mxu0 0.0
      %5429 = vmatprep.subr.mxu0 0.0
      %5430 = vmatpush2.msra.mxu0 0.0
      %5431 = vmatprep.subr.mxu0 0.0
      %5432 = vmatpush2.msra.mxu0 0.0
      %5433 = vmatprep.subr.mxu0 0.0
      %5434 = vmatpush2.msra.mxu0 0.0
      %5435 = vmatprep.subr.mxu0 0.0
      %5436 = vmatpush2.msra.mxu0 0.0
      %5437 = vmatprep.subr.mxu0 0.0
      %5438 = vmatpush2.msra.mxu0 0.0
      %5439 = vmatprep.subr.mxu0 0.0
      %5440 = vmatpush2.msra.mxu0 0.0
      %5441 = vmatprep.subr.mxu0 0.0
      %5442 = vmatpush2.msra.mxu0 0.0
      %5443 = vmatprep.subr.mxu0 0.0
      %5444 = vmatpush2.msra.mxu0 0.0
      %5445 = vmatprep.subr.mxu0 0.0
      %5446 = vmatpush2.msra.mxu0 0.0
      %5447 = vmatprep.subr.mxu0 0.0
      %5448 = vmatpush2.msra.mxu0 0.0
      %5449 = vmatprep.subr.mxu0 0.0
      %5450 = vmatpush2.msra.mxu0 0.0
      %5451 = vmatprep.subr.mxu0 0.0
      %5452 = vmatpush2.msra.mxu0 0.0
      %5453 = vmatprep.subr.mxu0 0.0
      %5454 = vmatpush2.msra.mxu0 0.0
      %5455 = vmatprep.subr.mxu0 0.0
      %5456 = vmatpush2.msra.mxu0 0.0
      %5457 = vmatprep.subr.mxu0 0.0
      %5458 = vmatpush2.msra.mxu0 0.0
      %5459 = vmatprep.mubr.f32.mxu0 0.0
      %5460 = vmatmul.mubr.f32.gmra.mxu0 %v4807
      %v5461 = vpop.f32.mrf.mxu0
      %v5462 = vadd.f32 0.0, %v5461
      %v5463 = vpop.f32.mrf.mxu0
      %v5464 = vadd.f32 0.0, %v5463
      %5465 = vmatprep.mubr.f32.mxu0 0.0
      %5466 = vmatmul.mubr.f32.gmra.mxu0 %v4810
      %v5467 = vpop.f32.mrf.mxu0
      %v5468 = vadd.f32 0.0, %v5467
      %v5469 = vpop.f32.mrf.mxu0
      %v5470 = vadd.f32 0.0, %v5469
      %5471 = vmatprep.mubr.f32.mxu0 0.0
      %5472 = vmatmul.mubr.f32.gmra.mxu0 %v4813
      %v5473 = vpop.f32.mrf.mxu0
      %v5474 = vadd.f32 0.0, %v5473
      %v5475 = vpop.f32.mrf.mxu0
      %v5476 = vadd.f32 0.0, %v5475
      %5477 = vmatprep.mubr.f32.mxu0 0.0
      %5478 = vmatmul.mubr.f32.gmra.mxu0 %v4816
      %v5479 = vpop.f32.mrf.mxu0
      %v5480 = vadd.f32 0.0, %v5479
      %v5481 = vpop.f32.mrf.mxu0
      %v5482 = vadd.f32 0.0, %v5481
      %5483 = vmatprep.mubr.f32.mxu0 0.0
      %5484 = vmatmul.mubr.f32.gmra.mxu0 %v4819
      %v5485 = vpop.f32.mrf.mxu0
      %v5486 = vadd.f32 0.0, %v5485
      %v5487 = vpop.f32.mrf.mxu0
      %v5488 = vadd.f32 0.0, %v5487
      %5489 = vmatprep.mubr.f32.mxu0 0.0
      %5490 = vmatmul.mubr.f32.gmra.mxu0 %v4822
      %v5491 = vpop.f32.mrf.mxu0
      %v5492 = vadd.f32 0.0, %v5491
      %v5493 = vpop.f32.mrf.mxu0
      %v5494 = vadd.f32 0.0, %v5493
      %5495 = vmatprep.mubr.f32.mxu0 0.0
      %5496 = vmatmul.mubr.f32.gmra.mxu0 %v4825
      %v5497 = vpop.f32.mrf.mxu0
      %v5498 = vadd.f32 0.0, %v5497
      %v5499 = vpop.f32.mrf.mxu0
      %v5500 = vadd.f32 0.0, %v5499
      %5501 = vmatprep.mubr.f32.mxu0 0.0
      %5502 = vmatmul.mubr.f32.gmra.mxu0 %v4828
      %v5503 = vpop.f32.mrf.mxu0
      %v5504 = vadd.f32 0.0, %v5503
      %v5505 = vpop.f32.mrf.mxu0
      %v5506 = vadd.f32 0.0, %v5505
      %5507 = vdwg.mxu0
      %5508 = vmatprep.subr.mxu0 0.0
      %5509 = vmatpush1.msra.mxu0 0.0
      %5510 = vmatprep.subr.mxu0 0.0
      %5511 = vmatpush1.msra.mxu0 0.0
      %5512 = vmatprep.subr.mxu0 0.0
      %5513 = vmatpush1.msra.mxu0 0.0
      %5514 = vmatprep.subr.mxu0 0.0
      %5515 = vmatpush1.msra.mxu0 0.0
      %5516 = vmatprep.subr.mxu0 0.0
      %5517 = vmatpush1.msra.mxu0 0.0
      %5518 = vmatprep.subr.mxu0 0.0
      %5519 = vmatpush1.msra.mxu0 0.0
      %5520 = vmatprep.subr.mxu0 0.0
      %5521 = vmatpush1.msra.mxu0 0.0
      %5522 = vmatprep.subr.mxu0 0.0
      %5523 = vmatpush1.msra.mxu0 0.0
      %5524 = vmatprep.subr.mxu0 0.0
      %5525 = vmatpush1.msra.mxu0 0.0
      %5526 = vmatprep.subr.mxu0 0.0
      %5527 = vmatpush1.msra.mxu0 0.0
      %5528 = vmatprep.subr.mxu0 0.0
      %5529 = vmatpush1.msra.mxu0 0.0
      %5530 = vmatprep.subr.mxu0 0.0
      %5531 = vmatpush1.msra.mxu0 0.0
      %5532 = vmatprep.subr.mxu0 %v4800
      %5533 = vmatpush1.msra.mxu0 %v4799
      %5534 = vmatprep.subr.mxu0 %v4782
      %5535 = vmatpush1.msra.mxu0 %v4781
      %5536 = vmatprep.subr.mxu0 %v4764
      %5537 = vmatpush1.msra.mxu0 %v4763
      %5538 = vmatprep.subr.mxu0 %v4746
      %5539 = vmatpush1.msra.mxu0 %v4745
      %5540 = vmatprep.subr.mxu0 0.0
      %5541 = vmatpush2.msra.mxu0 0.0
      %5542 = vmatprep.subr.mxu0 0.0
      %5543 = vmatpush2.msra.mxu0 0.0
      %5544 = vmatprep.subr.mxu0 0.0
      %5545 = vmatpush2.msra.mxu0 0.0
      %5546 = vmatprep.subr.mxu0 0.0
      %5547 = vmatpush2.msra.mxu0 0.0
      %5548 = vmatprep.subr.mxu0 0.0
      %5549 = vmatpush2.msra.mxu0 0.0
      %5550 = vmatprep.subr.mxu0 0.0
      %5551 = vmatpush2.msra.mxu0 0.0
      %5552 = vmatprep.subr.mxu0 0.0
      %5553 = vmatpush2.msra.mxu0 0.0
      %5554 = vmatprep.subr.mxu0 0.0
      %5555 = vmatpush2.msra.mxu0 0.0
      %5556 = vmatprep.subr.mxu0 0.0
      %5557 = vmatpush2.msra.mxu0 0.0
      %5558 = vmatprep.subr.mxu0 0.0
      %5559 = vmatpush2.msra.mxu0 0.0
      %5560 = vmatprep.subr.mxu0 0.0
      %5561 = vmatpush2.msra.mxu0 0.0
      %5562 = vmatprep.subr.mxu0 0.0
      %5563 = vmatpush2.msra.mxu0 0.0
      %5564 = vmatprep.subr.mxu0 0.0
      %5565 = vmatpush2.msra.mxu0 0.0
      %5566 = vmatprep.subr.mxu0 0.0
      %5567 = vmatpush2.msra.mxu0 0.0
      %5568 = vmatprep.subr.mxu0 0.0
      %5569 = vmatpush2.msra.mxu0 0.0
      %5570 = vmatprep.subr.mxu0 0.0
      %5571 = vmatpush2.msra.mxu0 0.0
      %5572 = vmatprep.mubr.f32.mxu0 0.0
      %5573 = vmatmul.mubr.f32.gmra.mxu0 %v4807
      %v5574 = vpop.f32.mrf.mxu0
      %v5575 = vadd.f32 0.0, %v5574
      %v5576 = vpop.f32.mrf.mxu0
      %v5577 = vadd.f32 0.0, %v5576
      %5578 = vmatprep.mubr.f32.mxu0 0.0
      %5579 = vmatmul.mubr.f32.gmra.mxu0 %v4810
      %v5580 = vpop.f32.mrf.mxu0
      %v5581 = vadd.f32 0.0, %v5580
      %v5582 = vpop.f32.mrf.mxu0
      %v5583 = vadd.f32 0.0, %v5582
      %5584 = vmatprep.mubr.f32.mxu0 0.0
      %5585 = vmatmul.mubr.f32.gmra.mxu0 %v4813
      %v5586 = vpop.f32.mrf.mxu0
      %v5587 = vadd.f32 0.0, %v5586
      %v5588 = vpop.f32.mrf.mxu0
      %v5589 = vadd.f32 0.0, %v5588
      %5590 = vmatprep.mubr.f32.mxu0 0.0
      %5591 = vmatmul.mubr.f32.gmra.mxu0 %v4816
      %v5592 = vpop.f32.mrf.mxu0
      %v5593 = vadd.f32 0.0, %v5592
      %v5594 = vpop.f32.mrf.mxu0
      %v5595 = vadd.f32 0.0, %v5594
      %5596 = vmatprep.mubr.f32.mxu0 0.0
      %5597 = vmatmul.mubr.f32.gmra.mxu0 %v4819
      %v5598 = vpop.f32.mrf.mxu0
      %v5599 = vadd.f32 0.0, %v5598
      %v5600 = vpop.f32.mrf.mxu0
      %v5601 = vadd.f32 0.0, %v5600
      %5602 = vmatprep.mubr.f32.mxu0 0.0
      %5603 = vmatmul.mubr.f32.gmra.mxu0 %v4822
      %v5604 = vpop.f32.mrf.mxu0
      %v5605 = vadd.f32 0.0, %v5604
      %v5606 = vpop.f32.mrf.mxu0
      %v5607 = vadd.f32 0.0, %v5606
      %5608 = vmatprep.mubr.f32.mxu0 0.0
      %5609 = vmatmul.mubr.f32.gmra.mxu0 %v4825
      %v5610 = vpop.f32.mrf.mxu0
      %v5611 = vadd.f32 0.0, %v5610
      %v5612 = vpop.f32.mrf.mxu0
      %v5613 = vadd.f32 0.0, %v5612
      %5614 = vmatprep.mubr.f32.mxu0 0.0
      %5615 = vmatmul.mubr.f32.gmra.mxu0 %v4828
      %v5616 = vpop.f32.mrf.mxu0
      %v5617 = vadd.f32 0.0, %v5616
      %v5618 = vpop.f32.mrf.mxu0
      %v5619 = vadd.f32 0.0, %v5618
      %5620 = vdwg.mxu0
      %5621 = vmatprep.subr.mxu0 0.0
      %5622 = vmatpush1.msra.mxu0 0.0
      %5623 = vmatprep.subr.mxu0 0.0
      %5624 = vmatpush1.msra.mxu0 0.0
      %5625 = vmatprep.subr.mxu0 0.0
      %5626 = vmatpush1.msra.mxu0 0.0
      %5627 = vmatprep.subr.mxu0 0.0
      %5628 = vmatpush1.msra.mxu0 0.0
      %5629 = vmatprep.subr.mxu0 0.0
      %5630 = vmatpush1.msra.mxu0 0.0
      %5631 = vmatprep.subr.mxu0 0.0
      %5632 = vmatpush1.msra.mxu0 0.0
      %5633 = vmatprep.subr.mxu0 0.0
      %5634 = vmatpush1.msra.mxu0 0.0
      %5635 = vmatprep.subr.mxu0 0.0
      %5636 = vmatpush1.msra.mxu0 0.0
      %5637 = vmatprep.subr.mxu0 0.0
      %5638 = vmatpush1.msra.mxu0 0.0
      %5639 = vmatprep.subr.mxu0 0.0
      %5640 = vmatpush1.msra.mxu0 0.0
      %5641 = vmatprep.subr.mxu0 0.0
      %5642 = vmatpush1.msra.mxu0 0.0
      %5643 = vmatprep.subr.mxu0 0.0
      %5644 = vmatpush1.msra.mxu0 0.0
      %5645 = vmatprep.subr.mxu0 %v4802
      %5646 = vmatpush1.msra.mxu0 %v4801
      %5647 = vmatprep.subr.mxu0 %v4784
      %5648 = vmatpush1.msra.mxu0 %v4783
      %5649 = vmatprep.subr.mxu0 %v4766
      %5650 = vmatpush1.msra.mxu0 %v4765
      %5651 = vmatprep.subr.mxu0 %v4748
      %5652 = vmatpush1.msra.mxu0 %v4747
      %5653 = vmatprep.subr.mxu0 0.0
      %5654 = vmatpush2.msra.mxu0 0.0
      %5655 = vmatprep.subr.mxu0 0.0
      %5656 = vmatpush2.msra.mxu0 0.0
      %5657 = vmatprep.subr.mxu0 0.0
      %5658 = vmatpush2.msra.mxu0 0.0
      %5659 = vmatprep.subr.mxu0 0.0
      %5660 = vmatpush2.msra.mxu0 0.0
      %5661 = vmatprep.subr.mxu0 0.0
      %5662 = vmatpush2.msra.mxu0 0.0
      %5663 = vmatprep.subr.mxu0 0.0
      %5664 = vmatpush2.msra.mxu0 0.0
      %5665 = vmatprep.subr.mxu0 0.0
      %5666 = vmatpush2.msra.mxu0 0.0
      %5667 = vmatprep.subr.mxu0 0.0
      %5668 = vmatpush2.msra.mxu0 0.0
      %5669 = vmatprep.subr.mxu0 0.0
      %5670 = vmatpush2.msra.mxu0 0.0
      %5671 = vmatprep.subr.mxu0 0.0
      %5672 = vmatpush2.msra.mxu0 0.0
      %5673 = vmatprep.subr.mxu0 0.0
      %5674 = vmatpush2.msra.mxu0 0.0
      %5675 = vmatprep.subr.mxu0 0.0
      %5676 = vmatpush2.msra.mxu0 0.0
      %5677 = vmatprep.subr.mxu0 0.0
      %5678 = vmatpush2.msra.mxu0 0.0
      %5679 = vmatprep.subr.mxu0 0.0
      %5680 = vmatpush2.msra.mxu0 0.0
      %5681 = vmatprep.subr.mxu0 0.0
      %5682 = vmatpush2.msra.mxu0 0.0
      %5683 = vmatprep.subr.mxu0 0.0
      %5684 = vmatpush2.msra.mxu0 0.0
      %5685 = vmatprep.mubr.f32.mxu0 0.0
      %5686 = vmatmul.mubr.f32.gmra.mxu0 %v4807
      %v5687 = vpop.f32.mrf.mxu0
      %v5688 = vadd.f32 0.0, %v5687
      %v5689 = vpop.f32.mrf.mxu0
      %v5690 = vadd.f32 0.0, %v5689
      %5691 = vmatprep.mubr.f32.mxu0 0.0
      %5692 = vmatmul.mubr.f32.gmra.mxu0 %v4810
      %v5693 = vpop.f32.mrf.mxu0
      %v5694 = vadd.f32 0.0, %v5693
      %v5695 = vpop.f32.mrf.mxu0
      %v5696 = vadd.f32 0.0, %v5695
      %5697 = vmatprep.mubr.f32.mxu0 0.0
      %5698 = vmatmul.mubr.f32.gmra.mxu0 %v4813
      %v5699 = vpop.f32.mrf.mxu0
      %v5700 = vadd.f32 0.0, %v5699
      %v5701 = vpop.f32.mrf.mxu0
      %v5702 = vadd.f32 0.0, %v5701
      %5703 = vmatprep.mubr.f32.mxu0 0.0
      %5704 = vmatmul.mubr.f32.gmra.mxu0 %v4816
      %v5705 = vpop.f32.mrf.mxu0
      %v5706 = vadd.f32 0.0, %v5705
      %v5707 = vpop.f32.mrf.mxu0
      %v5708 = vadd.f32 0.0, %v5707
      %5709 = vmatprep.mubr.f32.mxu0 0.0
      %5710 = vmatmul.mubr.f32.gmra.mxu0 %v4819
      %v5711 = vpop.f32.mrf.mxu0
      %v5712 = vadd.f32 0.0, %v5711
      %v5713 = vpop.f32.mrf.mxu0
      %v5714 = vadd.f32 0.0, %v5713
      %5715 = vmatprep.mubr.f32.mxu0 0.0
      %5716 = vmatmul.mubr.f32.gmra.mxu0 %v4822
      %v5717 = vpop.f32.mrf.mxu0
      %v5718 = vadd.f32 0.0, %v5717
      %v5719 = vpop.f32.mrf.mxu0
      %v5720 = vadd.f32 0.0, %v5719
      %5721 = vmatprep.mubr.f32.mxu0 0.0
      %5722 = vmatmul.mubr.f32.gmra.mxu0 %v4825
      %v5723 = vpop.f32.mrf.mxu0
      %v5724 = vadd.f32 0.0, %v5723
      %v5725 = vpop.f32.mrf.mxu0
      %v5726 = vadd.f32 0.0, %v5725
      %5727 = vmatprep.mubr.f32.mxu0 0.0
      %5728 = vmatmul.mubr.f32.gmra.mxu0 %v4828
      %v5729 = vpop.f32.mrf.mxu0
      %v5730 = vadd.f32 0.0, %v5729
      %v5731 = vpop.f32.mrf.mxu0
      %v5732 = vadd.f32 0.0, %v5731
      %5733 = vdwg.mxu0
      %5734 = vmatprep.subr.mxu0 0.0
      %5735 = vmatpush1.msra.mxu0 0.0
      %5736 = vmatprep.subr.mxu0 0.0
      %5737 = vmatpush1.msra.mxu0 0.0
      %5738 = vmatprep.subr.mxu0 0.0
      %5739 = vmatpush1.msra.mxu0 0.0
      %5740 = vmatprep.subr.mxu0 0.0
      %5741 = vmatpush1.msra.mxu0 0.0
      %5742 = vmatprep.subr.mxu0 0.0
      %5743 = vmatpush1.msra.mxu0 0.0
      %5744 = vmatprep.subr.mxu0 0.0
      %5745 = vmatpush1.msra.mxu0 0.0
      %5746 = vmatprep.subr.mxu0 0.0
      %5747 = vmatpush1.msra.mxu0 0.0
      %5748 = vmatprep.subr.mxu0 0.0
      %5749 = vmatpush1.msra.mxu0 0.0
      %5750 = vmatprep.subr.mxu0 0.0
      %5751 = vmatpush1.msra.mxu0 0.0
      %5752 = vmatprep.subr.mxu0 0.0
      %5753 = vmatpush1.msra.mxu0 0.0
      %5754 = vmatprep.subr.mxu0 0.0
      %5755 = vmatpush1.msra.mxu0 0.0
      %5756 = vmatprep.subr.mxu0 0.0
      %5757 = vmatpush1.msra.mxu0 0.0
      %5758 = vmatprep.subr.mxu0 %v4804
      %5759 = vmatpush1.msra.mxu0 %v4803
      %5760 = vmatprep.subr.mxu0 %v4786
      %5761 = vmatpush1.msra.mxu0 %v4785
      %5762 = vmatprep.subr.mxu0 %v4768
      %5763 = vmatpush1.msra.mxu0 %v4767
      %5764 = vmatprep.subr.mxu0 %v4750
      %5765 = vmatpush1.msra.mxu0 %v4749
      %5766 = vmatprep.subr.mxu0 0.0
      %5767 = vmatpush2.msra.mxu0 0.0
      %5768 = vmatprep.subr.mxu0 0.0
      %5769 = vmatpush2.msra.mxu0 0.0
      %5770 = vmatprep.subr.mxu0 0.0
      %5771 = vmatpush2.msra.mxu0 0.0
      %5772 = vmatprep.subr.mxu0 0.0
      %5773 = vmatpush2.msra.mxu0 0.0
      %5774 = vmatprep.subr.mxu0 0.0
      %5775 = vmatpush2.msra.mxu0 0.0
      %5776 = vmatprep.subr.mxu0 0.0
      %5777 = vmatpush2.msra.mxu0 0.0
      %5778 = vmatprep.subr.mxu0 0.0
      %5779 = vmatpush2.msra.mxu0 0.0
      %5780 = vmatprep.subr.mxu0 0.0
      %5781 = vmatpush2.msra.mxu0 0.0
      %5782 = vmatprep.subr.mxu0 0.0
      %5783 = vmatpush2.msra.mxu0 0.0
      %5784 = vmatprep.subr.mxu0 0.0
      %5785 = vmatpush2.msra.mxu0 0.0
      %5786 = vmatprep.subr.mxu0 0.0
      %5787 = vmatpush2.msra.mxu0 0.0
      %5788 = vmatprep.subr.mxu0 0.0
      %5789 = vmatpush2.msra.mxu0 0.0
      %5790 = vmatprep.subr.mxu0 0.0
      %5791 = vmatpush2.msra.mxu0 0.0
      %5792 = vmatprep.subr.mxu0 0.0
      %5793 = vmatpush2.msra.mxu0 0.0
      %5794 = vmatprep.subr.mxu0 0.0
      %5795 = vmatpush2.msra.mxu0 0.0
      %5796 = vmatprep.subr.mxu0 0.0
      %5797 = vmatpush2.msra.mxu0 0.0
      %5798 = vmatprep.mubr.f32.mxu0 0.0
      %5799 = vmatmul.mubr.f32.gmra.mxu0 %v4807
      %v5800 = vpop.f32.mrf.mxu0
      %v5801 = vadd.f32 0.0, %v5800
      %v5802 = vpop.f32.mrf.mxu0
      %v5803 = vadd.f32 0.0, %v5802
      %5804 = vmatprep.mubr.f32.mxu0 0.0
      %5805 = vmatmul.mubr.f32.gmra.mxu0 %v4810
      %v5806 = vpop.f32.mrf.mxu0
      %v5807 = vadd.f32 0.0, %v5806
      %v5808 = vpop.f32.mrf.mxu0
      %v5809 = vadd.f32 0.0, %v5808
      %5810 = vmatprep.mubr.f32.mxu0 0.0
      %5811 = vmatmul.mubr.f32.gmra.mxu0 %v4813
      %v5812 = vpop.f32.mrf.mxu0
      %v5813 = vadd.f32 0.0, %v5812
      %v5814 = vpop.f32.mrf.mxu0
      %v5815 = vadd.f32 0.0, %v5814
      %5816 = vmatprep.mubr.f32.mxu0 0.0
      %5817 = vmatmul.mubr.f32.gmra.mxu0 %v4816
      %v5818 = vpop.f32.mrf.mxu0
      %v5819 = vadd.f32 0.0, %v5818
      %v5820 = vpop.f32.mrf.mxu0
      %v5821 = vadd.f32 0.0, %v5820
      %5822 = vmatprep.mubr.f32.mxu0 0.0
      %5823 = vmatmul.mubr.f32.gmra.mxu0 %v4819
      %v5824 = vpop.f32.mrf.mxu0
      %v5825 = vadd.f32 0.0, %v5824
      %v5826 = vpop.f32.mrf.mxu0
      %v5827 = vadd.f32 0.0, %v5826
      %5828 = vmatprep.mubr.f32.mxu0 0.0
      %5829 = vmatmul.mubr.f32.gmra.mxu0 %v4822
      %v5830 = vpop.f32.mrf.mxu0
      %v5831 = vadd.f32 0.0, %v5830
      %v5832 = vpop.f32.mrf.mxu0
      %v5833 = vadd.f32 0.0, %v5832
      %5834 = vmatprep.mubr.f32.mxu0 0.0
      %5835 = vmatmul.mubr.f32.gmra.mxu0 %v4825
      %v5836 = vpop.f32.mrf.mxu0
      %v5837 = vadd.f32 0.0, %v5836
      %v5838 = vpop.f32.mrf.mxu0
      %v5839 = vadd.f32 0.0, %v5838
      %5840 = vmatprep.mubr.f32.mxu0 0.0
      %5841 = vmatmul.mubr.f32.gmra.mxu0 %v4828
      %v5842 = vpop.f32.mrf.mxu0
      %v5843 = vadd.f32 0.0, %v5842
      %v5844 = vpop.f32.mrf.mxu0
      %v5845 = vadd.f32 0.0, %v5844
      %5846 = vdwg.mxu0
      %v5847 = vld [vmem:[%s17] sm:$0x3]
      %v5849 = vlaneseq
      %v5850 = vshrl.u32 %v5849, 7
      %v5851 = vsub.s32 0, %v5850
      %v5852 = vrot.slane %v5847, %v5851
      %v5853 = vlaneseq
      %v5854 = vshrl.u32 %v5853, 7
      %v5855 = vsub.s32 1, %v5854
      %v5856 = vrot.slane %v5847, %v5855
      %5859 = vmatprep.subr.mxu0 %v5054
      %5860 = vmatpush1.msra.mxu0 %v5052
      %5861 = vmatprep.subr.mxu0 %v5048
      %5862 = vmatpush1.msra.mxu0 %v5046
      %5863 = vmatprep.subr.mxu0 %v5042
      %5864 = vmatpush1.msra.mxu0 %v5040
      %5865 = vmatprep.subr.mxu0 %v5036
      %5866 = vmatpush1.msra.mxu0 %v5034
      %5867 = vmatprep.subr.mxu0 %v5030
      %5868 = vmatpush1.msra.mxu0 %v5028
      %5869 = vmatprep.subr.mxu0 %v5024
      %5870 = vmatpush1.msra.mxu0 %v5022
      %5871 = vmatprep.subr.mxu0 %v5018
      %5872 = vmatpush1.msra.mxu0 %v5016
      %5873 = vmatprep.subr.mxu0 %v5012
      %5874 = vmatpush1.msra.mxu0 %v5010
      %5875 = vmatprep.subr.mxu0 %v4941
      %5876 = vmatpush1.msra.mxu0 %v4939
      %5877 = vmatprep.subr.mxu0 %v4935
      %5878 = vmatpush1.msra.mxu0 %v4933
      %5879 = vmatprep.subr.mxu0 %v4929
      %5880 = vmatpush1.msra.mxu0 %v4927
      %5881 = vmatprep.subr.mxu0 %v4923
      %5882 = vmatpush1.msra.mxu0 %v4921
      %5883 = vmatprep.subr.mxu0 %v4917
      %5884 = vmatpush1.msra.mxu0 %v4915
      %5885 = vmatprep.subr.mxu0 %v4911
      %5886 = vmatpush1.msra.mxu0 %v4909
      %5887 = vmatprep.subr.mxu0 %v4905
      %5888 = vmatpush1.msra.mxu0 %v4903
      %5889 = vmatprep.subr.mxu0 %v4899
      %5890 = vmatpush1.msra.mxu0 %v4897
      %5891 = vmatprep.subr.mxu0 %v5280
      %5892 = vmatpush2.msra.mxu0 %v5278
      %5893 = vmatprep.subr.mxu0 %v5274
      %5894 = vmatpush2.msra.mxu0 %v5272
      %5895 = vmatprep.subr.mxu0 %v5268
      %5896 = vmatpush2.msra.mxu0 %v5266
      %5897 = vmatprep.subr.mxu0 %v5262
      %5898 = vmatpush2.msra.mxu0 %v5260
      %5899 = vmatprep.subr.mxu0 %v5256
      %5900 = vmatpush2.msra.mxu0 %v5254
      %5901 = vmatprep.subr.mxu0 %v5250
      %5902 = vmatpush2.msra.mxu0 %v5248
      %5903 = vmatprep.subr.mxu0 %v5244
      %5904 = vmatpush2.msra.mxu0 %v5242
      %5905 = vmatprep.subr.mxu0 %v5238
      %5906 = vmatpush2.msra.mxu0 %v5236
      %5907 = vmatprep.subr.mxu0 %v5167
      %5908 = vmatpush2.msra.mxu0 %v5165
      %5909 = vmatprep.subr.mxu0 %v5161
      %5910 = vmatpush2.msra.mxu0 %v5159
      %5911 = vmatprep.subr.mxu0 %v5155
      %5912 = vmatpush2.msra.mxu0 %v5153
      %5913 = vmatprep.subr.mxu0 %v5149
      %5914 = vmatpush2.msra.mxu0 %v5147
      %5915 = vmatprep.subr.mxu0 %v5143
      %5916 = vmatpush2.msra.mxu0 %v5141
      %5917 = vmatprep.subr.mxu0 %v5137
      %5918 = vmatpush2.msra.mxu0 %v5135
      %5919 = vmatprep.subr.mxu0 %v5131
      %5920 = vmatpush2.msra.mxu0 %v5129
      %5921 = vmatprep.subr.mxu0 %v5125
      %5922 = vmatpush2.msra.mxu0 %v5123
      %5923 = vmatprep.mubr.f32.mxu0 %v2381
      %5924 = vmatmul.mubr.f32.gmra.mxu0 %v2380
      %v5925 = vpop.f32.mrf.mxu0
      %v5926 = vadd.f32 %v5852, %v5925
      %v5927 = vpop.f32.mrf.mxu0
      %v5928 = vadd.f32 %v5856, %v5927
      %5929 = vmatprep.mubr.f32.mxu0 %v2386
      %5930 = vmatmul.mubr.f32.gmra.mxu0 %v2385
      %v5931 = vpop.f32.mrf.mxu0
      %v5932 = vadd.f32 %v5852, %v5931
      %v5933 = vpop.f32.mrf.mxu0
      %v5934 = vadd.f32 %v5856, %v5933
      %5935 = vmatprep.mubr.f32.mxu0 %v2391
      %5936 = vmatmul.mubr.f32.gmra.mxu0 %v2390
      %v5937 = vpop.f32.mrf.mxu0
      %v5938 = vadd.f32 %v5852, %v5937
      %v5939 = vpop.f32.mrf.mxu0
      %v5940 = vadd.f32 %v5856, %v5939
      %5941 = vmatprep.mubr.f32.mxu0 %v2396
      %5942 = vmatmul.mubr.f32.gmra.mxu0 %v2395
      %v5943 = vpop.f32.mrf.mxu0
      %v5944 = vadd.f32 %v5852, %v5943
      %v5945 = vpop.f32.mrf.mxu0
      %v5946 = vadd.f32 %v5856, %v5945
      %5947 = vmatprep.mubr.f32.mxu0 %v2401
      %5948 = vmatmul.mubr.f32.gmra.mxu0 %v2400
      %v5949 = vpop.f32.mrf.mxu0
      %v5950 = vadd.f32 %v5852, %v5949
      %v5951 = vpop.f32.mrf.mxu0
      %v5952 = vadd.f32 %v5856, %v5951
      %5953 = vmatprep.mubr.f32.mxu0 %v2406
      %5954 = vmatmul.mubr.f32.gmra.mxu0 %v2405
      %v5955 = vpop.f32.mrf.mxu0
      %v5956 = vadd.f32 %v5852, %v5955
      %v5957 = vpop.f32.mrf.mxu0
      %v5958 = vadd.f32 %v5856, %v5957
      %5959 = vmatprep.mubr.f32.mxu0 %v2411
      %5960 = vmatmul.mubr.f32.gmra.mxu0 %v2410
      %v5961 = vpop.f32.mrf.mxu0
      %v5962 = vadd.f32 %v5852, %v5961
      %v5963 = vpop.f32.mrf.mxu0
      %v5964 = vadd.f32 %v5856, %v5963
      %5965 = vmatprep.mubr.f32.mxu0 %v2416
      %5966 = vmatmul.mubr.f32.gmra.mxu0 %v2415
      %v5967 = vpop.f32.mrf.mxu0
      %v5968 = vadd.f32 %v5852, %v5967
      %v5969 = vpop.f32.mrf.mxu0
      %v5970 = vadd.f32 %v5856, %v5969
      %5971 = vdwg.mxu0
      %5972 = vmatprep.subr.mxu0 %v5506
      %5973 = vmatpush1.msra.mxu0 %v5504
      %5974 = vmatprep.subr.mxu0 %v5500
      %5975 = vmatpush1.msra.mxu0 %v5498
      %5976 = vmatprep.subr.mxu0 %v5494
      %5977 = vmatpush1.msra.mxu0 %v5492
      %5978 = vmatprep.subr.mxu0 %v5488
      %5979 = vmatpush1.msra.mxu0 %v5486
      %5980 = vmatprep.subr.mxu0 %v5482
      %5981 = vmatpush1.msra.mxu0 %v5480
      %5982 = vmatprep.subr.mxu0 %v5476
      %5983 = vmatpush1.msra.mxu0 %v5474
      %5984 = vmatprep.subr.mxu0 %v5470
      %5985 = vmatpush1.msra.mxu0 %v5468
      %5986 = vmatprep.subr.mxu0 %v5464
      %5987 = vmatpush1.msra.mxu0 %v5462
      %5988 = vmatprep.subr.mxu0 %v5393
      %5989 = vmatpush1.msra.mxu0 %v5391
      %5990 = vmatprep.subr.mxu0 %v5387
      %5991 = vmatpush1.msra.mxu0 %v5385
      %5992 = vmatprep.subr.mxu0 %v5381
      %5993 = vmatpush1.msra.mxu0 %v5379
      %5994 = vmatprep.subr.mxu0 %v5375
      %5995 = vmatpush1.msra.mxu0 %v5373
      %5996 = vmatprep.subr.mxu0 %v5369
      %5997 = vmatpush1.msra.mxu0 %v5367
      %5998 = vmatprep.subr.mxu0 %v5363
      %5999 = vmatpush1.msra.mxu0 %v5361
      %6000 = vmatprep.subr.mxu0 %v5357
      %6001 = vmatpush1.msra.mxu0 %v5355
      %6002 = vmatprep.subr.mxu0 %v5351
      %6003 = vmatpush1.msra.mxu0 %v5349
      %6004 = vmatprep.subr.mxu0 %v5732
      %6005 = vmatpush2.msra.mxu0 %v5730
      %6006 = vmatprep.subr.mxu0 %v5726
      %6007 = vmatpush2.msra.mxu0 %v5724
      %6008 = vmatprep.subr.mxu0 %v5720
      %6009 = vmatpush2.msra.mxu0 %v5718
      %6010 = vmatprep.subr.mxu0 %v5714
      %6011 = vmatpush2.msra.mxu0 %v5712
      %6012 = vmatprep.subr.mxu0 %v5708
      %6013 = vmatpush2.msra.mxu0 %v5706
      %6014 = vmatprep.subr.mxu0 %v5702
      %6015 = vmatpush2.msra.mxu0 %v5700
      %6016 = vmatprep.subr.mxu0 %v5696
      %6017 = vmatpush2.msra.mxu0 %v5694
      %6018 = vmatprep.subr.mxu0 %v5690
      %6019 = vmatpush2.msra.mxu0 %v5688
      %6020 = vmatprep.subr.mxu0 %v5619
      %6021 = vmatpush2.msra.mxu0 %v5617
      %6022 = vmatprep.subr.mxu0 %v5613
      %6023 = vmatpush2.msra.mxu0 %v5611
      %6024 = vmatprep.subr.mxu0 %v5607
      %6025 = vmatpush2.msra.mxu0 %v5605
      %6026 = vmatprep.subr.mxu0 %v5601
      %6027 = vmatpush2.msra.mxu0 %v5599
      %6028 = vmatprep.subr.mxu0 %v5595
      %6029 = vmatpush2.msra.mxu0 %v5593
      %6030 = vmatprep.subr.mxu0 %v5589
      %6031 = vmatpush2.msra.mxu0 %v5587
      %6032 = vmatprep.subr.mxu0 %v5583
      %6033 = vmatpush2.msra.mxu0 %v5581
      %6034 = vmatprep.subr.mxu0 %v5577
      %6035 = vmatpush2.msra.mxu0 %v5575
      %6036 = vmatprep.mubr.f32.mxu0 %v2383
      %6037 = vmatmul.mubr.f32.gmra.mxu0 %v2382
      %v6038 = vpop.f32.mrf.mxu0
      %v6039 = vadd.f32 %v5926, %v6038
      %v6040 = vpop.f32.mrf.mxu0
      %v6041 = vadd.f32 %v5928, %v6040
      %6042 = vmatprep.mubr.f32.mxu0 %v2388
      %6043 = vmatmul.mubr.f32.gmra.mxu0 %v2387
      %v6044 = vpop.f32.mrf.mxu0
      %v6045 = vadd.f32 %v5932, %v6044
      %v6046 = vpop.f32.mrf.mxu0
      %v6047 = vadd.f32 %v5934, %v6046
      %6048 = vmatprep.mubr.f32.mxu0 %v2393
      %6049 = vmatmul.mubr.f32.gmra.mxu0 %v2392
      %v6050 = vpop.f32.mrf.mxu0
      %v6051 = vadd.f32 %v5938, %v6050
      %v6052 = vpop.f32.mrf.mxu0
      %v6053 = vadd.f32 %v5940, %v6052
      %6054 = vmatprep.mubr.f32.mxu0 %v2398
      %6055 = vmatmul.mubr.f32.gmra.mxu0 %v2397
      %v6056 = vpop.f32.mrf.mxu0
      %v6057 = vadd.f32 %v5944, %v6056
      %v6058 = vpop.f32.mrf.mxu0
      %v6059 = vadd.f32 %v5946, %v6058
      %6060 = vmatprep.mubr.f32.mxu0 %v2403
      %6061 = vmatmul.mubr.f32.gmra.mxu0 %v2402
      %v6062 = vpop.f32.mrf.mxu0
      %v6063 = vadd.f32 %v5950, %v6062
      %v6064 = vpop.f32.mrf.mxu0
      %v6065 = vadd.f32 %v5952, %v6064
      %6066 = vmatprep.mubr.f32.mxu0 %v2408
      %6067 = vmatmul.mubr.f32.gmra.mxu0 %v2407
      %v6068 = vpop.f32.mrf.mxu0
      %v6069 = vadd.f32 %v5956, %v6068
      %v6070 = vpop.f32.mrf.mxu0
      %v6071 = vadd.f32 %v5958, %v6070
      %6072 = vmatprep.mubr.f32.mxu0 %v2413
      %6073 = vmatmul.mubr.f32.gmra.mxu0 %v2412
      %v6074 = vpop.f32.mrf.mxu0
      %v6075 = vadd.f32 %v5962, %v6074
      %v6076 = vpop.f32.mrf.mxu0
      %v6077 = vadd.f32 %v5964, %v6076
      %6078 = vmatprep.mubr.f32.mxu0 %v2418
      %6079 = vmatmul.mubr.f32.gmra.mxu0 %v2417
      %v6080 = vpop.f32.mrf.mxu0
      %v6081 = vadd.f32 %v5968, %v6080
      %v6082 = vpop.f32.mrf.mxu0
      %v6083 = vadd.f32 %v5970, %v6082
      %6084 = vdwg.mxu0
      %6085 = vmatprep.subr.mxu0 0.0
      %6086 = vmatpush1.msra.mxu0 0.0
      %6087 = vmatprep.subr.mxu0 0.0
      %6088 = vmatpush1.msra.mxu0 0.0
      %6089 = vmatprep.subr.mxu0 0.0
      %6090 = vmatpush1.msra.mxu0 0.0
      %6091 = vmatprep.subr.mxu0 0.0
      %6092 = vmatpush1.msra.mxu0 0.0
      %6093 = vmatprep.subr.mxu0 0.0
      %6094 = vmatpush1.msra.mxu0 0.0
      %6095 = vmatprep.subr.mxu0 0.0
      %6096 = vmatpush1.msra.mxu0 0.0
      %6097 = vmatprep.subr.mxu0 0.0
      %6098 = vmatpush1.msra.mxu0 0.0
      %6099 = vmatprep.subr.mxu0 0.0
      %6100 = vmatpush1.msra.mxu0 0.0
      %6101 = vmatprep.subr.mxu0 %v5845
      %6102 = vmatpush1.msra.mxu0 %v5843
      %6103 = vmatprep.subr.mxu0 %v5839
      %6104 = vmatpush1.msra.mxu0 %v5837
      %6105 = vmatprep.subr.mxu0 %v5833
      %6106 = vmatpush1.msra.mxu0 %v5831
      %6107 = vmatprep.subr.mxu0 %v5827
      %6108 = vmatpush1.msra.mxu0 %v5825
      %6109 = vmatprep.subr.mxu0 %v5821
      %6110 = vmatpush1.msra.mxu0 %v5819
      %6111 = vmatprep.subr.mxu0 %v5815
      %6112 = vmatpush1.msra.mxu0 %v5813
      %6113 = vmatprep.subr.mxu0 %v5809
      %6114 = vmatpush1.msra.mxu0 %v5807
      %6115 = vmatprep.subr.mxu0 %v5803
      %6116 = vmatpush1.msra.mxu0 %v5801
      %6117 = vmatprep.subr.mxu0 0.0
      %6118 = vmatpush2.msra.mxu0 0.0
      %6119 = vmatprep.subr.mxu0 0.0
      %6120 = vmatpush2.msra.mxu0 0.0
      %6121 = vmatprep.subr.mxu0 0.0
      %6122 = vmatpush2.msra.mxu0 0.0
      %6123 = vmatprep.subr.mxu0 0.0
      %6124 = vmatpush2.msra.mxu0 0.0
      %6125 = vmatprep.subr.mxu0 0.0
      %6126 = vmatpush2.msra.mxu0 0.0
      %6127 = vmatprep.subr.mxu0 0.0
      %6128 = vmatpush2.msra.mxu0 0.0
      %6129 = vmatprep.subr.mxu0 0.0
      %6130 = vmatpush2.msra.mxu0 0.0
      %6131 = vmatprep.subr.mxu0 0.0
      %6132 = vmatpush2.msra.mxu0 0.0
      %6133 = vmatprep.subr.mxu0 0.0
      %6134 = vmatpush2.msra.mxu0 0.0
      %6135 = vmatprep.subr.mxu0 0.0
      %6136 = vmatpush2.msra.mxu0 0.0
      %6137 = vmatprep.subr.mxu0 0.0
      %6138 = vmatpush2.msra.mxu0 0.0
      %6139 = vmatprep.subr.mxu0 0.0
      %6140 = vmatpush2.msra.mxu0 0.0
      %6141 = vmatprep.subr.mxu0 0.0
      %6142 = vmatpush2.msra.mxu0 0.0
      %6143 = vmatprep.subr.mxu0 0.0
      %6144 = vmatpush2.msra.mxu0 0.0
      %6145 = vmatprep.subr.mxu0 0.0
      %6146 = vmatpush2.msra.mxu0 0.0
      %6147 = vmatprep.subr.mxu0 0.0
      %6148 = vmatpush2.msra.mxu0 0.0
      %6149 = vmatprep.mubr.f32.mxu0 0.0
      %6150 = vmatmul.mubr.f32.gmra.mxu0 %v3186
      %v6151 = vpop.f32.mrf.mxu0
      %v6152 = vadd.f32 %v6039, %v6151
      %v6153 = vpop.f32.mrf.mxu0
      %v6154 = vadd.f32 %v6041, %v6153
      %6155 = vmatprep.mubr.f32.mxu0 0.0
      %6156 = vmatmul.mubr.f32.gmra.mxu0 %v3189
      %v6157 = vpop.f32.mrf.mxu0
      %v6158 = vadd.f32 %v6045, %v6157
      %v6159 = vpop.f32.mrf.mxu0
      %v6160 = vadd.f32 %v6047, %v6159
      %6161 = vmatprep.mubr.f32.mxu0 0.0
      %6162 = vmatmul.mubr.f32.gmra.mxu0 %v3192
      %v6163 = vpop.f32.mrf.mxu0
      %v6164 = vadd.f32 %v6051, %v6163
      %v6165 = vpop.f32.mrf.mxu0
      %v6166 = vadd.f32 %v6053, %v6165
      %6167 = vmatprep.mubr.f32.mxu0 0.0
      %6168 = vmatmul.mubr.f32.gmra.mxu0 %v3195
      %v6169 = vpop.f32.mrf.mxu0
      %v6170 = vadd.f32 %v6057, %v6169
      %v6171 = vpop.f32.mrf.mxu0
      %v6172 = vadd.f32 %v6059, %v6171
      %6173 = vmatprep.mubr.f32.mxu0 0.0
      %6174 = vmatmul.mubr.f32.gmra.mxu0 %v3198
      %v6175 = vpop.f32.mrf.mxu0
      %v6176 = vadd.f32 %v6063, %v6175
      %v6177 = vpop.f32.mrf.mxu0
      %v6178 = vadd.f32 %v6065, %v6177
      %6179 = vmatprep.mubr.f32.mxu0 0.0
      %6180 = vmatmul.mubr.f32.gmra.mxu0 %v3201
      %v6181 = vpop.f32.mrf.mxu0
      %v6182 = vadd.f32 %v6069, %v6181
      %v6183 = vpop.f32.mrf.mxu0
      %v6184 = vadd.f32 %v6071, %v6183
      %6185 = vmatprep.mubr.f32.mxu0 0.0
      %6186 = vmatmul.mubr.f32.gmra.mxu0 %v3204
      %v6187 = vpop.f32.mrf.mxu0
      %v6188 = vadd.f32 %v6075, %v6187
      %v6189 = vpop.f32.mrf.mxu0
      %v6190 = vadd.f32 %v6077, %v6189
      %6191 = vmatprep.mubr.f32.mxu0 0.0
      %6192 = vmatmul.mubr.f32.gmra.mxu0 %v3207
      %v6193 = vpop.f32.mrf.mxu0
      %v6194 = vadd.f32 %v6081, %v6193
      %v6195 = vpop.f32.mrf.mxu0
      %v6196 = vadd.f32 %v6083, %v6195
      %6197 = vdwg.mxu0
      %v6198 = vmax.f32 %v6152, 0.0
      %v6199 = vmax.f32 %v6154, 0.0
      %v6200 = vmax.f32 %v6158, 0.0
      %v6201 = vmax.f32 %v6160, 0.0
      %v6202 = vmax.f32 %v6164, 0.0
      %v6203 = vmax.f32 %v6166, 0.0
      %v6204 = vmax.f32 %v6170, 0.0
      %v6205 = vmax.f32 %v6172, 0.0
      %v6206 = vmax.f32 %v6176, 0.0
      %v6207 = vmax.f32 %v6178, 0.0
      %v6208 = vmax.f32 %v6182, 0.0
      %v6209 = vmax.f32 %v6184, 0.0
      %v6210 = vmax.f32 %v6188, 0.0
      %v6211 = vmax.f32 %v6190, 0.0
      %v6212 = vmax.f32 %v6194, 0.0
      %v6213 = vmax.f32 %v6196, 0.0
      %v6214 = vld [vmem:[%s5] sm:$0xff]
      %v6215 = vld [vmem:[%s5 + $0x8] sm:$0xff]
      %v6216 = vld [vmem:[%s5 + $0x10] sm:$0xff]
      %v6217 = vld [vmem:[%s5 + $0x18] sm:$0xff]
      %v6218 = vld [vmem:[%s5 + $0x20] sm:$0xff]
      %v6219 = vld [vmem:[%s5 + $0x28] sm:$0xff]
      %v6220 = vld [vmem:[%s5 + $0x30] sm:$0xff]
      %v6221 = vld [vmem:[%s5 + $0x38] sm:$0xff]
      %6223 = vset.pattern.permute.xlu0 0
      %6224 = vperm.xlu0 %6223, %v6214
      %v6225 = vpop.permute.xlu0 %6224
      %6228 = vset.pattern.permute.xlu0 0
      %6229 = vperm.xlu0 %6228, %v6215
      %v6230 = vpop.permute.xlu0 %6229
      %6233 = vset.pattern.permute.xlu0 0
      %6234 = vperm.xlu0 %6233, %v6216
      %v6235 = vpop.permute.xlu0 %6234
      %6238 = vset.pattern.permute.xlu0 0
      %6239 = vperm.xlu0 %6238, %v6217
      %v6240 = vpop.permute.xlu0 %6239
      %6243 = vset.pattern.permute.xlu0 0
      %6244 = vperm.xlu0 %6243, %v6218
      %v6245 = vpop.permute.xlu0 %6244
      %6248 = vset.pattern.permute.xlu0 0
      %6249 = vperm.xlu0 %6248, %v6219
      %v6250 = vpop.permute.xlu0 %6249
      %6253 = vset.pattern.permute.xlu0 0
      %6254 = vperm.xlu0 %6253, %v6220
      %v6255 = vpop.permute.xlu0 %6254
      %6258 = vset.pattern.permute.xlu0 0
      %6259 = vperm.xlu0 %6258, %v6221
      %v6260 = vpop.permute.xlu0 %6259
      %v6262 = vmul.f32 %v3524, %v6225
      %v6263 = vmul.f32 %v3525, %v6230
      %v6264 = vmul.f32 %v3526, %v6235
      %v6265 = vmul.f32 %v3527, %v6240
      %v6266 = vmul.f32 %v3528, %v6245
      %v6267 = vmul.f32 %v3529, %v6250
      %v6268 = vmul.f32 %v3530, %v6255
      %v6269 = vmul.f32 %v3531, %v6260
      %6270 = vst [vmem:[%s575] sm:$0xff] %v6262
      %6271 = vst [vmem:[%s575 + $0x20] sm:$0xff] %v6263
      %6272 = vst [vmem:[%s575 + $0x40] sm:$0xff] %v6264
      %6273 = vst [vmem:[%s575 + $0x60] sm:$0xff] %v6265
      %6274 = vst [vmem:[%s575 + $0x80] sm:$0xff] %v6266
      %6275 = vst [vmem:[%s575 + $0xa0] sm:$0xff] %v6267
      %6276 = vst [vmem:[%s575 + $0xc0] sm:$0xff] %v6268
      %6277 = vst [vmem:[%s575 + $0xe0] sm:$0xff] %v6269
      %v6278 = vmul.f32 %v4589, %v6225
      %v6279 = vmul.f32 %v4590, %v6230
      %v6280 = vmul.f32 %v4591, %v6235
      %v6281 = vmul.f32 %v4592, %v6240
      %v6282 = vmul.f32 %v4593, %v6245
      %v6283 = vmul.f32 %v4594, %v6250
      %v6284 = vmul.f32 %v4595, %v6255
      %v6285 = vmul.f32 %v4596, %v6260
      %6286 = vst [vmem:[%s575 + $0x8] sm:$0xff] %v6278
      %6287 = vst [vmem:[%s575 + $0x28] sm:$0xff] %v6279
      %6288 = vst [vmem:[%s575 + $0x48] sm:$0xff] %v6280
      %6289 = vst [vmem:[%s575 + $0x68] sm:$0xff] %v6281
      %6290 = vst [vmem:[%s575 + $0x88] sm:$0xff] %v6282
      %6291 = vst [vmem:[%s575 + $0xa8] sm:$0xff] %v6283
      %6292 = vst [vmem:[%s575 + $0xc8] sm:$0xff] %v6284
      %6293 = vst [vmem:[%s575 + $0xe8] sm:$0xff] %v6285
      %v6294 = vmul.f32 %v6198, %v6225
      %v6295 = vmul.f32 %v6199, %v6225
      %v6296 = vmul.f32 %v6200, %v6230
      %v6297 = vmul.f32 %v6201, %v6230
      %v6298 = vmul.f32 %v6202, %v6235
      %v6299 = vmul.f32 %v6203, %v6235
      %v6300 = vmul.f32 %v6204, %v6240
      %v6301 = vmul.f32 %v6205, %v6240
      %v6302 = vmul.f32 %v6206, %v6245
      %v6303 = vmul.f32 %v6207, %v6245
      %v6304 = vmul.f32 %v6208, %v6250
      %v6305 = vmul.f32 %v6209, %v6250
      %v6306 = vmul.f32 %v6210, %v6255
      %v6307 = vmul.f32 %v6211, %v6255
      %v6308 = vmul.f32 %v6212, %v6260
      %v6309 = vmul.f32 %v6213, %v6260
      %6310 = vst [vmem:[%s575 + $0x10] sm:$0xff] %v6294
      %6311 = vst [vmem:[%s575 + $0x18] sm:$0xff] %v6295
      %6312 = vst [vmem:[%s575 + $0x30] sm:$0xff] %v6296
      %6313 = vst [vmem:[%s575 + $0x38] sm:$0xff] %v6297
      %6314 = vst [vmem:[%s575 + $0x50] sm:$0xff] %v6298
      %6315 = vst [vmem:[%s575 + $0x58] sm:$0xff] %v6299
      %6316 = vst [vmem:[%s575 + $0x70] sm:$0xff] %v6300
      %6317 = vst [vmem:[%s575 + $0x78] sm:$0xff] %v6301
      %6318 = vst [vmem:[%s575 + $0x90] sm:$0xff] %v6302
      %6319 = vst [vmem:[%s575 + $0x98] sm:$0xff] %v6303
      %6320 = vst [vmem:[%s575 + $0xb0] sm:$0xff] %v6304
      %6321 = vst [vmem:[%s575 + $0xb8] sm:$0xff] %v6305
      %6322 = vst [vmem:[%s575 + $0xd0] sm:$0xff] %v6306
      %6323 = vst [vmem:[%s575 + $0xd8] sm:$0xff] %v6307
      %6324 = vst [vmem:[%s575 + $0xf0] sm:$0xff] %v6308
      %6325 = vst [vmem:[%s575 + $0xf8] sm:$0xff] %v6309
      %p6326 = scmp.lt.s32.totalorder %s29, 1
      %s6327 = scalar_select %p6326, %s29, 1
      %s6328 = smul.addr %s6327, 32
      %s6329 = smul.addr %s6328, 8
      %s6330 = scalar_lea.vmem %s18, %s6329
      // Predicated region
      $region93: #{squeezecfnet_light_forward.2} parent=91 // pred_check
        %p6331 = pneg %p430
      $region94: #{squeezecfnet_light_forward.2} parent=91 // pred_check_branch
        %6333 = sbr.rel (%p6331) target = $region96
      $region95: #{squeezecfnet_light_forward.2} parent=91 // pred_region
        _
      $region96: #{squeezecfnet_light_forward.2} parent=91 // pred_fallthru
        _
    $region92: #{squeezecfnet_light_forward.2} parent=5 // pred_fallthru
      _
    %p6334 = scmp.le.s32.totalorder 2, %s24
    // Predicated region
    $region97: #{squeezecfnet_light_forward.2} parent=5 // pred_check
      %p6335 = pneg %p6334
    $region98: #{squeezecfnet_light_forward.2} parent=5 // pred_check_branch
      %6337 = sbr.rel (%p6335) target = $region100
    $region99: #{squeezecfnet_light_forward.2} parent=5 // pred_region
      %s6338 = ssub.s32 %s24, 2
      // Predicated region
      $region101: #{squeezecfnet_light_forward.2} parent=99 // pred_check
        %p6339 = pneg %p436
      $region102: #{squeezecfnet_light_forward.2} parent=99 // pred_check_branch
        %6341 = sbr.rel (%p6339) target = $region104
      $region103: #{squeezecfnet_light_forward.2} parent=99 // pred_region
        %p6342 = scmp.lt.s32.totalorder %s30, 1
        %s6343 = scalar_select %p6342, %s30, 1
        %s6344 = smul.addr %s6343, 32
        %s6345 = smul.addr %s6344, 8
        %s6346 = scalar_lea.vmem %s18, %s6345
      $region104: #{squeezecfnet_light_forward.2} parent=99 // pred_fallthru
        _
    $region100: #{squeezecfnet_light_forward.2} parent=5 // pred_fallthru
      _
  $region6: #{squeezecfnet_light_forward.2} parent=0 // loop_footer
    %s28 = sadd.s32 1, %s24
  $region7: #{squeezecfnet_light_forward.2} parent=0 // loop_footer_branch
    %23 = sbr.rel target = $region3
  $region8: #{squeezecfnet_light_forward.2} parent=0 // loop_exit
    _

// kernel: squeeze.0
$region0: #{squeeze.0}
  %s0 = inlined_call_operand.vmem [shape: f32[2,1,8,5,1], index: 0, kind: input, shape index: {}]
  %s1 = inlined_call_operand.vmem [shape: f32[80,1], index: 1, kind: output, shape index: {}]
  %v2 = vld [vmem:[%s0] sm:$0xff]
  %vm3 = vcmask 7168
  %4 = vst.msk [vmem:[%s1] ss:$5 sm:$0xff] %vm3, %v2
  %s5 = scalar_lea.vmem %s0, 8
  %v6 = vld [vmem:[%s5] sm:$0xff]
  %vm7 = vcmask 7168
  %s8 = scalar_lea.vmem %s1, 40
  %9 = vst.msk [vmem:[%s8] ss:$5 sm:$0xff] %vm7, %v6
  %v10 = vld.sshfl [vmem:[%s0] sm:$0xff pattern:$0xf28e17d0]
  %11 = vrot.lane.b32.xlu0 %v10, 127
  %v12 = vpop.permute.xlu0 %11
  %vm13 = vcmask 7168
  %s14 = scalar_lea.vmem %s1, 1
  %15 = vst.msk [vmem:[%s14] ss:$65 sm:$0x3] %vm13, %v12
  %s16 = scalar_lea.vmem %s1, 96
  %17 = vst.msk [vmem:[%s16] ss:$-30 sm:$0xc] %vm13, %v12
  %s18 = scalar_lea.vmem %s1, 191
  %19 = vst.msk [vmem:[%s18] ss:$-30 sm:$0x70] %vm13, %v12
  %s20 = scalar_lea.vmem %s1, 69
  %21 = vst.msk [vmem:[%s20] sm:$0x80] %vm13, %v12
  %s22 = scalar_lea.vmem %s0, 3
  %v23 = vld.sshfl [vmem:[%s22] sm:$0xff pattern:$0x39281706]
  %24 = vrot.lane.b32.xlu0 %v23, 127
  %v25 = vpop.permute.xlu0 %24
  %vm26 = vcmask 7168
  %s27 = scalar_lea.vmem %s1, 46
  %28 = vst.msk [vmem:[%s27] ss:$-30 sm:$0x3] %vm26, %v25
  %s29 = scalar_lea.vmem %s1, 111
  %30 = vst.msk [vmem:[%s29] ss:$-30 sm:$0xc] %vm26, %v25
  %s31 = scalar_lea.vmem %s1, 176
  %32 = vst.msk [vmem:[%s31] ss:$-30 sm:$0x30] %vm26, %v25
  %s33 = scalar_lea.vmem %s1, 241
  %34 = vst.msk [vmem:[%s33] ss:$-30 sm:$0xc0] %vm26, %v25
  %v35 = vld.sshfl [vmem:[%s0] sm:$0xff pattern:$0x28e17d06]
  %36 = vrot.lane.b32.xlu0 %v35, 126
  %v37 = vpop.permute.xlu0 %36
  %vm38 = vcmask 7168
  %s39 = scalar_lea.vmem %s1, 32
  %40 = vst.msk [vmem:[%s39] ss:$-30 sm:$0x3] %vm38, %v37
  %s41 = scalar_lea.vmem %s1, 127
  %42 = vst.msk [vmem:[%s41] ss:$-30 sm:$0x1c] %vm38, %v37
  %s43 = scalar_lea.vmem %s1, 222
  %44 = vst.msk [vmem:[%s43] ss:$-30 sm:$0xe0] %vm38, %v37
  %s45 = scalar_lea.vmem %s0, 3
  %v46 = vld.sshfl [vmem:[%s45] sm:$0xff pattern:$0x9281706c]
  %47 = vrot.lane.b32.xlu0 %v46, 126
  %v48 = vpop.permute.xlu0 %47
  %vm49 = vcmask 7168
  %s50 = scalar_lea.vmem %s1, 77
  %51 = vst.msk [vmem:[%s50] ss:$-30 sm:$0x7] %vm49, %v48
  %s52 = scalar_lea.vmem %s1, 142
  %53 = vst.msk [vmem:[%s52] ss:$-30 sm:$0x18] %vm49, %v48
  %s54 = scalar_lea.vmem %s1, 207
  %55 = vst.msk [vmem:[%s54] ss:$-30 sm:$0x60] %vm49, %v48
  %s56 = scalar_lea.vmem %s1, 55
  %57 = vst.msk [vmem:[%s56] sm:$0x80] %vm49, %v48
  %v58 = vld.sshfl [vmem:[%s0] sm:$0xff pattern:$0x28e17d06]
  %59 = vrot.lane.b32.xlu0 %v58, 125
  %v60 = vpop.permute.xlu0 %59
  %vm61 = vcmask 7168
  %s62 = scalar_lea.vmem %s1, 33
  %63 = vst.msk [vmem:[%s62] ss:$-30 sm:$0x3] %vm61, %v60
  %s64 = scalar_lea.vmem %s1, 128
  %65 = vst.msk [vmem:[%s64] ss:$-30 sm:$0x1c] %vm61, %v60
  %s66 = scalar_lea.vmem %s1, 223
  %67 = vst.msk [vmem:[%s66] ss:$-30 sm:$0xe0] %vm61, %v60
  %s68 = scalar_lea.vmem %s0, 3
  %v69 = vld.sshfl [vmem:[%s68] sm:$0xff pattern:$0x9281706c]
  %70 = vrot.lane.b32.xlu0 %v69, 125
  %v71 = vpop.permute.xlu0 %70
  %vm72 = vcmask 7168
  %s73 = scalar_lea.vmem %s1, 78
  %74 = vst.msk [vmem:[%s73] ss:$-30 sm:$0x7] %vm72, %v71
  %s75 = scalar_lea.vmem %s1, 143
  %76 = vst.msk [vmem:[%s75] ss:$-30 sm:$0x18] %vm72, %v71
  %s77 = scalar_lea.vmem %s1, 208
  %78 = vst.msk [vmem:[%s77] ss:$-30 sm:$0x60] %vm72, %v71
  %s79 = scalar_lea.vmem %s1, 56
  %80 = vst.msk [vmem:[%s79] sm:$0x80] %vm72, %v71
  %v81 = vld.sshfl [vmem:[%s0] sm:$0xff pattern:$0x8e17d06c]
  %82 = vrot.lane.b32.xlu0 %v81, 124
  %v83 = vpop.permute.xlu0 %82
  %vm84 = vcmask 7168
  %s85 = scalar_lea.vmem %s1, 64
  %86 = vst.msk [vmem:[%s85] ss:$-30 sm:$0x7] %vm84, %v83
  %s87 = scalar_lea.vmem %s1, 159
  %88 = vst.msk [vmem:[%s87] ss:$-30 sm:$0x38] %vm84, %v83
  %s89 = scalar_lea.vmem %s1, 254
  %90 = vst.msk [vmem:[%s89] ss:$-30 sm:$0xc0] %vm84, %v83
  %s91 = scalar_lea.vmem %s0, 2
  %v92 = vld.sshfl [vmem:[%s91] sm:$0xff pattern:$0x392817d0]
  %93 = vrot.lane.b32.xlu0 %v92, 124
  %v94 = vpop.permute.xlu0 %93
  %vm95 = vcmask 7168
  %s96 = scalar_lea.vmem %s1, 14
  %97 = vst.msk [vmem:[%s96] ss:$65 sm:$0x3] %vm95, %v94
  %s98 = scalar_lea.vmem %s1, 109
  %99 = vst.msk [vmem:[%s98] ss:$-30 sm:$0xc] %vm95, %v94
  %s100 = scalar_lea.vmem %s1, 174
  %101 = vst.msk [vmem:[%s100] ss:$-30 sm:$0x30] %vm95, %v94
  %s102 = scalar_lea.vmem %s1, 239
  %103 = vst.msk [vmem:[%s102] ss:$-30 sm:$0xc0] %vm95, %v94

// kernel: squeezecfnet_light_forward.3
$region0: #{squeezecfnet_light_forward.3}
  #allocation0 [shape = 'u32[]', space=smem, size = 0x4, offset = 0x4, fixed_abs, tag = 'smem constant byte address 0x4 - core index']
  #allocation1 [shape = 'u32[144,128]{1,0:T(1,128)}', space=vmem, size = 0x12000, scoped, tag = 'internal scratch']
  %s0 = inlined_call_operand.vmem [shape: f32[80,512], index: 0, kind: input, shape index: {}]
  %s1 = inlined_call_operand.vmem [shape: f32[80,512], index: 1, kind: input, shape index: {}]
  %s2 = inlined_call_operand.vmem [shape: f32[80,512], index: 2, kind: input, shape index: {}]
  %s3 = inlined_call_operand.vmem [shape: f32[80,512], index: 3, kind: input, shape index: {}]
  %s4 = inlined_call_operand.vmem [shape: f32[80,1], index: 4, kind: input, shape index: {}]
  %s5 = inlined_call_operand.vmem [shape: f32[80,1], index: 5, kind: input, shape index: {}]
  %s6 = inlined_call_operand.vmem [shape: f32[80,2], index: 6, kind: output, shape index: {}]
  %s7 = sld [smem:[#allocation0]]
  $region34: #{squeezecfnet_light_forward.3} parent=0
    _
  %s9 = ssub.s32 1, %s7
  %s10 = scalar_select 0, %s9, %s7
  // Predicated region
  $region2: #{squeezecfnet_light_forward.3} parent=0 // pred_check
    _
  $region3: #{squeezecfnet_light_forward.3} parent=0 // pred_check_branch
    %12 = sbr.rel (0) target = $region5
  $region4: #{squeezecfnet_light_forward.3} parent=0 // pred_region
    _
  $region5: #{squeezecfnet_light_forward.3} parent=0 // pred_fallthru
    _
  // Predicated region
  $region6: #{squeezecfnet_light_forward.3} parent=0 // pred_check
    _
  $region7: #{squeezecfnet_light_forward.3} parent=0 // pred_check_branch
    %14 = sbr.rel (0) target = $region9
  $region8: #{squeezecfnet_light_forward.3} parent=0 // pred_region
    _
  $region9: #{squeezecfnet_light_forward.3} parent=0 // pred_fallthru
    _
  // Predicated region
  $region10: #{squeezecfnet_light_forward.3} parent=0 // pred_check
    _
  $region11: #{squeezecfnet_light_forward.3} parent=0 // pred_check_branch
    %16 = sbr.rel (0) target = $region13
  $region12: #{squeezecfnet_light_forward.3} parent=0 // pred_region
    _
  $region13: #{squeezecfnet_light_forward.3} parent=0 // pred_fallthru
    _
  // Predicated region
  $region14: #{squeezecfnet_light_forward.3} parent=0 // pred_check
    _
  $region15: #{squeezecfnet_light_forward.3} parent=0 // pred_check_branch
    %18 = sbr.rel (0) target = $region17
  $region16: #{squeezecfnet_light_forward.3} parent=0 // pred_region
    _
  $region17: #{squeezecfnet_light_forward.3} parent=0 // pred_fallthru
    _
  // Predicated region
  $region18: #{squeezecfnet_light_forward.3} parent=0 // pred_check
    _
  $region19: #{squeezecfnet_light_forward.3} parent=0 // pred_check_branch
    %20 = sbr.rel (0) target = $region21
  $region20: #{squeezecfnet_light_forward.3} parent=0 // pred_region
    _
  $region21: #{squeezecfnet_light_forward.3} parent=0 // pred_fallthru
    _
  // Predicated region
  $region22: #{squeezecfnet_light_forward.3} parent=0 // pred_check
    _
  $region23: #{squeezecfnet_light_forward.3} parent=0 // pred_check_branch
    %22 = sbr.rel (0) target = $region25
  $region24: #{squeezecfnet_light_forward.3} parent=0 // pred_region
    _
  $region25: #{squeezecfnet_light_forward.3} parent=0 // pred_fallthru
    _
  %v23 = vld [vmem:[%s0] sm:$0xff]
  %v24 = vld [vmem:[%s0 + $0x8] sm:$0xff]
  %v25 = vld [vmem:[%s0 + $0x10] sm:$0xff]
  %v26 = vld [vmem:[%s0 + $0x18] sm:$0xff]
  %v27 = vld [vmem:[%s0 + $0x20] sm:$0xff]
  %v28 = vld [vmem:[%s0 + $0x28] sm:$0xff]
  %v29 = vld [vmem:[%s0 + $0x30] sm:$0xff]
  %v30 = vld [vmem:[%s0 + $0x38] sm:$0xff]
  %v31 = vld [vmem:[%s0 + $0x40] sm:$0xff]
  %v32 = vld [vmem:[%s0 + $0x48] sm:$0xff]
  %v33 = vld [vmem:[%s0 + $0x50] sm:$0xff]
  %v34 = vld [vmem:[%s0 + $0x58] sm:$0xff]
  %v35 = vld [vmem:[%s0 + $0x60] sm:$0xff]
  %v36 = vld [vmem:[%s0 + $0x68] sm:$0xff]
  %v37 = vld [vmem:[%s0 + $0x70] sm:$0xff]
  %v38 = vld [vmem:[%s0 + $0x78] sm:$0xff]
  %v39 = vld [vmem:[%s0 + $0x80] sm:$0xff]
  %v40 = vld [vmem:[%s0 + $0x88] sm:$0xff]
  %v41 = vld [vmem:[%s0 + $0x90] sm:$0xff]
  %v42 = vld [vmem:[%s0 + $0x98] sm:$0xff]
  %v43 = vld [vmem:[%s0 + $0xa0] sm:$0xff]
  %v44 = vld [vmem:[%s0 + $0xa8] sm:$0xff]
  %v45 = vld [vmem:[%s0 + $0xb0] sm:$0xff]
  %v46 = vld [vmem:[%s0 + $0xb8] sm:$0xff]
  %v47 = vld [vmem:[%s0 + $0xc0] sm:$0xff]
  %v48 = vld [vmem:[%s0 + $0xc8] sm:$0xff]
  %v49 = vld [vmem:[%s0 + $0xd0] sm:$0xff]
  %v50 = vld [vmem:[%s0 + $0xd8] sm:$0xff]
  %v51 = vld [vmem:[%s0 + $0xe0] sm:$0xff]
  %v52 = vld [vmem:[%s0 + $0xe8] sm:$0xff]
  %v53 = vld [vmem:[%s0 + $0xf0] sm:$0xff]
  %v54 = vld [vmem:[%s0 + $0xf8] sm:$0xff]
  %v55 = vld [vmem:[%s0 + $0x100] sm:$0xff]
  %v56 = vld [vmem:[%s0 + $0x108] sm:$0xff]
  %v57 = vld [vmem:[%s0 + $0x110] sm:$0xff]
  %v58 = vld [vmem:[%s0 + $0x118] sm:$0xff]
  %v59 = vld [vmem:[%s0 + $0x120] sm:$0xff]
  %v60 = vld [vmem:[%s0 + $0x128] sm:$0xff]
  %v61 = vld [vmem:[%s0 + $0x130] sm:$0xff]
  %v62 = vld [vmem:[%s0 + $0x138] sm:$0xff]
  %v63 = vld [vmem:[%s1] sm:$0xff]
  %v64 = vld [vmem:[%s1 + $0x8] sm:$0xff]
  %v65 = vld [vmem:[%s1 + $0x10] sm:$0xff]
  %v66 = vld [vmem:[%s1 + $0x18] sm:$0xff]
  %v67 = vld [vmem:[%s1 + $0x20] sm:$0xff]
  %v68 = vld [vmem:[%s1 + $0x28] sm:$0xff]
  %v69 = vld [vmem:[%s1 + $0x30] sm:$0xff]
  %v70 = vld [vmem:[%s1 + $0x38] sm:$0xff]
  %v71 = vld [vmem:[%s1 + $0x40] sm:$0xff]
  %v72 = vld [vmem:[%s1 + $0x48] sm:$0xff]
  %v73 = vld [vmem:[%s1 + $0x50] sm:$0xff]
  %v74 = vld [vmem:[%s1 + $0x58] sm:$0xff]
  %v75 = vld [vmem:[%s1 + $0x60] sm:$0xff]
  %v76 = vld [vmem:[%s1 + $0x68] sm:$0xff]
  %v77 = vld [vmem:[%s1 + $0x70] sm:$0xff]
  %v78 = vld [vmem:[%s1 + $0x78] sm:$0xff]
  %v79 = vld [vmem:[%s1 + $0x80] sm:$0xff]
  %v80 = vld [vmem:[%s1 + $0x88] sm:$0xff]
  %v81 = vld [vmem:[%s1 + $0x90] sm:$0xff]
  %v82 = vld [vmem:[%s1 + $0x98] sm:$0xff]
  %v83 = vld [vmem:[%s1 + $0xa0] sm:$0xff]
  %v84 = vld [vmem:[%s1 + $0xa8] sm:$0xff]
  %v85 = vld [vmem:[%s1 + $0xb0] sm:$0xff]
  %v86 = vld [vmem:[%s1 + $0xb8] sm:$0xff]
  %v87 = vld [vmem:[%s1 + $0xc0] sm:$0xff]
  %v88 = vld [vmem:[%s1 + $0xc8] sm:$0xff]
  %v89 = vld [vmem:[%s1 + $0xd0] sm:$0xff]
  %v90 = vld [vmem:[%s1 + $0xd8] sm:$0xff]
  %v91 = vld [vmem:[%s1 + $0xe0] sm:$0xff]
  %v92 = vld [vmem:[%s1 + $0xe8] sm:$0xff]
  %v93 = vld [vmem:[%s1 + $0xf0] sm:$0xff]
  %v94 = vld [vmem:[%s1 + $0xf8] sm:$0xff]
  %v95 = vld [vmem:[%s1 + $0x100] sm:$0xff]
  %v96 = vld [vmem:[%s1 + $0x108] sm:$0xff]
  %v97 = vld [vmem:[%s1 + $0x110] sm:$0xff]
  %v98 = vld [vmem:[%s1 + $0x118] sm:$0xff]
  %v99 = vld [vmem:[%s1 + $0x120] sm:$0xff]
  %v100 = vld [vmem:[%s1 + $0x128] sm:$0xff]
  %v101 = vld [vmem:[%s1 + $0x130] sm:$0xff]
  %v102 = vld [vmem:[%s1 + $0x138] sm:$0xff]
  %v103 = vld [vmem:[%s2] sm:$0xff]
  %v104 = vld [vmem:[%s2 + $0x8] sm:$0xff]
  %v105 = vld [vmem:[%s2 + $0x10] sm:$0xff]
  %v106 = vld [vmem:[%s2 + $0x18] sm:$0xff]
  %v107 = vld [vmem:[%s2 + $0x20] sm:$0xff]
  %v108 = vld [vmem:[%s2 + $0x28] sm:$0xff]
  %v109 = vld [vmem:[%s2 + $0x30] sm:$0xff]
  %v110 = vld [vmem:[%s2 + $0x38] sm:$0xff]
  %v111 = vld [vmem:[%s2 + $0x40] sm:$0xff]
  %v112 = vld [vmem:[%s2 + $0x48] sm:$0xff]
  %v113 = vld [vmem:[%s2 + $0x50] sm:$0xff]
  %v114 = vld [vmem:[%s2 + $0x58] sm:$0xff]
  %v115 = vld [vmem:[%s2 + $0x60] sm:$0xff]
  %v116 = vld [vmem:[%s2 + $0x68] sm:$0xff]
  %v117 = vld [vmem:[%s2 + $0x70] sm:$0xff]
  %v118 = vld [vmem:[%s2 + $0x78] sm:$0xff]
  %v119 = vld [vmem:[%s2 + $0x80] sm:$0xff]
  %v120 = vld [vmem:[%s2 + $0x88] sm:$0xff]
  %v121 = vld [vmem:[%s2 + $0x90] sm:$0xff]
  %v122 = vld [vmem:[%s2 + $0x98] sm:$0xff]
  %v123 = vld [vmem:[%s2 + $0xa0] sm:$0xff]
  %v124 = vld [vmem:[%s2 + $0xa8] sm:$0xff]
  %v125 = vld [vmem:[%s2 + $0xb0] sm:$0xff]
  %v126 = vld [vmem:[%s2 + $0xb8] sm:$0xff]
  %v127 = vld [vmem:[%s2 + $0xc0] sm:$0xff]
  %v128 = vld [vmem:[%s2 + $0xc8] sm:$0xff]
  %v129 = vld [vmem:[%s2 + $0xd0] sm:$0xff]
  %v130 = vld [vmem:[%s2 + $0xd8] sm:$0xff]
  %v131 = vld [vmem:[%s2 + $0xe0] sm:$0xff]
  %v132 = vld [vmem:[%s2 + $0xe8] sm:$0xff]
  %v133 = vld [vmem:[%s2 + $0xf0] sm:$0xff]
  %v134 = vld [vmem:[%s2 + $0xf8] sm:$0xff]
  %v135 = vld [vmem:[%s2 + $0x100] sm:$0xff]
  %v136 = vld [vmem:[%s2 + $0x108] sm:$0xff]
  %v137 = vld [vmem:[%s2 + $0x110] sm:$0xff]
  %v138 = vld [vmem:[%s2 + $0x118] sm:$0xff]
  %v139 = vld [vmem:[%s2 + $0x120] sm:$0xff]
  %v140 = vld [vmem:[%s2 + $0x128] sm:$0xff]
  %v141 = vld [vmem:[%s2 + $0x130] sm:$0xff]
  %v142 = vld [vmem:[%s2 + $0x138] sm:$0xff]
  %v143 = vld [vmem:[%s3] sm:$0xff]
  %v144 = vld [vmem:[%s3 + $0x8] sm:$0xff]
  %v145 = vld [vmem:[%s3 + $0x10] sm:$0xff]
  %v146 = vld [vmem:[%s3 + $0x18] sm:$0xff]
  %v147 = vld [vmem:[%s3 + $0x20] sm:$0xff]
  %v148 = vld [vmem:[%s3 + $0x28] sm:$0xff]
  %v149 = vld [vmem:[%s3 + $0x30] sm:$0xff]
  %v150 = vld [vmem:[%s3 + $0x38] sm:$0xff]
  %v151 = vld [vmem:[%s3 + $0x40] sm:$0xff]
  %v152 = vld [vmem:[%s3 + $0x48] sm:$0xff]
  %v153 = vld [vmem:[%s3 + $0x50] sm:$0xff]
  %v154 = vld [vmem:[%s3 + $0x58] sm:$0xff]
  %v155 = vld [vmem:[%s3 + $0x60] sm:$0xff]
  %v156 = vld [vmem:[%s3 + $0x68] sm:$0xff]
  %v157 = vld [vmem:[%s3 + $0x70] sm:$0xff]
  %v158 = vld [vmem:[%s3 + $0x78] sm:$0xff]
  %v159 = vld [vmem:[%s3 + $0x80] sm:$0xff]
  %v160 = vld [vmem:[%s3 + $0x88] sm:$0xff]
  %v161 = vld [vmem:[%s3 + $0x90] sm:$0xff]
  %v162 = vld [vmem:[%s3 + $0x98] sm:$0xff]
  %v163 = vld [vmem:[%s3 + $0xa0] sm:$0xff]
  %v164 = vld [vmem:[%s3 + $0xa8] sm:$0xff]
  %v165 = vld [vmem:[%s3 + $0xb0] sm:$0xff]
  %v166 = vld [vmem:[%s3 + $0xb8] sm:$0xff]
  %v167 = vld [vmem:[%s3 + $0xc0] sm:$0xff]
  %v168 = vld [vmem:[%s3 + $0xc8] sm:$0xff]
  %v169 = vld [vmem:[%s3 + $0xd0] sm:$0xff]
  %v170 = vld [vmem:[%s3 + $0xd8] sm:$0xff]
  %v171 = vld [vmem:[%s3 + $0xe0] sm:$0xff]
  %v172 = vld [vmem:[%s3 + $0xe8] sm:$0xff]
  %v173 = vld [vmem:[%s3 + $0xf0] sm:$0xff]
  %v174 = vld [vmem:[%s3 + $0xf8] sm:$0xff]
  %v175 = vld [vmem:[%s3 + $0x100] sm:$0xff]
  %v176 = vld [vmem:[%s3 + $0x108] sm:$0xff]
  %v177 = vld [vmem:[%s3 + $0x110] sm:$0xff]
  %v178 = vld [vmem:[%s3 + $0x118] sm:$0xff]
  %v179 = vld [vmem:[%s3 + $0x120] sm:$0xff]
  %v180 = vld [vmem:[%s3 + $0x128] sm:$0xff]
  %v181 = vld [vmem:[%s3 + $0x130] sm:$0xff]
  %v182 = vld [vmem:[%s3 + $0x138] sm:$0xff]
  %v183 = vmul.f32 %v23, %v103
  %v184 = vmul.f32 %v24, %v104
  %v185 = vmul.f32 %v25, %v105
  %v186 = vmul.f32 %v26, %v106
  %v187 = vmul.f32 %v27, %v107
  %v188 = vmul.f32 %v28, %v108
  %v189 = vmul.f32 %v29, %v109
  %v190 = vmul.f32 %v30, %v110
  %v191 = vmul.f32 %v31, %v111
  %v192 = vmul.f32 %v32, %v112
  %v193 = vmul.f32 %v33, %v113
  %v194 = vmul.f32 %v34, %v114
  %v195 = vmul.f32 %v35, %v115
  %v196 = vmul.f32 %v36, %v116
  %v197 = vmul.f32 %v37, %v117
  %v198 = vmul.f32 %v38, %v118
  %v199 = vmul.f32 %v39, %v119
  %v200 = vmul.f32 %v40, %v120
  %v201 = vmul.f32 %v41, %v121
  %v202 = vmul.f32 %v42, %v122
  %v203 = vmul.f32 %v43, %v123
  %v204 = vmul.f32 %v44, %v124
  %v205 = vmul.f32 %v45, %v125
  %v206 = vmul.f32 %v46, %v126
  %v207 = vmul.f32 %v47, %v127
  %v208 = vmul.f32 %v48, %v128
  %v209 = vmul.f32 %v49, %v129
  %v210 = vmul.f32 %v50, %v130
  %v211 = vmul.f32 %v51, %v131
  %v212 = vmul.f32 %v52, %v132
  %v213 = vmul.f32 %v53, %v133
  %v214 = vmul.f32 %v54, %v134
  %v215 = vmul.f32 %v55, %v135
  %v216 = vmul.f32 %v56, %v136
  %v217 = vmul.f32 %v57, %v137
  %v218 = vmul.f32 %v58, %v138
  %v219 = vmul.f32 %v59, %v139
  %v220 = vmul.f32 %v60, %v140
  %v221 = vmul.f32 %v61, %v141
  %v222 = vmul.f32 %v62, %v142
  %v223 = vmul.f32 %v63, %v143
  %v224 = vmul.f32 %v64, %v144
  %v225 = vmul.f32 %v65, %v145
  %v226 = vmul.f32 %v66, %v146
  %v227 = vmul.f32 %v67, %v147
  %v228 = vmul.f32 %v68, %v148
  %v229 = vmul.f32 %v69, %v149
  %v230 = vmul.f32 %v70, %v150
  %v231 = vmul.f32 %v71, %v151
  %v232 = vmul.f32 %v72, %v152
  %v233 = vmul.f32 %v73, %v153
  %v234 = vmul.f32 %v74, %v154
  %v235 = vmul.f32 %v75, %v155
  %v236 = vmul.f32 %v76, %v156
  %v237 = vmul.f32 %v77, %v157
  %v238 = vmul.f32 %v78, %v158
  %v239 = vmul.f32 %v79, %v159
  %v240 = vmul.f32 %v80, %v160
  %v241 = vmul.f32 %v81, %v161
  %v242 = vmul.f32 %v82, %v162
  %v243 = vmul.f32 %v83, %v163
  %v244 = vmul.f32 %v84, %v164
  %v245 = vmul.f32 %v85, %v165
  %v246 = vmul.f32 %v86, %v166
  %v247 = vmul.f32 %v87, %v167
  %v248 = vmul.f32 %v88, %v168
  %v249 = vmul.f32 %v89, %v169
  %v250 = vmul.f32 %v90, %v170
  %v251 = vmul.f32 %v91, %v171
  %v252 = vmul.f32 %v92, %v172
  %v253 = vmul.f32 %v93, %v173
  %v254 = vmul.f32 %v94, %v174
  %v255 = vmul.f32 %v95, %v175
  %v256 = vmul.f32 %v96, %v176
  %v257 = vmul.f32 %v97, %v177
  %v258 = vmul.f32 %v98, %v178
  %v259 = vmul.f32 %v99, %v179
  %v260 = vmul.f32 %v100, %v180
  %v261 = vmul.f32 %v101, %v181
  %v262 = vmul.f32 %v102, %v182
  %v263 = vadd.f32 %v183, %v223
  %v264 = vadd.f32 %v184, %v224
  %v265 = vadd.f32 %v185, %v225
  %v266 = vadd.f32 %v186, %v226
  %v267 = vadd.f32 %v187, %v227
  %v268 = vadd.f32 %v188, %v228
  %v269 = vadd.f32 %v189, %v229
  %v270 = vadd.f32 %v190, %v230
  %v271 = vadd.f32 %v191, %v231
  %v272 = vadd.f32 %v192, %v232
  %v273 = vadd.f32 %v193, %v233
  %v274 = vadd.f32 %v194, %v234
  %v275 = vadd.f32 %v195, %v235
  %v276 = vadd.f32 %v196, %v236
  %v277 = vadd.f32 %v197, %v237
  %v278 = vadd.f32 %v198, %v238
  %v279 = vadd.f32 %v199, %v239
  %v280 = vadd.f32 %v200, %v240
  %v281 = vadd.f32 %v201, %v241
  %v282 = vadd.f32 %v202, %v242
  %v283 = vadd.f32 %v203, %v243
  %v284 = vadd.f32 %v204, %v244
  %v285 = vadd.f32 %v205, %v245
  %v286 = vadd.f32 %v206, %v246
  %v287 = vadd.f32 %v207, %v247
  %v288 = vadd.f32 %v208, %v248
  %v289 = vadd.f32 %v209, %v249
  %v290 = vadd.f32 %v210, %v250
  %v291 = vadd.f32 %v211, %v251
  %v292 = vadd.f32 %v212, %v252
  %v293 = vadd.f32 %v213, %v253
  %v294 = vadd.f32 %v214, %v254
  %v295 = vadd.f32 %v215, %v255
  %v296 = vadd.f32 %v216, %v256
  %v297 = vadd.f32 %v217, %v257
  %v298 = vadd.f32 %v218, %v258
  %v299 = vadd.f32 %v219, %v259
  %v300 = vadd.f32 %v220, %v260
  %v301 = vadd.f32 %v221, %v261
  %v302 = vadd.f32 %v222, %v262
  %v303 = vadd.f32 %v263, %v264
  %v304 = vadd.f32 %v303, %v265
  %v305 = vadd.f32 %v304, %v266
  %306 = vadd.xlane.f32.xlu0 %v305
  %v307 = vpop.xlane.xlu0 %306
  %v308 = vadd.f32 %v267, %v268
  %v309 = vadd.f32 %v308, %v269
  %v310 = vadd.f32 %v309, %v270
  %311 = vadd.xlane.f32.xlu0 %v310
  %v312 = vpop.xlane.xlu0 %311
  %v313 = vadd.f32 %v271, %v272
  %v314 = vadd.f32 %v313, %v273
  %v315 = vadd.f32 %v314, %v274
  %316 = vadd.xlane.f32.xlu0 %v315
  %v317 = vpop.xlane.xlu0 %316
  %v318 = vadd.f32 %v275, %v276
  %v319 = vadd.f32 %v318, %v277
  %v320 = vadd.f32 %v319, %v278
  %321 = vadd.xlane.f32.xlu0 %v320
  %v322 = vpop.xlane.xlu0 %321
  %v323 = vadd.f32 %v279, %v280
  %v324 = vadd.f32 %v323, %v281
  %v325 = vadd.f32 %v324, %v282
  %326 = vadd.xlane.f32.xlu0 %v325
  %v327 = vpop.xlane.xlu0 %326
  %v328 = vadd.f32 %v283, %v284
  %v329 = vadd.f32 %v328, %v285
  %v330 = vadd.f32 %v329, %v286
  %331 = vadd.xlane.f32.xlu0 %v330
  %v332 = vpop.xlane.xlu0 %331
  %v333 = vadd.f32 %v287, %v288
  %v334 = vadd.f32 %v333, %v289
  %v335 = vadd.f32 %v334, %v290
  %336 = vadd.xlane.f32.xlu0 %v335
  %v337 = vpop.xlane.xlu0 %336
  %v338 = vadd.f32 %v291, %v292
  %v339 = vadd.f32 %v338, %v293
  %v340 = vadd.f32 %v339, %v294
  %341 = vadd.xlane.f32.xlu0 %v340
  %v342 = vpop.xlane.xlu0 %341
  %v343 = vadd.f32 %v295, %v296
  %v344 = vadd.f32 %v343, %v297
  %v345 = vadd.f32 %v344, %v298
  %346 = vadd.xlane.f32.xlu0 %v345
  %v347 = vpop.xlane.xlu0 %346
  %v348 = vadd.f32 %v299, %v300
  %v349 = vadd.f32 %v348, %v301
  %v350 = vadd.f32 %v349, %v302
  %351 = vadd.xlane.f32.xlu0 %v350
  %v352 = vpop.xlane.xlu0 %351
  %v353 = vmul.f32 %v63, %v103
  %v354 = vmul.f32 %v64, %v104
  %v355 = vmul.f32 %v65, %v105
  %v356 = vmul.f32 %v66, %v106
  %v357 = vmul.f32 %v67, %v107
  %v358 = vmul.f32 %v68, %v108
  %v359 = vmul.f32 %v69, %v109
  %v360 = vmul.f32 %v70, %v110
  %v361 = vmul.f32 %v71, %v111
  %v362 = vmul.f32 %v72, %v112
  %v363 = vmul.f32 %v73, %v113
  %v364 = vmul.f32 %v74, %v114
  %v365 = vmul.f32 %v75, %v115
  %v366 = vmul.f32 %v76, %v116
  %v367 = vmul.f32 %v77, %v117
  %v368 = vmul.f32 %v78, %v118
  %v369 = vmul.f32 %v79, %v119
  %v370 = vmul.f32 %v80, %v120
  %v371 = vmul.f32 %v81, %v121
  %v372 = vmul.f32 %v82, %v122
  %v373 = vmul.f32 %v83, %v123
  %v374 = vmul.f32 %v84, %v124
  %v375 = vmul.f32 %v85, %v125
  %v376 = vmul.f32 %v86, %v126
  %v377 = vmul.f32 %v87, %v127
  %v378 = vmul.f32 %v88, %v128
  %v379 = vmul.f32 %v89, %v129
  %v380 = vmul.f32 %v90, %v130
  %v381 = vmul.f32 %v91, %v131
  %v382 = vmul.f32 %v92, %v132
  %v383 = vmul.f32 %v93, %v133
  %v384 = vmul.f32 %v94, %v134
  %v385 = vmul.f32 %v95, %v135
  %v386 = vmul.f32 %v96, %v136
  %v387 = vmul.f32 %v97, %v137
  %v388 = vmul.f32 %v98, %v138
  %v389 = vmul.f32 %v99, %v139
  %v390 = vmul.f32 %v100, %v140
  %v391 = vmul.f32 %v101, %v141
  %v392 = vmul.f32 %v102, %v142
  %v393 = vmul.f32 %v23, %v143
  %v394 = vmul.f32 %v24, %v144
  %v395 = vmul.f32 %v25, %v145
  %v396 = vmul.f32 %v26, %v146
  %v397 = vmul.f32 %v27, %v147
  %v398 = vmul.f32 %v28, %v148
  %v399 = vmul.f32 %v29, %v149
  %v400 = vmul.f32 %v30, %v150
  %v401 = vmul.f32 %v31, %v151
  %v402 = vmul.f32 %v32, %v152
  %v403 = vmul.f32 %v33, %v153
  %v404 = vmul.f32 %v34, %v154
  %v405 = vmul.f32 %v35, %v155
  %v406 = vmul.f32 %v36, %v156
  %v407 = vmul.f32 %v37, %v157
  %v408 = vmul.f32 %v38, %v158
  %v409 = vmul.f32 %v39, %v159
  %v410 = vmul.f32 %v40, %v160
  %v411 = vmul.f32 %v41, %v161
  %v412 = vmul.f32 %v42, %v162
  %v413 = vmul.f32 %v43, %v163
  %v414 = vmul.f32 %v44, %v164
  %v415 = vmul.f32 %v45, %v165
  %v416 = vmul.f32 %v46, %v166
  %v417 = vmul.f32 %v47, %v167
  %v418 = vmul.f32 %v48, %v168
  %v419 = vmul.f32 %v49, %v169
  %v420 = vmul.f32 %v50, %v170
  %v421 = vmul.f32 %v51, %v171
  %v422 = vmul.f32 %v52, %v172
  %v423 = vmul.f32 %v53, %v173
  %v424 = vmul.f32 %v54, %v174
  %v425 = vmul.f32 %v55, %v175
  %v426 = vmul.f32 %v56, %v176
  %v427 = vmul.f32 %v57, %v177
  %v428 = vmul.f32 %v58, %v178
  %v429 = vmul.f32 %v59, %v179
  %v430 = vmul.f32 %v60, %v180
  %v431 = vmul.f32 %v61, %v181
  %v432 = vmul.f32 %v62, %v182
  %v433 = vsub.f32 %v353, %v393
  %v434 = vsub.f32 %v354, %v394
  %v435 = vsub.f32 %v355, %v395
  %v436 = vsub.f32 %v356, %v396
  %v437 = vsub.f32 %v357, %v397
  %v438 = vsub.f32 %v358, %v398
  %v439 = vsub.f32 %v359, %v399
  %v440 = vsub.f32 %v360, %v400
  %v441 = vsub.f32 %v361, %v401
  %v442 = vsub.f32 %v362, %v402
  %v443 = vsub.f32 %v363, %v403
  %v444 = vsub.f32 %v364, %v404
  %v445 = vsub.f32 %v365, %v405
  %v446 = vsub.f32 %v366, %v406
  %v447 = vsub.f32 %v367, %v407
  %v448 = vsub.f32 %v368, %v408
  %v449 = vsub.f32 %v369, %v409
  %v450 = vsub.f32 %v370, %v410
  %v451 = vsub.f32 %v371, %v411
  %v452 = vsub.f32 %v372, %v412
  %v453 = vsub.f32 %v373, %v413
  %v454 = vsub.f32 %v374, %v414
  %v455 = vsub.f32 %v375, %v415
  %v456 = vsub.f32 %v376, %v416
  %v457 = vsub.f32 %v377, %v417
  %v458 = vsub.f32 %v378, %v418
  %v459 = vsub.f32 %v379, %v419
  %v460 = vsub.f32 %v380, %v420
  %v461 = vsub.f32 %v381, %v421
  %v462 = vsub.f32 %v382, %v422
  %v463 = vsub.f32 %v383, %v423
  %v464 = vsub.f32 %v384, %v424
  %v465 = vsub.f32 %v385, %v425
  %v466 = vsub.f32 %v386, %v426
  %v467 = vsub.f32 %v387, %v427
  %v468 = vsub.f32 %v388, %v428
  %v469 = vsub.f32 %v389, %v429
  %v470 = vsub.f32 %v390, %v430
  %v471 = vsub.f32 %v391, %v431
  %v472 = vsub.f32 %v392, %v432
  %v473 = vadd.f32 %v433, %v434
  %v474 = vadd.f32 %v473, %v435
  %v475 = vadd.f32 %v474, %v436
  %476 = vadd.xlane.f32.xlu0 %v475
  %v477 = vpop.xlane.xlu0 %476
  %v478 = vadd.f32 %v437, %v438
  %v479 = vadd.f32 %v478, %v439
  %v480 = vadd.f32 %v479, %v440
  %481 = vadd.xlane.f32.xlu0 %v480
  %v482 = vpop.xlane.xlu0 %481
  %v483 = vadd.f32 %v441, %v442
  %v484 = vadd.f32 %v483, %v443
  %v485 = vadd.f32 %v484, %v444
  %486 = vadd.xlane.f32.xlu0 %v485
  %v487 = vpop.xlane.xlu0 %486
  %v488 = vadd.f32 %v445, %v446
  %v489 = vadd.f32 %v488, %v447
  %v490 = vadd.f32 %v489, %v448
  %491 = vadd.xlane.f32.xlu0 %v490
  %v492 = vpop.xlane.xlu0 %491
  %v493 = vadd.f32 %v449, %v450
  %v494 = vadd.f32 %v493, %v451
  %v495 = vadd.f32 %v494, %v452
  %496 = vadd.xlane.f32.xlu0 %v495
  %v497 = vpop.xlane.xlu0 %496
  %v498 = vadd.f32 %v453, %v454
  %v499 = vadd.f32 %v498, %v455
  %v500 = vadd.f32 %v499, %v456
  %501 = vadd.xlane.f32.xlu0 %v500
  %v502 = vpop.xlane.xlu0 %501
  %v503 = vadd.f32 %v457, %v458
  %v504 = vadd.f32 %v503, %v459
  %v505 = vadd.f32 %v504, %v460
  %506 = vadd.xlane.f32.xlu0 %v505
  %v507 = vpop.xlane.xlu0 %506
  %v508 = vadd.f32 %v461, %v462
  %v509 = vadd.f32 %v508, %v463
  %v510 = vadd.f32 %v509, %v464
  %511 = vadd.xlane.f32.xlu0 %v510
  %v512 = vpop.xlane.xlu0 %511
  %v513 = vadd.f32 %v465, %v466
  %v514 = vadd.f32 %v513, %v467
  %v515 = vadd.f32 %v514, %v468
  %516 = vadd.xlane.f32.xlu0 %v515
  %v517 = vpop.xlane.xlu0 %516
  %v518 = vadd.f32 %v469, %v470
  %v519 = vadd.f32 %v518, %v471
  %v520 = vadd.f32 %v519, %v472
  %521 = vadd.xlane.f32.xlu0 %v520
  %v522 = vpop.xlane.xlu0 %521
  %v523 = vld [vmem:[%s4] sm:$0xff]
  %v524 = vld [vmem:[%s4 + $0x8] sm:$0xff]
  %v525 = vld [vmem:[%s4 + $0x10] sm:$0xff]
  %v526 = vld [vmem:[%s4 + $0x18] sm:$0xff]
  %v527 = vld [vmem:[%s4 + $0x20] sm:$0xff]
  %v528 = vld [vmem:[%s4 + $0x28] sm:$0xff]
  %v529 = vld [vmem:[%s4 + $0x30] sm:$0xff]
  %v530 = vld [vmem:[%s4 + $0x38] sm:$0xff]
  %v531 = vld [vmem:[%s4 + $0x40] sm:$0xff]
  %v532 = vld [vmem:[%s4 + $0x48] sm:$0xff]
  %v533 = vld [vmem:[%s5] sm:$0xff]
  %v534 = vld [vmem:[%s5 + $0x8] sm:$0xff]
  %v535 = vld [vmem:[%s5 + $0x10] sm:$0xff]
  %v536 = vld [vmem:[%s5 + $0x18] sm:$0xff]
  %v537 = vld [vmem:[%s5 + $0x20] sm:$0xff]
  %v538 = vld [vmem:[%s5 + $0x28] sm:$0xff]
  %v539 = vld [vmem:[%s5 + $0x30] sm:$0xff]
  %v540 = vld [vmem:[%s5 + $0x38] sm:$0xff]
  %v541 = vld [vmem:[%s5 + $0x40] sm:$0xff]
  %v542 = vld [vmem:[%s5 + $0x48] sm:$0xff]
  %v543 = vmul.f32 %v307, %v523
  %v544 = vmul.f32 %v312, %v524
  %v545 = vmul.f32 %v317, %v525
  %v546 = vmul.f32 %v322, %v526
  %v547 = vmul.f32 %v327, %v527
  %v548 = vmul.f32 %v332, %v528
  %v549 = vmul.f32 %v337, %v529
  %v550 = vmul.f32 %v342, %v530
  %v551 = vmul.f32 %v347, %v531
  %v552 = vmul.f32 %v352, %v532
  %v553 = vmul.f32 %v477, %v533
  %v554 = vmul.f32 %v482, %v534
  %v555 = vmul.f32 %v487, %v535
  %v556 = vmul.f32 %v492, %v536
  %v557 = vmul.f32 %v497, %v537
  %v558 = vmul.f32 %v502, %v538
  %v559 = vmul.f32 %v507, %v539
  %v560 = vmul.f32 %v512, %v540
  %v561 = vmul.f32 %v517, %v541
  %v562 = vmul.f32 %v522, %v542
  %v563 = vsub.f32 %v543, %v553
  %v564 = vsub.f32 %v544, %v554
  %v565 = vsub.f32 %v545, %v555
  %v566 = vsub.f32 %v546, %v556
  %v567 = vsub.f32 %v547, %v557
  %v568 = vsub.f32 %v548, %v558
  %v569 = vsub.f32 %v549, %v559
  %v570 = vsub.f32 %v550, %v560
  %v571 = vsub.f32 %v551, %v561
  %v572 = vsub.f32 %v552, %v562
  %vm573 = vcmask 7168
  %574 = vst.msk [vmem:[%s6] sm:$0xff] %vm573, %v563
  %575 = vst.msk [vmem:[%s6 + $0x8] sm:$0xff] %vm573, %v564
  %576 = vst.msk [vmem:[%s6 + $0x10] sm:$0xff] %vm573, %v565
  %577 = vst.msk [vmem:[%s6 + $0x18] sm:$0xff] %vm573, %v566
  %578 = vst.msk [vmem:[%s6 + $0x20] sm:$0xff] %vm573, %v567
  %579 = vst.msk [vmem:[%s6 + $0x28] sm:$0xff] %vm573, %v568
  %580 = vst.msk [vmem:[%s6 + $0x30] sm:$0xff] %vm573, %v569
  %581 = vst.msk [vmem:[%s6 + $0x38] sm:$0xff] %vm573, %v570
  %582 = vst.msk [vmem:[%s6 + $0x40] sm:$0xff] %vm573, %v571
  %583 = vst.msk [vmem:[%s6 + $0x48] sm:$0xff] %vm573, %v572
  %v584 = vmul.f32 %v307, %v533
  %v585 = vmul.f32 %v312, %v534
  %v586 = vmul.f32 %v317, %v535
  %v587 = vmul.f32 %v322, %v536
  %v588 = vmul.f32 %v327, %v537
  %v589 = vmul.f32 %v332, %v538
  %v590 = vmul.f32 %v337, %v539
  %v591 = vmul.f32 %v342, %v540
  %v592 = vmul.f32 %v347, %v541
  %v593 = vmul.f32 %v352, %v542
  %v594 = vmul.f32 %v477, %v523
  %v595 = vmul.f32 %v482, %v524
  %v596 = vmul.f32 %v487, %v525
  %v597 = vmul.f32 %v492, %v526
  %v598 = vmul.f32 %v497, %v527
  %v599 = vmul.f32 %v502, %v528
  %v600 = vmul.f32 %v507, %v529
  %v601 = vmul.f32 %v512, %v530
  %v602 = vmul.f32 %v517, %v531
  %v603 = vmul.f32 %v522, %v532
  %v604 = vadd.f32 %v584, %v594
  %v605 = vadd.f32 %v585, %v595
  %v606 = vadd.f32 %v586, %v596
  %v607 = vadd.f32 %v587, %v597
  %v608 = vadd.f32 %v588, %v598
  %v609 = vadd.f32 %v589, %v599
  %v610 = vadd.f32 %v590, %v600
  %v611 = vadd.f32 %v591, %v601
  %v612 = vadd.f32 %v592, %v602
  %v613 = vadd.f32 %v593, %v603
  %624 = vrot.lane.b32.xlu0 %v604, 1
  %v625 = vpop.permute.xlu0 %624
  %626 = vrot.lane.b32.xlu0 %v605, 1
  %v627 = vpop.permute.xlu0 %626
  %628 = vrot.lane.b32.xlu0 %v606, 1
  %v629 = vpop.permute.xlu0 %628
  %630 = vrot.lane.b32.xlu0 %v607, 1
  %v631 = vpop.permute.xlu0 %630
  %632 = vrot.lane.b32.xlu0 %v608, 1
  %v633 = vpop.permute.xlu0 %632
  %634 = vrot.lane.b32.xlu0 %v609, 1
  %v635 = vpop.permute.xlu0 %634
  %636 = vrot.lane.b32.xlu0 %v610, 1
  %v637 = vpop.permute.xlu0 %636
  %638 = vrot.lane.b32.xlu0 %v611, 1
  %v639 = vpop.permute.xlu0 %638
  %640 = vrot.lane.b32.xlu0 %v612, 1
  %v641 = vpop.permute.xlu0 %640
  %642 = vrot.lane.b32.xlu0 %v613, 1
  %v643 = vpop.permute.xlu0 %642
  %vm654 = vcmask 15368
  %655 = vst.msk [vmem:[%s6] sm:$0xff] %vm654, %v625
  %656 = vst.msk [vmem:[%s6 + $0x8] sm:$0xff] %vm654, %v627
  %657 = vst.msk [vmem:[%s6 + $0x10] sm:$0xff] %vm654, %v629
  %658 = vst.msk [vmem:[%s6 + $0x18] sm:$0xff] %vm654, %v631
  %659 = vst.msk [vmem:[%s6 + $0x20] sm:$0xff] %vm654, %v633
  %660 = vst.msk [vmem:[%s6 + $0x28] sm:$0xff] %vm654, %v635
  %661 = vst.msk [vmem:[%s6 + $0x30] sm:$0xff] %vm654, %v637
  %662 = vst.msk [vmem:[%s6 + $0x38] sm:$0xff] %vm654, %v639
  %663 = vst.msk [vmem:[%s6 + $0x40] sm:$0xff] %vm654, %v641
  %664 = vst.msk [vmem:[%s6 + $0x48] sm:$0xff] %vm654, %v643
  // Predicated region
  $region26: #{squeezecfnet_light_forward.3} parent=0 // pred_check
    _
  $region27: #{squeezecfnet_light_forward.3} parent=0 // pred_check_branch
    %666 = sbr.rel (0) target = $region29
  $region28: #{squeezecfnet_light_forward.3} parent=0 // pred_region
    _
  $region29: #{squeezecfnet_light_forward.3} parent=0 // pred_fallthru
    _
  // Predicated region
  $region30: #{squeezecfnet_light_forward.3} parent=0 // pred_check
    _
  $region31: #{squeezecfnet_light_forward.3} parent=0 // pred_check_branch
    %668 = sbr.rel (0) target = $region33
  $region32: #{squeezecfnet_light_forward.3} parent=0 // pred_region
    _
  $region33: #{squeezecfnet_light_forward.3} parent=0 // pred_fallthru
    _

// kernel: reverse.1
$region0: #{reverse.1}
  #allocation0 [shape = 's32[1]{0}', space=sflag, size = 0x4, scoped, tag = 'scoped memory for reverse.1']
  %s0 = inlined_call_operand.vmem [shape: f32[2,1,8,3], index: 0, kind: input, shape index: {}]
  %s1 = inlined_call_operand.vmem [shape: f32[2,1,8,3], index: 1, kind: output, shape index: {}]
  %s2 = scalar_lea.vmem %s0, 4
  %v3 = vld [vmem:[%s2] sm:$0x3]
  %4 = vst [vmem:[%s1] sm:$0x3] %v3
  %s5 = scalar_lea.vmem %s0, 2
  %v6 = vld [vmem:[%s5] sm:$0x3]
  %s7 = scalar_lea.vmem %s1, 2
  %8 = vst [vmem:[%s7] sm:$0x3] %v6
  %v9 = vld [vmem:[%s0] sm:$0x3]
  %s10 = scalar_lea.vmem %s1, 4
  %11 = vst [vmem:[%s10] sm:$0x3] %v9

</llo_original>
